<compile_context>
chip_gen: v6e
topology: v6e:2x2x1
jax: 0.10.0
libtpu: 0.0.40
codegen_flags: <defaults>
</compile_context>

<pallas_src>
import functools
import math

import jax
import jax.numpy as jnp
import numpy as np
from jax.experimental import pallas as pl
from jax.experimental.pallas import tpu as pltpu

CFG_VGG5 = [64, "A", 128, 128, "A"]
LABELS = 10


# ---------------------------------------------------------------------------
# Pallas kernels
# ---------------------------------------------------------------------------
def _matmul_relu_kernel(x_ref, w_ref, o_ref):
    # x_ref: (M, K)  w_ref: (K, Cout)  o_ref: (M, Cout); whole problem in one block.
    acc = jnp.dot(x_ref[...], w_ref[...], preferred_element_type=jnp.float32)
    o_ref[...] = jnp.maximum(acc, 0.0)


def _avgpool_kernel(x_ref, o_ref, *, C):
    # x_ref: (N*Ho, 2, Wo, 2*C) -- free reshape of NHWC; pooling done in-kernel.
    x = x_ref[...]
    s = x[:, 0] + x[:, 1]                       # sum over the H-pair (leading dim)
    o_ref[...] = (s[..., :C] + s[..., C:]) * 0.25  # sum over the W-pair (lane halves)


def _linear_kernel(x_ref, w_ref, o_ref, acc_ref, *, relu):
    @pl.when(pl.program_id(1) == 0)
    def _():
        acc_ref[...] = jnp.zeros_like(acc_ref)

    acc_ref[...] += jnp.dot(x_ref[...], w_ref[...],
                            preferred_element_type=jnp.float32)

    @pl.when(pl.program_id(1) == pl.num_programs(1) - 1)
    def _():
        r = acc_ref[...]
        if relu:
            r = jnp.maximum(r, 0.0)
        o_ref[...] = r


# ---------------------------------------------------------------------------
# Pallas-backed layer wrappers
# ---------------------------------------------------------------------------
def conv3x3_relu(x_nhwc, wmat):
    """3x3 conv, stride 1, padding 1 (no bias), + ReLU.

    wmat: pre-reshaped weight of shape (Kp, Cout) where Kp >= 9*Cin (zero-padded).
    Batch is folded into the matmul M dimension (single grid step).
    """
    N, H, W, Cin = x_nhwc.shape
    Kp, Cout = wmat.shape
    K = 9 * Cin

    # glue: pad + im2col (slicing / concatenation / free reshape only)
    xp = jnp.pad(x_nhwc, ((0, 0), (1, 1), (1, 1), (0, 0)))
    cols = jnp.concatenate(
        [xp[:, ky:ky + H, kx:kx + W, :] for ky in range(3) for kx in range(3)],
        axis=-1,
    ).reshape(N * H * W, K)
    if Kp > K:  # lane-pad the contraction dim (conv1: 27 -> 128)
        cols = jnp.pad(cols, ((0, 0), (0, Kp - K)))

    out = pl.pallas_call(
        _matmul_relu_kernel,
        out_shape=jax.ShapeDtypeStruct((N * H * W, Cout), jnp.float32),
    )(cols, wmat)
    return out.reshape(N, H, W, Cout)


def avgpool2(x_nhwc):
    """2x2 average pool, stride 2 — single kernel, pooling done inside."""
    N, H, W, C = x_nhwc.shape
    Ho, Wo = H // 2, W // 2
    # Free (contiguous) reshape: (N,H,W,C) -> (N*Ho, 2, Wo, 2*C); no data movement.
    xr = x_nhwc.reshape(N * Ho, 2, Wo, 2 * C)
    out = pl.pallas_call(
        functools.partial(_avgpool_kernel, C=C),
        out_shape=jax.ShapeDtypeStruct((N * Ho, Wo, C), jnp.float32),
    )(xr)
    return out.reshape(N, Ho, Wo, C)


def _pick_tile(dim, preferred=(1024, 512, 256, 128)):
    for t in preferred:
        if dim % t == 0:
            return t
    # Guard against silently creating huge single tiles for odd sizes.
    assert dim <= 1024, f"no lane-aligned tile divides dim={dim}"
    return dim


def linear_pallas(x, w_in_out, relu):
    """y = x @ w_in_out (optionally ReLU).  w_in_out is (in_features, out_features)."""
    M, K = x.shape
    K2, Nout = w_in_out.shape
    assert K == K2
    tk = _pick_tile(K)
    tn = _pick_tile(Nout)
    grid = (Nout // tn, K // tk)  # reduction axis last

    cost = pl.CostEstimate(
        flops=2 * M * K * Nout,
        transcendentals=0,
        bytes_accessed=4 * (M * K + K * Nout + M * Nout),
    )
    kernel = functools.partial(_linear_kernel, relu=relu)
    return pl.pallas_call(
        kernel,
        out_shape=jax.ShapeDtypeStruct((M, Nout), jnp.float32),
        grid_spec=pltpu.PrefetchScalarGridSpec(
            num_scalar_prefetch=0,
            grid=grid,
            in_specs=[
                pl.BlockSpec((M, tk), lambda j, k: (0, k)),
                pl.BlockSpec((tk, tn), lambda j, k: (k, j)),
            ],
            out_specs=pl.BlockSpec((M, tn), lambda j, k: (0, j)),
            scratch_shapes=[pltpu.VMEM((M, tn), jnp.float32)],
        ),
        compiler_params=pltpu.CompilerParams(
            dimension_semantics=("parallel", "arbitrary"),
            vmem_limit_bytes=32 * 1024 * 1024),
        cost_estimate=cost,
    )(x, w_in_out)


# ---------------------------------------------------------------------------
# Model: parameter init (mirrors _initialize_weights2) and forward
# ---------------------------------------------------------------------------
def init_params(key, cfg_list, labels=LABELS):
    convs, conv_mats = [], []
    in_c = 3
    for v in cfg_list:
        if v == "A":
            continue
        key, sub = jax.random.split(key)
        n = 3 * 3 * v  # kH * kW * out_channels
        w = jax.random.normal(sub, (v, in_c, 3, 3), jnp.float32) * math.sqrt(2.0 / n)
        convs.append(w)
        # Hoisted weight transform: (Cout,Cin,3,3) -> (ky,kx,Cin,Cout) -> (9*Cin,Cout)
        wmat = jnp.transpose(w, (2, 3, 1, 0)).reshape(9 * in_c, v)
        k = wmat.shape[0]
        if k < 128:  # lane-pad conv1's contraction dim (27 -> 128)
            wmat = jnp.pad(wmat, ((0, 128 - k), (0, 0)))
        conv_mats.append(wmat)
        in_c = v

    fcs, fc_mats = [], []
    for out_f, in_f in [(4096, 512 * 2 * 2), (4096, 4096), (labels, 4096)]:
        key, sub = jax.random.split(key)
        w = jax.random.normal(sub, (out_f, in_f), jnp.float32) * 0.01
        fcs.append(w)
        wt = w.T  # pre-transposed once at init: (in_features, out_features)
        if out_f % 128 != 0:  # lane-pad final layer's output (10 -> 128)
            pad_n = ((out_f + 127) // 128) * 128 - out_f
            wt = jnp.pad(wt, ((0, 0), (0, pad_n)))
        fc_mats.append(wt)

    return {"convs": convs, "conv_mats": conv_mats, "fcs": fcs, "fc_mats": fc_mats}


def vgg_forward(x_nchw, params):
    x = jnp.transpose(x_nchw, (0, 2, 3, 1)).astype(jnp.float32)  # NCHW -> NHWC
    ci = 0
    for v in CFG_VGG5:
        if v == "A":
            x = avgpool2(x)
        else:
            x = conv3x3_relu(x, params["conv_mats"][ci])
            ci += 1
            # Dropout(0.2): identity at inference
    # flatten in PyTorch (N, C, H, W) order
    x = jnp.transpose(x, (0, 3, 1, 2)).reshape(x.shape[0], -1)
    x = linear_pallas(x, params["fc_mats"][0], relu=True)
    x = linear_pallas(x, params["fc_mats"][1], relu=True)
    x = linear_pallas(x, params["fc_mats"][2], relu=False)
    return x[:, :LABELS]  # drop the lane-padding columns of the last layer


def reference_forward(x_nchw, params):
    """Pure-JAX reference mirroring the PyTorch forward (eval mode)."""
    x = x_nchw.astype(jnp.float32)
    ci = 0
    for v in CFG_VGG5:
        if v == "A":
            N, C, H, W = x.shape
            x = x.reshape(N, C, H // 2, 2, W // 2, 2).mean(axis=(3, 5))
        else:
            x = jax.lax.conv_general_dilated(
                x, params["convs"][ci], (1, 1), ((1, 1), (1, 1)),
                dimension_numbers=("NCHW", "OIHW", "NCHW"))
            x = jnp.maximum(x, 0.0)
            ci += 1
    x = x.reshape(x.shape[0], -1)
    x = jnp.maximum(x @ params["fcs"][0].T, 0.0)
    x = jnp.maximum(x @ params["fcs"][1].T, 0.0)
    x = x @ params["fcs"][2].T
    return x


if __name__ == "__main__":
    key = jax.random.PRNGKey(0)
    key, pkey, xkey = jax.random.split(key, 3)
    params = init_params(pkey, CFG_VGG5, LABELS)

    # PyTorch-convention NCHW input: batch=2, channels=3, spatial=16
    x = jax.random.normal(xkey, (2, 3, 16, 16), jnp.float32)

    fwd = jax.jit(vgg_forward)
    out = jax.block_until_ready(fwd(x, params))

    ref = jax.block_until_ready(reference_forward(x, params))
    assert out.shape == (2, LABELS) and out.dtype == jnp.float32
    if not np.allclose(np.asarray(out), np.asarray(ref), rtol=5e-3, atol=5e-3):
        raise AssertionError("Pallas VGG output does not match JAX reference")

    print("KERNEL_OK")
</pallas_src>

<mosaic_0001>
module attributes {stable_mosaic.version = 11 : i64} {
  func.func @_matmul_relu_kernel(%arg0: memref<512x128xf32, #tpu.memory_space<vmem>>, %arg1: memref<128x64xf32, #tpu.memory_space<vmem>>, %arg2: memref<512x64xf32, #tpu.memory_space<vmem>>) attributes {dimension_semantics = [], scalar_prefetch = 0 : i64, scratch_operands = 0 : i64, tpu.core_type = #tpu.core_type<tc>} {
    %c0 = arith.constant 0 : index
    %c0_0 = arith.constant 0 : index
    %0 = vector.load %arg0[%c0, %c0_0] : memref<512x128xf32, #tpu.memory_space<vmem>>, vector<512x128xf32>
    %c0_1 = arith.constant 0 : index
    %c0_2 = arith.constant 0 : index
    %1 = vector.load %arg1[%c0_1, %c0_2] : memref<128x64xf32, #tpu.memory_space<vmem>>, vector<128x64xf32>
    %cst = arith.constant dense<0.000000e+00> : vector<512x64xf32>
    %2 = tpu.matmul %0, %1, %cst {dimension_numbers = #tpu.dot_dimension_numbers<[1], [0], [0], [1], [0, 0, 1, 1], [], []>} : vector<512x128xf32>, vector<128x64xf32>, vector<512x64xf32> -> vector<512x64xf32>
    %cst_3 = arith.constant 0.000000e+00 : f32
    %3 = vector.broadcast %cst_3 : f32 to vector<512x64xf32>
    %4 = arith.maximumf %2, %3 : vector<512x64xf32>
    %c0_4 = arith.constant 0 : index
    %c0_5 = arith.constant 0 : index
    %5 = vector.load %arg2[%c0_4, %c0_5] : memref<512x64xf32, #tpu.memory_space<vmem>>, vector<512x64xf32>
    tpu.vector_store %arg2[%c0_4, %c0_5], %4 {strides = array<i32>} : memref<512x64xf32, #tpu.memory_space<vmem>>, vector<512x64xf32>,
    return
  }
}

module attributes {stable_mosaic.version = 11 : i64} {
  func.func @_avgpool_kernel(%arg0: memref<16x2x8x128xf32, #tpu.memory_space<vmem>>, %arg1: memref<16x8x64xf32, #tpu.memory_space<vmem>>) attributes {dimension_semantics = [], scalar_prefetch = 0 : i64, scratch_operands = 0 : i64, tpu.core_type = #tpu.core_type<tc>} {
    %c0 = arith.constant 0 : index
    %c0_0 = arith.constant 0 : index
    %c0_1 = arith.constant 0 : index
    %c0_2 = arith.constant 0 : index
    %0 = vector.load %arg0[%c0, %c0_0, %c0_1, %c0_2] : memref<16x2x8x128xf32, #tpu.memory_space<vmem>>, vector<16x2x8x128xf32>
    %1 = vector.extract_strided_slice %0 {offsets = [0, 0, 0, 0], sizes = [16, 1, 8, 128], strides = [1, 1, 1, 1]} : vector<16x2x8x128xf32> to vector<16x1x8x128xf32>
    %2 = vector.shape_cast %1 : vector<16x1x8x128xf32> to vector<16x8x128xf32>
    %3 = vector.extract_strided_slice %0 {offsets = [0, 1, 0, 0], sizes = [16, 1, 8, 128], strides = [1, 1, 1, 1]} : vector<16x2x8x128xf32> to vector<16x1x8x128xf32>
    %4 = vector.shape_cast %3 : vector<16x1x8x128xf32> to vector<16x8x128xf32>
    %5 = arith.addf %2, %4 : vector<16x8x128xf32>
    %6 = vector.extract_strided_slice %5 {offsets = [0, 0, 0], sizes = [16, 8, 64], strides = [1, 1, 1]} : vector<16x8x128xf32> to vector<16x8x64xf32>
    %7 = vector.extract_strided_slice %5 {offsets = [0, 0, 64], sizes = [16, 8, 64], strides = [1, 1, 1]} : vector<16x8x128xf32> to vector<16x8x64xf32>
    %8 = arith.addf %6, %7 : vector<16x8x64xf32>
    %cst = arith.constant 2.500000e-01 : f32
    %9 = vector.broadcast %cst : f32 to vector<16x8x64xf32>
    %10 = arith.mulf %8, %9 : vector<16x8x64xf32>
    %c0_3 = arith.constant 0 : index
    %c0_4 = arith.constant 0 : index
    %c0_5 = arith.constant 0 : index
    %11 = vector.load %arg1[%c0_3, %c0_4, %c0_5] : memref<16x8x64xf32, #tpu.memory_space<vmem>>, vector<16x8x64xf32>
    tpu.vector_store %arg1[%c0_3, %c0_4, %c0_5], %10 {strides = array<i32>} : memref<16x8x64xf32, #tpu.memory_space<vmem>>, vector<16x8x64xf32>,
    return
  }
}

module attributes {stable_mosaic.version = 11 : i64} {
  func.func @_matmul_relu_kernel(%arg0: memref<128x576xf32, #tpu.memory_space<vmem>>, %arg1: memref<576x128xf32, #tpu.memory_space<vmem>>, %arg2: memref<128x128xf32, #tpu.memory_space<vmem>>) attributes {dimension_semantics = [], scalar_prefetch = 0 : i64, scratch_operands = 0 : i64, tpu.core_type = #tpu.core_type<tc>} {
    %c0 = arith.constant 0 : index
    %c0_0 = arith.constant 0 : index
    %0 = vector.load %arg0[%c0, %c0_0] : memref<128x576xf32, #tpu.memory_space<vmem>>, vector<128x576xf32>
    %c0_1 = arith.constant 0 : index
    %c0_2 = arith.constant 0 : index
    %1 = vector.load %arg1[%c0_1, %c0_2] : memref<576x128xf32, #tpu.memory_space<vmem>>, vector<576x128xf32>
    %cst = arith.constant dense<0.000000e+00> : vector<128x128xf32>
    %2 = tpu.matmul %0, %1, %cst {dimension_numbers = #tpu.dot_dimension_numbers<[1], [0], [0], [1], [0, 0, 1, 1], [], []>} : vector<128x576xf32>, vector<576x128xf32>, vector<128x128xf32> -> vector<128x128xf32>
    %cst_3 = arith.constant 0.000000e+00 : f32
    %3 = vector.broadcast %cst_3 : f32 to vector<128x128xf32>
    %4 = arith.maximumf %2, %3 : vector<128x128xf32>
    %c0_4 = arith.constant 0 : index
    %c0_5 = arith.constant 0 : index
    %5 = vector.load %arg2[%c0_4, %c0_5] : memref<128x128xf32, #tpu.memory_space<vmem>>, vector<128x128xf32>
    tpu.vector_store %arg2[%c0_4, %c0_5], %4 {strides = array<i32>} : memref<128x128xf32, #tpu.memory_space<vmem>>, vector<128x128xf32>,
    return
  }
}

module attributes {stable_mosaic.version = 11 : i64} {
  func.func @_matmul_relu_kernel(%arg0: memref<128x1152xf32, #tpu.memory_space<vmem>>, %arg1: memref<1152x128xf32, #tpu.memory_space<vmem>>, %arg2: memref<128x128xf32, #tpu.memory_space<vmem>>) attributes {dimension_semantics = [], scalar_prefetch = 0 : i64, scratch_operands = 0 : i64, tpu.core_type = #tpu.core_type<tc>} {
    %c0 = arith.constant 0 : index
    %c0_0 = arith.constant 0 : index
    %0 = vector.load %arg0[%c0, %c0_0] : memref<128x1152xf32, #tpu.memory_space<vmem>>, vector<128x1152xf32>
    %c0_1 = arith.constant 0 : index
    %c0_2 = arith.constant 0 : index
    %1 = vector.load %arg1[%c0_1, %c0_2] : memref<1152x128xf32, #tpu.memory_space<vmem>>, vector<1152x128xf32>
    %cst = arith.constant dense<0.000000e+00> : vector<128x128xf32>
    %2 = tpu.matmul %0, %1, %cst {dimension_numbers = #tpu.dot_dimension_numbers<[1], [0], [0], [1], [0, 0, 1, 1], [], []>} : vector<128x1152xf32>, vector<1152x128xf32>, vector<128x128xf32> -> vector<128x128xf32>
    %cst_3 = arith.constant 0.000000e+00 : f32
    %3 = vector.broadcast %cst_3 : f32 to vector<128x128xf32>
    %4 = arith.maximumf %2, %3 : vector<128x128xf32>
    %c0_4 = arith.constant 0 : index
    %c0_5 = arith.constant 0 : index
    %5 = vector.load %arg2[%c0_4, %c0_5] : memref<128x128xf32, #tpu.memory_space<vmem>>, vector<128x128xf32>
    tpu.vector_store %arg2[%c0_4, %c0_5], %4 {strides = array<i32>} : memref<128x128xf32, #tpu.memory_space<vmem>>, vector<128x128xf32>,
    return
  }
}

module attributes {stable_mosaic.version = 11 : i64} {
  func.func @_avgpool_kernel(%arg0: memref<8x2x4x256xf32, #tpu.memory_space<vmem>>, %arg1: memref<8x4x128xf32, #tpu.memory_space<vmem>>) attributes {dimension_semantics = [], scalar_prefetch = 0 : i64, scratch_operands = 0 : i64, tpu.core_type = #tpu.core_type<tc>} {
    %c0 = arith.constant 0 : index
    %c0_0 = arith.constant 0 : index
    %c0_1 = arith.constant 0 : index
    %c0_2 = arith.constant 0 : index
    %0 = vector.load %arg0[%c0, %c0_0, %c0_1, %c0_2] : memref<8x2x4x256xf32, #tpu.memory_space<vmem>>, vector<8x2x4x256xf32>
    %1 = vector.extract_strided_slice %0 {offsets = [0, 0, 0, 0], sizes = [8, 1, 4, 256], strides = [1, 1, 1, 1]} : vector<8x2x4x256xf32> to vector<8x1x4x256xf32>
    %2 = vector.shape_cast %1 : vector<8x1x4x256xf32> to vector<8x4x256xf32>
    %3 = vector.extract_strided_slice %0 {offsets = [0, 1, 0, 0], sizes = [8, 1, 4, 256], strides = [1, 1, 1, 1]} : vector<8x2x4x256xf32> to vector<8x1x4x256xf32>
    %4 = vector.shape_cast %3 : vector<8x1x4x256xf32> to vector<8x4x256xf32>
    %5 = arith.addf %2, %4 : vector<8x4x256xf32>
    %6 = vector.extract_strided_slice %5 {offsets = [0, 0, 0], sizes = [8, 4, 128], strides = [1, 1, 1]} : vector<8x4x256xf32> to vector<8x4x128xf32>
    %7 = vector.extract_strided_slice %5 {offsets = [0, 0, 128], sizes = [8, 4, 128], strides = [1, 1, 1]} : vector<8x4x256xf32> to vector<8x4x128xf32>
    %8 = arith.addf %6, %7 : vector<8x4x128xf32>
    %cst = arith.constant 2.500000e-01 : f32
    %9 = vector.broadcast %cst : f32 to vector<8x4x128xf32>
    %10 = arith.mulf %8, %9 : vector<8x4x128xf32>
    %c0_3 = arith.constant 0 : index
    %c0_4 = arith.constant 0 : index
    %c0_5 = arith.constant 0 : index
    %11 = vector.load %arg1[%c0_3, %c0_4, %c0_5] : memref<8x4x128xf32, #tpu.memory_space<vmem>>, vector<8x4x128xf32>
    tpu.vector_store %arg1[%c0_3, %c0_4, %c0_5], %10 {strides = array<i32>} : memref<8x4x128xf32, #tpu.memory_space<vmem>>, vector<8x4x128xf32>,
    return
  }
}

module attributes {stable_mosaic.version = 11 : i64} {
  func.func @_linear_kernel(%arg0: i32, %arg1: i32, %arg2: memref<2x1024xf32, #tpu.memory_space<vmem>>, %arg3: memref<1024x1024xf32, #tpu.memory_space<vmem>>, %arg4: memref<2x1024xf32, #tpu.memory_space<vmem>>, %arg5: memref<2x1024xf32, #tpu.memory_space<vmem>>) attributes {dimension_semantics = [#tpu.dimension_semantics<parallel>, #tpu.dimension_semantics<arbitrary>], iteration_bounds = array<i64: 4, 2>, scalar_prefetch = 0 : i64, scratch_operands = 1 : i64, tpu.core_type = #tpu.core_type<tc>, window_params = [{transform_indices = @transform_0, window_bounds = array<i64: 2, 1024>}, {transform_indices = @transform_1, window_bounds = array<i64: 1024, 1024>}, {transform_indices = @transform_2, window_bounds = array<i64: 2, 1024>}]} {
    %c0_i32 = arith.constant 0 : i32
    %0 = arith.cmpi eq, %arg1, %c0_i32 : i32
    %1 = arith.extui %0 : i1 to i32
    %c0_i32_0 = arith.constant 0 : i32
    %2 = arith.cmpi ne, %1, %c0_i32_0 : i32
    scf.if %2 {
      %cst_9 = arith.constant 0.000000e+00 : f32
      %12 = vector.broadcast %cst_9 : f32 to vector<2x1024xf32>
      %c0_10 = arith.constant 0 : index
      %c0_11 = arith.constant 0 : index
      %13 = vector.load %arg5[%c0_10, %c0_11] : memref<2x1024xf32, #tpu.memory_space<vmem>>, vector<2x1024xf32>
      tpu.vector_store %arg5[%c0_10, %c0_11], %12 {strides = array<i32>} : memref<2x1024xf32, #tpu.memory_space<vmem>>, vector<2x1024xf32>,
    } else {
    }
    %c0 = arith.constant 0 : index
    %c0_1 = arith.constant 0 : index
    %3 = vector.load %arg5[%c0, %c0_1] : memref<2x1024xf32, #tpu.memory_space<vmem>>, vector<2x1024xf32>
    %c0_2 = arith.constant 0 : index
    %c0_3 = arith.constant 0 : index
    %4 = vector.load %arg2[%c0_2, %c0_3] : memref<2x1024xf32, #tpu.memory_space<vmem>>, vector<2x1024xf32>
    %c0_4 = arith.constant 0 : index
    %c0_5 = arith.constant 0 : index
    %5 = vector.load %arg3[%c0_4, %c0_5] : memref<1024x1024xf32, #tpu.memory_space<vmem>>, vector<1024x1024xf32>
    %cst = arith.constant dense<0.000000e+00> : vector<2x1024xf32>
    %6 = tpu.matmul %4, %5, %cst {dimension_numbers = #tpu.dot_dimension_numbers<[1], [0], [0], [1], [0, 0, 1, 1], [], []>} : vector<2x1024xf32>, vector<1024x1024xf32>, vector<2x1024xf32> -> vector<2x1024xf32>
    %7 = arith.addf %3, %6 : vector<2x1024xf32>
    %c0_6 = arith.constant 0 : index
    %c0_7 = arith.constant 0 : index
    %8 = vector.load %arg5[%c0_6, %c0_7] : memref<2x1024xf32, #tpu.memory_space<vmem>>, vector<2x1024xf32>
    tpu.vector_store %arg5[%c0_6, %c0_7], %7 {strides = array<i32>} : memref<2x1024xf32, #tpu.memory_space<vmem>>, vector<2x1024xf32>,
    %c1_i32 = arith.constant 1 : i32
    %9 = arith.cmpi eq, %arg1, %c1_i32 : i32
    %10 = arith.extui %9 : i1 to i32
    %c0_i32_8 = arith.constant 0 : i32
    %11 = arith.cmpi ne, %10, %c0_i32_8 : i32
    scf.if %11 {
      %c0_9 = arith.constant 0 : index
      %c0_10 = arith.constant 0 : index
      %12 = vector.load %arg5[%c0_9, %c0_10] : memref<2x1024xf32, #tpu.memory_space<vmem>>, vector<2x1024xf32>
      %cst_11 = arith.constant 0.000000e+00 : f32
      %13 = vector.broadcast %cst_11 : f32 to vector<2x1024xf32>
      %14 = arith.maximumf %12, %13 : vector<2x1024xf32>
      %c0_12 = arith.constant 0 : index
      %c0_13 = arith.constant 0 : index
      %15 = vector.load %arg4[%c0_12, %c0_13] : memref<2x1024xf32, #tpu.memory_space<vmem>>, vector<2x1024xf32>
      tpu.vector_store %arg4[%c0_12, %c0_13], %14 {strides = array<i32>} : memref<2x1024xf32, #tpu.memory_space<vmem>>, vector<2x1024xf32>,
    } else {
    }
    return
  }
  func.func @transform_0(%arg0: i32, %arg1: i32) -> (i32, i32) {
    %c0_i32 = arith.constant 0 : i32
    %c0_i32_0 = arith.constant 0 : i32
    return %c0_i32, %arg1 : i32, i32
  }
  func.func @transform_1(%arg0: i32, %arg1: i32) -> (i32, i32) {
    %c0_i32 = arith.constant 0 : i32
    return %arg1, %arg0 : i32, i32
  }
  func.func @transform_2(%arg0: i32, %arg1: i32) -> (i32, i32) {
    %c0_i32 = arith.constant 0 : i32
    %c0_i32_0 = arith.constant 0 : i32
    return %c0_i32, %arg0 : i32, i32
  }
}

module attributes {stable_mosaic.version = 11 : i64} {
  func.func @_linear_kernel(%arg0: i32, %arg1: i32, %arg2: memref<2x1024xf32, #tpu.memory_space<vmem>>, %arg3: memref<1024x1024xf32, #tpu.memory_space<vmem>>, %arg4: memref<2x1024xf32, #tpu.memory_space<vmem>>, %arg5: memref<2x1024xf32, #tpu.memory_space<vmem>>) attributes {dimension_semantics = [#tpu.dimension_semantics<parallel>, #tpu.dimension_semantics<arbitrary>], iteration_bounds = array<i64: 4, 4>, scalar_prefetch = 0 : i64, scratch_operands = 1 : i64, tpu.core_type = #tpu.core_type<tc>, window_params = [{transform_indices = @transform_0, window_bounds = array<i64: 2, 1024>}, {transform_indices = @transform_1, window_bounds = array<i64: 1024, 1024>}, {transform_indices = @transform_2, window_bounds = array<i64: 2, 1024>}]} {
    %c0_i32 = arith.constant 0 : i32
    %0 = arith.cmpi eq, %arg1, %c0_i32 : i32
    %1 = arith.extui %0 : i1 to i32
    %c0_i32_0 = arith.constant 0 : i32
    %2 = arith.cmpi ne, %1, %c0_i32_0 : i32
    scf.if %2 {
      %cst_9 = arith.constant 0.000000e+00 : f32
      %12 = vector.broadcast %cst_9 : f32 to vector<2x1024xf32>
      %c0_10 = arith.constant 0 : index
      %c0_11 = arith.constant 0 : index
      %13 = vector.load %arg5[%c0_10, %c0_11] : memref<2x1024xf32, #tpu.memory_space<vmem>>, vector<2x1024xf32>
      tpu.vector_store %arg5[%c0_10, %c0_11], %12 {strides = array<i32>} : memref<2x1024xf32, #tpu.memory_space<vmem>>, vector<2x1024xf32>,
    } else {
    }
    %c0 = arith.constant 0 : index
    %c0_1 = arith.constant 0 : index
    %3 = vector.load %arg5[%c0, %c0_1] : memref<2x1024xf32, #tpu.memory_space<vmem>>, vector<2x1024xf32>
    %c0_2 = arith.constant 0 : index
    %c0_3 = arith.constant 0 : index
    %4 = vector.load %arg2[%c0_2, %c0_3] : memref<2x1024xf32, #tpu.memory_space<vmem>>, vector<2x1024xf32>
    %c0_4 = arith.constant 0 : index
    %c0_5 = arith.constant 0 : index
    %5 = vector.load %arg3[%c0_4, %c0_5] : memref<1024x1024xf32, #tpu.memory_space<vmem>>, vector<1024x1024xf32>
    %cst = arith.constant dense<0.000000e+00> : vector<2x1024xf32>
    %6 = tpu.matmul %4, %5, %cst {dimension_numbers = #tpu.dot_dimension_numbers<[1], [0], [0], [1], [0, 0, 1, 1], [], []>} : vector<2x1024xf32>, vector<1024x1024xf32>, vector<2x1024xf32> -> vector<2x1024xf32>
    %7 = arith.addf %3, %6 : vector<2x1024xf32>
    %c0_6 = arith.constant 0 : index
    %c0_7 = arith.constant 0 : index
    %8 = vector.load %arg5[%c0_6, %c0_7] : memref<2x1024xf32, #tpu.memory_space<vmem>>, vector<2x1024xf32>
    tpu.vector_store %arg5[%c0_6, %c0_7], %7 {strides = array<i32>} : memref<2x1024xf32, #tpu.memory_space<vmem>>, vector<2x1024xf32>,
    %c3_i32 = arith.constant 3 : i32
    %9 = arith.cmpi eq, %arg1, %c3_i32 : i32
    %10 = arith.extui %9 : i1 to i32
    %c0_i32_8 = arith.constant 0 : i32
    %11 = arith.cmpi ne, %10, %c0_i32_8 : i32
    scf.if %11 {
      %c0_9 = arith.constant 0 : index
      %c0_10 = arith.constant 0 : index
      %12 = vector.load %arg5[%c0_9, %c0_10] : memref<2x1024xf32, #tpu.memory_space<vmem>>, vector<2x1024xf32>
      %cst_11 = arith.constant 0.000000e+00 : f32
      %13 = vector.broadcast %cst_11 : f32 to vector<2x1024xf32>
      %14 = arith.maximumf %12, %13 : vector<2x1024xf32>
      %c0_12 = arith.constant 0 : index
      %c0_13 = arith.constant 0 : index
      %15 = vector.load %arg4[%c0_12, %c0_13] : memref<2x1024xf32, #tpu.memory_space<vmem>>, vector<2x1024xf32>
      tpu.vector_store %arg4[%c0_12, %c0_13], %14 {strides = array<i32>} : memref<2x1024xf32, #tpu.memory_space<vmem>>, vector<2x1024xf32>,
    } else {
    }
    return
  }
  func.func @transform_0(%arg0: i32, %arg1: i32) -> (i32, i32) {
    %c0_i32 = arith.constant 0 : i32
    %c0_i32_0 = arith.constant 0 : i32
    return %c0_i32, %arg1 : i32, i32
  }
  func.func @transform_1(%arg0: i32, %arg1: i32) -> (i32, i32) {
    %c0_i32 = arith.constant 0 : i32
    return %arg1, %arg0 : i32, i32
  }
  func.func @transform_2(%arg0: i32, %arg1: i32) -> (i32, i32) {
    %c0_i32 = arith.constant 0 : i32
    %c0_i32_0 = arith.constant 0 : i32
    return %c0_i32, %arg0 : i32, i32
  }
}

module attributes {stable_mosaic.version = 11 : i64} {
  func.func @_linear_kernel(%arg0: i32, %arg1: i32, %arg2: memref<2x1024xf32, #tpu.memory_space<vmem>>, %arg3: memref<1024x128xf32, #tpu.memory_space<vmem>>, %arg4: memref<2x128xf32, #tpu.memory_space<vmem>>, %arg5: memref<2x128xf32, #tpu.memory_space<vmem>>) attributes {dimension_semantics = [#tpu.dimension_semantics<parallel>, #tpu.dimension_semantics<arbitrary>], iteration_bounds = array<i64: 1, 4>, scalar_prefetch = 0 : i64, scratch_operands = 1 : i64, tpu.core_type = #tpu.core_type<tc>, window_params = [{transform_indices = @transform_0, window_bounds = array<i64: 2, 1024>}, {transform_indices = @transform_1, window_bounds = array<i64: 1024, 128>}, {transform_indices = @transform_2, window_bounds = array<i64: 2, 128>}]} {
    %c0_i32 = arith.constant 0 : i32
    %0 = arith.cmpi eq, %arg1, %c0_i32 : i32
    %1 = arith.extui %0 : i1 to i32
    %c0_i32_0 = arith.constant 0 : i32
    %2 = arith.cmpi ne, %1, %c0_i32_0 : i32
    scf.if %2 {
      %cst_9 = arith.constant 0.000000e+00 : f32
      %12 = vector.broadcast %cst_9 : f32 to vector<2x128xf32>
      %c0_10 = arith.constant 0 : index
      %c0_11 = arith.constant 0 : index
      %13 = vector.load %arg5[%c0_10, %c0_11] : memref<2x128xf32, #tpu.memory_space<vmem>>, vector<2x128xf32>
      tpu.vector_store %arg5[%c0_10, %c0_11], %12 {strides = array<i32>} : memref<2x128xf32, #tpu.memory_space<vmem>>, vector<2x128xf32>,
    } else {
    }
    %c0 = arith.constant 0 : index
    %c0_1 = arith.constant 0 : index
    %3 = vector.load %arg5[%c0, %c0_1] : memref<2x128xf32, #tpu.memory_space<vmem>>, vector<2x128xf32>
    %c0_2 = arith.constant 0 : index
    %c0_3 = arith.constant 0 : index
    %4 = vector.load %arg2[%c0_2, %c0_3] : memref<2x1024xf32, #tpu.memory_space<vmem>>, vector<2x1024xf32>
    %c0_4 = arith.constant 0 : index
    %c0_5 = arith.constant 0 : index
    %5 = vector.load %arg3[%c0_4, %c0_5] : memref<1024x128xf32, #tpu.memory_space<vmem>>, vector<1024x128xf32>
    %cst = arith.constant dense<0.000000e+00> : vector<2x128xf32>
    %6 = tpu.matmul %4, %5, %cst {dimension_numbers = #tpu.dot_dimension_numbers<[1], [0], [0], [1], [0, 0, 1, 1], [], []>} : vector<2x1024xf32>, vector<1024x128xf32>, vector<2x128xf32> -> vector<2x128xf32>
    %7 = arith.addf %3, %6 : vector<2x128xf32>
    %c0_6 = arith.constant 0 : index
    %c0_7 = arith.constant 0 : index
    %8 = vector.load %arg5[%c0_6, %c0_7] : memref<2x128xf32, #tpu.memory_space<vmem>>, vector<2x128xf32>
    tpu.vector_store %arg5[%c0_6, %c0_7], %7 {strides = array<i32>} : memref<2x128xf32, #tpu.memory_space<vmem>>, vector<2x128xf32>,
    %c3_i32 = arith.constant 3 : i32
    %9 = arith.cmpi eq, %arg1, %c3_i32 : i32
    %10 = arith.extui %9 : i1 to i32
    %c0_i32_8 = arith.constant 0 : i32
    %11 = arith.cmpi ne, %10, %c0_i32_8 : i32
    scf.if %11 {
      %c0_9 = arith.constant 0 : index
      %c0_10 = arith.constant 0 : index
      %12 = vector.load %arg5[%c0_9, %c0_10] : memref<2x128xf32, #tpu.memory_space<vmem>>, vector<2x128xf32>
      %c0_11 = arith.constant 0 : index
      %c0_12 = arith.constant 0 : index
      %13 = vector.load %arg4[%c0_11, %c0_12] : memref<2x128xf32, #tpu.memory_space<vmem>>, vector<2x128xf32>
      tpu.vector_store %arg4[%c0_11, %c0_12], %12 {strides = array<i32>} : memref<2x128xf32, #tpu.memory_space<vmem>>, vector<2x128xf32>,
    } else {
    }
    return
  }
  func.func @transform_0(%arg0: i32, %arg1: i32) -> (i32, i32) {
    %c0_i32 = arith.constant 0 : i32
    %c0_i32_0 = arith.constant 0 : i32
    return %c0_i32, %arg1 : i32, i32
  }
  func.func @transform_1(%arg0: i32, %arg1: i32) -> (i32, i32) {
    %c0_i32 = arith.constant 0 : i32
    return %arg1, %arg0 : i32, i32
  }
  func.func @transform_2(%arg0: i32, %arg1: i32) -> (i32, i32) {
    %c0_i32 = arith.constant 0 : i32
    %c0_i32_0 = arith.constant 0 : i32
    return %c0_i32, %arg0 : i32, i32
  }
}

</mosaic_0001>

<llo_original>
// kernel: vgg_forward.9
$region0: #{vgg_forward.9}
  #allocation0 [shape = 'u32[]', space=smem, size = 0x4, offset = 0x4, fixed_abs, tag = 'smem constant byte address 0x4 - core index']
  #allocation1 [shape = 'u32[144,128]{1,0:T(1,128)}', space=vmem, size = 0x12000, scoped, tag = 'internal scratch']
  %s0 = inlined_call_operand.vmem [shape: f32[16,2,8,128], index: 0, kind: input, shape index: {}]
  %s1 = inlined_call_operand.vmem [shape: f32[16,8,64], index: 1, kind: output, shape index: {}]
  %s2 = sld [smem:[#allocation0]]
  $region14: #{vgg_forward.9} parent=0
    _
  %s4 = ssub.s32 1, %s2
  %s5 = scalar_select 0, %s4, %s2
  // Predicated region
  $region2: #{vgg_forward.9} parent=0 // pred_check
    _
  $region3: #{vgg_forward.9} parent=0 // pred_check_branch
    %7 = sbr.rel (0) target = $region5
  $region4: #{vgg_forward.9} parent=0 // pred_region
    _
  $region5: #{vgg_forward.9} parent=0 // pred_fallthru
    _
  %v8 = vld [vmem:[%s0] sm:$0xff]
  %v9 = vld [vmem:[%s0 + $0x8] sm:$0xff]
  %v10 = vld [vmem:[%s0 + $0x10] sm:$0xff]
  %v11 = vld [vmem:[%s0 + $0x18] sm:$0xff]
  %v12 = vld [vmem:[%s0 + $0x20] sm:$0xff]
  %v13 = vld [vmem:[%s0 + $0x28] sm:$0xff]
  %v14 = vld [vmem:[%s0 + $0x30] sm:$0xff]
  %v15 = vld [vmem:[%s0 + $0x38] sm:$0xff]
  %v16 = vld [vmem:[%s0 + $0x40] sm:$0xff]
  %v17 = vld [vmem:[%s0 + $0x48] sm:$0xff]
  %v18 = vld [vmem:[%s0 + $0x50] sm:$0xff]
  %v19 = vld [vmem:[%s0 + $0x58] sm:$0xff]
  %v20 = vld [vmem:[%s0 + $0x60] sm:$0xff]
  %v21 = vld [vmem:[%s0 + $0x68] sm:$0xff]
  %v22 = vld [vmem:[%s0 + $0x70] sm:$0xff]
  %v23 = vld [vmem:[%s0 + $0x78] sm:$0xff]
  %v24 = vld [vmem:[%s0 + $0x80] sm:$0xff]
  %v25 = vld [vmem:[%s0 + $0x88] sm:$0xff]
  %v26 = vld [vmem:[%s0 + $0x90] sm:$0xff]
  %v27 = vld [vmem:[%s0 + $0x98] sm:$0xff]
  %v28 = vld [vmem:[%s0 + $0xa0] sm:$0xff]
  %v29 = vld [vmem:[%s0 + $0xa8] sm:$0xff]
  %v30 = vld [vmem:[%s0 + $0xb0] sm:$0xff]
  %v31 = vld [vmem:[%s0 + $0xb8] sm:$0xff]
  %v32 = vld [vmem:[%s0 + $0xc0] sm:$0xff]
  %v33 = vld [vmem:[%s0 + $0xc8] sm:$0xff]
  %v34 = vld [vmem:[%s0 + $0xd0] sm:$0xff]
  %v35 = vld [vmem:[%s0 + $0xd8] sm:$0xff]
  %v36 = vld [vmem:[%s0 + $0xe0] sm:$0xff]
  %v37 = vld [vmem:[%s0 + $0xe8] sm:$0xff]
  %v38 = vld [vmem:[%s0 + $0xf0] sm:$0xff]
  %v39 = vld [vmem:[%s0 + $0xf8] sm:$0xff]
  %v40 = vadd.f32 %v8, %v9
  %v41 = vadd.f32 %v10, %v11
  %v42 = vadd.f32 %v12, %v13
  %v43 = vadd.f32 %v14, %v15
  %v44 = vadd.f32 %v16, %v17
  %v45 = vadd.f32 %v18, %v19
  %v46 = vadd.f32 %v20, %v21
  %v47 = vadd.f32 %v22, %v23
  %v48 = vadd.f32 %v24, %v25
  %v49 = vadd.f32 %v26, %v27
  %v50 = vadd.f32 %v28, %v29
  %v51 = vadd.f32 %v30, %v31
  %v52 = vadd.f32 %v32, %v33
  %v53 = vadd.f32 %v34, %v35
  %v54 = vadd.f32 %v36, %v37
  %v55 = vadd.f32 %v38, %v39
  %72 = vrot.lane.b32.xlu0 %v40, 64
  %v73 = vpop.permute.xlu0 %72
  %74 = vrot.lane.b32.xlu0 %v41, 64
  %v75 = vpop.permute.xlu0 %74
  %76 = vrot.lane.b32.xlu0 %v42, 64
  %v77 = vpop.permute.xlu0 %76
  %78 = vrot.lane.b32.xlu0 %v43, 64
  %v79 = vpop.permute.xlu0 %78
  %80 = vrot.lane.b32.xlu0 %v44, 64
  %v81 = vpop.permute.xlu0 %80
  %82 = vrot.lane.b32.xlu0 %v45, 64
  %v83 = vpop.permute.xlu0 %82
  %84 = vrot.lane.b32.xlu0 %v46, 64
  %v85 = vpop.permute.xlu0 %84
  %86 = vrot.lane.b32.xlu0 %v47, 64
  %v87 = vpop.permute.xlu0 %86
  %88 = vrot.lane.b32.xlu0 %v48, 64
  %v89 = vpop.permute.xlu0 %88
  %90 = vrot.lane.b32.xlu0 %v49, 64
  %v91 = vpop.permute.xlu0 %90
  %92 = vrot.lane.b32.xlu0 %v50, 64
  %v93 = vpop.permute.xlu0 %92
  %94 = vrot.lane.b32.xlu0 %v51, 64
  %v95 = vpop.permute.xlu0 %94
  %96 = vrot.lane.b32.xlu0 %v52, 64
  %v97 = vpop.permute.xlu0 %96
  %98 = vrot.lane.b32.xlu0 %v53, 64
  %v99 = vpop.permute.xlu0 %98
  %100 = vrot.lane.b32.xlu0 %v54, 64
  %v101 = vpop.permute.xlu0 %100
  %102 = vrot.lane.b32.xlu0 %v55, 64
  %v103 = vpop.permute.xlu0 %102
  %v120 = vadd.f32 %v40, %v73
  %v121 = vadd.f32 %v41, %v75
  %v122 = vadd.f32 %v42, %v77
  %v123 = vadd.f32 %v43, %v79
  %v124 = vadd.f32 %v44, %v81
  %v125 = vadd.f32 %v45, %v83
  %v126 = vadd.f32 %v46, %v85
  %v127 = vadd.f32 %v47, %v87
  %v128 = vadd.f32 %v48, %v89
  %v129 = vadd.f32 %v49, %v91
  %v130 = vadd.f32 %v50, %v93
  %v131 = vadd.f32 %v51, %v95
  %v132 = vadd.f32 %v52, %v97
  %v133 = vadd.f32 %v53, %v99
  %v134 = vadd.f32 %v54, %v101
  %v135 = vadd.f32 %v55, %v103
  %v136 = vmul.f32 %v120, 0.25
  %v137 = vmul.f32 %v121, 0.25
  %v138 = vmul.f32 %v122, 0.25
  %v139 = vmul.f32 %v123, 0.25
  %v140 = vmul.f32 %v124, 0.25
  %v141 = vmul.f32 %v125, 0.25
  %v142 = vmul.f32 %v126, 0.25
  %v143 = vmul.f32 %v127, 0.25
  %v144 = vmul.f32 %v128, 0.25
  %v145 = vmul.f32 %v129, 0.25
  %v146 = vmul.f32 %v130, 0.25
  %v147 = vmul.f32 %v131, 0.25
  %v148 = vmul.f32 %v132, 0.25
  %v149 = vmul.f32 %v133, 0.25
  %v150 = vmul.f32 %v134, 0.25
  %v151 = vmul.f32 %v135, 0.25
  %vm152 = vcmask 523264
  %153 = vst.msk [vmem:[%s1] sm:$0xff] %vm152, %v136
  %154 = vst.msk [vmem:[%s1 + $0x8] sm:$0xff] %vm152, %v137
  %155 = vst.msk [vmem:[%s1 + $0x10] sm:$0xff] %vm152, %v138
  %156 = vst.msk [vmem:[%s1 + $0x18] sm:$0xff] %vm152, %v139
  %157 = vst.msk [vmem:[%s1 + $0x20] sm:$0xff] %vm152, %v140
  %158 = vst.msk [vmem:[%s1 + $0x28] sm:$0xff] %vm152, %v141
  %159 = vst.msk [vmem:[%s1 + $0x30] sm:$0xff] %vm152, %v142
  %160 = vst.msk [vmem:[%s1 + $0x38] sm:$0xff] %vm152, %v143
  %161 = vst.msk [vmem:[%s1 + $0x40] sm:$0xff] %vm152, %v144
  %162 = vst.msk [vmem:[%s1 + $0x48] sm:$0xff] %vm152, %v145
  %163 = vst.msk [vmem:[%s1 + $0x50] sm:$0xff] %vm152, %v146
  %164 = vst.msk [vmem:[%s1 + $0x58] sm:$0xff] %vm152, %v147
  %165 = vst.msk [vmem:[%s1 + $0x60] sm:$0xff] %vm152, %v148
  %166 = vst.msk [vmem:[%s1 + $0x68] sm:$0xff] %vm152, %v149
  %167 = vst.msk [vmem:[%s1 + $0x70] sm:$0xff] %vm152, %v150
  %168 = vst.msk [vmem:[%s1 + $0x78] sm:$0xff] %vm152, %v151
  // Predicated region
  $region6: #{vgg_forward.9} parent=0 // pred_check
    _
  $region7: #{vgg_forward.9} parent=0 // pred_check_branch
    %170 = sbr.rel (0) target = $region9
  $region8: #{vgg_forward.9} parent=0 // pred_region
    _
  $region9: #{vgg_forward.9} parent=0 // pred_fallthru
    _
  // Predicated region
  $region10: #{vgg_forward.9} parent=0 // pred_check
    _
  $region11: #{vgg_forward.9} parent=0 // pred_check_branch
    %172 = sbr.rel (0) target = $region13
  $region12: #{vgg_forward.9} parent=0 // pred_region
    _
  $region13: #{vgg_forward.9} parent=0 // pred_fallthru
    _

// kernel: vgg_forward.8
$region0: #{vgg_forward.8}
  #allocation0 [shape = 'u32[]', space=smem, size = 0x4, offset = 0x4, fixed_abs, tag = 'smem constant byte address 0x4 - core index']
  #allocation1 [shape = 'u32[144,128]{1,0:T(1,128)}', space=vmem, size = 0x12000, scoped, tag = 'internal scratch']
  %s0 = inlined_call_operand.vmem [shape: f32[512,128], index: 0, kind: input, shape index: {}]
  %s1 = inlined_call_operand.vmem [shape: f32[128,64], index: 1, kind: input, shape index: {}]
  %s2 = inlined_call_operand.vmem [shape: f32[512,64], index: 2, kind: output, shape index: {}]
  %s3 = sld [smem:[#allocation0]]
  $region18: #{vgg_forward.8} parent=0
    _
  %s5 = ssub.s32 1, %s3
  %s6 = scalar_select 0, %s5, %s3
  // Predicated region
  $region2: #{vgg_forward.8} parent=0 // pred_check
    _
  $region3: #{vgg_forward.8} parent=0 // pred_check_branch
    %8 = sbr.rel (0) target = $region5
  $region4: #{vgg_forward.8} parent=0 // pred_region
    _
  $region5: #{vgg_forward.8} parent=0 // pred_fallthru
    _
  // Predicated region
  $region6: #{vgg_forward.8} parent=0 // pred_check
    _
  $region7: #{vgg_forward.8} parent=0 // pred_check_branch
    %10 = sbr.rel (0) target = $region9
  $region8: #{vgg_forward.8} parent=0 // pred_region
    _
  $region9: #{vgg_forward.8} parent=0 // pred_fallthru
    _
  %v11 = vld [vmem:[%s0] sm:$0xff]
  %v12 = vld [vmem:[%s0 + $0x8] sm:$0xff]
  %v13 = vld [vmem:[%s0 + $0x10] sm:$0xff]
  %v14 = vld [vmem:[%s0 + $0x18] sm:$0xff]
  %v15 = vld [vmem:[%s0 + $0x20] sm:$0xff]
  %v16 = vld [vmem:[%s0 + $0x28] sm:$0xff]
  %v17 = vld [vmem:[%s0 + $0x30] sm:$0xff]
  %v18 = vld [vmem:[%s0 + $0x38] sm:$0xff]
  %v19 = vld [vmem:[%s0 + $0x40] sm:$0xff]
  %v20 = vld [vmem:[%s0 + $0x48] sm:$0xff]
  %v21 = vld [vmem:[%s0 + $0x50] sm:$0xff]
  %v22 = vld [vmem:[%s0 + $0x58] sm:$0xff]
  %v23 = vld [vmem:[%s0 + $0x60] sm:$0xff]
  %v24 = vld [vmem:[%s0 + $0x68] sm:$0xff]
  %v25 = vld [vmem:[%s0 + $0x70] sm:$0xff]
  %v26 = vld [vmem:[%s0 + $0x78] sm:$0xff]
  %v27 = vld [vmem:[%s0 + $0x80] sm:$0xff]
  %v28 = vld [vmem:[%s0 + $0x88] sm:$0xff]
  %v29 = vld [vmem:[%s0 + $0x90] sm:$0xff]
  %v30 = vld [vmem:[%s0 + $0x98] sm:$0xff]
  %v31 = vld [vmem:[%s0 + $0xa0] sm:$0xff]
  %v32 = vld [vmem:[%s0 + $0xa8] sm:$0xff]
  %v33 = vld [vmem:[%s0 + $0xb0] sm:$0xff]
  %v34 = vld [vmem:[%s0 + $0xb8] sm:$0xff]
  %v35 = vld [vmem:[%s0 + $0xc0] sm:$0xff]
  %v36 = vld [vmem:[%s0 + $0xc8] sm:$0xff]
  %v37 = vld [vmem:[%s0 + $0xd0] sm:$0xff]
  %v38 = vld [vmem:[%s0 + $0xd8] sm:$0xff]
  %v39 = vld [vmem:[%s0 + $0xe0] sm:$0xff]
  %v40 = vld [vmem:[%s0 + $0xe8] sm:$0xff]
  %v41 = vld [vmem:[%s0 + $0xf0] sm:$0xff]
  %v42 = vld [vmem:[%s0 + $0xf8] sm:$0xff]
  %v43 = vld [vmem:[%s0 + $0x100] sm:$0xff]
  %v44 = vld [vmem:[%s0 + $0x108] sm:$0xff]
  %v45 = vld [vmem:[%s0 + $0x110] sm:$0xff]
  %v46 = vld [vmem:[%s0 + $0x118] sm:$0xff]
  %v47 = vld [vmem:[%s0 + $0x120] sm:$0xff]
  %v48 = vld [vmem:[%s0 + $0x128] sm:$0xff]
  %v49 = vld [vmem:[%s0 + $0x130] sm:$0xff]
  %v50 = vld [vmem:[%s0 + $0x138] sm:$0xff]
  %v51 = vld [vmem:[%s0 + $0x140] sm:$0xff]
  %v52 = vld [vmem:[%s0 + $0x148] sm:$0xff]
  %v53 = vld [vmem:[%s0 + $0x150] sm:$0xff]
  %v54 = vld [vmem:[%s0 + $0x158] sm:$0xff]
  %v55 = vld [vmem:[%s0 + $0x160] sm:$0xff]
  %v56 = vld [vmem:[%s0 + $0x168] sm:$0xff]
  %v57 = vld [vmem:[%s0 + $0x170] sm:$0xff]
  %v58 = vld [vmem:[%s0 + $0x178] sm:$0xff]
  %v59 = vld [vmem:[%s0 + $0x180] sm:$0xff]
  %v60 = vld [vmem:[%s0 + $0x188] sm:$0xff]
  %v61 = vld [vmem:[%s0 + $0x190] sm:$0xff]
  %v62 = vld [vmem:[%s0 + $0x198] sm:$0xff]
  %v63 = vld [vmem:[%s0 + $0x1a0] sm:$0xff]
  %v64 = vld [vmem:[%s0 + $0x1a8] sm:$0xff]
  %v65 = vld [vmem:[%s0 + $0x1b0] sm:$0xff]
  %v66 = vld [vmem:[%s0 + $0x1b8] sm:$0xff]
  %v67 = vld [vmem:[%s0 + $0x1c0] sm:$0xff]
  %v68 = vld [vmem:[%s0 + $0x1c8] sm:$0xff]
  %v69 = vld [vmem:[%s0 + $0x1d0] sm:$0xff]
  %v70 = vld [vmem:[%s0 + $0x1d8] sm:$0xff]
  %v71 = vld [vmem:[%s0 + $0x1e0] sm:$0xff]
  %v72 = vld [vmem:[%s0 + $0x1e8] sm:$0xff]
  %v73 = vld [vmem:[%s0 + $0x1f0] sm:$0xff]
  %v74 = vld [vmem:[%s0 + $0x1f8] sm:$0xff]
  %v75 = vld [vmem:[%s1] sm:$0xff]
  %v76 = vld [vmem:[%s1 + $0x8] sm:$0xff]
  %v77 = vld [vmem:[%s1 + $0x10] sm:$0xff]
  %v78 = vld [vmem:[%s1 + $0x18] sm:$0xff]
  %v79 = vld [vmem:[%s1 + $0x20] sm:$0xff]
  %v80 = vld [vmem:[%s1 + $0x28] sm:$0xff]
  %v81 = vld [vmem:[%s1 + $0x30] sm:$0xff]
  %v82 = vld [vmem:[%s1 + $0x38] sm:$0xff]
  %v83 = vld [vmem:[%s1 + $0x40] sm:$0xff]
  %v84 = vld [vmem:[%s1 + $0x48] sm:$0xff]
  %v85 = vld [vmem:[%s1 + $0x50] sm:$0xff]
  %v86 = vld [vmem:[%s1 + $0x58] sm:$0xff]
  %v87 = vld [vmem:[%s1 + $0x60] sm:$0xff]
  %v88 = vld [vmem:[%s1 + $0x68] sm:$0xff]
  %v89 = vld [vmem:[%s1 + $0x70] sm:$0xff]
  %v90 = vld [vmem:[%s1 + $0x78] sm:$0xff]
  %91 = vmatprep.subr.mxu0 0.0
  %92 = vmatpush1.msra.mxu0 %v90
  %93 = vmatprep.subr.mxu0 0.0
  %94 = vmatpush1.msra.mxu0 %v89
  %95 = vmatprep.subr.mxu0 0.0
  %96 = vmatpush1.msra.mxu0 %v88
  %97 = vmatprep.subr.mxu0 0.0
  %98 = vmatpush1.msra.mxu0 %v87
  %99 = vmatprep.subr.mxu0 0.0
  %100 = vmatpush1.msra.mxu0 %v86
  %101 = vmatprep.subr.mxu0 0.0
  %102 = vmatpush1.msra.mxu0 %v85
  %103 = vmatprep.subr.mxu0 0.0
  %104 = vmatpush1.msra.mxu0 %v84
  %105 = vmatprep.subr.mxu0 0.0
  %106 = vmatpush1.msra.mxu0 %v83
  %107 = vmatprep.subr.mxu0 0.0
  %108 = vmatpush1.msra.mxu0 %v82
  %109 = vmatprep.subr.mxu0 0.0
  %110 = vmatpush1.msra.mxu0 %v81
  %111 = vmatprep.subr.mxu0 0.0
  %112 = vmatpush1.msra.mxu0 %v80
  %113 = vmatprep.subr.mxu0 0.0
  %114 = vmatpush1.msra.mxu0 %v79
  %115 = vmatprep.subr.mxu0 0.0
  %116 = vmatpush1.msra.mxu0 %v78
  %117 = vmatprep.subr.mxu0 0.0
  %118 = vmatpush1.msra.mxu0 %v77
  %119 = vmatprep.subr.mxu0 0.0
  %120 = vmatpush1.msra.mxu0 %v76
  %121 = vmatprep.subr.mxu0 0.0
  %122 = vmatpush1.msra.mxu0 %v75
  %123 = vmatprep.subr.mxu0 0.0
  %124 = vmatpush2.msra.mxu0 0.0
  %125 = vmatprep.subr.mxu0 0.0
  %126 = vmatpush2.msra.mxu0 0.0
  %127 = vmatprep.subr.mxu0 0.0
  %128 = vmatpush2.msra.mxu0 0.0
  %129 = vmatprep.subr.mxu0 0.0
  %130 = vmatpush2.msra.mxu0 0.0
  %131 = vmatprep.subr.mxu0 0.0
  %132 = vmatpush2.msra.mxu0 0.0
  %133 = vmatprep.subr.mxu0 0.0
  %134 = vmatpush2.msra.mxu0 0.0
  %135 = vmatprep.subr.mxu0 0.0
  %136 = vmatpush2.msra.mxu0 0.0
  %137 = vmatprep.subr.mxu0 0.0
  %138 = vmatpush2.msra.mxu0 0.0
  %139 = vmatprep.subr.mxu0 0.0
  %140 = vmatpush2.msra.mxu0 0.0
  %141 = vmatprep.subr.mxu0 0.0
  %142 = vmatpush2.msra.mxu0 0.0
  %143 = vmatprep.subr.mxu0 0.0
  %144 = vmatpush2.msra.mxu0 0.0
  %145 = vmatprep.subr.mxu0 0.0
  %146 = vmatpush2.msra.mxu0 0.0
  %147 = vmatprep.subr.mxu0 0.0
  %148 = vmatpush2.msra.mxu0 0.0
  %149 = vmatprep.subr.mxu0 0.0
  %150 = vmatpush2.msra.mxu0 0.0
  %151 = vmatprep.subr.mxu0 0.0
  %152 = vmatpush2.msra.mxu0 0.0
  %153 = vmatprep.subr.mxu0 0.0
  %154 = vmatpush2.msra.mxu0 0.0
  %155 = vmatprep.mubr.f32.mxu0 0.0
  %156 = vmatmul.mubr.f32.gmra.mxu0 %v11
  %v157 = vpop.f32.mrf.mxu0
  %v158 = vadd.f32 0.0, %v157
  %v159 = vpop.f32.mrf.mxu0
  %160 = vmatprep.mubr.f32.mxu0 0.0
  %161 = vmatmul.mubr.f32.gmra.mxu0 %v12
  %v162 = vpop.f32.mrf.mxu0
  %v163 = vadd.f32 0.0, %v162
  %v164 = vpop.f32.mrf.mxu0
  %165 = vmatprep.mubr.f32.mxu0 0.0
  %166 = vmatmul.mubr.f32.gmra.mxu0 %v13
  %v167 = vpop.f32.mrf.mxu0
  %v168 = vadd.f32 0.0, %v167
  %v169 = vpop.f32.mrf.mxu0
  %170 = vmatprep.mubr.f32.mxu0 0.0
  %171 = vmatmul.mubr.f32.gmra.mxu0 %v14
  %v172 = vpop.f32.mrf.mxu0
  %v173 = vadd.f32 0.0, %v172
  %v174 = vpop.f32.mrf.mxu0
  %175 = vmatprep.mubr.f32.mxu0 0.0
  %176 = vmatmul.mubr.f32.gmra.mxu0 %v15
  %v177 = vpop.f32.mrf.mxu0
  %v178 = vadd.f32 0.0, %v177
  %v179 = vpop.f32.mrf.mxu0
  %180 = vmatprep.mubr.f32.mxu0 0.0
  %181 = vmatmul.mubr.f32.gmra.mxu0 %v16
  %v182 = vpop.f32.mrf.mxu0
  %v183 = vadd.f32 0.0, %v182
  %v184 = vpop.f32.mrf.mxu0
  %185 = vmatprep.mubr.f32.mxu0 0.0
  %186 = vmatmul.mubr.f32.gmra.mxu0 %v17
  %v187 = vpop.f32.mrf.mxu0
  %v188 = vadd.f32 0.0, %v187
  %v189 = vpop.f32.mrf.mxu0
  %190 = vmatprep.mubr.f32.mxu0 0.0
  %191 = vmatmul.mubr.f32.gmra.mxu0 %v18
  %v192 = vpop.f32.mrf.mxu0
  %v193 = vadd.f32 0.0, %v192
  %v194 = vpop.f32.mrf.mxu0
  %195 = vmatprep.mubr.f32.mxu0 0.0
  %196 = vmatmul.mubr.f32.gmra.mxu0 %v19
  %v197 = vpop.f32.mrf.mxu0
  %v198 = vadd.f32 0.0, %v197
  %v199 = vpop.f32.mrf.mxu0
  %200 = vmatprep.mubr.f32.mxu0 0.0
  %201 = vmatmul.mubr.f32.gmra.mxu0 %v20
  %v202 = vpop.f32.mrf.mxu0
  %v203 = vadd.f32 0.0, %v202
  %v204 = vpop.f32.mrf.mxu0
  %205 = vmatprep.mubr.f32.mxu0 0.0
  %206 = vmatmul.mubr.f32.gmra.mxu0 %v21
  %v207 = vpop.f32.mrf.mxu0
  %v208 = vadd.f32 0.0, %v207
  %v209 = vpop.f32.mrf.mxu0
  %210 = vmatprep.mubr.f32.mxu0 0.0
  %211 = vmatmul.mubr.f32.gmra.mxu0 %v22
  %v212 = vpop.f32.mrf.mxu0
  %v213 = vadd.f32 0.0, %v212
  %v214 = vpop.f32.mrf.mxu0
  %215 = vmatprep.mubr.f32.mxu0 0.0
  %216 = vmatmul.mubr.f32.gmra.mxu0 %v23
  %v217 = vpop.f32.mrf.mxu0
  %v218 = vadd.f32 0.0, %v217
  %v219 = vpop.f32.mrf.mxu0
  %220 = vmatprep.mubr.f32.mxu0 0.0
  %221 = vmatmul.mubr.f32.gmra.mxu0 %v24
  %v222 = vpop.f32.mrf.mxu0
  %v223 = vadd.f32 0.0, %v222
  %v224 = vpop.f32.mrf.mxu0
  %225 = vmatprep.mubr.f32.mxu0 0.0
  %226 = vmatmul.mubr.f32.gmra.mxu0 %v25
  %v227 = vpop.f32.mrf.mxu0
  %v228 = vadd.f32 0.0, %v227
  %v229 = vpop.f32.mrf.mxu0
  %230 = vmatprep.mubr.f32.mxu0 0.0
  %231 = vmatmul.mubr.f32.gmra.mxu0 %v26
  %v232 = vpop.f32.mrf.mxu0
  %v233 = vadd.f32 0.0, %v232
  %v234 = vpop.f32.mrf.mxu0
  %235 = vmatprep.mubr.f32.mxu0 0.0
  %236 = vmatmul.mubr.f32.gmra.mxu0 %v27
  %v237 = vpop.f32.mrf.mxu0
  %v238 = vadd.f32 0.0, %v237
  %v239 = vpop.f32.mrf.mxu0
  %240 = vmatprep.mubr.f32.mxu0 0.0
  %241 = vmatmul.mubr.f32.gmra.mxu0 %v28
  %v242 = vpop.f32.mrf.mxu0
  %v243 = vadd.f32 0.0, %v242
  %v244 = vpop.f32.mrf.mxu0
  %245 = vmatprep.mubr.f32.mxu0 0.0
  %246 = vmatmul.mubr.f32.gmra.mxu0 %v29
  %v247 = vpop.f32.mrf.mxu0
  %v248 = vadd.f32 0.0, %v247
  %v249 = vpop.f32.mrf.mxu0
  %250 = vmatprep.mubr.f32.mxu0 0.0
  %251 = vmatmul.mubr.f32.gmra.mxu0 %v30
  %v252 = vpop.f32.mrf.mxu0
  %v253 = vadd.f32 0.0, %v252
  %v254 = vpop.f32.mrf.mxu0
  %255 = vmatprep.mubr.f32.mxu0 0.0
  %256 = vmatmul.mubr.f32.gmra.mxu0 %v31
  %v257 = vpop.f32.mrf.mxu0
  %v258 = vadd.f32 0.0, %v257
  %v259 = vpop.f32.mrf.mxu0
  %260 = vmatprep.mubr.f32.mxu0 0.0
  %261 = vmatmul.mubr.f32.gmra.mxu0 %v32
  %v262 = vpop.f32.mrf.mxu0
  %v263 = vadd.f32 0.0, %v262
  %v264 = vpop.f32.mrf.mxu0
  %265 = vmatprep.mubr.f32.mxu0 0.0
  %266 = vmatmul.mubr.f32.gmra.mxu0 %v33
  %v267 = vpop.f32.mrf.mxu0
  %v268 = vadd.f32 0.0, %v267
  %v269 = vpop.f32.mrf.mxu0
  %270 = vmatprep.mubr.f32.mxu0 0.0
  %271 = vmatmul.mubr.f32.gmra.mxu0 %v34
  %v272 = vpop.f32.mrf.mxu0
  %v273 = vadd.f32 0.0, %v272
  %v274 = vpop.f32.mrf.mxu0
  %275 = vmatprep.mubr.f32.mxu0 0.0
  %276 = vmatmul.mubr.f32.gmra.mxu0 %v35
  %v277 = vpop.f32.mrf.mxu0
  %v278 = vadd.f32 0.0, %v277
  %v279 = vpop.f32.mrf.mxu0
  %280 = vmatprep.mubr.f32.mxu0 0.0
  %281 = vmatmul.mubr.f32.gmra.mxu0 %v36
  %v282 = vpop.f32.mrf.mxu0
  %v283 = vadd.f32 0.0, %v282
  %v284 = vpop.f32.mrf.mxu0
  %285 = vmatprep.mubr.f32.mxu0 0.0
  %286 = vmatmul.mubr.f32.gmra.mxu0 %v37
  %v287 = vpop.f32.mrf.mxu0
  %v288 = vadd.f32 0.0, %v287
  %v289 = vpop.f32.mrf.mxu0
  %290 = vmatprep.mubr.f32.mxu0 0.0
  %291 = vmatmul.mubr.f32.gmra.mxu0 %v38
  %v292 = vpop.f32.mrf.mxu0
  %v293 = vadd.f32 0.0, %v292
  %v294 = vpop.f32.mrf.mxu0
  %295 = vmatprep.mubr.f32.mxu0 0.0
  %296 = vmatmul.mubr.f32.gmra.mxu0 %v39
  %v297 = vpop.f32.mrf.mxu0
  %v298 = vadd.f32 0.0, %v297
  %v299 = vpop.f32.mrf.mxu0
  %300 = vmatprep.mubr.f32.mxu0 0.0
  %301 = vmatmul.mubr.f32.gmra.mxu0 %v40
  %v302 = vpop.f32.mrf.mxu0
  %v303 = vadd.f32 0.0, %v302
  %v304 = vpop.f32.mrf.mxu0
  %305 = vmatprep.mubr.f32.mxu0 0.0
  %306 = vmatmul.mubr.f32.gmra.mxu0 %v41
  %v307 = vpop.f32.mrf.mxu0
  %v308 = vadd.f32 0.0, %v307
  %v309 = vpop.f32.mrf.mxu0
  %310 = vmatprep.mubr.f32.mxu0 0.0
  %311 = vmatmul.mubr.f32.gmra.mxu0 %v42
  %v312 = vpop.f32.mrf.mxu0
  %v313 = vadd.f32 0.0, %v312
  %v314 = vpop.f32.mrf.mxu0
  %315 = vmatprep.mubr.f32.mxu0 0.0
  %316 = vmatmul.mubr.f32.gmra.mxu0 %v43
  %v317 = vpop.f32.mrf.mxu0
  %v318 = vadd.f32 0.0, %v317
  %v319 = vpop.f32.mrf.mxu0
  %320 = vmatprep.mubr.f32.mxu0 0.0
  %321 = vmatmul.mubr.f32.gmra.mxu0 %v44
  %v322 = vpop.f32.mrf.mxu0
  %v323 = vadd.f32 0.0, %v322
  %v324 = vpop.f32.mrf.mxu0
  %325 = vmatprep.mubr.f32.mxu0 0.0
  %326 = vmatmul.mubr.f32.gmra.mxu0 %v45
  %v327 = vpop.f32.mrf.mxu0
  %v328 = vadd.f32 0.0, %v327
  %v329 = vpop.f32.mrf.mxu0
  %330 = vmatprep.mubr.f32.mxu0 0.0
  %331 = vmatmul.mubr.f32.gmra.mxu0 %v46
  %v332 = vpop.f32.mrf.mxu0
  %v333 = vadd.f32 0.0, %v332
  %v334 = vpop.f32.mrf.mxu0
  %335 = vmatprep.mubr.f32.mxu0 0.0
  %336 = vmatmul.mubr.f32.gmra.mxu0 %v47
  %v337 = vpop.f32.mrf.mxu0
  %v338 = vadd.f32 0.0, %v337
  %v339 = vpop.f32.mrf.mxu0
  %340 = vmatprep.mubr.f32.mxu0 0.0
  %341 = vmatmul.mubr.f32.gmra.mxu0 %v48
  %v342 = vpop.f32.mrf.mxu0
  %v343 = vadd.f32 0.0, %v342
  %v344 = vpop.f32.mrf.mxu0
  %345 = vmatprep.mubr.f32.mxu0 0.0
  %346 = vmatmul.mubr.f32.gmra.mxu0 %v49
  %v347 = vpop.f32.mrf.mxu0
  %v348 = vadd.f32 0.0, %v347
  %v349 = vpop.f32.mrf.mxu0
  %350 = vmatprep.mubr.f32.mxu0 0.0
  %351 = vmatmul.mubr.f32.gmra.mxu0 %v50
  %v352 = vpop.f32.mrf.mxu0
  %v353 = vadd.f32 0.0, %v352
  %v354 = vpop.f32.mrf.mxu0
  %355 = vmatprep.mubr.f32.mxu0 0.0
  %356 = vmatmul.mubr.f32.gmra.mxu0 %v51
  %v357 = vpop.f32.mrf.mxu0
  %v358 = vadd.f32 0.0, %v357
  %v359 = vpop.f32.mrf.mxu0
  %360 = vmatprep.mubr.f32.mxu0 0.0
  %361 = vmatmul.mubr.f32.gmra.mxu0 %v52
  %v362 = vpop.f32.mrf.mxu0
  %v363 = vadd.f32 0.0, %v362
  %v364 = vpop.f32.mrf.mxu0
  %365 = vmatprep.mubr.f32.mxu0 0.0
  %366 = vmatmul.mubr.f32.gmra.mxu0 %v53
  %v367 = vpop.f32.mrf.mxu0
  %v368 = vadd.f32 0.0, %v367
  %v369 = vpop.f32.mrf.mxu0
  %370 = vmatprep.mubr.f32.mxu0 0.0
  %371 = vmatmul.mubr.f32.gmra.mxu0 %v54
  %v372 = vpop.f32.mrf.mxu0
  %v373 = vadd.f32 0.0, %v372
  %v374 = vpop.f32.mrf.mxu0
  %375 = vmatprep.mubr.f32.mxu0 0.0
  %376 = vmatmul.mubr.f32.gmra.mxu0 %v55
  %v377 = vpop.f32.mrf.mxu0
  %v378 = vadd.f32 0.0, %v377
  %v379 = vpop.f32.mrf.mxu0
  %380 = vmatprep.mubr.f32.mxu0 0.0
  %381 = vmatmul.mubr.f32.gmra.mxu0 %v56
  %v382 = vpop.f32.mrf.mxu0
  %v383 = vadd.f32 0.0, %v382
  %v384 = vpop.f32.mrf.mxu0
  %385 = vmatprep.mubr.f32.mxu0 0.0
  %386 = vmatmul.mubr.f32.gmra.mxu0 %v57
  %v387 = vpop.f32.mrf.mxu0
  %v388 = vadd.f32 0.0, %v387
  %v389 = vpop.f32.mrf.mxu0
  %390 = vmatprep.mubr.f32.mxu0 0.0
  %391 = vmatmul.mubr.f32.gmra.mxu0 %v58
  %v392 = vpop.f32.mrf.mxu0
  %v393 = vadd.f32 0.0, %v392
  %v394 = vpop.f32.mrf.mxu0
  %395 = vmatprep.mubr.f32.mxu0 0.0
  %396 = vmatmul.mubr.f32.gmra.mxu0 %v59
  %v397 = vpop.f32.mrf.mxu0
  %v398 = vadd.f32 0.0, %v397
  %v399 = vpop.f32.mrf.mxu0
  %400 = vmatprep.mubr.f32.mxu0 0.0
  %401 = vmatmul.mubr.f32.gmra.mxu0 %v60
  %v402 = vpop.f32.mrf.mxu0
  %v403 = vadd.f32 0.0, %v402
  %v404 = vpop.f32.mrf.mxu0
  %405 = vmatprep.mubr.f32.mxu0 0.0
  %406 = vmatmul.mubr.f32.gmra.mxu0 %v61
  %v407 = vpop.f32.mrf.mxu0
  %v408 = vadd.f32 0.0, %v407
  %v409 = vpop.f32.mrf.mxu0
  %410 = vmatprep.mubr.f32.mxu0 0.0
  %411 = vmatmul.mubr.f32.gmra.mxu0 %v62
  %v412 = vpop.f32.mrf.mxu0
  %v413 = vadd.f32 0.0, %v412
  %v414 = vpop.f32.mrf.mxu0
  %415 = vmatprep.mubr.f32.mxu0 0.0
  %416 = vmatmul.mubr.f32.gmra.mxu0 %v63
  %v417 = vpop.f32.mrf.mxu0
  %v418 = vadd.f32 0.0, %v417
  %v419 = vpop.f32.mrf.mxu0
  %420 = vmatprep.mubr.f32.mxu0 0.0
  %421 = vmatmul.mubr.f32.gmra.mxu0 %v64
  %v422 = vpop.f32.mrf.mxu0
  %v423 = vadd.f32 0.0, %v422
  %v424 = vpop.f32.mrf.mxu0
  %425 = vmatprep.mubr.f32.mxu0 0.0
  %426 = vmatmul.mubr.f32.gmra.mxu0 %v65
  %v427 = vpop.f32.mrf.mxu0
  %v428 = vadd.f32 0.0, %v427
  %v429 = vpop.f32.mrf.mxu0
  %430 = vmatprep.mubr.f32.mxu0 0.0
  %431 = vmatmul.mubr.f32.gmra.mxu0 %v66
  %v432 = vpop.f32.mrf.mxu0
  %v433 = vadd.f32 0.0, %v432
  %v434 = vpop.f32.mrf.mxu0
  %435 = vmatprep.mubr.f32.mxu0 0.0
  %436 = vmatmul.mubr.f32.gmra.mxu0 %v67
  %v437 = vpop.f32.mrf.mxu0
  %v438 = vadd.f32 0.0, %v437
  %v439 = vpop.f32.mrf.mxu0
  %440 = vmatprep.mubr.f32.mxu0 0.0
  %441 = vmatmul.mubr.f32.gmra.mxu0 %v68
  %v442 = vpop.f32.mrf.mxu0
  %v443 = vadd.f32 0.0, %v442
  %v444 = vpop.f32.mrf.mxu0
  %445 = vmatprep.mubr.f32.mxu0 0.0
  %446 = vmatmul.mubr.f32.gmra.mxu0 %v69
  %v447 = vpop.f32.mrf.mxu0
  %v448 = vadd.f32 0.0, %v447
  %v449 = vpop.f32.mrf.mxu0
  %450 = vmatprep.mubr.f32.mxu0 0.0
  %451 = vmatmul.mubr.f32.gmra.mxu0 %v70
  %v452 = vpop.f32.mrf.mxu0
  %v453 = vadd.f32 0.0, %v452
  %v454 = vpop.f32.mrf.mxu0
  %455 = vmatprep.mubr.f32.mxu0 0.0
  %456 = vmatmul.mubr.f32.gmra.mxu0 %v71
  %v457 = vpop.f32.mrf.mxu0
  %v458 = vadd.f32 0.0, %v457
  %v459 = vpop.f32.mrf.mxu0
  %460 = vmatprep.mubr.f32.mxu0 0.0
  %461 = vmatmul.mubr.f32.gmra.mxu0 %v72
  %v462 = vpop.f32.mrf.mxu0
  %v463 = vadd.f32 0.0, %v462
  %v464 = vpop.f32.mrf.mxu0
  %465 = vmatprep.mubr.f32.mxu0 0.0
  %466 = vmatmul.mubr.f32.gmra.mxu0 %v73
  %v467 = vpop.f32.mrf.mxu0
  %v468 = vadd.f32 0.0, %v467
  %v469 = vpop.f32.mrf.mxu0
  %470 = vmatprep.mubr.f32.mxu0 0.0
  %471 = vmatmul.mubr.f32.gmra.mxu0 %v74
  %v472 = vpop.f32.mrf.mxu0
  %v473 = vadd.f32 0.0, %v472
  %v474 = vpop.f32.mrf.mxu0
  %475 = vdwg.mxu0
  %v476 = vmax.f32 %v158, 0.0
  %v477 = vmax.f32 %v163, 0.0
  %v478 = vmax.f32 %v168, 0.0
  %v479 = vmax.f32 %v173, 0.0
  %v480 = vmax.f32 %v178, 0.0
  %v481 = vmax.f32 %v183, 0.0
  %v482 = vmax.f32 %v188, 0.0
  %v483 = vmax.f32 %v193, 0.0
  %v484 = vmax.f32 %v198, 0.0
  %v485 = vmax.f32 %v203, 0.0
  %v486 = vmax.f32 %v208, 0.0
  %v487 = vmax.f32 %v213, 0.0
  %v488 = vmax.f32 %v218, 0.0
  %v489 = vmax.f32 %v223, 0.0
  %v490 = vmax.f32 %v228, 0.0
  %v491 = vmax.f32 %v233, 0.0
  %v492 = vmax.f32 %v238, 0.0
  %v493 = vmax.f32 %v243, 0.0
  %v494 = vmax.f32 %v248, 0.0
  %v495 = vmax.f32 %v253, 0.0
  %v496 = vmax.f32 %v258, 0.0
  %v497 = vmax.f32 %v263, 0.0
  %v498 = vmax.f32 %v268, 0.0
  %v499 = vmax.f32 %v273, 0.0
  %v500 = vmax.f32 %v278, 0.0
  %v501 = vmax.f32 %v283, 0.0
  %v502 = vmax.f32 %v288, 0.0
  %v503 = vmax.f32 %v293, 0.0
  %v504 = vmax.f32 %v298, 0.0
  %v505 = vmax.f32 %v303, 0.0
  %v506 = vmax.f32 %v308, 0.0
  %v507 = vmax.f32 %v313, 0.0
  %v508 = vmax.f32 %v318, 0.0
  %v509 = vmax.f32 %v323, 0.0
  %v510 = vmax.f32 %v328, 0.0
  %v511 = vmax.f32 %v333, 0.0
  %v512 = vmax.f32 %v338, 0.0
  %v513 = vmax.f32 %v343, 0.0
  %v514 = vmax.f32 %v348, 0.0
  %v515 = vmax.f32 %v353, 0.0
  %v516 = vmax.f32 %v358, 0.0
  %v517 = vmax.f32 %v363, 0.0
  %v518 = vmax.f32 %v368, 0.0
  %v519 = vmax.f32 %v373, 0.0
  %v520 = vmax.f32 %v378, 0.0
  %v521 = vmax.f32 %v383, 0.0
  %v522 = vmax.f32 %v388, 0.0
  %v523 = vmax.f32 %v393, 0.0
  %v524 = vmax.f32 %v398, 0.0
  %v525 = vmax.f32 %v403, 0.0
  %v526 = vmax.f32 %v408, 0.0
  %v527 = vmax.f32 %v413, 0.0
  %v528 = vmax.f32 %v418, 0.0
  %v529 = vmax.f32 %v423, 0.0
  %v530 = vmax.f32 %v428, 0.0
  %v531 = vmax.f32 %v433, 0.0
  %v532 = vmax.f32 %v438, 0.0
  %v533 = vmax.f32 %v443, 0.0
  %v534 = vmax.f32 %v448, 0.0
  %v535 = vmax.f32 %v453, 0.0
  %v536 = vmax.f32 %v458, 0.0
  %v537 = vmax.f32 %v463, 0.0
  %v538 = vmax.f32 %v468, 0.0
  %v539 = vmax.f32 %v473, 0.0
  %vm540 = vcmask 523264
  %541 = vst.msk [vmem:[%s2] sm:$0xff] %vm540, %v476
  %542 = vst.msk [vmem:[%s2 + $0x8] sm:$0xff] %vm540, %v477
  %543 = vst.msk [vmem:[%s2 + $0x10] sm:$0xff] %vm540, %v478
  %544 = vst.msk [vmem:[%s2 + $0x18] sm:$0xff] %vm540, %v479
  %545 = vst.msk [vmem:[%s2 + $0x20] sm:$0xff] %vm540, %v480
  %546 = vst.msk [vmem:[%s2 + $0x28] sm:$0xff] %vm540, %v481
  %547 = vst.msk [vmem:[%s2 + $0x30] sm:$0xff] %vm540, %v482
  %548 = vst.msk [vmem:[%s2 + $0x38] sm:$0xff] %vm540, %v483
  %549 = vst.msk [vmem:[%s2 + $0x40] sm:$0xff] %vm540, %v484
  %550 = vst.msk [vmem:[%s2 + $0x48] sm:$0xff] %vm540, %v485
  %551 = vst.msk [vmem:[%s2 + $0x50] sm:$0xff] %vm540, %v486
  %552 = vst.msk [vmem:[%s2 + $0x58] sm:$0xff] %vm540, %v487
  %553 = vst.msk [vmem:[%s2 + $0x60] sm:$0xff] %vm540, %v488
  %554 = vst.msk [vmem:[%s2 + $0x68] sm:$0xff] %vm540, %v489
  %555 = vst.msk [vmem:[%s2 + $0x70] sm:$0xff] %vm540, %v490
  %556 = vst.msk [vmem:[%s2 + $0x78] sm:$0xff] %vm540, %v491
  %557 = vst.msk [vmem:[%s2 + $0x80] sm:$0xff] %vm540, %v492
  %558 = vst.msk [vmem:[%s2 + $0x88] sm:$0xff] %vm540, %v493
  %559 = vst.msk [vmem:[%s2 + $0x90] sm:$0xff] %vm540, %v494
  %560 = vst.msk [vmem:[%s2 + $0x98] sm:$0xff] %vm540, %v495
  %561 = vst.msk [vmem:[%s2 + $0xa0] sm:$0xff] %vm540, %v496
  %562 = vst.msk [vmem:[%s2 + $0xa8] sm:$0xff] %vm540, %v497
  %563 = vst.msk [vmem:[%s2 + $0xb0] sm:$0xff] %vm540, %v498
  %564 = vst.msk [vmem:[%s2 + $0xb8] sm:$0xff] %vm540, %v499
  %565 = vst.msk [vmem:[%s2 + $0xc0] sm:$0xff] %vm540, %v500
  %566 = vst.msk [vmem:[%s2 + $0xc8] sm:$0xff] %vm540, %v501
  %567 = vst.msk [vmem:[%s2 + $0xd0] sm:$0xff] %vm540, %v502
  %568 = vst.msk [vmem:[%s2 + $0xd8] sm:$0xff] %vm540, %v503
  %569 = vst.msk [vmem:[%s2 + $0xe0] sm:$0xff] %vm540, %v504
  %570 = vst.msk [vmem:[%s2 + $0xe8] sm:$0xff] %vm540, %v505
  %571 = vst.msk [vmem:[%s2 + $0xf0] sm:$0xff] %vm540, %v506
  %572 = vst.msk [vmem:[%s2 + $0xf8] sm:$0xff] %vm540, %v507
  %573 = vst.msk [vmem:[%s2 + $0x100] sm:$0xff] %vm540, %v508
  %574 = vst.msk [vmem:[%s2 + $0x108] sm:$0xff] %vm540, %v509
  %575 = vst.msk [vmem:[%s2 + $0x110] sm:$0xff] %vm540, %v510
  %576 = vst.msk [vmem:[%s2 + $0x118] sm:$0xff] %vm540, %v511
  %577 = vst.msk [vmem:[%s2 + $0x120] sm:$0xff] %vm540, %v512
  %578 = vst.msk [vmem:[%s2 + $0x128] sm:$0xff] %vm540, %v513
  %579 = vst.msk [vmem:[%s2 + $0x130] sm:$0xff] %vm540, %v514
  %580 = vst.msk [vmem:[%s2 + $0x138] sm:$0xff] %vm540, %v515
  %581 = vst.msk [vmem:[%s2 + $0x140] sm:$0xff] %vm540, %v516
  %582 = vst.msk [vmem:[%s2 + $0x148] sm:$0xff] %vm540, %v517
  %583 = vst.msk [vmem:[%s2 + $0x150] sm:$0xff] %vm540, %v518
  %584 = vst.msk [vmem:[%s2 + $0x158] sm:$0xff] %vm540, %v519
  %585 = vst.msk [vmem:[%s2 + $0x160] sm:$0xff] %vm540, %v520
  %586 = vst.msk [vmem:[%s2 + $0x168] sm:$0xff] %vm540, %v521
  %587 = vst.msk [vmem:[%s2 + $0x170] sm:$0xff] %vm540, %v522
  %588 = vst.msk [vmem:[%s2 + $0x178] sm:$0xff] %vm540, %v523
  %589 = vst.msk [vmem:[%s2 + $0x180] sm:$0xff] %vm540, %v524
  %590 = vst.msk [vmem:[%s2 + $0x188] sm:$0xff] %vm540, %v525
  %591 = vst.msk [vmem:[%s2 + $0x190] sm:$0xff] %vm540, %v526
  %592 = vst.msk [vmem:[%s2 + $0x198] sm:$0xff] %vm540, %v527
  %593 = vst.msk [vmem:[%s2 + $0x1a0] sm:$0xff] %vm540, %v528
  %594 = vst.msk [vmem:[%s2 + $0x1a8] sm:$0xff] %vm540, %v529
  %595 = vst.msk [vmem:[%s2 + $0x1b0] sm:$0xff] %vm540, %v530
  %596 = vst.msk [vmem:[%s2 + $0x1b8] sm:$0xff] %vm540, %v531
  %597 = vst.msk [vmem:[%s2 + $0x1c0] sm:$0xff] %vm540, %v532
  %598 = vst.msk [vmem:[%s2 + $0x1c8] sm:$0xff] %vm540, %v533
  %599 = vst.msk [vmem:[%s2 + $0x1d0] sm:$0xff] %vm540, %v534
  %600 = vst.msk [vmem:[%s2 + $0x1d8] sm:$0xff] %vm540, %v535
  %601 = vst.msk [vmem:[%s2 + $0x1e0] sm:$0xff] %vm540, %v536
  %602 = vst.msk [vmem:[%s2 + $0x1e8] sm:$0xff] %vm540, %v537
  %603 = vst.msk [vmem:[%s2 + $0x1f0] sm:$0xff] %vm540, %v538
  %604 = vst.msk [vmem:[%s2 + $0x1f8] sm:$0xff] %vm540, %v539
  // Predicated region
  $region10: #{vgg_forward.8} parent=0 // pred_check
    _
  $region11: #{vgg_forward.8} parent=0 // pred_check_branch
    %606 = sbr.rel (0) target = $region13
  $region12: #{vgg_forward.8} parent=0 // pred_region
    _
  $region13: #{vgg_forward.8} parent=0 // pred_fallthru
    _
  // Predicated region
  $region14: #{vgg_forward.8} parent=0 // pred_check
    _
  $region15: #{vgg_forward.8} parent=0 // pred_check_branch
    %608 = sbr.rel (0) target = $region17
  $region16: #{vgg_forward.8} parent=0 // pred_region
    _
  $region17: #{vgg_forward.8} parent=0 // pred_fallthru
    _

// kernel: vgg_forward.12
$region0: #{vgg_forward.12}
  #allocation0 [shape = 'u32[]', space=smem, size = 0x4, offset = 0x4, fixed_abs, tag = 'smem constant byte address 0x4 - core index']
  #allocation1 [shape = 'u32[144,128]{1,0:T(1,128)}', space=vmem, size = 0x12000, scoped, tag = 'internal scratch']
  %s0 = inlined_call_operand.vmem [shape: f32[8,2,4,256], index: 0, kind: input, shape index: {}]
  %s1 = inlined_call_operand.vmem [shape: f32[8,4,128], index: 1, kind: output, shape index: {}]
  %s2 = sld [smem:[#allocation0]]
  $region14: #{vgg_forward.12} parent=0
    _
  %s4 = ssub.s32 1, %s2
  %s5 = scalar_select 0, %s4, %s2
  // Predicated region
  $region2: #{vgg_forward.12} parent=0 // pred_check
    _
  $region3: #{vgg_forward.12} parent=0 // pred_check_branch
    %7 = sbr.rel (0) target = $region5
  $region4: #{vgg_forward.12} parent=0 // pred_region
    _
  $region5: #{vgg_forward.12} parent=0 // pred_fallthru
    _
  %v8 = vld [vmem:[%s0] sm:$0xff]
  %v9 = vld [vmem:[%s0 + $0x8] sm:$0xff]
  %v10 = vld [vmem:[%s0 + $0x10] sm:$0xff]
  %v11 = vld [vmem:[%s0 + $0x18] sm:$0xff]
  %v12 = vld [vmem:[%s0 + $0x20] sm:$0xff]
  %v13 = vld [vmem:[%s0 + $0x28] sm:$0xff]
  %v14 = vld [vmem:[%s0 + $0x30] sm:$0xff]
  %v15 = vld [vmem:[%s0 + $0x38] sm:$0xff]
  %v16 = vld [vmem:[%s0 + $0x40] sm:$0xff]
  %v17 = vld [vmem:[%s0 + $0x48] sm:$0xff]
  %v18 = vld [vmem:[%s0 + $0x50] sm:$0xff]
  %v19 = vld [vmem:[%s0 + $0x58] sm:$0xff]
  %v20 = vld [vmem:[%s0 + $0x60] sm:$0xff]
  %v21 = vld [vmem:[%s0 + $0x68] sm:$0xff]
  %v22 = vld [vmem:[%s0 + $0x70] sm:$0xff]
  %v23 = vld [vmem:[%s0 + $0x78] sm:$0xff]
  %v24 = vadd.f32 %v8, %v9
  %v25 = vadd.f32 %v10, %v11
  %v26 = vadd.f32 %v12, %v13
  %v27 = vadd.f32 %v14, %v15
  %v28 = vadd.f32 %v16, %v17
  %v29 = vadd.f32 %v18, %v19
  %v30 = vadd.f32 %v20, %v21
  %v31 = vadd.f32 %v22, %v23
  %v40 = vrot.slane %v24, 4
  %v41 = vrot.slane %v25, 4
  %v42 = vrot.slane %v26, 4
  %v43 = vrot.slane %v27, 4
  %v44 = vrot.slane %v28, 4
  %v45 = vrot.slane %v29, 4
  %v46 = vrot.slane %v30, 4
  %v47 = vrot.slane %v31, 4
  %v56 = vadd.f32 %v24, %v40
  %v57 = vadd.f32 %v25, %v41
  %v58 = vadd.f32 %v26, %v42
  %v59 = vadd.f32 %v27, %v43
  %v60 = vadd.f32 %v28, %v44
  %v61 = vadd.f32 %v29, %v45
  %v62 = vadd.f32 %v30, %v46
  %v63 = vadd.f32 %v31, %v47
  %v64 = vmul.f32 %v56, 0.25
  %v65 = vmul.f32 %v57, 0.25
  %v66 = vmul.f32 %v58, 0.25
  %v67 = vmul.f32 %v59, 0.25
  %v68 = vmul.f32 %v60, 0.25
  %v69 = vmul.f32 %v61, 0.25
  %v70 = vmul.f32 %v62, 0.25
  %v71 = vmul.f32 %v63, 0.25
  %72 = vst [vmem:[%s1] sm:$0xf] %v64
  %73 = vst [vmem:[%s1 + $0x4] sm:$0xf] %v65
  %74 = vst [vmem:[%s1 + $0x8] sm:$0xf] %v66
  %75 = vst [vmem:[%s1 + $0xc] sm:$0xf] %v67
  %76 = vst [vmem:[%s1 + $0x10] sm:$0xf] %v68
  %77 = vst [vmem:[%s1 + $0x14] sm:$0xf] %v69
  %78 = vst [vmem:[%s1 + $0x18] sm:$0xf] %v70
  %79 = vst [vmem:[%s1 + $0x1c] sm:$0xf] %v71
  // Predicated region
  $region6: #{vgg_forward.12} parent=0 // pred_check
    _
  $region7: #{vgg_forward.12} parent=0 // pred_check_branch
    %81 = sbr.rel (0) target = $region9
  $region8: #{vgg_forward.12} parent=0 // pred_region
    _
  $region9: #{vgg_forward.12} parent=0 // pred_fallthru
    _
  // Predicated region
  $region10: #{vgg_forward.12} parent=0 // pred_check
    _
  $region11: #{vgg_forward.12} parent=0 // pred_check_branch
    %83 = sbr.rel (0) target = $region13
  $region12: #{vgg_forward.12} parent=0 // pred_region
    _
  $region13: #{vgg_forward.12} parent=0 // pred_fallthru
    _

// kernel: vgg_forward.10
$region0: #{vgg_forward.10}
  #allocation0 [shape = 'u32[]', space=smem, size = 0x4, offset = 0x4, fixed_abs, tag = 'smem constant byte address 0x4 - core index']
  #allocation1 [shape = 'u32[144,128]{1,0:T(1,128)}', space=vmem, size = 0x12000, scoped, tag = 'internal scratch']
  %s0 = inlined_call_operand.vmem [shape: f32[128,576], index: 0, kind: input, shape index: {}]
  %s1 = inlined_call_operand.hbm [shape: f32[576,128], index: 1, kind: input, shape index: {}]
  %s2 = inlined_call_operand.vmem [shape: f32[128,128], index: 2, kind: output, shape index: {}]
  %s3 = sld [smem:[#allocation0]]
  $region22: #{vgg_forward.10} parent=0
    _
  %s5 = ssub.s32 1, %s3
  %s6 = scalar_select 0, %s5, %s3
  $region1: #{vgg_forward.10} parent=0
    #allocation2 [shape = 'u8[294912]{0}', space=vmem, size = 0x48000, scoped, tag = 'input window, operand 1, single buffered']
    #allocation3 [shape = 's32[1]{0}', space=sflag, size = 0x4, scoped, tag = 'scoped memory for vgg_forward.10']
    %7 = vsyncpa [#allocation3], 0
    // Predicated region
    $region2: #{vgg_forward.10} parent=1 // pred_check
      _
    $region3: #{vgg_forward.10} parent=1 // pred_check_branch
      %9 = sbr.rel (0) target = $region5
    $region4: #{vgg_forward.10} parent=1 // pred_region
      _
    $region5: #{vgg_forward.10} parent=1 // pred_fallthru
      _
    // Predicated region
    $region6: #{vgg_forward.10} parent=1 // pred_check
      _
    $region7: #{vgg_forward.10} parent=1 // pred_check_branch
      %11 = sbr.rel (0) target = $region9
    $region8: #{vgg_forward.10} parent=1 // pred_region
      %s13 = ssub.s32 9216, 9216
      %14 = vsyncadd [#allocation3], %s13
      %s15 = sshll.u32 [#allocation2], 4
      %s16 = int_to_ptr.vmem [resolvable:$true] %s15
      %21 = dma.hbm_to_vmem [thread:$0]  %s1, 9216, %s16, [#allocation3], 128, 128, 8
    $region9: #{vgg_forward.10} parent=1 // pred_fallthru
      _
    // Predicated region
    $region10: #{vgg_forward.10} parent=1 // pred_check
      _
    $region11: #{vgg_forward.10} parent=1 // pred_check_branch
      %23 = sbr.rel (0) target = $region13
    $region12: #{vgg_forward.10} parent=1 // pred_region
      %24 = dma.done [#allocation3], 9216
    $region13: #{vgg_forward.10} parent=1 // pred_fallthru
      _
    %v25 = vld [vmem:[%s0] sm:$0xff]
    %v26 = vld [vmem:[%s0 + $0x8] sm:$0xff]
    %v27 = vld [vmem:[%s0 + $0x10] sm:$0xff]
    %v28 = vld [vmem:[%s0 + $0x18] sm:$0xff]
    %v29 = vld [vmem:[%s0 + $0x20] sm:$0xff]
    %v30 = vld [vmem:[%s0 + $0x28] sm:$0xff]
    %v31 = vld [vmem:[%s0 + $0x30] sm:$0xff]
    %v32 = vld [vmem:[%s0 + $0x38] sm:$0xff]
    %v33 = vld [vmem:[%s0 + $0x40] sm:$0xff]
    %v34 = vld [vmem:[%s0 + $0x48] sm:$0xff]
    %v35 = vld [vmem:[%s0 + $0x50] sm:$0xff]
    %v36 = vld [vmem:[%s0 + $0x58] sm:$0xff]
    %v37 = vld [vmem:[%s0 + $0x60] sm:$0xff]
    %v38 = vld [vmem:[%s0 + $0x68] sm:$0xff]
    %v39 = vld [vmem:[%s0 + $0x70] sm:$0xff]
    %v40 = vld [vmem:[%s0 + $0x78] sm:$0xff]
    %v41 = vld [vmem:[%s0 + $0x80] sm:$0xff]
    %v42 = vld [vmem:[%s0 + $0x88] sm:$0xff]
    %v43 = vld [vmem:[%s0 + $0x90] sm:$0xff]
    %v44 = vld [vmem:[%s0 + $0x98] sm:$0xff]
    %v45 = vld [vmem:[%s0 + $0xa0] sm:$0xff]
    %v46 = vld [vmem:[%s0 + $0xa8] sm:$0xff]
    %v47 = vld [vmem:[%s0 + $0xb0] sm:$0xff]
    %v48 = vld [vmem:[%s0 + $0xb8] sm:$0xff]
    %v49 = vld [vmem:[%s0 + $0xc0] sm:$0xff]
    %v50 = vld [vmem:[%s0 + $0xc8] sm:$0xff]
    %v51 = vld [vmem:[%s0 + $0xd0] sm:$0xff]
    %v52 = vld [vmem:[%s0 + $0xd8] sm:$0xff]
    %v53 = vld [vmem:[%s0 + $0xe0] sm:$0xff]
    %v54 = vld [vmem:[%s0 + $0xe8] sm:$0xff]
    %v55 = vld [vmem:[%s0 + $0xf0] sm:$0xff]
    %v56 = vld [vmem:[%s0 + $0xf8] sm:$0xff]
    %v57 = vld [vmem:[%s0 + $0x100] sm:$0xff]
    %v58 = vld [vmem:[%s0 + $0x108] sm:$0xff]
    %v59 = vld [vmem:[%s0 + $0x110] sm:$0xff]
    %v60 = vld [vmem:[%s0 + $0x118] sm:$0xff]
    %v61 = vld [vmem:[%s0 + $0x120] sm:$0xff]
    %v62 = vld [vmem:[%s0 + $0x128] sm:$0xff]
    %v63 = vld [vmem:[%s0 + $0x130] sm:$0xff]
    %v64 = vld [vmem:[%s0 + $0x138] sm:$0xff]
    %v65 = vld [vmem:[%s0 + $0x140] sm:$0xff]
    %v66 = vld [vmem:[%s0 + $0x148] sm:$0xff]
    %v67 = vld [vmem:[%s0 + $0x150] sm:$0xff]
    %v68 = vld [vmem:[%s0 + $0x158] sm:$0xff]
    %v69 = vld [vmem:[%s0 + $0x160] sm:$0xff]
    %v70 = vld [vmem:[%s0 + $0x168] sm:$0xff]
    %v71 = vld [vmem:[%s0 + $0x170] sm:$0xff]
    %v72 = vld [vmem:[%s0 + $0x178] sm:$0xff]
    %v73 = vld [vmem:[%s0 + $0x180] sm:$0xff]
    %v74 = vld [vmem:[%s0 + $0x188] sm:$0xff]
    %v75 = vld [vmem:[%s0 + $0x190] sm:$0xff]
    %v76 = vld [vmem:[%s0 + $0x198] sm:$0xff]
    %v77 = vld [vmem:[%s0 + $0x1a0] sm:$0xff]
    %v78 = vld [vmem:[%s0 + $0x1a8] sm:$0xff]
    %v79 = vld [vmem:[%s0 + $0x1b0] sm:$0xff]
    %v80 = vld [vmem:[%s0 + $0x1b8] sm:$0xff]
    %v81 = vld [vmem:[%s0 + $0x1c0] sm:$0xff]
    %v82 = vld [vmem:[%s0 + $0x1c8] sm:$0xff]
    %v83 = vld [vmem:[%s0 + $0x1d0] sm:$0xff]
    %v84 = vld [vmem:[%s0 + $0x1d8] sm:$0xff]
    %v85 = vld [vmem:[%s0 + $0x1e0] sm:$0xff]
    %v86 = vld [vmem:[%s0 + $0x1e8] sm:$0xff]
    %v87 = vld [vmem:[%s0 + $0x1f0] sm:$0xff]
    %v88 = vld [vmem:[%s0 + $0x1f8] sm:$0xff]
    %v89 = vld [vmem:[%s0 + $0x200] sm:$0xff]
    %v90 = vld [vmem:[%s0 + $0x208] sm:$0xff]
    %v91 = vld [vmem:[%s0 + $0x210] sm:$0xff]
    %v92 = vld [vmem:[%s0 + $0x218] sm:$0xff]
    %v93 = vld [vmem:[%s0 + $0x220] sm:$0xff]
    %v94 = vld [vmem:[%s0 + $0x228] sm:$0xff]
    %v95 = vld [vmem:[%s0 + $0x230] sm:$0xff]
    %v96 = vld [vmem:[%s0 + $0x238] sm:$0xff]
    %v97 = vld [vmem:[%s0 + $0x240] sm:$0xff]
    %v98 = vld [vmem:[%s0 + $0x248] sm:$0xff]
    %v99 = vld [vmem:[%s0 + $0x250] sm:$0xff]
    %v100 = vld [vmem:[%s0 + $0x258] sm:$0xff]
    %v101 = vld [vmem:[%s0 + $0x260] sm:$0xff]
    %v102 = vld [vmem:[%s0 + $0x268] sm:$0xff]
    %v103 = vld [vmem:[%s0 + $0x270] sm:$0xff]
    %v104 = vld [vmem:[%s0 + $0x278] sm:$0xff]
    %v105 = vld [vmem:[#allocation2] sm:$0xff]
    %v106 = vld [vmem:[#allocation2 + $0x8] sm:$0xff]
    %v107 = vld [vmem:[#allocation2 + $0x10] sm:$0xff]
    %v108 = vld [vmem:[#allocation2 + $0x18] sm:$0xff]
    %v109 = vld [vmem:[#allocation2 + $0x20] sm:$0xff]
    %v110 = vld [vmem:[#allocation2 + $0x28] sm:$0xff]
    %v111 = vld [vmem:[#allocation2 + $0x30] sm:$0xff]
    %v112 = vld [vmem:[#allocation2 + $0x38] sm:$0xff]
    %v113 = vld [vmem:[#allocation2 + $0x40] sm:$0xff]
    %v114 = vld [vmem:[#allocation2 + $0x48] sm:$0xff]
    %v115 = vld [vmem:[#allocation2 + $0x50] sm:$0xff]
    %v116 = vld [vmem:[#allocation2 + $0x58] sm:$0xff]
    %v117 = vld [vmem:[#allocation2 + $0x60] sm:$0xff]
    %v118 = vld [vmem:[#allocation2 + $0x68] sm:$0xff]
    %v119 = vld [vmem:[#allocation2 + $0x70] sm:$0xff]
    %v120 = vld [vmem:[#allocation2 + $0x78] sm:$0xff]
    %v121 = vld [vmem:[#allocation2 + $0x80] sm:$0xff]
    %v122 = vld [vmem:[#allocation2 + $0x88] sm:$0xff]
    %v123 = vld [vmem:[#allocation2 + $0x90] sm:$0xff]
    %v124 = vld [vmem:[#allocation2 + $0x98] sm:$0xff]
    %v125 = vld [vmem:[#allocation2 + $0xa0] sm:$0xff]
    %v126 = vld [vmem:[#allocation2 + $0xa8] sm:$0xff]
    %v127 = vld [vmem:[#allocation2 + $0xb0] sm:$0xff]
    %v128 = vld [vmem:[#allocation2 + $0xb8] sm:$0xff]
    %v129 = vld [vmem:[#allocation2 + $0xc0] sm:$0xff]
    %v130 = vld [vmem:[#allocation2 + $0xc8] sm:$0xff]
    %v131 = vld [vmem:[#allocation2 + $0xd0] sm:$0xff]
    %v132 = vld [vmem:[#allocation2 + $0xd8] sm:$0xff]
    %v133 = vld [vmem:[#allocation2 + $0xe0] sm:$0xff]
    %v134 = vld [vmem:[#allocation2 + $0xe8] sm:$0xff]
    %v135 = vld [vmem:[#allocation2 + $0xf0] sm:$0xff]
    %v136 = vld [vmem:[#allocation2 + $0xf8] sm:$0xff]
    %v137 = vld [vmem:[#allocation2 + $0x100] sm:$0xff]
    %v138 = vld [vmem:[#allocation2 + $0x108] sm:$0xff]
    %v139 = vld [vmem:[#allocation2 + $0x110] sm:$0xff]
    %v140 = vld [vmem:[#allocation2 + $0x118] sm:$0xff]
    %v141 = vld [vmem:[#allocation2 + $0x120] sm:$0xff]
    %v142 = vld [vmem:[#allocation2 + $0x128] sm:$0xff]
    %v143 = vld [vmem:[#allocation2 + $0x130] sm:$0xff]
    %v144 = vld [vmem:[#allocation2 + $0x138] sm:$0xff]
    %v145 = vld [vmem:[#allocation2 + $0x140] sm:$0xff]
    %v146 = vld [vmem:[#allocation2 + $0x148] sm:$0xff]
    %v147 = vld [vmem:[#allocation2 + $0x150] sm:$0xff]
    %v148 = vld [vmem:[#allocation2 + $0x158] sm:$0xff]
    %v149 = vld [vmem:[#allocation2 + $0x160] sm:$0xff]
    %v150 = vld [vmem:[#allocation2 + $0x168] sm:$0xff]
    %v151 = vld [vmem:[#allocation2 + $0x170] sm:$0xff]
    %v152 = vld [vmem:[#allocation2 + $0x178] sm:$0xff]
    %v153 = vld [vmem:[#allocation2 + $0x180] sm:$0xff]
    %v154 = vld [vmem:[#allocation2 + $0x188] sm:$0xff]
    %v155 = vld [vmem:[#allocation2 + $0x190] sm:$0xff]
    %v156 = vld [vmem:[#allocation2 + $0x198] sm:$0xff]
    %v157 = vld [vmem:[#allocation2 + $0x1a0] sm:$0xff]
    %v158 = vld [vmem:[#allocation2 + $0x1a8] sm:$0xff]
    %v159 = vld [vmem:[#allocation2 + $0x1b0] sm:$0xff]
    %v160 = vld [vmem:[#allocation2 + $0x1b8] sm:$0xff]
    %v161 = vld [vmem:[#allocation2 + $0x1c0] sm:$0xff]
    %v162 = vld [vmem:[#allocation2 + $0x1c8] sm:$0xff]
    %v163 = vld [vmem:[#allocation2 + $0x1d0] sm:$0xff]
    %v164 = vld [vmem:[#allocation2 + $0x1d8] sm:$0xff]
    %v165 = vld [vmem:[#allocation2 + $0x1e0] sm:$0xff]
    %v166 = vld [vmem:[#allocation2 + $0x1e8] sm:$0xff]
    %v167 = vld [vmem:[#allocation2 + $0x1f0] sm:$0xff]
    %v168 = vld [vmem:[#allocation2 + $0x1f8] sm:$0xff]
    %v169 = vld [vmem:[#allocation2 + $0x200] sm:$0xff]
    %v170 = vld [vmem:[#allocation2 + $0x208] sm:$0xff]
    %v171 = vld [vmem:[#allocation2 + $0x210] sm:$0xff]
    %v172 = vld [vmem:[#allocation2 + $0x218] sm:$0xff]
    %v173 = vld [vmem:[#allocation2 + $0x220] sm:$0xff]
    %v174 = vld [vmem:[#allocation2 + $0x228] sm:$0xff]
    %v175 = vld [vmem:[#allocation2 + $0x230] sm:$0xff]
    %v176 = vld [vmem:[#allocation2 + $0x238] sm:$0xff]
    %vm177 = vcmask 523264
    %v179 = vsel %vm177, %v29, 0
    %v182 = vsel %vm177, %v34, 0
    %v185 = vsel %vm177, %v39, 0
    %v188 = vsel %vm177, %v44, 0
    %v191 = vsel %vm177, %v49, 0
    %v194 = vsel %vm177, %v54, 0
    %v197 = vsel %vm177, %v59, 0
    %v200 = vsel %vm177, %v64, 0
    %v203 = vsel %vm177, %v69, 0
    %v206 = vsel %vm177, %v74, 0
    %v209 = vsel %vm177, %v79, 0
    %v212 = vsel %vm177, %v84, 0
    %v215 = vsel %vm177, %v89, 0
    %v218 = vsel %vm177, %v94, 0
    %v221 = vsel %vm177, %v99, 0
    %v224 = vsel %vm177, %v104, 0
    %226 = vmatprep.subr.mxu0 0.0
    %227 = vmatpush1.msra.mxu0 %v120
    %228 = vmatprep.subr.mxu0 0.0
    %229 = vmatpush1.msra.mxu0 %v119
    %230 = vmatprep.subr.mxu0 0.0
    %231 = vmatpush1.msra.mxu0 %v118
    %232 = vmatprep.subr.mxu0 0.0
    %233 = vmatpush1.msra.mxu0 %v117
    %234 = vmatprep.subr.mxu0 0.0
    %235 = vmatpush1.msra.mxu0 %v116
    %236 = vmatprep.subr.mxu0 0.0
    %237 = vmatpush1.msra.mxu0 %v115
    %238 = vmatprep.subr.mxu0 0.0
    %239 = vmatpush1.msra.mxu0 %v114
    %240 = vmatprep.subr.mxu0 0.0
    %241 = vmatpush1.msra.mxu0 %v113
    %242 = vmatprep.subr.mxu0 0.0
    %243 = vmatpush1.msra.mxu0 %v112
    %244 = vmatprep.subr.mxu0 0.0
    %245 = vmatpush1.msra.mxu0 %v111
    %246 = vmatprep.subr.mxu0 0.0
    %247 = vmatpush1.msra.mxu0 %v110
    %248 = vmatprep.subr.mxu0 0.0
    %249 = vmatpush1.msra.mxu0 %v109
    %250 = vmatprep.subr.mxu0 0.0
    %251 = vmatpush1.msra.mxu0 %v108
    %252 = vmatprep.subr.mxu0 0.0
    %253 = vmatpush1.msra.mxu0 %v107
    %254 = vmatprep.subr.mxu0 0.0
    %255 = vmatpush1.msra.mxu0 %v106
    %256 = vmatprep.subr.mxu0 0.0
    %257 = vmatpush1.msra.mxu0 %v105
    %258 = vmatprep.subr.mxu0 0.0
    %259 = vmatpush2.msra.mxu0 %v136
    %260 = vmatprep.subr.mxu0 0.0
    %261 = vmatpush2.msra.mxu0 %v135
    %262 = vmatprep.subr.mxu0 0.0
    %263 = vmatpush2.msra.mxu0 %v134
    %264 = vmatprep.subr.mxu0 0.0
    %265 = vmatpush2.msra.mxu0 %v133
    %266 = vmatprep.subr.mxu0 0.0
    %267 = vmatpush2.msra.mxu0 %v132
    %268 = vmatprep.subr.mxu0 0.0
    %269 = vmatpush2.msra.mxu0 %v131
    %270 = vmatprep.subr.mxu0 0.0
    %271 = vmatpush2.msra.mxu0 %v130
    %272 = vmatprep.subr.mxu0 0.0
    %273 = vmatpush2.msra.mxu0 %v129
    %274 = vmatprep.subr.mxu0 0.0
    %275 = vmatpush2.msra.mxu0 %v128
    %276 = vmatprep.subr.mxu0 0.0
    %277 = vmatpush2.msra.mxu0 %v127
    %278 = vmatprep.subr.mxu0 0.0
    %279 = vmatpush2.msra.mxu0 %v126
    %280 = vmatprep.subr.mxu0 0.0
    %281 = vmatpush2.msra.mxu0 %v125
    %282 = vmatprep.subr.mxu0 0.0
    %283 = vmatpush2.msra.mxu0 %v124
    %284 = vmatprep.subr.mxu0 0.0
    %285 = vmatpush2.msra.mxu0 %v123
    %286 = vmatprep.subr.mxu0 0.0
    %287 = vmatpush2.msra.mxu0 %v122
    %288 = vmatprep.subr.mxu0 0.0
    %289 = vmatpush2.msra.mxu0 %v121
    %290 = vmatprep.mubr.f32.mxu0 %v26
    %291 = vmatmul.mubr.f32.gmra.mxu0 %v25
    %v292 = vpop.f32.mrf.mxu0
    %v293 = vadd.f32 0.0, %v292
    %v294 = vpop.f32.mrf.mxu0
    %295 = vmatprep.mubr.f32.mxu0 %v31
    %296 = vmatmul.mubr.f32.gmra.mxu0 %v30
    %v297 = vpop.f32.mrf.mxu0
    %v298 = vadd.f32 0.0, %v297
    %v299 = vpop.f32.mrf.mxu0
    %300 = vmatprep.mubr.f32.mxu0 %v36
    %301 = vmatmul.mubr.f32.gmra.mxu0 %v35
    %v302 = vpop.f32.mrf.mxu0
    %v303 = vadd.f32 0.0, %v302
    %v304 = vpop.f32.mrf.mxu0
    %305 = vmatprep.mubr.f32.mxu0 %v41
    %306 = vmatmul.mubr.f32.gmra.mxu0 %v40
    %v307 = vpop.f32.mrf.mxu0
    %v308 = vadd.f32 0.0, %v307
    %v309 = vpop.f32.mrf.mxu0
    %310 = vmatprep.mubr.f32.mxu0 %v46
    %311 = vmatmul.mubr.f32.gmra.mxu0 %v45
    %v312 = vpop.f32.mrf.mxu0
    %v313 = vadd.f32 0.0, %v312
    %v314 = vpop.f32.mrf.mxu0
    %315 = vmatprep.mubr.f32.mxu0 %v51
    %316 = vmatmul.mubr.f32.gmra.mxu0 %v50
    %v317 = vpop.f32.mrf.mxu0
    %v318 = vadd.f32 0.0, %v317
    %v319 = vpop.f32.mrf.mxu0
    %320 = vmatprep.mubr.f32.mxu0 %v56
    %321 = vmatmul.mubr.f32.gmra.mxu0 %v55
    %v322 = vpop.f32.mrf.mxu0
    %v323 = vadd.f32 0.0, %v322
    %v324 = vpop.f32.mrf.mxu0
    %325 = vmatprep.mubr.f32.mxu0 %v61
    %326 = vmatmul.mubr.f32.gmra.mxu0 %v60
    %v327 = vpop.f32.mrf.mxu0
    %v328 = vadd.f32 0.0, %v327
    %v329 = vpop.f32.mrf.mxu0
    %330 = vmatprep.mubr.f32.mxu0 %v66
    %331 = vmatmul.mubr.f32.gmra.mxu0 %v65
    %v332 = vpop.f32.mrf.mxu0
    %v333 = vadd.f32 0.0, %v332
    %v334 = vpop.f32.mrf.mxu0
    %335 = vmatprep.mubr.f32.mxu0 %v71
    %336 = vmatmul.mubr.f32.gmra.mxu0 %v70
    %v337 = vpop.f32.mrf.mxu0
    %v338 = vadd.f32 0.0, %v337
    %v339 = vpop.f32.mrf.mxu0
    %340 = vmatprep.mubr.f32.mxu0 %v76
    %341 = vmatmul.mubr.f32.gmra.mxu0 %v75
    %v342 = vpop.f32.mrf.mxu0
    %v343 = vadd.f32 0.0, %v342
    %v344 = vpop.f32.mrf.mxu0
    %345 = vmatprep.mubr.f32.mxu0 %v81
    %346 = vmatmul.mubr.f32.gmra.mxu0 %v80
    %v347 = vpop.f32.mrf.mxu0
    %v348 = vadd.f32 0.0, %v347
    %v349 = vpop.f32.mrf.mxu0
    %350 = vmatprep.mubr.f32.mxu0 %v86
    %351 = vmatmul.mubr.f32.gmra.mxu0 %v85
    %v352 = vpop.f32.mrf.mxu0
    %v353 = vadd.f32 0.0, %v352
    %v354 = vpop.f32.mrf.mxu0
    %355 = vmatprep.mubr.f32.mxu0 %v91
    %356 = vmatmul.mubr.f32.gmra.mxu0 %v90
    %v357 = vpop.f32.mrf.mxu0
    %v358 = vadd.f32 0.0, %v357
    %v359 = vpop.f32.mrf.mxu0
    %360 = vmatprep.mubr.f32.mxu0 %v96
    %361 = vmatmul.mubr.f32.gmra.mxu0 %v95
    %v362 = vpop.f32.mrf.mxu0
    %v363 = vadd.f32 0.0, %v362
    %v364 = vpop.f32.mrf.mxu0
    %365 = vmatprep.mubr.f32.mxu0 %v101
    %366 = vmatmul.mubr.f32.gmra.mxu0 %v100
    %v367 = vpop.f32.mrf.mxu0
    %v368 = vadd.f32 0.0, %v367
    %v369 = vpop.f32.mrf.mxu0
    %370 = vdwg.mxu0
    %371 = vmatprep.subr.mxu0 0.0
    %372 = vmatpush1.msra.mxu0 %v152
    %373 = vmatprep.subr.mxu0 0.0
    %374 = vmatpush1.msra.mxu0 %v151
    %375 = vmatprep.subr.mxu0 0.0
    %376 = vmatpush1.msra.mxu0 %v150
    %377 = vmatprep.subr.mxu0 0.0
    %378 = vmatpush1.msra.mxu0 %v149
    %379 = vmatprep.subr.mxu0 0.0
    %380 = vmatpush1.msra.mxu0 %v148
    %381 = vmatprep.subr.mxu0 0.0
    %382 = vmatpush1.msra.mxu0 %v147
    %383 = vmatprep.subr.mxu0 0.0
    %384 = vmatpush1.msra.mxu0 %v146
    %385 = vmatprep.subr.mxu0 0.0
    %386 = vmatpush1.msra.mxu0 %v145
    %387 = vmatprep.subr.mxu0 0.0
    %388 = vmatpush1.msra.mxu0 %v144
    %389 = vmatprep.subr.mxu0 0.0
    %390 = vmatpush1.msra.mxu0 %v143
    %391 = vmatprep.subr.mxu0 0.0
    %392 = vmatpush1.msra.mxu0 %v142
    %393 = vmatprep.subr.mxu0 0.0
    %394 = vmatpush1.msra.mxu0 %v141
    %395 = vmatprep.subr.mxu0 0.0
    %396 = vmatpush1.msra.mxu0 %v140
    %397 = vmatprep.subr.mxu0 0.0
    %398 = vmatpush1.msra.mxu0 %v139
    %399 = vmatprep.subr.mxu0 0.0
    %400 = vmatpush1.msra.mxu0 %v138
    %401 = vmatprep.subr.mxu0 0.0
    %402 = vmatpush1.msra.mxu0 %v137
    %403 = vmatprep.subr.mxu0 0.0
    %404 = vmatpush2.msra.mxu0 %v168
    %405 = vmatprep.subr.mxu0 0.0
    %406 = vmatpush2.msra.mxu0 %v167
    %407 = vmatprep.subr.mxu0 0.0
    %408 = vmatpush2.msra.mxu0 %v166
    %409 = vmatprep.subr.mxu0 0.0
    %410 = vmatpush2.msra.mxu0 %v165
    %411 = vmatprep.subr.mxu0 0.0
    %412 = vmatpush2.msra.mxu0 %v164
    %413 = vmatprep.subr.mxu0 0.0
    %414 = vmatpush2.msra.mxu0 %v163
    %415 = vmatprep.subr.mxu0 0.0
    %416 = vmatpush2.msra.mxu0 %v162
    %417 = vmatprep.subr.mxu0 0.0
    %418 = vmatpush2.msra.mxu0 %v161
    %419 = vmatprep.subr.mxu0 0.0
    %420 = vmatpush2.msra.mxu0 %v160
    %421 = vmatprep.subr.mxu0 0.0
    %422 = vmatpush2.msra.mxu0 %v159
    %423 = vmatprep.subr.mxu0 0.0
    %424 = vmatpush2.msra.mxu0 %v158
    %425 = vmatprep.subr.mxu0 0.0
    %426 = vmatpush2.msra.mxu0 %v157
    %427 = vmatprep.subr.mxu0 0.0
    %428 = vmatpush2.msra.mxu0 %v156
    %429 = vmatprep.subr.mxu0 0.0
    %430 = vmatpush2.msra.mxu0 %v155
    %431 = vmatprep.subr.mxu0 0.0
    %432 = vmatpush2.msra.mxu0 %v154
    %433 = vmatprep.subr.mxu0 0.0
    %434 = vmatpush2.msra.mxu0 %v153
    %435 = vmatprep.mubr.f32.mxu0 %v28
    %436 = vmatmul.mubr.f32.gmra.mxu0 %v27
    %v437 = vpop.f32.mrf.mxu0
    %v438 = vadd.f32 %v293, %v437
    %v439 = vpop.f32.mrf.mxu0
    %440 = vmatprep.mubr.f32.mxu0 %v33
    %441 = vmatmul.mubr.f32.gmra.mxu0 %v32
    %v442 = vpop.f32.mrf.mxu0
    %v443 = vadd.f32 %v298, %v442
    %v444 = vpop.f32.mrf.mxu0
    %445 = vmatprep.mubr.f32.mxu0 %v38
    %446 = vmatmul.mubr.f32.gmra.mxu0 %v37
    %v447 = vpop.f32.mrf.mxu0
    %v448 = vadd.f32 %v303, %v447
    %v449 = vpop.f32.mrf.mxu0
    %450 = vmatprep.mubr.f32.mxu0 %v43
    %451 = vmatmul.mubr.f32.gmra.mxu0 %v42
    %v452 = vpop.f32.mrf.mxu0
    %v453 = vadd.f32 %v308, %v452
    %v454 = vpop.f32.mrf.mxu0
    %455 = vmatprep.mubr.f32.mxu0 %v48
    %456 = vmatmul.mubr.f32.gmra.mxu0 %v47
    %v457 = vpop.f32.mrf.mxu0
    %v458 = vadd.f32 %v313, %v457
    %v459 = vpop.f32.mrf.mxu0
    %460 = vmatprep.mubr.f32.mxu0 %v53
    %461 = vmatmul.mubr.f32.gmra.mxu0 %v52
    %v462 = vpop.f32.mrf.mxu0
    %v463 = vadd.f32 %v318, %v462
    %v464 = vpop.f32.mrf.mxu0
    %465 = vmatprep.mubr.f32.mxu0 %v58
    %466 = vmatmul.mubr.f32.gmra.mxu0 %v57
    %v467 = vpop.f32.mrf.mxu0
    %v468 = vadd.f32 %v323, %v467
    %v469 = vpop.f32.mrf.mxu0
    %470 = vmatprep.mubr.f32.mxu0 %v63
    %471 = vmatmul.mubr.f32.gmra.mxu0 %v62
    %v472 = vpop.f32.mrf.mxu0
    %v473 = vadd.f32 %v328, %v472
    %v474 = vpop.f32.mrf.mxu0
    %475 = vmatprep.mubr.f32.mxu0 %v68
    %476 = vmatmul.mubr.f32.gmra.mxu0 %v67
    %v477 = vpop.f32.mrf.mxu0
    %v478 = vadd.f32 %v333, %v477
    %v479 = vpop.f32.mrf.mxu0
    %480 = vmatprep.mubr.f32.mxu0 %v73
    %481 = vmatmul.mubr.f32.gmra.mxu0 %v72
    %v482 = vpop.f32.mrf.mxu0
    %v483 = vadd.f32 %v338, %v482
    %v484 = vpop.f32.mrf.mxu0
    %485 = vmatprep.mubr.f32.mxu0 %v78
    %486 = vmatmul.mubr.f32.gmra.mxu0 %v77
    %v487 = vpop.f32.mrf.mxu0
    %v488 = vadd.f32 %v343, %v487
    %v489 = vpop.f32.mrf.mxu0
    %490 = vmatprep.mubr.f32.mxu0 %v83
    %491 = vmatmul.mubr.f32.gmra.mxu0 %v82
    %v492 = vpop.f32.mrf.mxu0
    %v493 = vadd.f32 %v348, %v492
    %v494 = vpop.f32.mrf.mxu0
    %495 = vmatprep.mubr.f32.mxu0 %v88
    %496 = vmatmul.mubr.f32.gmra.mxu0 %v87
    %v497 = vpop.f32.mrf.mxu0
    %v498 = vadd.f32 %v353, %v497
    %v499 = vpop.f32.mrf.mxu0
    %500 = vmatprep.mubr.f32.mxu0 %v93
    %501 = vmatmul.mubr.f32.gmra.mxu0 %v92
    %v502 = vpop.f32.mrf.mxu0
    %v503 = vadd.f32 %v358, %v502
    %v504 = vpop.f32.mrf.mxu0
    %505 = vmatprep.mubr.f32.mxu0 %v98
    %506 = vmatmul.mubr.f32.gmra.mxu0 %v97
    %v507 = vpop.f32.mrf.mxu0
    %v508 = vadd.f32 %v363, %v507
    %v509 = vpop.f32.mrf.mxu0
    %510 = vmatprep.mubr.f32.mxu0 %v103
    %511 = vmatmul.mubr.f32.gmra.mxu0 %v102
    %v512 = vpop.f32.mrf.mxu0
    %v513 = vadd.f32 %v368, %v512
    %v514 = vpop.f32.mrf.mxu0
    %515 = vdwg.mxu0
    %516 = vmatprep.subr.mxu0 0.0
    %517 = vmatpush1.msra.mxu0 0.0
    %518 = vmatprep.subr.mxu0 0.0
    %519 = vmatpush1.msra.mxu0 0.0
    %520 = vmatprep.subr.mxu0 0.0
    %521 = vmatpush1.msra.mxu0 0.0
    %522 = vmatprep.subr.mxu0 0.0
    %523 = vmatpush1.msra.mxu0 0.0
    %524 = vmatprep.subr.mxu0 0.0
    %525 = vmatpush1.msra.mxu0 0.0
    %526 = vmatprep.subr.mxu0 0.0
    %527 = vmatpush1.msra.mxu0 0.0
    %528 = vmatprep.subr.mxu0 0.0
    %529 = vmatpush1.msra.mxu0 0.0
    %530 = vmatprep.subr.mxu0 0.0
    %531 = vmatpush1.msra.mxu0 0.0
    %532 = vmatprep.subr.mxu0 0.0
    %533 = vmatpush1.msra.mxu0 %v176
    %534 = vmatprep.subr.mxu0 0.0
    %535 = vmatpush1.msra.mxu0 %v175
    %536 = vmatprep.subr.mxu0 0.0
    %537 = vmatpush1.msra.mxu0 %v174
    %538 = vmatprep.subr.mxu0 0.0
    %539 = vmatpush1.msra.mxu0 %v173
    %540 = vmatprep.subr.mxu0 0.0
    %541 = vmatpush1.msra.mxu0 %v172
    %542 = vmatprep.subr.mxu0 0.0
    %543 = vmatpush1.msra.mxu0 %v171
    %544 = vmatprep.subr.mxu0 0.0
    %545 = vmatpush1.msra.mxu0 %v170
    %546 = vmatprep.subr.mxu0 0.0
    %547 = vmatpush1.msra.mxu0 %v169
    %548 = vmatprep.subr.mxu0 0.0
    %549 = vmatpush2.msra.mxu0 0.0
    %550 = vmatprep.subr.mxu0 0.0
    %551 = vmatpush2.msra.mxu0 0.0
    %552 = vmatprep.subr.mxu0 0.0
    %553 = vmatpush2.msra.mxu0 0.0
    %554 = vmatprep.subr.mxu0 0.0
    %555 = vmatpush2.msra.mxu0 0.0
    %556 = vmatprep.subr.mxu0 0.0
    %557 = vmatpush2.msra.mxu0 0.0
    %558 = vmatprep.subr.mxu0 0.0
    %559 = vmatpush2.msra.mxu0 0.0
    %560 = vmatprep.subr.mxu0 0.0
    %561 = vmatpush2.msra.mxu0 0.0
    %562 = vmatprep.subr.mxu0 0.0
    %563 = vmatpush2.msra.mxu0 0.0
    %564 = vmatprep.subr.mxu0 0.0
    %565 = vmatpush2.msra.mxu0 0.0
    %566 = vmatprep.subr.mxu0 0.0
    %567 = vmatpush2.msra.mxu0 0.0
    %568 = vmatprep.subr.mxu0 0.0
    %569 = vmatpush2.msra.mxu0 0.0
    %570 = vmatprep.subr.mxu0 0.0
    %571 = vmatpush2.msra.mxu0 0.0
    %572 = vmatprep.subr.mxu0 0.0
    %573 = vmatpush2.msra.mxu0 0.0
    %574 = vmatprep.subr.mxu0 0.0
    %575 = vmatpush2.msra.mxu0 0.0
    %576 = vmatprep.subr.mxu0 0.0
    %577 = vmatpush2.msra.mxu0 0.0
    %578 = vmatprep.subr.mxu0 0.0
    %579 = vmatpush2.msra.mxu0 0.0
    %580 = vmatprep.mubr.f32.mxu0 0.0
    %581 = vmatmul.mubr.f32.gmra.mxu0 %v179
    %v582 = vpop.f32.mrf.mxu0
    %v583 = vadd.f32 %v438, %v582
    %v584 = vpop.f32.mrf.mxu0
    %585 = vmatprep.mubr.f32.mxu0 0.0
    %586 = vmatmul.mubr.f32.gmra.mxu0 %v182
    %v587 = vpop.f32.mrf.mxu0
    %v588 = vadd.f32 %v443, %v587
    %v589 = vpop.f32.mrf.mxu0
    %590 = vmatprep.mubr.f32.mxu0 0.0
    %591 = vmatmul.mubr.f32.gmra.mxu0 %v185
    %v592 = vpop.f32.mrf.mxu0
    %v593 = vadd.f32 %v448, %v592
    %v594 = vpop.f32.mrf.mxu0
    %595 = vmatprep.mubr.f32.mxu0 0.0
    %596 = vmatmul.mubr.f32.gmra.mxu0 %v188
    %v597 = vpop.f32.mrf.mxu0
    %v598 = vadd.f32 %v453, %v597
    %v599 = vpop.f32.mrf.mxu0
    %600 = vmatprep.mubr.f32.mxu0 0.0
    %601 = vmatmul.mubr.f32.gmra.mxu0 %v191
    %v602 = vpop.f32.mrf.mxu0
    %v603 = vadd.f32 %v458, %v602
    %v604 = vpop.f32.mrf.mxu0
    %605 = vmatprep.mubr.f32.mxu0 0.0
    %606 = vmatmul.mubr.f32.gmra.mxu0 %v194
    %v607 = vpop.f32.mrf.mxu0
    %v608 = vadd.f32 %v463, %v607
    %v609 = vpop.f32.mrf.mxu0
    %610 = vmatprep.mubr.f32.mxu0 0.0
    %611 = vmatmul.mubr.f32.gmra.mxu0 %v197
    %v612 = vpop.f32.mrf.mxu0
    %v613 = vadd.f32 %v468, %v612
    %v614 = vpop.f32.mrf.mxu0
    %615 = vmatprep.mubr.f32.mxu0 0.0
    %616 = vmatmul.mubr.f32.gmra.mxu0 %v200
    %v617 = vpop.f32.mrf.mxu0
    %v618 = vadd.f32 %v473, %v617
    %v619 = vpop.f32.mrf.mxu0
    %620 = vmatprep.mubr.f32.mxu0 0.0
    %621 = vmatmul.mubr.f32.gmra.mxu0 %v203
    %v622 = vpop.f32.mrf.mxu0
    %v623 = vadd.f32 %v478, %v622
    %v624 = vpop.f32.mrf.mxu0
    %625 = vmatprep.mubr.f32.mxu0 0.0
    %626 = vmatmul.mubr.f32.gmra.mxu0 %v206
    %v627 = vpop.f32.mrf.mxu0
    %v628 = vadd.f32 %v483, %v627
    %v629 = vpop.f32.mrf.mxu0
    %630 = vmatprep.mubr.f32.mxu0 0.0
    %631 = vmatmul.mubr.f32.gmra.mxu0 %v209
    %v632 = vpop.f32.mrf.mxu0
    %v633 = vadd.f32 %v488, %v632
    %v634 = vpop.f32.mrf.mxu0
    %635 = vmatprep.mubr.f32.mxu0 0.0
    %636 = vmatmul.mubr.f32.gmra.mxu0 %v212
    %v637 = vpop.f32.mrf.mxu0
    %v638 = vadd.f32 %v493, %v637
    %v639 = vpop.f32.mrf.mxu0
    %640 = vmatprep.mubr.f32.mxu0 0.0
    %641 = vmatmul.mubr.f32.gmra.mxu0 %v215
    %v642 = vpop.f32.mrf.mxu0
    %v643 = vadd.f32 %v498, %v642
    %v644 = vpop.f32.mrf.mxu0
    %645 = vmatprep.mubr.f32.mxu0 0.0
    %646 = vmatmul.mubr.f32.gmra.mxu0 %v218
    %v647 = vpop.f32.mrf.mxu0
    %v648 = vadd.f32 %v503, %v647
    %v649 = vpop.f32.mrf.mxu0
    %650 = vmatprep.mubr.f32.mxu0 0.0
    %651 = vmatmul.mubr.f32.gmra.mxu0 %v221
    %v652 = vpop.f32.mrf.mxu0
    %v653 = vadd.f32 %v508, %v652
    %v654 = vpop.f32.mrf.mxu0
    %655 = vmatprep.mubr.f32.mxu0 0.0
    %656 = vmatmul.mubr.f32.gmra.mxu0 %v224
    %v657 = vpop.f32.mrf.mxu0
    %v658 = vadd.f32 %v513, %v657
    %v659 = vpop.f32.mrf.mxu0
    %660 = vdwg.mxu0
    %v661 = vmax.f32 %v583, 0.0
    %v662 = vmax.f32 %v588, 0.0
    %v663 = vmax.f32 %v593, 0.0
    %v664 = vmax.f32 %v598, 0.0
    %v665 = vmax.f32 %v603, 0.0
    %v666 = vmax.f32 %v608, 0.0
    %v667 = vmax.f32 %v613, 0.0
    %v668 = vmax.f32 %v618, 0.0
    %v669 = vmax.f32 %v623, 0.0
    %v670 = vmax.f32 %v628, 0.0
    %v671 = vmax.f32 %v633, 0.0
    %v672 = vmax.f32 %v638, 0.0
    %v673 = vmax.f32 %v643, 0.0
    %v674 = vmax.f32 %v648, 0.0
    %v675 = vmax.f32 %v653, 0.0
    %v676 = vmax.f32 %v658, 0.0
    %677 = vst [vmem:[%s2] sm:$0xff] %v661
    %678 = vst [vmem:[%s2 + $0x8] sm:$0xff] %v662
    %679 = vst [vmem:[%s2 + $0x10] sm:$0xff] %v663
    %680 = vst [vmem:[%s2 + $0x18] sm:$0xff] %v664
    %681 = vst [vmem:[%s2 + $0x20] sm:$0xff] %v665
    %682 = vst [vmem:[%s2 + $0x28] sm:$0xff] %v666
    %683 = vst [vmem:[%s2 + $0x30] sm:$0xff] %v667
    %684 = vst [vmem:[%s2 + $0x38] sm:$0xff] %v668
    %685 = vst [vmem:[%s2 + $0x40] sm:$0xff] %v669
    %686 = vst [vmem:[%s2 + $0x48] sm:$0xff] %v670
    %687 = vst [vmem:[%s2 + $0x50] sm:$0xff] %v671
    %688 = vst [vmem:[%s2 + $0x58] sm:$0xff] %v672
    %689 = vst [vmem:[%s2 + $0x60] sm:$0xff] %v673
    %690 = vst [vmem:[%s2 + $0x68] sm:$0xff] %v674
    %691 = vst [vmem:[%s2 + $0x70] sm:$0xff] %v675
    %692 = vst [vmem:[%s2 + $0x78] sm:$0xff] %v676
    // Predicated region
    $region14: #{vgg_forward.10} parent=1 // pred_check
      _
    $region15: #{vgg_forward.10} parent=1 // pred_check_branch
      %694 = sbr.rel (0) target = $region17
    $region16: #{vgg_forward.10} parent=1 // pred_region
      _
    $region17: #{vgg_forward.10} parent=1 // pred_fallthru
      _
    // Predicated region
    $region18: #{vgg_forward.10} parent=1 // pred_check
      _
    $region19: #{vgg_forward.10} parent=1 // pred_check_branch
      %696 = sbr.rel (0) target = $region21
    $region20: #{vgg_forward.10} parent=1 // pred_region
      _
    $region21: #{vgg_forward.10} parent=1 // pred_fallthru
      _
    %697 = vsyncpa [#allocation3], 1

// kernel: vgg_forward.11
$region0: #{vgg_forward.11}
  #allocation0 [shape = 'u32[]', space=smem, size = 0x4, offset = 0x4, fixed_abs, tag = 'smem constant byte address 0x4 - core index']
  #allocation1 [shape = 'u32[144,128]{1,0:T(1,128)}', space=vmem, size = 0x12000, scoped, tag = 'internal scratch']
  %s0 = inlined_call_operand.vmem [shape: f32[128,1152], index: 0, kind: input, shape index: {}]
  %s1 = inlined_call_operand.hbm [shape: f32[1152,128], index: 1, kind: input, shape index: {}]
  %s2 = inlined_call_operand.vmem [shape: f32[128,128], index: 2, kind: output, shape index: {}]
  %s3 = sld [smem:[#allocation0]]
  $region22: #{vgg_forward.11} parent=0
    _
  %s5 = ssub.s32 1, %s3
  %s6 = scalar_select 0, %s5, %s3
  $region1: #{vgg_forward.11} parent=0
    #allocation2 [shape = 'u8[589824]{0}', space=vmem, size = 0x90000, scoped, tag = 'input window, operand 1, single buffered']
    #allocation3 [shape = 's32[1]{0}', space=sflag, size = 0x4, scoped, tag = 'scoped memory for vgg_forward.11']
    %7 = vsyncpa [#allocation3], 0
    // Predicated region
    $region2: #{vgg_forward.11} parent=1 // pred_check
      _
    $region3: #{vgg_forward.11} parent=1 // pred_check_branch
      %9 = sbr.rel (0) target = $region5
    $region4: #{vgg_forward.11} parent=1 // pred_region
      _
    $region5: #{vgg_forward.11} parent=1 // pred_fallthru
      _
    // Predicated region
    $region6: #{vgg_forward.11} parent=1 // pred_check
      _
    $region7: #{vgg_forward.11} parent=1 // pred_check_branch
      %11 = sbr.rel (0) target = $region9
    $region8: #{vgg_forward.11} parent=1 // pred_region
      %s13 = ssub.s32 18432, 18432
      %14 = vsyncadd [#allocation3], %s13
      %s15 = sshll.u32 [#allocation2], 4
      %s16 = int_to_ptr.vmem [resolvable:$true] %s15
      %21 = dma.hbm_to_vmem [thread:$0]  %s1, 18432, %s16, [#allocation3], 128, 128, 8
    $region9: #{vgg_forward.11} parent=1 // pred_fallthru
      _
    // Predicated region
    $region10: #{vgg_forward.11} parent=1 // pred_check
      _
    $region11: #{vgg_forward.11} parent=1 // pred_check_branch
      %23 = sbr.rel (0) target = $region13
    $region12: #{vgg_forward.11} parent=1 // pred_region
      %24 = dma.done [#allocation3], 18432
    $region13: #{vgg_forward.11} parent=1 // pred_fallthru
      _
    %v25 = vld [vmem:[%s0] sm:$0xff]
    %v26 = vld [vmem:[%s0 + $0x8] sm:$0xff]
    %v27 = vld [vmem:[%s0 + $0x10] sm:$0xff]
    %v28 = vld [vmem:[%s0 + $0x18] sm:$0xff]
    %v29 = vld [vmem:[%s0 + $0x20] sm:$0xff]
    %v30 = vld [vmem:[%s0 + $0x28] sm:$0xff]
    %v31 = vld [vmem:[%s0 + $0x30] sm:$0xff]
    %v32 = vld [vmem:[%s0 + $0x38] sm:$0xff]
    %v33 = vld [vmem:[%s0 + $0x40] sm:$0xff]
    %v34 = vld [vmem:[%s0 + $0x48] sm:$0xff]
    %v35 = vld [vmem:[%s0 + $0x50] sm:$0xff]
    %v36 = vld [vmem:[%s0 + $0x58] sm:$0xff]
    %v37 = vld [vmem:[%s0 + $0x60] sm:$0xff]
    %v38 = vld [vmem:[%s0 + $0x68] sm:$0xff]
    %v39 = vld [vmem:[%s0 + $0x70] sm:$0xff]
    %v40 = vld [vmem:[%s0 + $0x78] sm:$0xff]
    %v41 = vld [vmem:[%s0 + $0x80] sm:$0xff]
    %v42 = vld [vmem:[%s0 + $0x88] sm:$0xff]
    %v43 = vld [vmem:[%s0 + $0x90] sm:$0xff]
    %v44 = vld [vmem:[%s0 + $0x98] sm:$0xff]
    %v45 = vld [vmem:[%s0 + $0xa0] sm:$0xff]
    %v46 = vld [vmem:[%s0 + $0xa8] sm:$0xff]
    %v47 = vld [vmem:[%s0 + $0xb0] sm:$0xff]
    %v48 = vld [vmem:[%s0 + $0xb8] sm:$0xff]
    %v49 = vld [vmem:[%s0 + $0xc0] sm:$0xff]
    %v50 = vld [vmem:[%s0 + $0xc8] sm:$0xff]
    %v51 = vld [vmem:[%s0 + $0xd0] sm:$0xff]
    %v52 = vld [vmem:[%s0 + $0xd8] sm:$0xff]
    %v53 = vld [vmem:[%s0 + $0xe0] sm:$0xff]
    %v54 = vld [vmem:[%s0 + $0xe8] sm:$0xff]
    %v55 = vld [vmem:[%s0 + $0xf0] sm:$0xff]
    %v56 = vld [vmem:[%s0 + $0xf8] sm:$0xff]
    %v57 = vld [vmem:[%s0 + $0x100] sm:$0xff]
    %v58 = vld [vmem:[%s0 + $0x108] sm:$0xff]
    %v59 = vld [vmem:[%s0 + $0x110] sm:$0xff]
    %v60 = vld [vmem:[%s0 + $0x118] sm:$0xff]
    %v61 = vld [vmem:[%s0 + $0x120] sm:$0xff]
    %v62 = vld [vmem:[%s0 + $0x128] sm:$0xff]
    %v63 = vld [vmem:[%s0 + $0x130] sm:$0xff]
    %v64 = vld [vmem:[%s0 + $0x138] sm:$0xff]
    %v65 = vld [vmem:[%s0 + $0x140] sm:$0xff]
    %v66 = vld [vmem:[%s0 + $0x148] sm:$0xff]
    %v67 = vld [vmem:[%s0 + $0x150] sm:$0xff]
    %v68 = vld [vmem:[%s0 + $0x158] sm:$0xff]
    %v69 = vld [vmem:[%s0 + $0x160] sm:$0xff]
    %v70 = vld [vmem:[%s0 + $0x168] sm:$0xff]
    %v71 = vld [vmem:[%s0 + $0x170] sm:$0xff]
    %v72 = vld [vmem:[%s0 + $0x178] sm:$0xff]
    %v73 = vld [vmem:[%s0 + $0x180] sm:$0xff]
    %v74 = vld [vmem:[%s0 + $0x188] sm:$0xff]
    %v75 = vld [vmem:[%s0 + $0x190] sm:$0xff]
    %v76 = vld [vmem:[%s0 + $0x198] sm:$0xff]
    %v77 = vld [vmem:[%s0 + $0x1a0] sm:$0xff]
    %v78 = vld [vmem:[%s0 + $0x1a8] sm:$0xff]
    %v79 = vld [vmem:[%s0 + $0x1b0] sm:$0xff]
    %v80 = vld [vmem:[%s0 + $0x1b8] sm:$0xff]
    %v81 = vld [vmem:[%s0 + $0x1c0] sm:$0xff]
    %v82 = vld [vmem:[%s0 + $0x1c8] sm:$0xff]
    %v83 = vld [vmem:[%s0 + $0x1d0] sm:$0xff]
    %v84 = vld [vmem:[%s0 + $0x1d8] sm:$0xff]
    %v85 = vld [vmem:[%s0 + $0x1e0] sm:$0xff]
    %v86 = vld [vmem:[%s0 + $0x1e8] sm:$0xff]
    %v87 = vld [vmem:[%s0 + $0x1f0] sm:$0xff]
    %v88 = vld [vmem:[%s0 + $0x1f8] sm:$0xff]
    %v89 = vld [vmem:[%s0 + $0x200] sm:$0xff]
    %v90 = vld [vmem:[%s0 + $0x208] sm:$0xff]
    %v91 = vld [vmem:[%s0 + $0x210] sm:$0xff]
    %v92 = vld [vmem:[%s0 + $0x218] sm:$0xff]
    %v93 = vld [vmem:[%s0 + $0x220] sm:$0xff]
    %v94 = vld [vmem:[%s0 + $0x228] sm:$0xff]
    %v95 = vld [vmem:[%s0 + $0x230] sm:$0xff]
    %v96 = vld [vmem:[%s0 + $0x238] sm:$0xff]
    %v97 = vld [vmem:[%s0 + $0x240] sm:$0xff]
    %v98 = vld [vmem:[%s0 + $0x248] sm:$0xff]
    %v99 = vld [vmem:[%s0 + $0x250] sm:$0xff]
    %v100 = vld [vmem:[%s0 + $0x258] sm:$0xff]
    %v101 = vld [vmem:[%s0 + $0x260] sm:$0xff]
    %v102 = vld [vmem:[%s0 + $0x268] sm:$0xff]
    %v103 = vld [vmem:[%s0 + $0x270] sm:$0xff]
    %v104 = vld [vmem:[%s0 + $0x278] sm:$0xff]
    %v105 = vld [vmem:[%s0 + $0x280] sm:$0xff]
    %v106 = vld [vmem:[%s0 + $0x288] sm:$0xff]
    %v107 = vld [vmem:[%s0 + $0x290] sm:$0xff]
    %v108 = vld [vmem:[%s0 + $0x298] sm:$0xff]
    %v109 = vld [vmem:[%s0 + $0x2a0] sm:$0xff]
    %v110 = vld [vmem:[%s0 + $0x2a8] sm:$0xff]
    %v111 = vld [vmem:[%s0 + $0x2b0] sm:$0xff]
    %v112 = vld [vmem:[%s0 + $0x2b8] sm:$0xff]
    %v113 = vld [vmem:[%s0 + $0x2c0] sm:$0xff]
    %v114 = vld [vmem:[%s0 + $0x2c8] sm:$0xff]
    %v115 = vld [vmem:[%s0 + $0x2d0] sm:$0xff]
    %v116 = vld [vmem:[%s0 + $0x2d8] sm:$0xff]
    %v117 = vld [vmem:[%s0 + $0x2e0] sm:$0xff]
    %v118 = vld [vmem:[%s0 + $0x2e8] sm:$0xff]
    %v119 = vld [vmem:[%s0 + $0x2f0] sm:$0xff]
    %v120 = vld [vmem:[%s0 + $0x2f8] sm:$0xff]
    %v121 = vld [vmem:[%s0 + $0x300] sm:$0xff]
    %v122 = vld [vmem:[%s0 + $0x308] sm:$0xff]
    %v123 = vld [vmem:[%s0 + $0x310] sm:$0xff]
    %v124 = vld [vmem:[%s0 + $0x318] sm:$0xff]
    %v125 = vld [vmem:[%s0 + $0x320] sm:$0xff]
    %v126 = vld [vmem:[%s0 + $0x328] sm:$0xff]
    %v127 = vld [vmem:[%s0 + $0x330] sm:$0xff]
    %v128 = vld [vmem:[%s0 + $0x338] sm:$0xff]
    %v129 = vld [vmem:[%s0 + $0x340] sm:$0xff]
    %v130 = vld [vmem:[%s0 + $0x348] sm:$0xff]
    %v131 = vld [vmem:[%s0 + $0x350] sm:$0xff]
    %v132 = vld [vmem:[%s0 + $0x358] sm:$0xff]
    %v133 = vld [vmem:[%s0 + $0x360] sm:$0xff]
    %v134 = vld [vmem:[%s0 + $0x368] sm:$0xff]
    %v135 = vld [vmem:[%s0 + $0x370] sm:$0xff]
    %v136 = vld [vmem:[%s0 + $0x378] sm:$0xff]
    %v137 = vld [vmem:[%s0 + $0x380] sm:$0xff]
    %v138 = vld [vmem:[%s0 + $0x388] sm:$0xff]
    %v139 = vld [vmem:[%s0 + $0x390] sm:$0xff]
    %v140 = vld [vmem:[%s0 + $0x398] sm:$0xff]
    %v141 = vld [vmem:[%s0 + $0x3a0] sm:$0xff]
    %v142 = vld [vmem:[%s0 + $0x3a8] sm:$0xff]
    %v143 = vld [vmem:[%s0 + $0x3b0] sm:$0xff]
    %v144 = vld [vmem:[%s0 + $0x3b8] sm:$0xff]
    %v145 = vld [vmem:[%s0 + $0x3c0] sm:$0xff]
    %v146 = vld [vmem:[%s0 + $0x3c8] sm:$0xff]
    %v147 = vld [vmem:[%s0 + $0x3d0] sm:$0xff]
    %v148 = vld [vmem:[%s0 + $0x3d8] sm:$0xff]
    %v149 = vld [vmem:[%s0 + $0x3e0] sm:$0xff]
    %v150 = vld [vmem:[%s0 + $0x3e8] sm:$0xff]
    %v151 = vld [vmem:[%s0 + $0x3f0] sm:$0xff]
    %v152 = vld [vmem:[%s0 + $0x3f8] sm:$0xff]
    %v153 = vld [vmem:[%s0 + $0x400] sm:$0xff]
    %v154 = vld [vmem:[%s0 + $0x408] sm:$0xff]
    %v155 = vld [vmem:[%s0 + $0x410] sm:$0xff]
    %v156 = vld [vmem:[%s0 + $0x418] sm:$0xff]
    %v157 = vld [vmem:[%s0 + $0x420] sm:$0xff]
    %v158 = vld [vmem:[%s0 + $0x428] sm:$0xff]
    %v159 = vld [vmem:[%s0 + $0x430] sm:$0xff]
    %v160 = vld [vmem:[%s0 + $0x438] sm:$0xff]
    %v161 = vld [vmem:[%s0 + $0x440] sm:$0xff]
    %v162 = vld [vmem:[%s0 + $0x448] sm:$0xff]
    %v163 = vld [vmem:[%s0 + $0x450] sm:$0xff]
    %v164 = vld [vmem:[%s0 + $0x458] sm:$0xff]
    %v165 = vld [vmem:[%s0 + $0x460] sm:$0xff]
    %v166 = vld [vmem:[%s0 + $0x468] sm:$0xff]
    %v167 = vld [vmem:[%s0 + $0x470] sm:$0xff]
    %v168 = vld [vmem:[%s0 + $0x478] sm:$0xff]
    %v169 = vld [vmem:[#allocation2] sm:$0xff]
    %v170 = vld [vmem:[#allocation2 + $0x8] sm:$0xff]
    %v171 = vld [vmem:[#allocation2 + $0x10] sm:$0xff]
    %v172 = vld [vmem:[#allocation2 + $0x18] sm:$0xff]
    %v173 = vld [vmem:[#allocation2 + $0x20] sm:$0xff]
    %v174 = vld [vmem:[#allocation2 + $0x28] sm:$0xff]
    %v175 = vld [vmem:[#allocation2 + $0x30] sm:$0xff]
    %v176 = vld [vmem:[#allocation2 + $0x38] sm:$0xff]
    %v177 = vld [vmem:[#allocation2 + $0x40] sm:$0xff]
    %v178 = vld [vmem:[#allocation2 + $0x48] sm:$0xff]
    %v179 = vld [vmem:[#allocation2 + $0x50] sm:$0xff]
    %v180 = vld [vmem:[#allocation2 + $0x58] sm:$0xff]
    %v181 = vld [vmem:[#allocation2 + $0x60] sm:$0xff]
    %v182 = vld [vmem:[#allocation2 + $0x68] sm:$0xff]
    %v183 = vld [vmem:[#allocation2 + $0x70] sm:$0xff]
    %v184 = vld [vmem:[#allocation2 + $0x78] sm:$0xff]
    %v185 = vld [vmem:[#allocation2 + $0x80] sm:$0xff]
    %v186 = vld [vmem:[#allocation2 + $0x88] sm:$0xff]
    %v187 = vld [vmem:[#allocation2 + $0x90] sm:$0xff]
    %v188 = vld [vmem:[#allocation2 + $0x98] sm:$0xff]
    %v189 = vld [vmem:[#allocation2 + $0xa0] sm:$0xff]
    %v190 = vld [vmem:[#allocation2 + $0xa8] sm:$0xff]
    %v191 = vld [vmem:[#allocation2 + $0xb0] sm:$0xff]
    %v192 = vld [vmem:[#allocation2 + $0xb8] sm:$0xff]
    %v193 = vld [vmem:[#allocation2 + $0xc0] sm:$0xff]
    %v194 = vld [vmem:[#allocation2 + $0xc8] sm:$0xff]
    %v195 = vld [vmem:[#allocation2 + $0xd0] sm:$0xff]
    %v196 = vld [vmem:[#allocation2 + $0xd8] sm:$0xff]
    %v197 = vld [vmem:[#allocation2 + $0xe0] sm:$0xff]
    %v198 = vld [vmem:[#allocation2 + $0xe8] sm:$0xff]
    %v199 = vld [vmem:[#allocation2 + $0xf0] sm:$0xff]
    %v200 = vld [vmem:[#allocation2 + $0xf8] sm:$0xff]
    %v201 = vld [vmem:[#allocation2 + $0x100] sm:$0xff]
    %v202 = vld [vmem:[#allocation2 + $0x108] sm:$0xff]
    %v203 = vld [vmem:[#allocation2 + $0x110] sm:$0xff]
    %v204 = vld [vmem:[#allocation2 + $0x118] sm:$0xff]
    %v205 = vld [vmem:[#allocation2 + $0x120] sm:$0xff]
    %v206 = vld [vmem:[#allocation2 + $0x128] sm:$0xff]
    %v207 = vld [vmem:[#allocation2 + $0x130] sm:$0xff]
    %v208 = vld [vmem:[#allocation2 + $0x138] sm:$0xff]
    %v209 = vld [vmem:[#allocation2 + $0x140] sm:$0xff]
    %v210 = vld [vmem:[#allocation2 + $0x148] sm:$0xff]
    %v211 = vld [vmem:[#allocation2 + $0x150] sm:$0xff]
    %v212 = vld [vmem:[#allocation2 + $0x158] sm:$0xff]
    %v213 = vld [vmem:[#allocation2 + $0x160] sm:$0xff]
    %v214 = vld [vmem:[#allocation2 + $0x168] sm:$0xff]
    %v215 = vld [vmem:[#allocation2 + $0x170] sm:$0xff]
    %v216 = vld [vmem:[#allocation2 + $0x178] sm:$0xff]
    %v217 = vld [vmem:[#allocation2 + $0x180] sm:$0xff]
    %v218 = vld [vmem:[#allocation2 + $0x188] sm:$0xff]
    %v219 = vld [vmem:[#allocation2 + $0x190] sm:$0xff]
    %v220 = vld [vmem:[#allocation2 + $0x198] sm:$0xff]
    %v221 = vld [vmem:[#allocation2 + $0x1a0] sm:$0xff]
    %v222 = vld [vmem:[#allocation2 + $0x1a8] sm:$0xff]
    %v223 = vld [vmem:[#allocation2 + $0x1b0] sm:$0xff]
    %v224 = vld [vmem:[#allocation2 + $0x1b8] sm:$0xff]
    %v225 = vld [vmem:[#allocation2 + $0x1c0] sm:$0xff]
    %v226 = vld [vmem:[#allocation2 + $0x1c8] sm:$0xff]
    %v227 = vld [vmem:[#allocation2 + $0x1d0] sm:$0xff]
    %v228 = vld [vmem:[#allocation2 + $0x1d8] sm:$0xff]
    %v229 = vld [vmem:[#allocation2 + $0x1e0] sm:$0xff]
    %v230 = vld [vmem:[#allocation2 + $0x1e8] sm:$0xff]
    %v231 = vld [vmem:[#allocation2 + $0x1f0] sm:$0xff]
    %v232 = vld [vmem:[#allocation2 + $0x1f8] sm:$0xff]
    %v233 = vld [vmem:[#allocation2 + $0x200] sm:$0xff]
    %v234 = vld [vmem:[#allocation2 + $0x208] sm:$0xff]
    %v235 = vld [vmem:[#allocation2 + $0x210] sm:$0xff]
    %v236 = vld [vmem:[#allocation2 + $0x218] sm:$0xff]
    %v237 = vld [vmem:[#allocation2 + $0x220] sm:$0xff]
    %v238 = vld [vmem:[#allocation2 + $0x228] sm:$0xff]
    %v239 = vld [vmem:[#allocation2 + $0x230] sm:$0xff]
    %v240 = vld [vmem:[#allocation2 + $0x238] sm:$0xff]
    %v241 = vld [vmem:[#allocation2 + $0x240] sm:$0xff]
    %v242 = vld [vmem:[#allocation2 + $0x248] sm:$0xff]
    %v243 = vld [vmem:[#allocation2 + $0x250] sm:$0xff]
    %v244 = vld [vmem:[#allocation2 + $0x258] sm:$0xff]
    %v245 = vld [vmem:[#allocation2 + $0x260] sm:$0xff]
    %v246 = vld [vmem:[#allocation2 + $0x268] sm:$0xff]
    %v247 = vld [vmem:[#allocation2 + $0x270] sm:$0xff]
    %v248 = vld [vmem:[#allocation2 + $0x278] sm:$0xff]
    %v249 = vld [vmem:[#allocation2 + $0x280] sm:$0xff]
    %v250 = vld [vmem:[#allocation2 + $0x288] sm:$0xff]
    %v251 = vld [vmem:[#allocation2 + $0x290] sm:$0xff]
    %v252 = vld [vmem:[#allocation2 + $0x298] sm:$0xff]
    %v253 = vld [vmem:[#allocation2 + $0x2a0] sm:$0xff]
    %v254 = vld [vmem:[#allocation2 + $0x2a8] sm:$0xff]
    %v255 = vld [vmem:[#allocation2 + $0x2b0] sm:$0xff]
    %v256 = vld [vmem:[#allocation2 + $0x2b8] sm:$0xff]
    %v257 = vld [vmem:[#allocation2 + $0x2c0] sm:$0xff]
    %v258 = vld [vmem:[#allocation2 + $0x2c8] sm:$0xff]
    %v259 = vld [vmem:[#allocation2 + $0x2d0] sm:$0xff]
    %v260 = vld [vmem:[#allocation2 + $0x2d8] sm:$0xff]
    %v261 = vld [vmem:[#allocation2 + $0x2e0] sm:$0xff]
    %v262 = vld [vmem:[#allocation2 + $0x2e8] sm:$0xff]
    %v263 = vld [vmem:[#allocation2 + $0x2f0] sm:$0xff]
    %v264 = vld [vmem:[#allocation2 + $0x2f8] sm:$0xff]
    %v265 = vld [vmem:[#allocation2 + $0x300] sm:$0xff]
    %v266 = vld [vmem:[#allocation2 + $0x308] sm:$0xff]
    %v267 = vld [vmem:[#allocation2 + $0x310] sm:$0xff]
    %v268 = vld [vmem:[#allocation2 + $0x318] sm:$0xff]
    %v269 = vld [vmem:[#allocation2 + $0x320] sm:$0xff]
    %v270 = vld [vmem:[#allocation2 + $0x328] sm:$0xff]
    %v271 = vld [vmem:[#allocation2 + $0x330] sm:$0xff]
    %v272 = vld [vmem:[#allocation2 + $0x338] sm:$0xff]
    %v273 = vld [vmem:[#allocation2 + $0x340] sm:$0xff]
    %v274 = vld [vmem:[#allocation2 + $0x348] sm:$0xff]
    %v275 = vld [vmem:[#allocation2 + $0x350] sm:$0xff]
    %v276 = vld [vmem:[#allocation2 + $0x358] sm:$0xff]
    %v277 = vld [vmem:[#allocation2 + $0x360] sm:$0xff]
    %v278 = vld [vmem:[#allocation2 + $0x368] sm:$0xff]
    %v279 = vld [vmem:[#allocation2 + $0x370] sm:$0xff]
    %v280 = vld [vmem:[#allocation2 + $0x378] sm:$0xff]
    %v281 = vld [vmem:[#allocation2 + $0x380] sm:$0xff]
    %v282 = vld [vmem:[#allocation2 + $0x388] sm:$0xff]
    %v283 = vld [vmem:[#allocation2 + $0x390] sm:$0xff]
    %v284 = vld [vmem:[#allocation2 + $0x398] sm:$0xff]
    %v285 = vld [vmem:[#allocation2 + $0x3a0] sm:$0xff]
    %v286 = vld [vmem:[#allocation2 + $0x3a8] sm:$0xff]
    %v287 = vld [vmem:[#allocation2 + $0x3b0] sm:$0xff]
    %v288 = vld [vmem:[#allocation2 + $0x3b8] sm:$0xff]
    %v289 = vld [vmem:[#allocation2 + $0x3c0] sm:$0xff]
    %v290 = vld [vmem:[#allocation2 + $0x3c8] sm:$0xff]
    %v291 = vld [vmem:[#allocation2 + $0x3d0] sm:$0xff]
    %v292 = vld [vmem:[#allocation2 + $0x3d8] sm:$0xff]
    %v293 = vld [vmem:[#allocation2 + $0x3e0] sm:$0xff]
    %v294 = vld [vmem:[#allocation2 + $0x3e8] sm:$0xff]
    %v295 = vld [vmem:[#allocation2 + $0x3f0] sm:$0xff]
    %v296 = vld [vmem:[#allocation2 + $0x3f8] sm:$0xff]
    %v297 = vld [vmem:[#allocation2 + $0x400] sm:$0xff]
    %v298 = vld [vmem:[#allocation2 + $0x408] sm:$0xff]
    %v299 = vld [vmem:[#allocation2 + $0x410] sm:$0xff]
    %v300 = vld [vmem:[#allocation2 + $0x418] sm:$0xff]
    %v301 = vld [vmem:[#allocation2 + $0x420] sm:$0xff]
    %v302 = vld [vmem:[#allocation2 + $0x428] sm:$0xff]
    %v303 = vld [vmem:[#allocation2 + $0x430] sm:$0xff]
    %v304 = vld [vmem:[#allocation2 + $0x438] sm:$0xff]
    %v305 = vld [vmem:[#allocation2 + $0x440] sm:$0xff]
    %v306 = vld [vmem:[#allocation2 + $0x448] sm:$0xff]
    %v307 = vld [vmem:[#allocation2 + $0x450] sm:$0xff]
    %v308 = vld [vmem:[#allocation2 + $0x458] sm:$0xff]
    %v309 = vld [vmem:[#allocation2 + $0x460] sm:$0xff]
    %v310 = vld [vmem:[#allocation2 + $0x468] sm:$0xff]
    %v311 = vld [vmem:[#allocation2 + $0x470] sm:$0xff]
    %v312 = vld [vmem:[#allocation2 + $0x478] sm:$0xff]
    %313 = vmatprep.subr.mxu0 0.0
    %314 = vmatpush1.msra.mxu0 %v184
    %315 = vmatprep.subr.mxu0 0.0
    %316 = vmatpush1.msra.mxu0 %v183
    %317 = vmatprep.subr.mxu0 0.0
    %318 = vmatpush1.msra.mxu0 %v182
    %319 = vmatprep.subr.mxu0 0.0
    %320 = vmatpush1.msra.mxu0 %v181
    %321 = vmatprep.subr.mxu0 0.0
    %322 = vmatpush1.msra.mxu0 %v180
    %323 = vmatprep.subr.mxu0 0.0
    %324 = vmatpush1.msra.mxu0 %v179
    %325 = vmatprep.subr.mxu0 0.0
    %326 = vmatpush1.msra.mxu0 %v178
    %327 = vmatprep.subr.mxu0 0.0
    %328 = vmatpush1.msra.mxu0 %v177
    %329 = vmatprep.subr.mxu0 0.0
    %330 = vmatpush1.msra.mxu0 %v176
    %331 = vmatprep.subr.mxu0 0.0
    %332 = vmatpush1.msra.mxu0 %v175
    %333 = vmatprep.subr.mxu0 0.0
    %334 = vmatpush1.msra.mxu0 %v174
    %335 = vmatprep.subr.mxu0 0.0
    %336 = vmatpush1.msra.mxu0 %v173
    %337 = vmatprep.subr.mxu0 0.0
    %338 = vmatpush1.msra.mxu0 %v172
    %339 = vmatprep.subr.mxu0 0.0
    %340 = vmatpush1.msra.mxu0 %v171
    %341 = vmatprep.subr.mxu0 0.0
    %342 = vmatpush1.msra.mxu0 %v170
    %343 = vmatprep.subr.mxu0 0.0
    %344 = vmatpush1.msra.mxu0 %v169
    %345 = vmatprep.subr.mxu0 0.0
    %346 = vmatpush2.msra.mxu0 %v200
    %347 = vmatprep.subr.mxu0 0.0
    %348 = vmatpush2.msra.mxu0 %v199
    %349 = vmatprep.subr.mxu0 0.0
    %350 = vmatpush2.msra.mxu0 %v198
    %351 = vmatprep.subr.mxu0 0.0
    %352 = vmatpush2.msra.mxu0 %v197
    %353 = vmatprep.subr.mxu0 0.0
    %354 = vmatpush2.msra.mxu0 %v196
    %355 = vmatprep.subr.mxu0 0.0
    %356 = vmatpush2.msra.mxu0 %v195
    %357 = vmatprep.subr.mxu0 0.0
    %358 = vmatpush2.msra.mxu0 %v194
    %359 = vmatprep.subr.mxu0 0.0
    %360 = vmatpush2.msra.mxu0 %v193
    %361 = vmatprep.subr.mxu0 0.0
    %362 = vmatpush2.msra.mxu0 %v192
    %363 = vmatprep.subr.mxu0 0.0
    %364 = vmatpush2.msra.mxu0 %v191
    %365 = vmatprep.subr.mxu0 0.0
    %366 = vmatpush2.msra.mxu0 %v190
    %367 = vmatprep.subr.mxu0 0.0
    %368 = vmatpush2.msra.mxu0 %v189
    %369 = vmatprep.subr.mxu0 0.0
    %370 = vmatpush2.msra.mxu0 %v188
    %371 = vmatprep.subr.mxu0 0.0
    %372 = vmatpush2.msra.mxu0 %v187
    %373 = vmatprep.subr.mxu0 0.0
    %374 = vmatpush2.msra.mxu0 %v186
    %375 = vmatprep.subr.mxu0 0.0
    %376 = vmatpush2.msra.mxu0 %v185
    %377 = vmatprep.mubr.f32.mxu0 %v26
    %378 = vmatmul.mubr.f32.gmra.mxu0 %v25
    %v379 = vpop.f32.mrf.mxu0
    %v380 = vadd.f32 0.0, %v379
    %v381 = vpop.f32.mrf.mxu0
    %382 = vmatprep.mubr.f32.mxu0 %v35
    %383 = vmatmul.mubr.f32.gmra.mxu0 %v34
    %v384 = vpop.f32.mrf.mxu0
    %v385 = vadd.f32 0.0, %v384
    %v386 = vpop.f32.mrf.mxu0
    %387 = vmatprep.mubr.f32.mxu0 %v44
    %388 = vmatmul.mubr.f32.gmra.mxu0 %v43
    %v389 = vpop.f32.mrf.mxu0
    %v390 = vadd.f32 0.0, %v389
    %v391 = vpop.f32.mrf.mxu0
    %392 = vmatprep.mubr.f32.mxu0 %v53
    %393 = vmatmul.mubr.f32.gmra.mxu0 %v52
    %v394 = vpop.f32.mrf.mxu0
    %v395 = vadd.f32 0.0, %v394
    %v396 = vpop.f32.mrf.mxu0
    %397 = vmatprep.mubr.f32.mxu0 %v62
    %398 = vmatmul.mubr.f32.gmra.mxu0 %v61
    %v399 = vpop.f32.mrf.mxu0
    %v400 = vadd.f32 0.0, %v399
    %v401 = vpop.f32.mrf.mxu0
    %402 = vmatprep.mubr.f32.mxu0 %v71
    %403 = vmatmul.mubr.f32.gmra.mxu0 %v70
    %v404 = vpop.f32.mrf.mxu0
    %v405 = vadd.f32 0.0, %v404
    %v406 = vpop.f32.mrf.mxu0
    %407 = vmatprep.mubr.f32.mxu0 %v80
    %408 = vmatmul.mubr.f32.gmra.mxu0 %v79
    %v409 = vpop.f32.mrf.mxu0
    %v410 = vadd.f32 0.0, %v409
    %v411 = vpop.f32.mrf.mxu0
    %412 = vmatprep.mubr.f32.mxu0 %v89
    %413 = vmatmul.mubr.f32.gmra.mxu0 %v88
    %v414 = vpop.f32.mrf.mxu0
    %v415 = vadd.f32 0.0, %v414
    %v416 = vpop.f32.mrf.mxu0
    %417 = vmatprep.mubr.f32.mxu0 %v98
    %418 = vmatmul.mubr.f32.gmra.mxu0 %v97
    %v419 = vpop.f32.mrf.mxu0
    %v420 = vadd.f32 0.0, %v419
    %v421 = vpop.f32.mrf.mxu0
    %422 = vmatprep.mubr.f32.mxu0 %v107
    %423 = vmatmul.mubr.f32.gmra.mxu0 %v106
    %v424 = vpop.f32.mrf.mxu0
    %v425 = vadd.f32 0.0, %v424
    %v426 = vpop.f32.mrf.mxu0
    %427 = vmatprep.mubr.f32.mxu0 %v116
    %428 = vmatmul.mubr.f32.gmra.mxu0 %v115
    %v429 = vpop.f32.mrf.mxu0
    %v430 = vadd.f32 0.0, %v429
    %v431 = vpop.f32.mrf.mxu0
    %432 = vmatprep.mubr.f32.mxu0 %v125
    %433 = vmatmul.mubr.f32.gmra.mxu0 %v124
    %v434 = vpop.f32.mrf.mxu0
    %v435 = vadd.f32 0.0, %v434
    %v436 = vpop.f32.mrf.mxu0
    %437 = vmatprep.mubr.f32.mxu0 %v134
    %438 = vmatmul.mubr.f32.gmra.mxu0 %v133
    %v439 = vpop.f32.mrf.mxu0
    %v440 = vadd.f32 0.0, %v439
    %v441 = vpop.f32.mrf.mxu0
    %442 = vmatprep.mubr.f32.mxu0 %v143
    %443 = vmatmul.mubr.f32.gmra.mxu0 %v142
    %v444 = vpop.f32.mrf.mxu0
    %v445 = vadd.f32 0.0, %v444
    %v446 = vpop.f32.mrf.mxu0
    %447 = vmatprep.mubr.f32.mxu0 %v152
    %448 = vmatmul.mubr.f32.gmra.mxu0 %v151
    %v449 = vpop.f32.mrf.mxu0
    %v450 = vadd.f32 0.0, %v449
    %v451 = vpop.f32.mrf.mxu0
    %452 = vmatprep.mubr.f32.mxu0 %v161
    %453 = vmatmul.mubr.f32.gmra.mxu0 %v160
    %v454 = vpop.f32.mrf.mxu0
    %v455 = vadd.f32 0.0, %v454
    %v456 = vpop.f32.mrf.mxu0
    %457 = vdwg.mxu0
    %458 = vmatprep.subr.mxu0 0.0
    %459 = vmatpush1.msra.mxu0 %v216
    %460 = vmatprep.subr.mxu0 0.0
    %461 = vmatpush1.msra.mxu0 %v215
    %462 = vmatprep.subr.mxu0 0.0
    %463 = vmatpush1.msra.mxu0 %v214
    %464 = vmatprep.subr.mxu0 0.0
    %465 = vmatpush1.msra.mxu0 %v213
    %466 = vmatprep.subr.mxu0 0.0
    %467 = vmatpush1.msra.mxu0 %v212
    %468 = vmatprep.subr.mxu0 0.0
    %469 = vmatpush1.msra.mxu0 %v211
    %470 = vmatprep.subr.mxu0 0.0
    %471 = vmatpush1.msra.mxu0 %v210
    %472 = vmatprep.subr.mxu0 0.0
    %473 = vmatpush1.msra.mxu0 %v209
    %474 = vmatprep.subr.mxu0 0.0
    %475 = vmatpush1.msra.mxu0 %v208
    %476 = vmatprep.subr.mxu0 0.0
    %477 = vmatpush1.msra.mxu0 %v207
    %478 = vmatprep.subr.mxu0 0.0
    %479 = vmatpush1.msra.mxu0 %v206
    %480 = vmatprep.subr.mxu0 0.0
    %481 = vmatpush1.msra.mxu0 %v205
    %482 = vmatprep.subr.mxu0 0.0
    %483 = vmatpush1.msra.mxu0 %v204
    %484 = vmatprep.subr.mxu0 0.0
    %485 = vmatpush1.msra.mxu0 %v203
    %486 = vmatprep.subr.mxu0 0.0
    %487 = vmatpush1.msra.mxu0 %v202
    %488 = vmatprep.subr.mxu0 0.0
    %489 = vmatpush1.msra.mxu0 %v201
    %490 = vmatprep.subr.mxu0 0.0
    %491 = vmatpush2.msra.mxu0 %v232
    %492 = vmatprep.subr.mxu0 0.0
    %493 = vmatpush2.msra.mxu0 %v231
    %494 = vmatprep.subr.mxu0 0.0
    %495 = vmatpush2.msra.mxu0 %v230
    %496 = vmatprep.subr.mxu0 0.0
    %497 = vmatpush2.msra.mxu0 %v229
    %498 = vmatprep.subr.mxu0 0.0
    %499 = vmatpush2.msra.mxu0 %v228
    %500 = vmatprep.subr.mxu0 0.0
    %501 = vmatpush2.msra.mxu0 %v227
    %502 = vmatprep.subr.mxu0 0.0
    %503 = vmatpush2.msra.mxu0 %v226
    %504 = vmatprep.subr.mxu0 0.0
    %505 = vmatpush2.msra.mxu0 %v225
    %506 = vmatprep.subr.mxu0 0.0
    %507 = vmatpush2.msra.mxu0 %v224
    %508 = vmatprep.subr.mxu0 0.0
    %509 = vmatpush2.msra.mxu0 %v223
    %510 = vmatprep.subr.mxu0 0.0
    %511 = vmatpush2.msra.mxu0 %v222
    %512 = vmatprep.subr.mxu0 0.0
    %513 = vmatpush2.msra.mxu0 %v221
    %514 = vmatprep.subr.mxu0 0.0
    %515 = vmatpush2.msra.mxu0 %v220
    %516 = vmatprep.subr.mxu0 0.0
    %517 = vmatpush2.msra.mxu0 %v219
    %518 = vmatprep.subr.mxu0 0.0
    %519 = vmatpush2.msra.mxu0 %v218
    %520 = vmatprep.subr.mxu0 0.0
    %521 = vmatpush2.msra.mxu0 %v217
    %522 = vmatprep.mubr.f32.mxu0 %v28
    %523 = vmatmul.mubr.f32.gmra.mxu0 %v27
    %v524 = vpop.f32.mrf.mxu0
    %v525 = vadd.f32 %v380, %v524
    %v526 = vpop.f32.mrf.mxu0
    %527 = vmatprep.mubr.f32.mxu0 %v37
    %528 = vmatmul.mubr.f32.gmra.mxu0 %v36
    %v529 = vpop.f32.mrf.mxu0
    %v530 = vadd.f32 %v385, %v529
    %v531 = vpop.f32.mrf.mxu0
    %532 = vmatprep.mubr.f32.mxu0 %v46
    %533 = vmatmul.mubr.f32.gmra.mxu0 %v45
    %v534 = vpop.f32.mrf.mxu0
    %v535 = vadd.f32 %v390, %v534
    %v536 = vpop.f32.mrf.mxu0
    %537 = vmatprep.mubr.f32.mxu0 %v55
    %538 = vmatmul.mubr.f32.gmra.mxu0 %v54
    %v539 = vpop.f32.mrf.mxu0
    %v540 = vadd.f32 %v395, %v539
    %v541 = vpop.f32.mrf.mxu0
    %542 = vmatprep.mubr.f32.mxu0 %v64
    %543 = vmatmul.mubr.f32.gmra.mxu0 %v63
    %v544 = vpop.f32.mrf.mxu0
    %v545 = vadd.f32 %v400, %v544
    %v546 = vpop.f32.mrf.mxu0
    %547 = vmatprep.mubr.f32.mxu0 %v73
    %548 = vmatmul.mubr.f32.gmra.mxu0 %v72
    %v549 = vpop.f32.mrf.mxu0
    %v550 = vadd.f32 %v405, %v549
    %v551 = vpop.f32.mrf.mxu0
    %552 = vmatprep.mubr.f32.mxu0 %v82
    %553 = vmatmul.mubr.f32.gmra.mxu0 %v81
    %v554 = vpop.f32.mrf.mxu0
    %v555 = vadd.f32 %v410, %v554
    %v556 = vpop.f32.mrf.mxu0
    %557 = vmatprep.mubr.f32.mxu0 %v91
    %558 = vmatmul.mubr.f32.gmra.mxu0 %v90
    %v559 = vpop.f32.mrf.mxu0
    %v560 = vadd.f32 %v415, %v559
    %v561 = vpop.f32.mrf.mxu0
    %562 = vmatprep.mubr.f32.mxu0 %v100
    %563 = vmatmul.mubr.f32.gmra.mxu0 %v99
    %v564 = vpop.f32.mrf.mxu0
    %v565 = vadd.f32 %v420, %v564
    %v566 = vpop.f32.mrf.mxu0
    %567 = vmatprep.mubr.f32.mxu0 %v109
    %568 = vmatmul.mubr.f32.gmra.mxu0 %v108
    %v569 = vpop.f32.mrf.mxu0
    %v570 = vadd.f32 %v425, %v569
    %v571 = vpop.f32.mrf.mxu0
    %572 = vmatprep.mubr.f32.mxu0 %v118
    %573 = vmatmul.mubr.f32.gmra.mxu0 %v117
    %v574 = vpop.f32.mrf.mxu0
    %v575 = vadd.f32 %v430, %v574
    %v576 = vpop.f32.mrf.mxu0
    %577 = vmatprep.mubr.f32.mxu0 %v127
    %578 = vmatmul.mubr.f32.gmra.mxu0 %v126
    %v579 = vpop.f32.mrf.mxu0
    %v580 = vadd.f32 %v435, %v579
    %v581 = vpop.f32.mrf.mxu0
    %582 = vmatprep.mubr.f32.mxu0 %v136
    %583 = vmatmul.mubr.f32.gmra.mxu0 %v135
    %v584 = vpop.f32.mrf.mxu0
    %v585 = vadd.f32 %v440, %v584
    %v586 = vpop.f32.mrf.mxu0
    %587 = vmatprep.mubr.f32.mxu0 %v145
    %588 = vmatmul.mubr.f32.gmra.mxu0 %v144
    %v589 = vpop.f32.mrf.mxu0
    %v590 = vadd.f32 %v445, %v589
    %v591 = vpop.f32.mrf.mxu0
    %592 = vmatprep.mubr.f32.mxu0 %v154
    %593 = vmatmul.mubr.f32.gmra.mxu0 %v153
    %v594 = vpop.f32.mrf.mxu0
    %v595 = vadd.f32 %v450, %v594
    %v596 = vpop.f32.mrf.mxu0
    %597 = vmatprep.mubr.f32.mxu0 %v163
    %598 = vmatmul.mubr.f32.gmra.mxu0 %v162
    %v599 = vpop.f32.mrf.mxu0
    %v600 = vadd.f32 %v455, %v599
    %v601 = vpop.f32.mrf.mxu0
    %602 = vdwg.mxu0
    %603 = vmatprep.subr.mxu0 0.0
    %604 = vmatpush1.msra.mxu0 %v248
    %605 = vmatprep.subr.mxu0 0.0
    %606 = vmatpush1.msra.mxu0 %v247
    %607 = vmatprep.subr.mxu0 0.0
    %608 = vmatpush1.msra.mxu0 %v246
    %609 = vmatprep.subr.mxu0 0.0
    %610 = vmatpush1.msra.mxu0 %v245
    %611 = vmatprep.subr.mxu0 0.0
    %612 = vmatpush1.msra.mxu0 %v244
    %613 = vmatprep.subr.mxu0 0.0
    %614 = vmatpush1.msra.mxu0 %v243
    %615 = vmatprep.subr.mxu0 0.0
    %616 = vmatpush1.msra.mxu0 %v242
    %617 = vmatprep.subr.mxu0 0.0
    %618 = vmatpush1.msra.mxu0 %v241
    %619 = vmatprep.subr.mxu0 0.0
    %620 = vmatpush1.msra.mxu0 %v240
    %621 = vmatprep.subr.mxu0 0.0
    %622 = vmatpush1.msra.mxu0 %v239
    %623 = vmatprep.subr.mxu0 0.0
    %624 = vmatpush1.msra.mxu0 %v238
    %625 = vmatprep.subr.mxu0 0.0
    %626 = vmatpush1.msra.mxu0 %v237
    %627 = vmatprep.subr.mxu0 0.0
    %628 = vmatpush1.msra.mxu0 %v236
    %629 = vmatprep.subr.mxu0 0.0
    %630 = vmatpush1.msra.mxu0 %v235
    %631 = vmatprep.subr.mxu0 0.0
    %632 = vmatpush1.msra.mxu0 %v234
    %633 = vmatprep.subr.mxu0 0.0
    %634 = vmatpush1.msra.mxu0 %v233
    %635 = vmatprep.subr.mxu0 0.0
    %636 = vmatpush2.msra.mxu0 %v264
    %637 = vmatprep.subr.mxu0 0.0
    %638 = vmatpush2.msra.mxu0 %v263
    %639 = vmatprep.subr.mxu0 0.0
    %640 = vmatpush2.msra.mxu0 %v262
    %641 = vmatprep.subr.mxu0 0.0
    %642 = vmatpush2.msra.mxu0 %v261
    %643 = vmatprep.subr.mxu0 0.0
    %644 = vmatpush2.msra.mxu0 %v260
    %645 = vmatprep.subr.mxu0 0.0
    %646 = vmatpush2.msra.mxu0 %v259
    %647 = vmatprep.subr.mxu0 0.0
    %648 = vmatpush2.msra.mxu0 %v258
    %649 = vmatprep.subr.mxu0 0.0
    %650 = vmatpush2.msra.mxu0 %v257
    %651 = vmatprep.subr.mxu0 0.0
    %652 = vmatpush2.msra.mxu0 %v256
    %653 = vmatprep.subr.mxu0 0.0
    %654 = vmatpush2.msra.mxu0 %v255
    %655 = vmatprep.subr.mxu0 0.0
    %656 = vmatpush2.msra.mxu0 %v254
    %657 = vmatprep.subr.mxu0 0.0
    %658 = vmatpush2.msra.mxu0 %v253
    %659 = vmatprep.subr.mxu0 0.0
    %660 = vmatpush2.msra.mxu0 %v252
    %661 = vmatprep.subr.mxu0 0.0
    %662 = vmatpush2.msra.mxu0 %v251
    %663 = vmatprep.subr.mxu0 0.0
    %664 = vmatpush2.msra.mxu0 %v250
    %665 = vmatprep.subr.mxu0 0.0
    %666 = vmatpush2.msra.mxu0 %v249
    %667 = vmatprep.mubr.f32.mxu0 %v30
    %668 = vmatmul.mubr.f32.gmra.mxu0 %v29
    %v669 = vpop.f32.mrf.mxu0
    %v670 = vadd.f32 %v525, %v669
    %v671 = vpop.f32.mrf.mxu0
    %672 = vmatprep.mubr.f32.mxu0 %v39
    %673 = vmatmul.mubr.f32.gmra.mxu0 %v38
    %v674 = vpop.f32.mrf.mxu0
    %v675 = vadd.f32 %v530, %v674
    %v676 = vpop.f32.mrf.mxu0
    %677 = vmatprep.mubr.f32.mxu0 %v48
    %678 = vmatmul.mubr.f32.gmra.mxu0 %v47
    %v679 = vpop.f32.mrf.mxu0
    %v680 = vadd.f32 %v535, %v679
    %v681 = vpop.f32.mrf.mxu0
    %682 = vmatprep.mubr.f32.mxu0 %v57
    %683 = vmatmul.mubr.f32.gmra.mxu0 %v56
    %v684 = vpop.f32.mrf.mxu0
    %v685 = vadd.f32 %v540, %v684
    %v686 = vpop.f32.mrf.mxu0
    %687 = vmatprep.mubr.f32.mxu0 %v66
    %688 = vmatmul.mubr.f32.gmra.mxu0 %v65
    %v689 = vpop.f32.mrf.mxu0
    %v690 = vadd.f32 %v545, %v689
    %v691 = vpop.f32.mrf.mxu0
    %692 = vmatprep.mubr.f32.mxu0 %v75
    %693 = vmatmul.mubr.f32.gmra.mxu0 %v74
    %v694 = vpop.f32.mrf.mxu0
    %v695 = vadd.f32 %v550, %v694
    %v696 = vpop.f32.mrf.mxu0
    %697 = vmatprep.mubr.f32.mxu0 %v84
    %698 = vmatmul.mubr.f32.gmra.mxu0 %v83
    %v699 = vpop.f32.mrf.mxu0
    %v700 = vadd.f32 %v555, %v699
    %v701 = vpop.f32.mrf.mxu0
    %702 = vmatprep.mubr.f32.mxu0 %v93
    %703 = vmatmul.mubr.f32.gmra.mxu0 %v92
    %v704 = vpop.f32.mrf.mxu0
    %v705 = vadd.f32 %v560, %v704
    %v706 = vpop.f32.mrf.mxu0
    %707 = vmatprep.mubr.f32.mxu0 %v102
    %708 = vmatmul.mubr.f32.gmra.mxu0 %v101
    %v709 = vpop.f32.mrf.mxu0
    %v710 = vadd.f32 %v565, %v709
    %v711 = vpop.f32.mrf.mxu0
    %712 = vmatprep.mubr.f32.mxu0 %v111
    %713 = vmatmul.mubr.f32.gmra.mxu0 %v110
    %v714 = vpop.f32.mrf.mxu0
    %v715 = vadd.f32 %v570, %v714
    %v716 = vpop.f32.mrf.mxu0
    %717 = vmatprep.mubr.f32.mxu0 %v120
    %718 = vmatmul.mubr.f32.gmra.mxu0 %v119
    %v719 = vpop.f32.mrf.mxu0
    %v720 = vadd.f32 %v575, %v719
    %v721 = vpop.f32.mrf.mxu0
    %722 = vmatprep.mubr.f32.mxu0 %v129
    %723 = vmatmul.mubr.f32.gmra.mxu0 %v128
    %v724 = vpop.f32.mrf.mxu0
    %v725 = vadd.f32 %v580, %v724
    %v726 = vpop.f32.mrf.mxu0
    %727 = vmatprep.mubr.f32.mxu0 %v138
    %728 = vmatmul.mubr.f32.gmra.mxu0 %v137
    %v729 = vpop.f32.mrf.mxu0
    %v730 = vadd.f32 %v585, %v729
    %v731 = vpop.f32.mrf.mxu0
    %732 = vmatprep.mubr.f32.mxu0 %v147
    %733 = vmatmul.mubr.f32.gmra.mxu0 %v146
    %v734 = vpop.f32.mrf.mxu0
    %v735 = vadd.f32 %v590, %v734
    %v736 = vpop.f32.mrf.mxu0
    %737 = vmatprep.mubr.f32.mxu0 %v156
    %738 = vmatmul.mubr.f32.gmra.mxu0 %v155
    %v739 = vpop.f32.mrf.mxu0
    %v740 = vadd.f32 %v595, %v739
    %v741 = vpop.f32.mrf.mxu0
    %742 = vmatprep.mubr.f32.mxu0 %v165
    %743 = vmatmul.mubr.f32.gmra.mxu0 %v164
    %v744 = vpop.f32.mrf.mxu0
    %v745 = vadd.f32 %v600, %v744
    %v746 = vpop.f32.mrf.mxu0
    %747 = vdwg.mxu0
    %748 = vmatprep.subr.mxu0 0.0
    %749 = vmatpush1.msra.mxu0 %v280
    %750 = vmatprep.subr.mxu0 0.0
    %751 = vmatpush1.msra.mxu0 %v279
    %752 = vmatprep.subr.mxu0 0.0
    %753 = vmatpush1.msra.mxu0 %v278
    %754 = vmatprep.subr.mxu0 0.0
    %755 = vmatpush1.msra.mxu0 %v277
    %756 = vmatprep.subr.mxu0 0.0
    %757 = vmatpush1.msra.mxu0 %v276
    %758 = vmatprep.subr.mxu0 0.0
    %759 = vmatpush1.msra.mxu0 %v275
    %760 = vmatprep.subr.mxu0 0.0
    %761 = vmatpush1.msra.mxu0 %v274
    %762 = vmatprep.subr.mxu0 0.0
    %763 = vmatpush1.msra.mxu0 %v273
    %764 = vmatprep.subr.mxu0 0.0
    %765 = vmatpush1.msra.mxu0 %v272
    %766 = vmatprep.subr.mxu0 0.0
    %767 = vmatpush1.msra.mxu0 %v271
    %768 = vmatprep.subr.mxu0 0.0
    %769 = vmatpush1.msra.mxu0 %v270
    %770 = vmatprep.subr.mxu0 0.0
    %771 = vmatpush1.msra.mxu0 %v269
    %772 = vmatprep.subr.mxu0 0.0
    %773 = vmatpush1.msra.mxu0 %v268
    %774 = vmatprep.subr.mxu0 0.0
    %775 = vmatpush1.msra.mxu0 %v267
    %776 = vmatprep.subr.mxu0 0.0
    %777 = vmatpush1.msra.mxu0 %v266
    %778 = vmatprep.subr.mxu0 0.0
    %779 = vmatpush1.msra.mxu0 %v265
    %780 = vmatprep.subr.mxu0 0.0
    %781 = vmatpush2.msra.mxu0 %v296
    %782 = vmatprep.subr.mxu0 0.0
    %783 = vmatpush2.msra.mxu0 %v295
    %784 = vmatprep.subr.mxu0 0.0
    %785 = vmatpush2.msra.mxu0 %v294
    %786 = vmatprep.subr.mxu0 0.0
    %787 = vmatpush2.msra.mxu0 %v293
    %788 = vmatprep.subr.mxu0 0.0
    %789 = vmatpush2.msra.mxu0 %v292
    %790 = vmatprep.subr.mxu0 0.0
    %791 = vmatpush2.msra.mxu0 %v291
    %792 = vmatprep.subr.mxu0 0.0
    %793 = vmatpush2.msra.mxu0 %v290
    %794 = vmatprep.subr.mxu0 0.0
    %795 = vmatpush2.msra.mxu0 %v289
    %796 = vmatprep.subr.mxu0 0.0
    %797 = vmatpush2.msra.mxu0 %v288
    %798 = vmatprep.subr.mxu0 0.0
    %799 = vmatpush2.msra.mxu0 %v287
    %800 = vmatprep.subr.mxu0 0.0
    %801 = vmatpush2.msra.mxu0 %v286
    %802 = vmatprep.subr.mxu0 0.0
    %803 = vmatpush2.msra.mxu0 %v285
    %804 = vmatprep.subr.mxu0 0.0
    %805 = vmatpush2.msra.mxu0 %v284
    %806 = vmatprep.subr.mxu0 0.0
    %807 = vmatpush2.msra.mxu0 %v283
    %808 = vmatprep.subr.mxu0 0.0
    %809 = vmatpush2.msra.mxu0 %v282
    %810 = vmatprep.subr.mxu0 0.0
    %811 = vmatpush2.msra.mxu0 %v281
    %812 = vmatprep.mubr.f32.mxu0 %v32
    %813 = vmatmul.mubr.f32.gmra.mxu0 %v31
    %v814 = vpop.f32.mrf.mxu0
    %v815 = vadd.f32 %v670, %v814
    %v816 = vpop.f32.mrf.mxu0
    %817 = vmatprep.mubr.f32.mxu0 %v41
    %818 = vmatmul.mubr.f32.gmra.mxu0 %v40
    %v819 = vpop.f32.mrf.mxu0
    %v820 = vadd.f32 %v675, %v819
    %v821 = vpop.f32.mrf.mxu0
    %822 = vmatprep.mubr.f32.mxu0 %v50
    %823 = vmatmul.mubr.f32.gmra.mxu0 %v49
    %v824 = vpop.f32.mrf.mxu0
    %v825 = vadd.f32 %v680, %v824
    %v826 = vpop.f32.mrf.mxu0
    %827 = vmatprep.mubr.f32.mxu0 %v59
    %828 = vmatmul.mubr.f32.gmra.mxu0 %v58
    %v829 = vpop.f32.mrf.mxu0
    %v830 = vadd.f32 %v685, %v829
    %v831 = vpop.f32.mrf.mxu0
    %832 = vmatprep.mubr.f32.mxu0 %v68
    %833 = vmatmul.mubr.f32.gmra.mxu0 %v67
    %v834 = vpop.f32.mrf.mxu0
    %v835 = vadd.f32 %v690, %v834
    %v836 = vpop.f32.mrf.mxu0
    %837 = vmatprep.mubr.f32.mxu0 %v77
    %838 = vmatmul.mubr.f32.gmra.mxu0 %v76
    %v839 = vpop.f32.mrf.mxu0
    %v840 = vadd.f32 %v695, %v839
    %v841 = vpop.f32.mrf.mxu0
    %842 = vmatprep.mubr.f32.mxu0 %v86
    %843 = vmatmul.mubr.f32.gmra.mxu0 %v85
    %v844 = vpop.f32.mrf.mxu0
    %v845 = vadd.f32 %v700, %v844
    %v846 = vpop.f32.mrf.mxu0
    %847 = vmatprep.mubr.f32.mxu0 %v95
    %848 = vmatmul.mubr.f32.gmra.mxu0 %v94
    %v849 = vpop.f32.mrf.mxu0
    %v850 = vadd.f32 %v705, %v849
    %v851 = vpop.f32.mrf.mxu0
    %852 = vmatprep.mubr.f32.mxu0 %v104
    %853 = vmatmul.mubr.f32.gmra.mxu0 %v103
    %v854 = vpop.f32.mrf.mxu0
    %v855 = vadd.f32 %v710, %v854
    %v856 = vpop.f32.mrf.mxu0
    %857 = vmatprep.mubr.f32.mxu0 %v113
    %858 = vmatmul.mubr.f32.gmra.mxu0 %v112
    %v859 = vpop.f32.mrf.mxu0
    %v860 = vadd.f32 %v715, %v859
    %v861 = vpop.f32.mrf.mxu0
    %862 = vmatprep.mubr.f32.mxu0 %v122
    %863 = vmatmul.mubr.f32.gmra.mxu0 %v121
    %v864 = vpop.f32.mrf.mxu0
    %v865 = vadd.f32 %v720, %v864
    %v866 = vpop.f32.mrf.mxu0
    %867 = vmatprep.mubr.f32.mxu0 %v131
    %868 = vmatmul.mubr.f32.gmra.mxu0 %v130
    %v869 = vpop.f32.mrf.mxu0
    %v870 = vadd.f32 %v725, %v869
    %v871 = vpop.f32.mrf.mxu0
    %872 = vmatprep.mubr.f32.mxu0 %v140
    %873 = vmatmul.mubr.f32.gmra.mxu0 %v139
    %v874 = vpop.f32.mrf.mxu0
    %v875 = vadd.f32 %v730, %v874
    %v876 = vpop.f32.mrf.mxu0
    %877 = vmatprep.mubr.f32.mxu0 %v149
    %878 = vmatmul.mubr.f32.gmra.mxu0 %v148
    %v879 = vpop.f32.mrf.mxu0
    %v880 = vadd.f32 %v735, %v879
    %v881 = vpop.f32.mrf.mxu0
    %882 = vmatprep.mubr.f32.mxu0 %v158
    %883 = vmatmul.mubr.f32.gmra.mxu0 %v157
    %v884 = vpop.f32.mrf.mxu0
    %v885 = vadd.f32 %v740, %v884
    %v886 = vpop.f32.mrf.mxu0
    %887 = vmatprep.mubr.f32.mxu0 %v167
    %888 = vmatmul.mubr.f32.gmra.mxu0 %v166
    %v889 = vpop.f32.mrf.mxu0
    %v890 = vadd.f32 %v745, %v889
    %v891 = vpop.f32.mrf.mxu0
    %892 = vdwg.mxu0
    %893 = vmatprep.subr.mxu0 0.0
    %894 = vmatpush1.msra.mxu0 %v312
    %895 = vmatprep.subr.mxu0 0.0
    %896 = vmatpush1.msra.mxu0 %v311
    %897 = vmatprep.subr.mxu0 0.0
    %898 = vmatpush1.msra.mxu0 %v310
    %899 = vmatprep.subr.mxu0 0.0
    %900 = vmatpush1.msra.mxu0 %v309
    %901 = vmatprep.subr.mxu0 0.0
    %902 = vmatpush1.msra.mxu0 %v308
    %903 = vmatprep.subr.mxu0 0.0
    %904 = vmatpush1.msra.mxu0 %v307
    %905 = vmatprep.subr.mxu0 0.0
    %906 = vmatpush1.msra.mxu0 %v306
    %907 = vmatprep.subr.mxu0 0.0
    %908 = vmatpush1.msra.mxu0 %v305
    %909 = vmatprep.subr.mxu0 0.0
    %910 = vmatpush1.msra.mxu0 %v304
    %911 = vmatprep.subr.mxu0 0.0
    %912 = vmatpush1.msra.mxu0 %v303
    %913 = vmatprep.subr.mxu0 0.0
    %914 = vmatpush1.msra.mxu0 %v302
    %915 = vmatprep.subr.mxu0 0.0
    %916 = vmatpush1.msra.mxu0 %v301
    %917 = vmatprep.subr.mxu0 0.0
    %918 = vmatpush1.msra.mxu0 %v300
    %919 = vmatprep.subr.mxu0 0.0
    %920 = vmatpush1.msra.mxu0 %v299
    %921 = vmatprep.subr.mxu0 0.0
    %922 = vmatpush1.msra.mxu0 %v298
    %923 = vmatprep.subr.mxu0 0.0
    %924 = vmatpush1.msra.mxu0 %v297
    %925 = vmatprep.subr.mxu0 0.0
    %926 = vmatpush2.msra.mxu0 0.0
    %927 = vmatprep.subr.mxu0 0.0
    %928 = vmatpush2.msra.mxu0 0.0
    %929 = vmatprep.subr.mxu0 0.0
    %930 = vmatpush2.msra.mxu0 0.0
    %931 = vmatprep.subr.mxu0 0.0
    %932 = vmatpush2.msra.mxu0 0.0
    %933 = vmatprep.subr.mxu0 0.0
    %934 = vmatpush2.msra.mxu0 0.0
    %935 = vmatprep.subr.mxu0 0.0
    %936 = vmatpush2.msra.mxu0 0.0
    %937 = vmatprep.subr.mxu0 0.0
    %938 = vmatpush2.msra.mxu0 0.0
    %939 = vmatprep.subr.mxu0 0.0
    %940 = vmatpush2.msra.mxu0 0.0
    %941 = vmatprep.subr.mxu0 0.0
    %942 = vmatpush2.msra.mxu0 0.0
    %943 = vmatprep.subr.mxu0 0.0
    %944 = vmatpush2.msra.mxu0 0.0
    %945 = vmatprep.subr.mxu0 0.0
    %946 = vmatpush2.msra.mxu0 0.0
    %947 = vmatprep.subr.mxu0 0.0
    %948 = vmatpush2.msra.mxu0 0.0
    %949 = vmatprep.subr.mxu0 0.0
    %950 = vmatpush2.msra.mxu0 0.0
    %951 = vmatprep.subr.mxu0 0.0
    %952 = vmatpush2.msra.mxu0 0.0
    %953 = vmatprep.subr.mxu0 0.0
    %954 = vmatpush2.msra.mxu0 0.0
    %955 = vmatprep.subr.mxu0 0.0
    %956 = vmatpush2.msra.mxu0 0.0
    %957 = vmatprep.mubr.f32.mxu0 0.0
    %958 = vmatmul.mubr.f32.gmra.mxu0 %v33
    %v959 = vpop.f32.mrf.mxu0
    %v960 = vadd.f32 %v815, %v959
    %v961 = vpop.f32.mrf.mxu0
    %962 = vmatprep.mubr.f32.mxu0 0.0
    %963 = vmatmul.mubr.f32.gmra.mxu0 %v42
    %v964 = vpop.f32.mrf.mxu0
    %v965 = vadd.f32 %v820, %v964
    %v966 = vpop.f32.mrf.mxu0
    %967 = vmatprep.mubr.f32.mxu0 0.0
    %968 = vmatmul.mubr.f32.gmra.mxu0 %v51
    %v969 = vpop.f32.mrf.mxu0
    %v970 = vadd.f32 %v825, %v969
    %v971 = vpop.f32.mrf.mxu0
    %972 = vmatprep.mubr.f32.mxu0 0.0
    %973 = vmatmul.mubr.f32.gmra.mxu0 %v60
    %v974 = vpop.f32.mrf.mxu0
    %v975 = vadd.f32 %v830, %v974
    %v976 = vpop.f32.mrf.mxu0
    %977 = vmatprep.mubr.f32.mxu0 0.0
    %978 = vmatmul.mubr.f32.gmra.mxu0 %v69
    %v979 = vpop.f32.mrf.mxu0
    %v980 = vadd.f32 %v835, %v979
    %v981 = vpop.f32.mrf.mxu0
    %982 = vmatprep.mubr.f32.mxu0 0.0
    %983 = vmatmul.mubr.f32.gmra.mxu0 %v78
    %v984 = vpop.f32.mrf.mxu0
    %v985 = vadd.f32 %v840, %v984
    %v986 = vpop.f32.mrf.mxu0
    %987 = vmatprep.mubr.f32.mxu0 0.0
    %988 = vmatmul.mubr.f32.gmra.mxu0 %v87
    %v989 = vpop.f32.mrf.mxu0
    %v990 = vadd.f32 %v845, %v989
    %v991 = vpop.f32.mrf.mxu0
    %992 = vmatprep.mubr.f32.mxu0 0.0
    %993 = vmatmul.mubr.f32.gmra.mxu0 %v96
    %v994 = vpop.f32.mrf.mxu0
    %v995 = vadd.f32 %v850, %v994
    %v996 = vpop.f32.mrf.mxu0
    %997 = vmatprep.mubr.f32.mxu0 0.0
    %998 = vmatmul.mubr.f32.gmra.mxu0 %v105
    %v999 = vpop.f32.mrf.mxu0
    %v1000 = vadd.f32 %v855, %v999
    %v1001 = vpop.f32.mrf.mxu0
    %1002 = vmatprep.mubr.f32.mxu0 0.0
    %1003 = vmatmul.mubr.f32.gmra.mxu0 %v114
    %v1004 = vpop.f32.mrf.mxu0
    %v1005 = vadd.f32 %v860, %v1004
    %v1006 = vpop.f32.mrf.mxu0
    %1007 = vmatprep.mubr.f32.mxu0 0.0
    %1008 = vmatmul.mubr.f32.gmra.mxu0 %v123
    %v1009 = vpop.f32.mrf.mxu0
    %v1010 = vadd.f32 %v865, %v1009
    %v1011 = vpop.f32.mrf.mxu0
    %1012 = vmatprep.mubr.f32.mxu0 0.0
    %1013 = vmatmul.mubr.f32.gmra.mxu0 %v132
    %v1014 = vpop.f32.mrf.mxu0
    %v1015 = vadd.f32 %v870, %v1014
    %v1016 = vpop.f32.mrf.mxu0
    %1017 = vmatprep.mubr.f32.mxu0 0.0
    %1018 = vmatmul.mubr.f32.gmra.mxu0 %v141
    %v1019 = vpop.f32.mrf.mxu0
    %v1020 = vadd.f32 %v875, %v1019
    %v1021 = vpop.f32.mrf.mxu0
    %1022 = vmatprep.mubr.f32.mxu0 0.0
    %1023 = vmatmul.mubr.f32.gmra.mxu0 %v150
    %v1024 = vpop.f32.mrf.mxu0
    %v1025 = vadd.f32 %v880, %v1024
    %v1026 = vpop.f32.mrf.mxu0
    %1027 = vmatprep.mubr.f32.mxu0 0.0
    %1028 = vmatmul.mubr.f32.gmra.mxu0 %v159
    %v1029 = vpop.f32.mrf.mxu0
    %v1030 = vadd.f32 %v885, %v1029
    %v1031 = vpop.f32.mrf.mxu0
    %1032 = vmatprep.mubr.f32.mxu0 0.0
    %1033 = vmatmul.mubr.f32.gmra.mxu0 %v168
    %v1034 = vpop.f32.mrf.mxu0
    %v1035 = vadd.f32 %v890, %v1034
    %v1036 = vpop.f32.mrf.mxu0
    %1037 = vdwg.mxu0
    %v1038 = vmax.f32 %v960, 0.0
    %v1039 = vmax.f32 %v965, 0.0
    %v1040 = vmax.f32 %v970, 0.0
    %v1041 = vmax.f32 %v975, 0.0
    %v1042 = vmax.f32 %v980, 0.0
    %v1043 = vmax.f32 %v985, 0.0
    %v1044 = vmax.f32 %v990, 0.0
    %v1045 = vmax.f32 %v995, 0.0
    %v1046 = vmax.f32 %v1000, 0.0
    %v1047 = vmax.f32 %v1005, 0.0
    %v1048 = vmax.f32 %v1010, 0.0
    %v1049 = vmax.f32 %v1015, 0.0
    %v1050 = vmax.f32 %v1020, 0.0
    %v1051 = vmax.f32 %v1025, 0.0
    %v1052 = vmax.f32 %v1030, 0.0
    %v1053 = vmax.f32 %v1035, 0.0
    %1054 = vst [vmem:[%s2] sm:$0xff] %v1038
    %1055 = vst [vmem:[%s2 + $0x8] sm:$0xff] %v1039
    %1056 = vst [vmem:[%s2 + $0x10] sm:$0xff] %v1040
    %1057 = vst [vmem:[%s2 + $0x18] sm:$0xff] %v1041
    %1058 = vst [vmem:[%s2 + $0x20] sm:$0xff] %v1042
    %1059 = vst [vmem:[%s2 + $0x28] sm:$0xff] %v1043
    %1060 = vst [vmem:[%s2 + $0x30] sm:$0xff] %v1044
    %1061 = vst [vmem:[%s2 + $0x38] sm:$0xff] %v1045
    %1062 = vst [vmem:[%s2 + $0x40] sm:$0xff] %v1046
    %1063 = vst [vmem:[%s2 + $0x48] sm:$0xff] %v1047
    %1064 = vst [vmem:[%s2 + $0x50] sm:$0xff] %v1048
    %1065 = vst [vmem:[%s2 + $0x58] sm:$0xff] %v1049
    %1066 = vst [vmem:[%s2 + $0x60] sm:$0xff] %v1050
    %1067 = vst [vmem:[%s2 + $0x68] sm:$0xff] %v1051
    %1068 = vst [vmem:[%s2 + $0x70] sm:$0xff] %v1052
    %1069 = vst [vmem:[%s2 + $0x78] sm:$0xff] %v1053
    // Predicated region
    $region14: #{vgg_forward.11} parent=1 // pred_check
      _
    $region15: #{vgg_forward.11} parent=1 // pred_check_branch
      %1071 = sbr.rel (0) target = $region17
    $region16: #{vgg_forward.11} parent=1 // pred_region
      _
    $region17: #{vgg_forward.11} parent=1 // pred_fallthru
      _
    // Predicated region
    $region18: #{vgg_forward.11} parent=1 // pred_check
      _
    $region19: #{vgg_forward.11} parent=1 // pred_check_branch
      %1073 = sbr.rel (0) target = $region21
    $region20: #{vgg_forward.11} parent=1 // pred_region
      _
    $region21: #{vgg_forward.11} parent=1 // pred_fallthru
      _
    %1074 = vsyncpa [#allocation3], 1

// kernel: vgg_forward.15
$region0: #{vgg_forward.15}
  #allocation0 [shape = 'u32[]', space=smem, size = 0x4, offset = 0x4, fixed_abs, tag = 'smem constant byte address 0x4 - core index']
  #allocation1 [shape = 'u32[144,128]{1,0:T(1,128)}', space=vmem, size = 0x12000, scoped, tag = 'internal scratch']
  #allocation2 [shape = 'f32[2,128]{1,0:T(2,128)}', space=vmem, size = 0x400, scoped, tag = 'scratch operand']
  %s0 = inlined_call_operand.vmem [shape: f32[2,4096], index: 0, kind: input, shape index: {}]
  %s1 = inlined_call_operand.vmem [shape: f32[4096,128], index: 1, kind: input, shape index: {}]
  %s2 = inlined_call_operand.hbm [shape: f32[2,128], index: 2, kind: output, shape index: {}]
  %s3 = sld [smem:[#allocation0]]
  $region49: #{vgg_forward.15} parent=0
    _
  %s5 = ssub.s32 1, %s3
  %s6 = scalar_select 0, %s5, %s3
  $region1: #{vgg_forward.15} parent=0
    #allocation3 [shape = 'u8[1024]{0}', space=vmem, size = 0x400, scoped, tag = 'output window, operand 0, single buffered']
    #allocation4 [shape = 's32[2]{0}', space=sflag, size = 0x8, scoped, tag = 'scoped memory for vgg_forward.15']
    %7 = vsyncpa [#allocation4], 0
    loop: start=0, step=1, limit=6
    $region2: #{vgg_forward.15} parent=1 // loop_pre_header
      _
    $region3: #{vgg_forward.15} parent=1 // loop_header
      %s9 = sphi 0, %s13
      %p10 = scmp.ge.s32.totalorder %s9, 6
      %s16 = sphi 0, %s28
      %s17 = sphi 0, %s24
      %s18 = sphi 0, %s16
      %s19 = sphi 0, %s17
      %s20 = sphi 0, %s18
      %s21 = sphi 0, %s19
      %s31 = sphi 0, %s33
      %s34 = sphi 0, %s31
      %s35 = sphi 0, %s34
      %s51 = sphi 0, %s35
      %s59 = sphi 0, %s61
      %s62 = sphi 0, %s59
      %s63 = sphi 0, %s62
      %s79 = sphi 0, %s63
      %s85 = sphi 0, %s87
      %s88 = sphi 0, %s85
      %s89 = sphi 0, %s88
      %s105 = sphi 0, %s89
    $region4: #{vgg_forward.15} parent=1 // loop_header_branch
      %12 = sbr.rel (%p10) target = $region8
    $region5: #{vgg_forward.15} parent=1 // loop_body
      %s14 = ssub.s32 %s9, 1
      %s15 = ssub.s32 %s9, 2
      %s22 = sadd.s32 1, %s17
      %p23 = scmp.ge.s32.totalorder %s22, 4
      %s24 = scalar_select %p23, 0, %s22
      %s25 = sadd.s32 1, %s16
      %s26 = scalar_select %p23, %s25, %s16
      %p27 = scmp.ge.s32.totalorder %s26, 1
      %s28 = scalar_select %p27, 0, %s26
      %s29 = ssub.s32 %s17, %s24
      %p30 = scmp.eq.s32.totalorder %s29, 0
      %s32 = sadd.s32 %s31, 1
      %s33 = scalar_select %p30, %s31, %s32
      %p36 = pneg %p30
      %p37 = scmp.eq.s32.totalorder %s9, 3
      %p38 = por %p36, %p37
      %p39 = scmp.ne.s32.totalorder %s31, %s34
      %p40 = scmp.eq.s32.totalorder %s9, 0
      %p41 = por %p39, %p40
      %p42 = scmp.ne.s32.totalorder %s31, %s34
      %p43 = scmp.eq.s32.totalorder %s14, 3
      %p44 = por %p42, %p43
      %p45 = scmp.ne.s32.totalorder %s34, %s35
      %p46 = scmp.eq.s32.totalorder %s14, 0
      %p47 = por %p45, %p46
      %p48 = scmp.ne.s32.totalorder %s34, %s35
      %p49 = scmp.eq.s32.totalorder %s15, 3
      %p50 = por %p48, %p49
      %p52 = scmp.ne.s32.totalorder %s35, %s51
      %p53 = scmp.eq.s32.totalorder %s15, 0
      %p54 = por %p52, %p53
      %s55 = ssub.s32 %s17, %s24
      %s56 = ssub.s32 %s16, %s28
      %s57 = sor.u32 %s55, %s56
      %p58 = scmp.eq.s32.totalorder %s57, 0
      %s60 = sadd.s32 %s59, 1
      %s61 = scalar_select %p58, %s59, %s60
      %p64 = pneg %p58
      %p65 = scmp.eq.s32.totalorder %s9, 3
      %p66 = por %p64, %p65
      %p67 = scmp.ne.s32.totalorder %s59, %s62
      %p68 = scmp.eq.s32.totalorder %s9, 0
      %p69 = por %p67, %p68
      %p70 = scmp.ne.s32.totalorder %s59, %s62
      %p71 = scmp.eq.s32.totalorder %s14, 3
      %p72 = por %p70, %p71
      %p73 = scmp.ne.s32.totalorder %s62, %s63
      %p74 = scmp.eq.s32.totalorder %s14, 0
      %p75 = por %p73, %p74
      %p76 = scmp.ne.s32.totalorder %s62, %s63
      %p77 = scmp.eq.s32.totalorder %s15, 3
      %p78 = por %p76, %p77
      %p80 = scmp.ne.s32.totalorder %s63, %s79
      %p81 = scmp.eq.s32.totalorder %s15, 0
      %p82 = por %p80, %p81
      %s83 = ssub.s32 %s16, %s28
      %p84 = scmp.eq.s32.totalorder %s83, 0
      %s86 = sadd.s32 %s85, 1
      %s87 = scalar_select %p84, %s85, %s86
      %p90 = pneg %p84
      %p91 = scmp.eq.s32.totalorder %s9, 3
      %p92 = por %p90, %p91
      %p93 = scmp.ne.s32.totalorder %s85, %s88
      %p94 = scmp.eq.s32.totalorder %s9, 0
      %p95 = por %p93, %p94
      %p96 = scmp.ne.s32.totalorder %s85, %s88
      %p97 = scmp.eq.s32.totalorder %s14, 3
      %p98 = por %p96, %p97
      %p99 = scmp.ne.s32.totalorder %s88, %s89
      %p100 = scmp.eq.s32.totalorder %s14, 0
      %p101 = por %p99, %p100
      %p102 = scmp.ne.s32.totalorder %s88, %s89
      %p103 = scmp.eq.s32.totalorder %s15, 3
      %p104 = por %p102, %p103
      %p106 = scmp.ne.s32.totalorder %s89, %s105
      %p107 = scmp.eq.s32.totalorder %s15, 0
      %p108 = por %p106, %p107
      %p109 = scmp.le.s32.totalorder 1, %s9
      %p110 = scmp.lt.s32.totalorder %s9, 5
      %p111 = pnand %p109, %p110
      %p112 = pneg %p111
      // Predicated region
      $region9: #{vgg_forward.15} parent=5 // pred_check
        _
      $region10: #{vgg_forward.15} parent=5 // pred_check_branch
        %114 = sbr.rel (%p111) target = $region12
      $region11: #{vgg_forward.15} parent=5 // pred_region
        %s115 = ssub.s32 %s9, 1
      $region12: #{vgg_forward.15} parent=5 // pred_fallthru
        _
      %p116 = scmp.lt.s32.totalorder %s9, 4
      // Predicated region
      $region13: #{vgg_forward.15} parent=5 // pred_check
        %p117 = pneg %p116
      $region14: #{vgg_forward.15} parent=5 // pred_check_branch
        %119 = sbr.rel (%p117) target = $region16
      $region15: #{vgg_forward.15} parent=5 // pred_region
        // Predicated region
        $region17: #{vgg_forward.15} parent=15 // pred_check
          %p120 = pneg %p41
        $region18: #{vgg_forward.15} parent=15 // pred_check_branch
          %122 = sbr.rel (%p120) target = $region20
        $region19: #{vgg_forward.15} parent=15 // pred_region
          %s123 = smul.u32 8, %s17
          %p124 = scmp.lt.s32.totalorder %s123, 31
          %s125 = scalar_select %p124, %s123, 31
          %s126 = smul.addr %s125, 2
          %s127 = scalar_lea.vmem %s0, %s126
          %s128 = smul.u32 8, %s17
        $region20: #{vgg_forward.15} parent=15 // pred_fallthru
          _
        // Predicated region
        $region21: #{vgg_forward.15} parent=15 // pred_check
          %p129 = pneg %p69
        $region22: #{vgg_forward.15} parent=15 // pred_check_branch
          %131 = sbr.rel (%p129) target = $region24
        $region23: #{vgg_forward.15} parent=15 // pred_region
          %s132 = smul.u32 128, %s17
          %p133 = scmp.lt.s32.totalorder %s132, 511
          %s134 = scalar_select %p133, %s132, 511
          %p135 = scmp.lt.s32.totalorder %s16, 0
          %s136 = scalar_select %p135, %s16, 0
          %s137 = sadd.s32 %s136, %s134
          %s138 = smul.addr %s137, 8
          %s139 = scalar_lea.vmem %s1, %s138
          %s140 = smul.u32 128, %s17
        $region24: #{vgg_forward.15} parent=15 // pred_fallthru
          _
      $region16: #{vgg_forward.15} parent=5 // pred_fallthru
        _
      %p141 = scmp.le.s32.totalorder 1, %s9
      %p142 = scmp.lt.s32.totalorder %s9, 5
      %p143 = pnand %p141, %p142
      %p144 = pneg %p143
      // Predicated region
      $region25: #{vgg_forward.15} parent=5 // pred_check
        _
      $region26: #{vgg_forward.15} parent=5 // pred_check_branch
        %146 = sbr.rel (%p143) target = $region28
      $region27: #{vgg_forward.15} parent=5 // pred_region
        %s147 = ssub.s32 %s9, 1
        %s148 = smul.u32 8, %s19
        %p149 = scmp.lt.s32.totalorder %s148, 31
        %s150 = scalar_select %p149, %s148, 31
        %s151 = smul.addr %s150, 2
        %s152 = scalar_lea.vmem %s0, %s151
        %p153 = pneg %p47
        %p154 = pneg %p44
        %s155 = smul.u32 128, %s19
        %p156 = scmp.lt.s32.totalorder %s155, 511
        %s157 = scalar_select %p156, %s155, 511
        %p158 = scmp.lt.s32.totalorder %s18, 0
        %s159 = scalar_select %p158, %s18, 0
        %s160 = sadd.s32 %s159, %s157
        %s161 = smul.addr %s160, 8
        %s162 = scalar_lea.vmem %s1, %s161
        %p163 = pneg %p75
        %p164 = pneg %p72
        %p165 = pneg %p101
        %p166 = pneg %p98
        %s167 = smul.u32 8, %s19
        %p168 = scmp.lt.s32.totalorder %s167, 31
        %s169 = scalar_select %p168, %s167, 31
        %s170 = smul.addr %s169, 2
        %s171 = scalar_lea.vmem %s0, %s170
        %s172 = smul.u32 8, %s19
        %s173 = smul.u32 128, %s19
        %p174 = scmp.lt.s32.totalorder %s173, 511
        %s175 = scalar_select %p174, %s173, 511
        %p176 = scmp.lt.s32.totalorder %s18, 0
        %s177 = scalar_select %p176, %s18, 0
        %s178 = sadd.s32 %s177, %s175
        %s179 = smul.addr %s178, 8
        %s180 = scalar_lea.vmem %s1, %s179
        %s181 = smul.u32 128, %s19
        %p182 = scmp.eq.s32.totalorder %s19, 0
        // Predicated region
        $region29: #{vgg_forward.15} parent=27 // pred_check
          %p183 = pneg %p182
        $region30: #{vgg_forward.15} parent=27 // pred_check_branch
          %185 = sbr.rel (%p183) target = $region32
        $region31: #{vgg_forward.15} parent=27 // pred_region
          %186 = vst [vmem:[#allocation2] sm:$0x3] 0.0
        $region32: #{vgg_forward.15} parent=27 // pred_fallthru
          _
        %v187 = vld [vmem:[#allocation2] sm:$0x3]
        %v188 = vld [vmem:[%s171] sm:$0xff]
        %v189 = vld [vmem:[%s171 + $0x8] sm:$0xff]
        %v190 = vld [vmem:[%s180] sm:$0xff]
        %v191 = vld [vmem:[%s180 + $0x8] sm:$0xff]
        %v192 = vld [vmem:[%s180 + $0x10] sm:$0xff]
        %v193 = vld [vmem:[%s180 + $0x18] sm:$0xff]
        %v194 = vld [vmem:[%s180 + $0x20] sm:$0xff]
        %v195 = vld [vmem:[%s180 + $0x28] sm:$0xff]
        %v196 = vld [vmem:[%s180 + $0x30] sm:$0xff]
        %v197 = vld [vmem:[%s180 + $0x38] sm:$0xff]
        %v198 = vld [vmem:[%s180 + $0x40] sm:$0xff]
        %v199 = vld [vmem:[%s180 + $0x48] sm:$0xff]
        %v200 = vld [vmem:[%s180 + $0x50] sm:$0xff]
        %v201 = vld [vmem:[%s180 + $0x58] sm:$0xff]
        %v202 = vld [vmem:[%s180 + $0x60] sm:$0xff]
        %v203 = vld [vmem:[%s180 + $0x68] sm:$0xff]
        %v204 = vld [vmem:[%s180 + $0x70] sm:$0xff]
        %v205 = vld [vmem:[%s180 + $0x78] sm:$0xff]
        %v206 = vld [vmem:[%s180 + $0x80] sm:$0xff]
        %v207 = vld [vmem:[%s180 + $0x88] sm:$0xff]
        %v208 = vld [vmem:[%s180 + $0x90] sm:$0xff]
        %v209 = vld [vmem:[%s180 + $0x98] sm:$0xff]
        %v210 = vld [vmem:[%s180 + $0xa0] sm:$0xff]
        %v211 = vld [vmem:[%s180 + $0xa8] sm:$0xff]
        %v212 = vld [vmem:[%s180 + $0xb0] sm:$0xff]
        %v213 = vld [vmem:[%s180 + $0xb8] sm:$0xff]
        %v214 = vld [vmem:[%s180 + $0xc0] sm:$0xff]
        %v215 = vld [vmem:[%s180 + $0xc8] sm:$0xff]
        %v216 = vld [vmem:[%s180 + $0xd0] sm:$0xff]
        %v217 = vld [vmem:[%s180 + $0xd8] sm:$0xff]
        %v218 = vld [vmem:[%s180 + $0xe0] sm:$0xff]
        %v219 = vld [vmem:[%s180 + $0xe8] sm:$0xff]
        %v220 = vld [vmem:[%s180 + $0xf0] sm:$0xff]
        %v221 = vld [vmem:[%s180 + $0xf8] sm:$0xff]
        %v222 = vld [vmem:[%s180 + $0x100] sm:$0xff]
        %v223 = vld [vmem:[%s180 + $0x108] sm:$0xff]
        %v224 = vld [vmem:[%s180 + $0x110] sm:$0xff]
        %v225 = vld [vmem:[%s180 + $0x118] sm:$0xff]
        %v226 = vld [vmem:[%s180 + $0x120] sm:$0xff]
        %v227 = vld [vmem:[%s180 + $0x128] sm:$0xff]
        %v228 = vld [vmem:[%s180 + $0x130] sm:$0xff]
        %v229 = vld [vmem:[%s180 + $0x138] sm:$0xff]
        %v230 = vld [vmem:[%s180 + $0x140] sm:$0xff]
        %v231 = vld [vmem:[%s180 + $0x148] sm:$0xff]
        %v232 = vld [vmem:[%s180 + $0x150] sm:$0xff]
        %v233 = vld [vmem:[%s180 + $0x158] sm:$0xff]
        %v234 = vld [vmem:[%s180 + $0x160] sm:$0xff]
        %v235 = vld [vmem:[%s180 + $0x168] sm:$0xff]
        %v236 = vld [vmem:[%s180 + $0x170] sm:$0xff]
        %v237 = vld [vmem:[%s180 + $0x178] sm:$0xff]
        %v238 = vld [vmem:[%s180 + $0x180] sm:$0xff]
        %v239 = vld [vmem:[%s180 + $0x188] sm:$0xff]
        %v240 = vld [vmem:[%s180 + $0x190] sm:$0xff]
        %v241 = vld [vmem:[%s180 + $0x198] sm:$0xff]
        %v242 = vld [vmem:[%s180 + $0x1a0] sm:$0xff]
        %v243 = vld [vmem:[%s180 + $0x1a8] sm:$0xff]
        %v244 = vld [vmem:[%s180 + $0x1b0] sm:$0xff]
        %v245 = vld [vmem:[%s180 + $0x1b8] sm:$0xff]
        %v246 = vld [vmem:[%s180 + $0x1c0] sm:$0xff]
        %v247 = vld [vmem:[%s180 + $0x1c8] sm:$0xff]
        %v248 = vld [vmem:[%s180 + $0x1d0] sm:$0xff]
        %v249 = vld [vmem:[%s180 + $0x1d8] sm:$0xff]
        %v250 = vld [vmem:[%s180 + $0x1e0] sm:$0xff]
        %v251 = vld [vmem:[%s180 + $0x1e8] sm:$0xff]
        %v252 = vld [vmem:[%s180 + $0x1f0] sm:$0xff]
        %v253 = vld [vmem:[%s180 + $0x1f8] sm:$0xff]
        %v254 = vld [vmem:[%s180 + $0x200] sm:$0xff]
        %v255 = vld [vmem:[%s180 + $0x208] sm:$0xff]
        %v256 = vld [vmem:[%s180 + $0x210] sm:$0xff]
        %v257 = vld [vmem:[%s180 + $0x218] sm:$0xff]
        %v258 = vld [vmem:[%s180 + $0x220] sm:$0xff]
        %v259 = vld [vmem:[%s180 + $0x228] sm:$0xff]
        %v260 = vld [vmem:[%s180 + $0x230] sm:$0xff]
        %v261 = vld [vmem:[%s180 + $0x238] sm:$0xff]
        %v262 = vld [vmem:[%s180 + $0x240] sm:$0xff]
        %v263 = vld [vmem:[%s180 + $0x248] sm:$0xff]
        %v264 = vld [vmem:[%s180 + $0x250] sm:$0xff]
        %v265 = vld [vmem:[%s180 + $0x258] sm:$0xff]
        %v266 = vld [vmem:[%s180 + $0x260] sm:$0xff]
        %v267 = vld [vmem:[%s180 + $0x268] sm:$0xff]
        %v268 = vld [vmem:[%s180 + $0x270] sm:$0xff]
        %v269 = vld [vmem:[%s180 + $0x278] sm:$0xff]
        %v270 = vld [vmem:[%s180 + $0x280] sm:$0xff]
        %v271 = vld [vmem:[%s180 + $0x288] sm:$0xff]
        %v272 = vld [vmem:[%s180 + $0x290] sm:$0xff]
        %v273 = vld [vmem:[%s180 + $0x298] sm:$0xff]
        %v274 = vld [vmem:[%s180 + $0x2a0] sm:$0xff]
        %v275 = vld [vmem:[%s180 + $0x2a8] sm:$0xff]
        %v276 = vld [vmem:[%s180 + $0x2b0] sm:$0xff]
        %v277 = vld [vmem:[%s180 + $0x2b8] sm:$0xff]
        %v278 = vld [vmem:[%s180 + $0x2c0] sm:$0xff]
        %v279 = vld [vmem:[%s180 + $0x2c8] sm:$0xff]
        %v280 = vld [vmem:[%s180 + $0x2d0] sm:$0xff]
        %v281 = vld [vmem:[%s180 + $0x2d8] sm:$0xff]
        %v282 = vld [vmem:[%s180 + $0x2e0] sm:$0xff]
        %v283 = vld [vmem:[%s180 + $0x2e8] sm:$0xff]
        %v284 = vld [vmem:[%s180 + $0x2f0] sm:$0xff]
        %v285 = vld [vmem:[%s180 + $0x2f8] sm:$0xff]
        %v286 = vld [vmem:[%s180 + $0x300] sm:$0xff]
        %v287 = vld [vmem:[%s180 + $0x308] sm:$0xff]
        %v288 = vld [vmem:[%s180 + $0x310] sm:$0xff]
        %v289 = vld [vmem:[%s180 + $0x318] sm:$0xff]
        %v290 = vld [vmem:[%s180 + $0x320] sm:$0xff]
        %v291 = vld [vmem:[%s180 + $0x328] sm:$0xff]
        %v292 = vld [vmem:[%s180 + $0x330] sm:$0xff]
        %v293 = vld [vmem:[%s180 + $0x338] sm:$0xff]
        %v294 = vld [vmem:[%s180 + $0x340] sm:$0xff]
        %v295 = vld [vmem:[%s180 + $0x348] sm:$0xff]
        %v296 = vld [vmem:[%s180 + $0x350] sm:$0xff]
        %v297 = vld [vmem:[%s180 + $0x358] sm:$0xff]
        %v298 = vld [vmem:[%s180 + $0x360] sm:$0xff]
        %v299 = vld [vmem:[%s180 + $0x368] sm:$0xff]
        %v300 = vld [vmem:[%s180 + $0x370] sm:$0xff]
        %v301 = vld [vmem:[%s180 + $0x378] sm:$0xff]
        %v302 = vld [vmem:[%s180 + $0x380] sm:$0xff]
        %v303 = vld [vmem:[%s180 + $0x388] sm:$0xff]
        %v304 = vld [vmem:[%s180 + $0x390] sm:$0xff]
        %v305 = vld [vmem:[%s180 + $0x398] sm:$0xff]
        %v306 = vld [vmem:[%s180 + $0x3a0] sm:$0xff]
        %v307 = vld [vmem:[%s180 + $0x3a8] sm:$0xff]
        %v308 = vld [vmem:[%s180 + $0x3b0] sm:$0xff]
        %v309 = vld [vmem:[%s180 + $0x3b8] sm:$0xff]
        %v310 = vld [vmem:[%s180 + $0x3c0] sm:$0xff]
        %v311 = vld [vmem:[%s180 + $0x3c8] sm:$0xff]
        %v312 = vld [vmem:[%s180 + $0x3d0] sm:$0xff]
        %v313 = vld [vmem:[%s180 + $0x3d8] sm:$0xff]
        %v314 = vld [vmem:[%s180 + $0x3e0] sm:$0xff]
        %v315 = vld [vmem:[%s180 + $0x3e8] sm:$0xff]
        %v316 = vld [vmem:[%s180 + $0x3f0] sm:$0xff]
        %v317 = vld [vmem:[%s180 + $0x3f8] sm:$0xff]
        %v320 = vcombine.high %v188, %v188
        %v322 = vunpack.c.l.s4 1983009808
        %v323 = vunpack.c.0.s8 %v322
        %v324 = vlaneseq
        %v325 = vshrl.u32 %v324, 7
        %v326 = vsub.s32 %v323, %v325
        %v327 = vrot.slane %v188, %v326
        %v329 = vunpack.c.l.s4 1983009808
        %v330 = vunpack.c.0.s8 %v329
        %v331 = vlaneseq
        %v332 = vshrl.u32 %v331, 7
        %v333 = vsub.s32 %v330, %v332
        %v334 = vrot.slane %v320, %v333
        %v335 = vcombine.high %v327, %v327
        %v336 = vcombine.high %v334, %v334
        %v337 = vcombine.high %v189, %v189
        %v339 = vunpack.c.l.s4 1983009808
        %v340 = vunpack.c.0.s8 %v339
        %v341 = vlaneseq
        %v342 = vshrl.u32 %v341, 7
        %v343 = vsub.s32 %v340, %v342
        %v344 = vrot.slane %v189, %v343
        %v346 = vunpack.c.l.s4 1983009808
        %v347 = vunpack.c.0.s8 %v346
        %v348 = vlaneseq
        %v349 = vshrl.u32 %v348, 7
        %v350 = vsub.s32 %v347, %v349
        %v351 = vrot.slane %v337, %v350
        %v352 = vcombine.high %v344, %v344
        %v353 = vcombine.high %v351, %v351
        %362 = vmatprep.subr.mxu0 0.0
        %363 = vmatpush1.msra.mxu0 %v205
        %364 = vmatprep.subr.mxu0 0.0
        %365 = vmatpush1.msra.mxu0 %v204
        %366 = vmatprep.subr.mxu0 0.0
        %367 = vmatpush1.msra.mxu0 %v203
        %368 = vmatprep.subr.mxu0 0.0
        %369 = vmatpush1.msra.mxu0 %v202
        %370 = vmatprep.subr.mxu0 0.0
        %371 = vmatpush1.msra.mxu0 %v201
        %372 = vmatprep.subr.mxu0 0.0
        %373 = vmatpush1.msra.mxu0 %v200
        %374 = vmatprep.subr.mxu0 0.0
        %375 = vmatpush1.msra.mxu0 %v199
        %376 = vmatprep.subr.mxu0 0.0
        %377 = vmatpush1.msra.mxu0 %v198
        %378 = vmatprep.subr.mxu0 0.0
        %379 = vmatpush1.msra.mxu0 %v197
        %380 = vmatprep.subr.mxu0 0.0
        %381 = vmatpush1.msra.mxu0 %v196
        %382 = vmatprep.subr.mxu0 0.0
        %383 = vmatpush1.msra.mxu0 %v195
        %384 = vmatprep.subr.mxu0 0.0
        %385 = vmatpush1.msra.mxu0 %v194
        %386 = vmatprep.subr.mxu0 0.0
        %387 = vmatpush1.msra.mxu0 %v193
        %388 = vmatprep.subr.mxu0 0.0
        %389 = vmatpush1.msra.mxu0 %v192
        %390 = vmatprep.subr.mxu0 0.0
        %391 = vmatpush1.msra.mxu0 %v191
        %392 = vmatprep.subr.mxu0 0.0
        %393 = vmatpush1.msra.mxu0 %v190
        %394 = vmatprep.subr.mxu0 0.0
        %395 = vmatpush2.msra.mxu0 %v221
        %396 = vmatprep.subr.mxu0 0.0
        %397 = vmatpush2.msra.mxu0 %v220
        %398 = vmatprep.subr.mxu0 0.0
        %399 = vmatpush2.msra.mxu0 %v219
        %400 = vmatprep.subr.mxu0 0.0
        %401 = vmatpush2.msra.mxu0 %v218
        %402 = vmatprep.subr.mxu0 0.0
        %403 = vmatpush2.msra.mxu0 %v217
        %404 = vmatprep.subr.mxu0 0.0
        %405 = vmatpush2.msra.mxu0 %v216
        %406 = vmatprep.subr.mxu0 0.0
        %407 = vmatpush2.msra.mxu0 %v215
        %408 = vmatprep.subr.mxu0 0.0
        %409 = vmatpush2.msra.mxu0 %v214
        %410 = vmatprep.subr.mxu0 0.0
        %411 = vmatpush2.msra.mxu0 %v213
        %412 = vmatprep.subr.mxu0 0.0
        %413 = vmatpush2.msra.mxu0 %v212
        %414 = vmatprep.subr.mxu0 0.0
        %415 = vmatpush2.msra.mxu0 %v211
        %416 = vmatprep.subr.mxu0 0.0
        %417 = vmatpush2.msra.mxu0 %v210
        %418 = vmatprep.subr.mxu0 0.0
        %419 = vmatpush2.msra.mxu0 %v209
        %420 = vmatprep.subr.mxu0 0.0
        %421 = vmatpush2.msra.mxu0 %v208
        %422 = vmatprep.subr.mxu0 0.0
        %423 = vmatpush2.msra.mxu0 %v207
        %424 = vmatprep.subr.mxu0 0.0
        %425 = vmatpush2.msra.mxu0 %v206
        %426 = vmatprep.mubr.f32.mxu0 %v335
        %427 = vmatmul.mubr.f32.gmra.mxu0 %v327
        %v428 = vpop.f32.mrf.mxu0
        %v429 = vadd.f32 0.0, %v428
        %v430 = vpop.f32.mrf.mxu0
        %431 = vdwg.mxu0
        %432 = vmatprep.subr.mxu0 0.0
        %433 = vmatpush1.msra.mxu0 %v237
        %434 = vmatprep.subr.mxu0 0.0
        %435 = vmatpush1.msra.mxu0 %v236
        %436 = vmatprep.subr.mxu0 0.0
        %437 = vmatpush1.msra.mxu0 %v235
        %438 = vmatprep.subr.mxu0 0.0
        %439 = vmatpush1.msra.mxu0 %v234
        %440 = vmatprep.subr.mxu0 0.0
        %441 = vmatpush1.msra.mxu0 %v233
        %442 = vmatprep.subr.mxu0 0.0
        %443 = vmatpush1.msra.mxu0 %v232
        %444 = vmatprep.subr.mxu0 0.0
        %445 = vmatpush1.msra.mxu0 %v231
        %446 = vmatprep.subr.mxu0 0.0
        %447 = vmatpush1.msra.mxu0 %v230
        %448 = vmatprep.subr.mxu0 0.0
        %449 = vmatpush1.msra.mxu0 %v229
        %450 = vmatprep.subr.mxu0 0.0
        %451 = vmatpush1.msra.mxu0 %v228
        %452 = vmatprep.subr.mxu0 0.0
        %453 = vmatpush1.msra.mxu0 %v227
        %454 = vmatprep.subr.mxu0 0.0
        %455 = vmatpush1.msra.mxu0 %v226
        %456 = vmatprep.subr.mxu0 0.0
        %457 = vmatpush1.msra.mxu0 %v225
        %458 = vmatprep.subr.mxu0 0.0
        %459 = vmatpush1.msra.mxu0 %v224
        %460 = vmatprep.subr.mxu0 0.0
        %461 = vmatpush1.msra.mxu0 %v223
        %462 = vmatprep.subr.mxu0 0.0
        %463 = vmatpush1.msra.mxu0 %v222
        %464 = vmatprep.subr.mxu0 0.0
        %465 = vmatpush2.msra.mxu0 %v253
        %466 = vmatprep.subr.mxu0 0.0
        %467 = vmatpush2.msra.mxu0 %v252
        %468 = vmatprep.subr.mxu0 0.0
        %469 = vmatpush2.msra.mxu0 %v251
        %470 = vmatprep.subr.mxu0 0.0
        %471 = vmatpush2.msra.mxu0 %v250
        %472 = vmatprep.subr.mxu0 0.0
        %473 = vmatpush2.msra.mxu0 %v249
        %474 = vmatprep.subr.mxu0 0.0
        %475 = vmatpush2.msra.mxu0 %v248
        %476 = vmatprep.subr.mxu0 0.0
        %477 = vmatpush2.msra.mxu0 %v247
        %478 = vmatprep.subr.mxu0 0.0
        %479 = vmatpush2.msra.mxu0 %v246
        %480 = vmatprep.subr.mxu0 0.0
        %481 = vmatpush2.msra.mxu0 %v245
        %482 = vmatprep.subr.mxu0 0.0
        %483 = vmatpush2.msra.mxu0 %v244
        %484 = vmatprep.subr.mxu0 0.0
        %485 = vmatpush2.msra.mxu0 %v243
        %486 = vmatprep.subr.mxu0 0.0
        %487 = vmatpush2.msra.mxu0 %v242
        %488 = vmatprep.subr.mxu0 0.0
        %489 = vmatpush2.msra.mxu0 %v241
        %490 = vmatprep.subr.mxu0 0.0
        %491 = vmatpush2.msra.mxu0 %v240
        %492 = vmatprep.subr.mxu0 0.0
        %493 = vmatpush2.msra.mxu0 %v239
        %494 = vmatprep.subr.mxu0 0.0
        %495 = vmatpush2.msra.mxu0 %v238
        %496 = vmatprep.mubr.f32.mxu0 %v336
        %497 = vmatmul.mubr.f32.gmra.mxu0 %v334
        %v498 = vpop.f32.mrf.mxu0
        %v499 = vadd.f32 %v429, %v498
        %v500 = vpop.f32.mrf.mxu0
        %501 = vdwg.mxu0
        %502 = vmatprep.subr.mxu0 0.0
        %503 = vmatpush1.msra.mxu0 %v269
        %504 = vmatprep.subr.mxu0 0.0
        %505 = vmatpush1.msra.mxu0 %v268
        %506 = vmatprep.subr.mxu0 0.0
        %507 = vmatpush1.msra.mxu0 %v267
        %508 = vmatprep.subr.mxu0 0.0
        %509 = vmatpush1.msra.mxu0 %v266
        %510 = vmatprep.subr.mxu0 0.0
        %511 = vmatpush1.msra.mxu0 %v265
        %512 = vmatprep.subr.mxu0 0.0
        %513 = vmatpush1.msra.mxu0 %v264
        %514 = vmatprep.subr.mxu0 0.0
        %515 = vmatpush1.msra.mxu0 %v263
        %516 = vmatprep.subr.mxu0 0.0
        %517 = vmatpush1.msra.mxu0 %v262
        %518 = vmatprep.subr.mxu0 0.0
        %519 = vmatpush1.msra.mxu0 %v261
        %520 = vmatprep.subr.mxu0 0.0
        %521 = vmatpush1.msra.mxu0 %v260
        %522 = vmatprep.subr.mxu0 0.0
        %523 = vmatpush1.msra.mxu0 %v259
        %524 = vmatprep.subr.mxu0 0.0
        %525 = vmatpush1.msra.mxu0 %v258
        %526 = vmatprep.subr.mxu0 0.0
        %527 = vmatpush1.msra.mxu0 %v257
        %528 = vmatprep.subr.mxu0 0.0
        %529 = vmatpush1.msra.mxu0 %v256
        %530 = vmatprep.subr.mxu0 0.0
        %531 = vmatpush1.msra.mxu0 %v255
        %532 = vmatprep.subr.mxu0 0.0
        %533 = vmatpush1.msra.mxu0 %v254
        %534 = vmatprep.subr.mxu0 0.0
        %535 = vmatpush2.msra.mxu0 %v285
        %536 = vmatprep.subr.mxu0 0.0
        %537 = vmatpush2.msra.mxu0 %v284
        %538 = vmatprep.subr.mxu0 0.0
        %539 = vmatpush2.msra.mxu0 %v283
        %540 = vmatprep.subr.mxu0 0.0
        %541 = vmatpush2.msra.mxu0 %v282
        %542 = vmatprep.subr.mxu0 0.0
        %543 = vmatpush2.msra.mxu0 %v281
        %544 = vmatprep.subr.mxu0 0.0
        %545 = vmatpush2.msra.mxu0 %v280
        %546 = vmatprep.subr.mxu0 0.0
        %547 = vmatpush2.msra.mxu0 %v279
        %548 = vmatprep.subr.mxu0 0.0
        %549 = vmatpush2.msra.mxu0 %v278
        %550 = vmatprep.subr.mxu0 0.0
        %551 = vmatpush2.msra.mxu0 %v277
        %552 = vmatprep.subr.mxu0 0.0
        %553 = vmatpush2.msra.mxu0 %v276
        %554 = vmatprep.subr.mxu0 0.0
        %555 = vmatpush2.msra.mxu0 %v275
        %556 = vmatprep.subr.mxu0 0.0
        %557 = vmatpush2.msra.mxu0 %v274
        %558 = vmatprep.subr.mxu0 0.0
        %559 = vmatpush2.msra.mxu0 %v273
        %560 = vmatprep.subr.mxu0 0.0
        %561 = vmatpush2.msra.mxu0 %v272
        %562 = vmatprep.subr.mxu0 0.0
        %563 = vmatpush2.msra.mxu0 %v271
        %564 = vmatprep.subr.mxu0 0.0
        %565 = vmatpush2.msra.mxu0 %v270
        %566 = vmatprep.mubr.f32.mxu0 %v352
        %567 = vmatmul.mubr.f32.gmra.mxu0 %v344
        %v568 = vpop.f32.mrf.mxu0
        %v569 = vadd.f32 %v499, %v568
        %v570 = vpop.f32.mrf.mxu0
        %571 = vdwg.mxu0
        %572 = vmatprep.subr.mxu0 0.0
        %573 = vmatpush1.msra.mxu0 %v301
        %574 = vmatprep.subr.mxu0 0.0
        %575 = vmatpush1.msra.mxu0 %v300
        %576 = vmatprep.subr.mxu0 0.0
        %577 = vmatpush1.msra.mxu0 %v299
        %578 = vmatprep.subr.mxu0 0.0
        %579 = vmatpush1.msra.mxu0 %v298
        %580 = vmatprep.subr.mxu0 0.0
        %581 = vmatpush1.msra.mxu0 %v297
        %582 = vmatprep.subr.mxu0 0.0
        %583 = vmatpush1.msra.mxu0 %v296
        %584 = vmatprep.subr.mxu0 0.0
        %585 = vmatpush1.msra.mxu0 %v295
        %586 = vmatprep.subr.mxu0 0.0
        %587 = vmatpush1.msra.mxu0 %v294
        %588 = vmatprep.subr.mxu0 0.0
        %589 = vmatpush1.msra.mxu0 %v293
        %590 = vmatprep.subr.mxu0 0.0
        %591 = vmatpush1.msra.mxu0 %v292
        %592 = vmatprep.subr.mxu0 0.0
        %593 = vmatpush1.msra.mxu0 %v291
        %594 = vmatprep.subr.mxu0 0.0
        %595 = vmatpush1.msra.mxu0 %v290
        %596 = vmatprep.subr.mxu0 0.0
        %597 = vmatpush1.msra.mxu0 %v289
        %598 = vmatprep.subr.mxu0 0.0
        %599 = vmatpush1.msra.mxu0 %v288
        %600 = vmatprep.subr.mxu0 0.0
        %601 = vmatpush1.msra.mxu0 %v287
        %602 = vmatprep.subr.mxu0 0.0
        %603 = vmatpush1.msra.mxu0 %v286
        %604 = vmatprep.subr.mxu0 0.0
        %605 = vmatpush2.msra.mxu0 %v317
        %606 = vmatprep.subr.mxu0 0.0
        %607 = vmatpush2.msra.mxu0 %v316
        %608 = vmatprep.subr.mxu0 0.0
        %609 = vmatpush2.msra.mxu0 %v315
        %610 = vmatprep.subr.mxu0 0.0
        %611 = vmatpush2.msra.mxu0 %v314
        %612 = vmatprep.subr.mxu0 0.0
        %613 = vmatpush2.msra.mxu0 %v313
        %614 = vmatprep.subr.mxu0 0.0
        %615 = vmatpush2.msra.mxu0 %v312
        %616 = vmatprep.subr.mxu0 0.0
        %617 = vmatpush2.msra.mxu0 %v311
        %618 = vmatprep.subr.mxu0 0.0
        %619 = vmatpush2.msra.mxu0 %v310
        %620 = vmatprep.subr.mxu0 0.0
        %621 = vmatpush2.msra.mxu0 %v309
        %622 = vmatprep.subr.mxu0 0.0
        %623 = vmatpush2.msra.mxu0 %v308
        %624 = vmatprep.subr.mxu0 0.0
        %625 = vmatpush2.msra.mxu0 %v307
        %626 = vmatprep.subr.mxu0 0.0
        %627 = vmatpush2.msra.mxu0 %v306
        %628 = vmatprep.subr.mxu0 0.0
        %629 = vmatpush2.msra.mxu0 %v305
        %630 = vmatprep.subr.mxu0 0.0
        %631 = vmatpush2.msra.mxu0 %v304
        %632 = vmatprep.subr.mxu0 0.0
        %633 = vmatpush2.msra.mxu0 %v303
        %634 = vmatprep.subr.mxu0 0.0
        %635 = vmatpush2.msra.mxu0 %v302
        %636 = vmatprep.mubr.f32.mxu0 %v353
        %637 = vmatmul.mubr.f32.gmra.mxu0 %v351
        %v638 = vpop.f32.mrf.mxu0
        %v639 = vadd.f32 %v569, %v638
        %v640 = vpop.f32.mrf.mxu0
        %641 = vdwg.mxu0
        %v642 = vadd.f32 %v187, %v639
        %643 = vst [vmem:[#allocation2] sm:$0x3] %v642
        %p644 = scmp.eq.s32.totalorder %s19, 3
        // Predicated region
        $region33: #{vgg_forward.15} parent=27 // pred_check
          %p645 = pneg %p644
        $region34: #{vgg_forward.15} parent=27 // pred_check_branch
          %647 = sbr.rel (%p645) target = $region36
        $region35: #{vgg_forward.15} parent=27 // pred_region
          %v648 = vld [vmem:[#allocation2] sm:$0x3]
          %649 = vst [vmem:[#allocation3] sm:$0x3] %v648
        $region36: #{vgg_forward.15} parent=27 // pred_fallthru
          _
        // Predicated region
        $region37: #{vgg_forward.15} parent=27 // pred_check
          %p650 = pneg %p98
        $region38: #{vgg_forward.15} parent=27 // pred_check_branch
          %652 = sbr.rel (%p650) target = $region40
        $region39: #{vgg_forward.15} parent=27 // pred_region
          %s654 = ssub.s32 32, 32
          %655 = vsyncadd [#allocation4], %s654
          %s656 = smul.addr %s18, 32
          %s657 = scalar_lea.hbm %s2, %s656
          %s659 = sshll.u32 [#allocation3], 4
          %s660 = int_to_ptr.vmem [resolvable:$true] %s659
          %662 = dma.vmem_to_hbm [thread:$0]  %s660, 32, %s657, [#allocation4]
        $region40: #{vgg_forward.15} parent=27 // pred_fallthru
          _
        // Predicated region
        $region41: #{vgg_forward.15} parent=27 // pred_check
          %p663 = pneg %p98
        $region42: #{vgg_forward.15} parent=27 // pred_check_branch
          %665 = sbr.rel (%p663) target = $region44
        $region43: #{vgg_forward.15} parent=27 // pred_region
          %666 = dma.done [#allocation4], 32
        $region44: #{vgg_forward.15} parent=27 // pred_fallthru
          _
      $region28: #{vgg_forward.15} parent=5 // pred_fallthru
        _
      %p667 = scmp.le.s32.totalorder 2, %s9
      // Predicated region
      $region45: #{vgg_forward.15} parent=5 // pred_check
        %p668 = pneg %p667
      $region46: #{vgg_forward.15} parent=5 // pred_check_branch
        %670 = sbr.rel (%p668) target = $region48
      $region47: #{vgg_forward.15} parent=5 // pred_region
        %s671 = ssub.s32 %s9, 2
      $region48: #{vgg_forward.15} parent=5 // pred_fallthru
        _
    $region6: #{vgg_forward.15} parent=1 // loop_footer
      %s13 = sadd.s32 1, %s9
    $region7: #{vgg_forward.15} parent=1 // loop_footer_branch
      %8 = sbr.rel target = $region3
    $region8: #{vgg_forward.15} parent=1 // loop_exit
      _
    %672 = vsyncpa [#allocation4], 1
    %s673 = scalar_lea.sflag [#allocation4], 1
    %674 = vsyncpa %s673, 1

// kernel: vgg_forward.13
$region0: #{vgg_forward.13}
  #allocation0 [shape = 'u32[]', space=smem, size = 0x4, offset = 0x4, fixed_abs, tag = 'smem constant byte address 0x4 - core index']
  #allocation1 [shape = 'u32[144,128]{1,0:T(1,128)}', space=vmem, size = 0x12000, scoped, tag = 'internal scratch']
  #allocation2 [shape = 'f32[2,1024]{1,0:T(2,128)}', space=vmem, size = 0x2000, scoped, tag = 'scratch operand']
  %s0 = inlined_call_operand.vmem [shape: f32[2,2048], index: 0, kind: input, shape index: {}]
  %s1 = inlined_call_operand.hbm [shape: f32[2048,4096], index: 1, kind: input, shape index: {}]
  %s2 = inlined_call_operand.vmem [shape: f32[2,4096], index: 2, kind: output, shape index: {}]
  %s3 = sld [smem:[#allocation0]]
  $region53: #{vgg_forward.13} parent=0
    _
  %s5 = ssub.s32 1, %s3
  %s6 = scalar_select 0, %s5, %s3
  $region1: #{vgg_forward.13} parent=0
    #allocation3 [shape = 'u8[8388608]{0}', space=vmem, size = 0x800000, scoped, tag = 'input window, operand 1']
    #allocation4 [shape = 's32[2]{0}', space=sflag, size = 0x8, scoped, tag = 'scoped memory for vgg_forward.13']
    %7 = vsyncpa [#allocation4], 0
    %s8 = scalar_lea.sflag [#allocation4], 1
    %9 = vsyncpa %s8, 0
    loop: start=0, step=1, limit=10
    $region2: #{vgg_forward.13} parent=1 // loop_pre_header
      _
    $region3: #{vgg_forward.13} parent=1 // loop_header
      %s11 = sphi 0, %s15
      %p12 = scmp.ge.s32.totalorder %s11, 10
      %s18 = sphi 0, %s30
      %s19 = sphi 0, %s26
      %s20 = sphi 0, %s18
      %s21 = sphi 0, %s19
      %s22 = sphi 0, %s20
      %s23 = sphi 0, %s21
      %s33 = sphi 0, %s35
      %s36 = sphi 0, %s33
      %s37 = sphi 0, %s36
      %s53 = sphi 0, %s37
      %s61 = sphi 0, %s63
      %s64 = sphi 0, %s61
      %s65 = sphi 0, %s64
      %s81 = sphi 0, %s65
      %s87 = sphi 0, %s89
      %s90 = sphi 0, %s87
      %s91 = sphi 0, %s90
      %s107 = sphi 0, %s91
    $region4: #{vgg_forward.13} parent=1 // loop_header_branch
      %14 = sbr.rel (%p12) target = $region8
    $region5: #{vgg_forward.13} parent=1 // loop_body
      %s16 = ssub.s32 %s11, 1
      %s17 = ssub.s32 %s11, 2
      %s24 = sadd.s32 1, %s19
      %p25 = scmp.ge.s32.totalorder %s24, 2
      %s26 = scalar_select %p25, 0, %s24
      %s27 = sadd.s32 1, %s18
      %s28 = scalar_select %p25, %s27, %s18
      %p29 = scmp.ge.s32.totalorder %s28, 4
      %s30 = scalar_select %p29, 0, %s28
      %s31 = ssub.s32 %s19, %s26
      %p32 = scmp.eq.s32.totalorder %s31, 0
      %s34 = sadd.s32 %s33, 1
      %s35 = scalar_select %p32, %s33, %s34
      %p38 = pneg %p32
      %p39 = scmp.eq.s32.totalorder %s11, 7
      %p40 = por %p38, %p39
      %p41 = scmp.ne.s32.totalorder %s33, %s36
      %p42 = scmp.eq.s32.totalorder %s11, 0
      %p43 = por %p41, %p42
      %p44 = scmp.ne.s32.totalorder %s33, %s36
      %p45 = scmp.eq.s32.totalorder %s16, 7
      %p46 = por %p44, %p45
      %p47 = scmp.ne.s32.totalorder %s36, %s37
      %p48 = scmp.eq.s32.totalorder %s16, 0
      %p49 = por %p47, %p48
      %p50 = scmp.ne.s32.totalorder %s36, %s37
      %p51 = scmp.eq.s32.totalorder %s17, 7
      %p52 = por %p50, %p51
      %p54 = scmp.ne.s32.totalorder %s37, %s53
      %p55 = scmp.eq.s32.totalorder %s17, 0
      %p56 = por %p54, %p55
      %s57 = ssub.s32 %s19, %s26
      %s58 = ssub.s32 %s18, %s30
      %s59 = sor.u32 %s57, %s58
      %p60 = scmp.eq.s32.totalorder %s59, 0
      %s62 = sadd.s32 %s61, 1
      %s63 = scalar_select %p60, %s61, %s62
      %p66 = pneg %p60
      %p67 = scmp.eq.s32.totalorder %s11, 7
      %p68 = por %p66, %p67
      %p69 = scmp.ne.s32.totalorder %s61, %s64
      %p70 = scmp.eq.s32.totalorder %s11, 0
      %p71 = por %p69, %p70
      %p72 = scmp.ne.s32.totalorder %s61, %s64
      %p73 = scmp.eq.s32.totalorder %s16, 7
      %p74 = por %p72, %p73
      %p75 = scmp.ne.s32.totalorder %s64, %s65
      %p76 = scmp.eq.s32.totalorder %s16, 0
      %p77 = por %p75, %p76
      %p78 = scmp.ne.s32.totalorder %s64, %s65
      %p79 = scmp.eq.s32.totalorder %s17, 7
      %p80 = por %p78, %p79
      %p82 = scmp.ne.s32.totalorder %s65, %s81
      %p83 = scmp.eq.s32.totalorder %s17, 0
      %p84 = por %p82, %p83
      %s85 = ssub.s32 %s18, %s30
      %p86 = scmp.eq.s32.totalorder %s85, 0
      %s88 = sadd.s32 %s87, 1
      %s89 = scalar_select %p86, %s87, %s88
      %p92 = pneg %p86
      %p93 = scmp.eq.s32.totalorder %s11, 7
      %p94 = por %p92, %p93
      %p95 = scmp.ne.s32.totalorder %s87, %s90
      %p96 = scmp.eq.s32.totalorder %s11, 0
      %p97 = por %p95, %p96
      %p98 = scmp.ne.s32.totalorder %s87, %s90
      %p99 = scmp.eq.s32.totalorder %s16, 7
      %p100 = por %p98, %p99
      %p101 = scmp.ne.s32.totalorder %s90, %s91
      %p102 = scmp.eq.s32.totalorder %s16, 0
      %p103 = por %p101, %p102
      %p104 = scmp.ne.s32.totalorder %s90, %s91
      %p105 = scmp.eq.s32.totalorder %s17, 7
      %p106 = por %p104, %p105
      %p108 = scmp.ne.s32.totalorder %s91, %s107
      %p109 = scmp.eq.s32.totalorder %s17, 0
      %p110 = por %p108, %p109
      %p111 = scmp.le.s32.totalorder 1, %s11
      %p112 = scmp.lt.s32.totalorder %s11, 9
      %p113 = pnand %p111, %p112
      %p114 = pneg %p113
      // Predicated region
      $region9: #{vgg_forward.13} parent=5 // pred_check
        _
      $region10: #{vgg_forward.13} parent=5 // pred_check_branch
        %116 = sbr.rel (%p113) target = $region12
      $region11: #{vgg_forward.13} parent=5 // pred_region
        %s117 = ssub.s32 %s11, 1
      $region12: #{vgg_forward.13} parent=5 // pred_fallthru
        _
      %p118 = scmp.lt.s32.totalorder %s11, 8
      // Predicated region
      $region13: #{vgg_forward.13} parent=5 // pred_check
        %p119 = pneg %p118
      $region14: #{vgg_forward.13} parent=5 // pred_check_branch
        %121 = sbr.rel (%p119) target = $region16
      $region15: #{vgg_forward.13} parent=5 // pred_region
        // Predicated region
        $region17: #{vgg_forward.13} parent=15 // pred_check
          %p122 = pneg %p43
        $region18: #{vgg_forward.13} parent=15 // pred_check_branch
          %124 = sbr.rel (%p122) target = $region20
        $region19: #{vgg_forward.13} parent=15 // pred_region
          %s125 = smul.u32 8, %s19
          %p126 = scmp.lt.s32.totalorder %s125, 15
          %s127 = scalar_select %p126, %s125, 15
          %s128 = smul.addr %s127, 2
          %s129 = scalar_lea.vmem %s0, %s128
          %s130 = smul.u32 8, %s19
        $region20: #{vgg_forward.13} parent=15 // pred_fallthru
          _
        // Predicated region
        $region21: #{vgg_forward.13} parent=15 // pred_check
          %p131 = pneg %p71
        $region22: #{vgg_forward.13} parent=15 // pred_check_branch
          %133 = sbr.rel (%p131) target = $region24
        $region23: #{vgg_forward.13} parent=15 // pred_region
          %s134 = sand.u32 %s61, 1
          %s135 = scalar_lea.sflag [#allocation4], %s134
          %s136 = sand.u32 %s61, 1
          %s137 = smul.addr %s136, 8192
          %s138 = scalar_lea.vmem [#allocation3], %s137
          %s139 = smul.u32 128, %s19
          %s140 = smul.u32 8, %s18
          %s142 = ssub.s32 131072, 131072
          %143 = vsyncadd %s135, %s142
          %s144 = smul.addr %s139, 32
          %s145 = sadd.s32 %s140, %s144
          %s146 = smul.addr %s145, 128
          %s147 = scalar_lea.hbm %s1, %s146
          %s148 = sshll.u32 %s138, 4
          %s149 = int_to_ptr.vmem [resolvable:$true] %s148
          %154 = dma.hbm_to_vmem [thread:$0]  %s147, 131072, %s149, %s135, 4096, 1024, 64
        $region24: #{vgg_forward.13} parent=15 // pred_fallthru
          _
      $region16: #{vgg_forward.13} parent=5 // pred_fallthru
        _
      %p155 = scmp.le.s32.totalorder 1, %s11
      %p156 = scmp.lt.s32.totalorder %s11, 9
      %p157 = pnand %p155, %p156
      %p158 = pneg %p157
      // Predicated region
      $region25: #{vgg_forward.13} parent=5 // pred_check
        _
      $region26: #{vgg_forward.13} parent=5 // pred_check_branch
        %160 = sbr.rel (%p157) target = $region28
      $region27: #{vgg_forward.13} parent=5 // pred_region
        %s161 = ssub.s32 %s11, 1
        %s162 = sand.u32 %s64, 1
        %s163 = scalar_lea.sflag [#allocation4], %s162
        %s164 = sand.u32 %s64, 1
        %s165 = smul.addr %s164, 8192
        %s166 = scalar_lea.vmem [#allocation3], %s165
        // Predicated region
        $region29: #{vgg_forward.13} parent=27 // pred_check
          %p167 = pneg %p77
        $region30: #{vgg_forward.13} parent=27 // pred_check_branch
          %169 = sbr.rel (%p167) target = $region32
        $region31: #{vgg_forward.13} parent=27 // pred_region
          %170 = dma.done %s163, 131072
        $region32: #{vgg_forward.13} parent=27 // pred_fallthru
          _
        %s171 = smul.u32 8, %s21
        %p172 = scmp.lt.s32.totalorder %s171, 15
        %s173 = scalar_select %p172, %s171, 15
        %s174 = smul.addr %s173, 2
        %s175 = scalar_lea.vmem %s0, %s174
        %p176 = pneg %p49
        %p177 = pneg %p46
        %s178 = sand.u32 %s64, 1
        %s179 = scalar_lea.sflag [#allocation4], %s178
        %s180 = sand.u32 %s64, 1
        %s181 = smul.addr %s180, 8192
        %s182 = scalar_lea.vmem [#allocation3], %s181
        %p183 = pneg %p77
        %p184 = pneg %p74
        %p185 = pneg %p103
        %p186 = pneg %p100
        %s187 = smul.u32 8, %s20
        %p188 = scmp.lt.s32.totalorder %s187, 31
        %s189 = scalar_select %p188, %s187, 31
        %s190 = smul.addr %s189, 2
        %s191 = scalar_lea.vmem %s2, %s190
        %s192 = smul.u32 8, %s21
        %p193 = scmp.lt.s32.totalorder %s192, 15
        %s194 = scalar_select %p193, %s192, 15
        %s195 = smul.addr %s194, 2
        %s196 = scalar_lea.vmem %s0, %s195
        %s197 = smul.u32 8, %s21
        %s198 = smul.u32 128, %s21
        %s199 = smul.u32 8, %s20
        %s200 = smul.u32 8, %s20
        %p201 = scmp.lt.s32.totalorder %s200, 31
        %s202 = scalar_select %p201, %s200, 31
        %s203 = smul.addr %s202, 2
        %s204 = scalar_lea.vmem %s2, %s203
        %s205 = smul.u32 8, %s20
        %p206 = scmp.eq.s32.totalorder %s21, 0
        // Predicated region
        $region33: #{vgg_forward.13} parent=27 // pred_check
          %p207 = pneg %p206
        $region34: #{vgg_forward.13} parent=27 // pred_check_branch
          %209 = sbr.rel (%p207) target = $region36
        $region35: #{vgg_forward.13} parent=27 // pred_region
          %210 = vst [vmem:[#allocation2] sm:$0xff] 0.0
          %211 = vst [vmem:[#allocation2 + $0x8] sm:$0xff] 0.0
        $region36: #{vgg_forward.13} parent=27 // pred_fallthru
          _
        %v212 = vld [vmem:[#allocation2] sm:$0xff]
        %v213 = vld [vmem:[#allocation2 + $0x8] sm:$0xff]
        %v214 = vld [vmem:[%s196] sm:$0xff]
        %v215 = vld [vmem:[%s196 + $0x8] sm:$0xff]
        %v216 = vld [vmem:[%s166] sm:$0xff]
        %v217 = vld [vmem:[%s166 + $0x8] sm:$0xff]
        %v218 = vld [vmem:[%s166 + $0x10] sm:$0xff]
        %v219 = vld [vmem:[%s166 + $0x18] sm:$0xff]
        %v220 = vld [vmem:[%s166 + $0x20] sm:$0xff]
        %v221 = vld [vmem:[%s166 + $0x28] sm:$0xff]
        %v222 = vld [vmem:[%s166 + $0x30] sm:$0xff]
        %v223 = vld [vmem:[%s166 + $0x38] sm:$0xff]
        %v224 = vld [vmem:[%s166 + $0x40] sm:$0xff]
        %v225 = vld [vmem:[%s166 + $0x48] sm:$0xff]
        %v226 = vld [vmem:[%s166 + $0x50] sm:$0xff]
        %v227 = vld [vmem:[%s166 + $0x58] sm:$0xff]
        %v228 = vld [vmem:[%s166 + $0x60] sm:$0xff]
        %v229 = vld [vmem:[%s166 + $0x68] sm:$0xff]
        %v230 = vld [vmem:[%s166 + $0x70] sm:$0xff]
        %v231 = vld [vmem:[%s166 + $0x78] sm:$0xff]
        %v232 = vld [vmem:[%s166 + $0x80] sm:$0xff]
        %v233 = vld [vmem:[%s166 + $0x88] sm:$0xff]
        %v234 = vld [vmem:[%s166 + $0x90] sm:$0xff]
        %v235 = vld [vmem:[%s166 + $0x98] sm:$0xff]
        %v236 = vld [vmem:[%s166 + $0xa0] sm:$0xff]
        %v237 = vld [vmem:[%s166 + $0xa8] sm:$0xff]
        %v238 = vld [vmem:[%s166 + $0xb0] sm:$0xff]
        %v239 = vld [vmem:[%s166 + $0xb8] sm:$0xff]
        %v240 = vld [vmem:[%s166 + $0xc0] sm:$0xff]
        %v241 = vld [vmem:[%s166 + $0xc8] sm:$0xff]
        %v242 = vld [vmem:[%s166 + $0xd0] sm:$0xff]
        %v243 = vld [vmem:[%s166 + $0xd8] sm:$0xff]
        %v244 = vld [vmem:[%s166 + $0xe0] sm:$0xff]
        %v245 = vld [vmem:[%s166 + $0xe8] sm:$0xff]
        %v246 = vld [vmem:[%s166 + $0xf0] sm:$0xff]
        %v247 = vld [vmem:[%s166 + $0xf8] sm:$0xff]
        %v248 = vld [vmem:[%s166 + $0x100] sm:$0xff]
        %v249 = vld [vmem:[%s166 + $0x108] sm:$0xff]
        %v250 = vld [vmem:[%s166 + $0x110] sm:$0xff]
        %v251 = vld [vmem:[%s166 + $0x118] sm:$0xff]
        %v252 = vld [vmem:[%s166 + $0x120] sm:$0xff]
        %v253 = vld [vmem:[%s166 + $0x128] sm:$0xff]
        %v254 = vld [vmem:[%s166 + $0x130] sm:$0xff]
        %v255 = vld [vmem:[%s166 + $0x138] sm:$0xff]
        %v256 = vld [vmem:[%s166 + $0x140] sm:$0xff]
        %v257 = vld [vmem:[%s166 + $0x148] sm:$0xff]
        %v258 = vld [vmem:[%s166 + $0x150] sm:$0xff]
        %v259 = vld [vmem:[%s166 + $0x158] sm:$0xff]
        %v260 = vld [vmem:[%s166 + $0x160] sm:$0xff]
        %v261 = vld [vmem:[%s166 + $0x168] sm:$0xff]
        %v262 = vld [vmem:[%s166 + $0x170] sm:$0xff]
        %v263 = vld [vmem:[%s166 + $0x178] sm:$0xff]
        %v264 = vld [vmem:[%s166 + $0x180] sm:$0xff]
        %v265 = vld [vmem:[%s166 + $0x188] sm:$0xff]
        %v266 = vld [vmem:[%s166 + $0x190] sm:$0xff]
        %v267 = vld [vmem:[%s166 + $0x198] sm:$0xff]
        %v268 = vld [vmem:[%s166 + $0x1a0] sm:$0xff]
        %v269 = vld [vmem:[%s166 + $0x1a8] sm:$0xff]
        %v270 = vld [vmem:[%s166 + $0x1b0] sm:$0xff]
        %v271 = vld [vmem:[%s166 + $0x1b8] sm:$0xff]
        %v272 = vld [vmem:[%s166 + $0x1c0] sm:$0xff]
        %v273 = vld [vmem:[%s166 + $0x1c8] sm:$0xff]
        %v274 = vld [vmem:[%s166 + $0x1d0] sm:$0xff]
        %v275 = vld [vmem:[%s166 + $0x1d8] sm:$0xff]
        %v276 = vld [vmem:[%s166 + $0x1e0] sm:$0xff]
        %v277 = vld [vmem:[%s166 + $0x1e8] sm:$0xff]
        %v278 = vld [vmem:[%s166 + $0x1f0] sm:$0xff]
        %v279 = vld [vmem:[%s166 + $0x1f8] sm:$0xff]
        %v280 = vld [vmem:[%s166 + $0x200] sm:$0xff]
        %v281 = vld [vmem:[%s166 + $0x208] sm:$0xff]
        %v282 = vld [vmem:[%s166 + $0x210] sm:$0xff]
        %v283 = vld [vmem:[%s166 + $0x218] sm:$0xff]
        %v284 = vld [vmem:[%s166 + $0x220] sm:$0xff]
        %v285 = vld [vmem:[%s166 + $0x228] sm:$0xff]
        %v286 = vld [vmem:[%s166 + $0x230] sm:$0xff]
        %v287 = vld [vmem:[%s166 + $0x238] sm:$0xff]
        %v288 = vld [vmem:[%s166 + $0x240] sm:$0xff]
        %v289 = vld [vmem:[%s166 + $0x248] sm:$0xff]
        %v290 = vld [vmem:[%s166 + $0x250] sm:$0xff]
        %v291 = vld [vmem:[%s166 + $0x258] sm:$0xff]
        %v292 = vld [vmem:[%s166 + $0x260] sm:$0xff]
        %v293 = vld [vmem:[%s166 + $0x268] sm:$0xff]
        %v294 = vld [vmem:[%s166 + $0x270] sm:$0xff]
        %v295 = vld [vmem:[%s166 + $0x278] sm:$0xff]
        %v296 = vld [vmem:[%s166 + $0x280] sm:$0xff]
        %v297 = vld [vmem:[%s166 + $0x288] sm:$0xff]
        %v298 = vld [vmem:[%s166 + $0x290] sm:$0xff]
        %v299 = vld [vmem:[%s166 + $0x298] sm:$0xff]
        %v300 = vld [vmem:[%s166 + $0x2a0] sm:$0xff]
        %v301 = vld [vmem:[%s166 + $0x2a8] sm:$0xff]
        %v302 = vld [vmem:[%s166 + $0x2b0] sm:$0xff]
        %v303 = vld [vmem:[%s166 + $0x2b8] sm:$0xff]
        %v304 = vld [vmem:[%s166 + $0x2c0] sm:$0xff]
        %v305 = vld [vmem:[%s166 + $0x2c8] sm:$0xff]
        %v306 = vld [vmem:[%s166 + $0x2d0] sm:$0xff]
        %v307 = vld [vmem:[%s166 + $0x2d8] sm:$0xff]
        %v308 = vld [vmem:[%s166 + $0x2e0] sm:$0xff]
        %v309 = vld [vmem:[%s166 + $0x2e8] sm:$0xff]
        %v310 = vld [vmem:[%s166 + $0x2f0] sm:$0xff]
        %v311 = vld [vmem:[%s166 + $0x2f8] sm:$0xff]
        %v312 = vld [vmem:[%s166 + $0x300] sm:$0xff]
        %v313 = vld [vmem:[%s166 + $0x308] sm:$0xff]
        %v314 = vld [vmem:[%s166 + $0x310] sm:$0xff]
        %v315 = vld [vmem:[%s166 + $0x318] sm:$0xff]
        %v316 = vld [vmem:[%s166 + $0x320] sm:$0xff]
        %v317 = vld [vmem:[%s166 + $0x328] sm:$0xff]
        %v318 = vld [vmem:[%s166 + $0x330] sm:$0xff]
        %v319 = vld [vmem:[%s166 + $0x338] sm:$0xff]
        %v320 = vld [vmem:[%s166 + $0x340] sm:$0xff]
        %v321 = vld [vmem:[%s166 + $0x348] sm:$0xff]
        %v322 = vld [vmem:[%s166 + $0x350] sm:$0xff]
        %v323 = vld [vmem:[%s166 + $0x358] sm:$0xff]
        %v324 = vld [vmem:[%s166 + $0x360] sm:$0xff]
        %v325 = vld [vmem:[%s166 + $0x368] sm:$0xff]
        %v326 = vld [vmem:[%s166 + $0x370] sm:$0xff]
        %v327 = vld [vmem:[%s166 + $0x378] sm:$0xff]
        %v328 = vld [vmem:[%s166 + $0x380] sm:$0xff]
        %v329 = vld [vmem:[%s166 + $0x388] sm:$0xff]
        %v330 = vld [vmem:[%s166 + $0x390] sm:$0xff]
        %v331 = vld [vmem:[%s166 + $0x398] sm:$0xff]
        %v332 = vld [vmem:[%s166 + $0x3a0] sm:$0xff]
        %v333 = vld [vmem:[%s166 + $0x3a8] sm:$0xff]
        %v334 = vld [vmem:[%s166 + $0x3b0] sm:$0xff]
        %v335 = vld [vmem:[%s166 + $0x3b8] sm:$0xff]
        %v336 = vld [vmem:[%s166 + $0x3c0] sm:$0xff]
        %v337 = vld [vmem:[%s166 + $0x3c8] sm:$0xff]
        %v338 = vld [vmem:[%s166 + $0x3d0] sm:$0xff]
        %v339 = vld [vmem:[%s166 + $0x3d8] sm:$0xff]
        %v340 = vld [vmem:[%s166 + $0x3e0] sm:$0xff]
        %v341 = vld [vmem:[%s166 + $0x3e8] sm:$0xff]
        %v342 = vld [vmem:[%s166 + $0x3f0] sm:$0xff]
        %v343 = vld [vmem:[%s166 + $0x3f8] sm:$0xff]
        %v344 = vld [vmem:[%s166 + $0x400] sm:$0xff]
        %v345 = vld [vmem:[%s166 + $0x408] sm:$0xff]
        %v346 = vld [vmem:[%s166 + $0x410] sm:$0xff]
        %v347 = vld [vmem:[%s166 + $0x418] sm:$0xff]
        %v348 = vld [vmem:[%s166 + $0x420] sm:$0xff]
        %v349 = vld [vmem:[%s166 + $0x428] sm:$0xff]
        %v350 = vld [vmem:[%s166 + $0x430] sm:$0xff]
        %v351 = vld [vmem:[%s166 + $0x438] sm:$0xff]
        %v352 = vld [vmem:[%s166 + $0x440] sm:$0xff]
        %v353 = vld [vmem:[%s166 + $0x448] sm:$0xff]
        %v354 = vld [vmem:[%s166 + $0x450] sm:$0xff]
        %v355 = vld [vmem:[%s166 + $0x458] sm:$0xff]
        %v356 = vld [vmem:[%s166 + $0x460] sm:$0xff]
        %v357 = vld [vmem:[%s166 + $0x468] sm:$0xff]
        %v358 = vld [vmem:[%s166 + $0x470] sm:$0xff]
        %v359 = vld [vmem:[%s166 + $0x478] sm:$0xff]
        %v360 = vld [vmem:[%s166 + $0x480] sm:$0xff]
        %v361 = vld [vmem:[%s166 + $0x488] sm:$0xff]
        %v362 = vld [vmem:[%s166 + $0x490] sm:$0xff]
        %v363 = vld [vmem:[%s166 + $0x498] sm:$0xff]
        %v364 = vld [vmem:[%s166 + $0x4a0] sm:$0xff]
        %v365 = vld [vmem:[%s166 + $0x4a8] sm:$0xff]
        %v366 = vld [vmem:[%s166 + $0x4b0] sm:$0xff]
        %v367 = vld [vmem:[%s166 + $0x4b8] sm:$0xff]
        %v368 = vld [vmem:[%s166 + $0x4c0] sm:$0xff]
        %v369 = vld [vmem:[%s166 + $0x4c8] sm:$0xff]
        %v370 = vld [vmem:[%s166 + $0x4d0] sm:$0xff]
        %v371 = vld [vmem:[%s166 + $0x4d8] sm:$0xff]
        %v372 = vld [vmem:[%s166 + $0x4e0] sm:$0xff]
        %v373 = vld [vmem:[%s166 + $0x4e8] sm:$0xff]
        %v374 = vld [vmem:[%s166 + $0x4f0] sm:$0xff]
        %v375 = vld [vmem:[%s166 + $0x4f8] sm:$0xff]
        %v376 = vld [vmem:[%s166 + $0x500] sm:$0xff]
        %v377 = vld [vmem:[%s166 + $0x508] sm:$0xff]
        %v378 = vld [vmem:[%s166 + $0x510] sm:$0xff]
        %v379 = vld [vmem:[%s166 + $0x518] sm:$0xff]
        %v380 = vld [vmem:[%s166 + $0x520] sm:$0xff]
        %v381 = vld [vmem:[%s166 + $0x528] sm:$0xff]
        %v382 = vld [vmem:[%s166 + $0x530] sm:$0xff]
        %v383 = vld [vmem:[%s166 + $0x538] sm:$0xff]
        %v384 = vld [vmem:[%s166 + $0x540] sm:$0xff]
        %v385 = vld [vmem:[%s166 + $0x548] sm:$0xff]
        %v386 = vld [vmem:[%s166 + $0x550] sm:$0xff]
        %v387 = vld [vmem:[%s166 + $0x558] sm:$0xff]
        %v388 = vld [vmem:[%s166 + $0x560] sm:$0xff]
        %v389 = vld [vmem:[%s166 + $0x568] sm:$0xff]
        %v390 = vld [vmem:[%s166 + $0x570] sm:$0xff]
        %v391 = vld [vmem:[%s166 + $0x578] sm:$0xff]
        %v392 = vld [vmem:[%s166 + $0x580] sm:$0xff]
        %v393 = vld [vmem:[%s166 + $0x588] sm:$0xff]
        %v394 = vld [vmem:[%s166 + $0x590] sm:$0xff]
        %v395 = vld [vmem:[%s166 + $0x598] sm:$0xff]
        %v396 = vld [vmem:[%s166 + $0x5a0] sm:$0xff]
        %v397 = vld [vmem:[%s166 + $0x5a8] sm:$0xff]
        %v398 = vld [vmem:[%s166 + $0x5b0] sm:$0xff]
        %v399 = vld [vmem:[%s166 + $0x5b8] sm:$0xff]
        %v400 = vld [vmem:[%s166 + $0x5c0] sm:$0xff]
        %v401 = vld [vmem:[%s166 + $0x5c8] sm:$0xff]
        %v402 = vld [vmem:[%s166 + $0x5d0] sm:$0xff]
        %v403 = vld [vmem:[%s166 + $0x5d8] sm:$0xff]
        %v404 = vld [vmem:[%s166 + $0x5e0] sm:$0xff]
        %v405 = vld [vmem:[%s166 + $0x5e8] sm:$0xff]
        %v406 = vld [vmem:[%s166 + $0x5f0] sm:$0xff]
        %v407 = vld [vmem:[%s166 + $0x5f8] sm:$0xff]
        %v408 = vld [vmem:[%s166 + $0x600] sm:$0xff]
        %v409 = vld [vmem:[%s166 + $0x608] sm:$0xff]
        %v410 = vld [vmem:[%s166 + $0x610] sm:$0xff]
        %v411 = vld [vmem:[%s166 + $0x618] sm:$0xff]
        %v412 = vld [vmem:[%s166 + $0x620] sm:$0xff]
        %v413 = vld [vmem:[%s166 + $0x628] sm:$0xff]
        %v414 = vld [vmem:[%s166 + $0x630] sm:$0xff]
        %v415 = vld [vmem:[%s166 + $0x638] sm:$0xff]
        %v416 = vld [vmem:[%s166 + $0x640] sm:$0xff]
        %v417 = vld [vmem:[%s166 + $0x648] sm:$0xff]
        %v418 = vld [vmem:[%s166 + $0x650] sm:$0xff]
        %v419 = vld [vmem:[%s166 + $0x658] sm:$0xff]
        %v420 = vld [vmem:[%s166 + $0x660] sm:$0xff]
        %v421 = vld [vmem:[%s166 + $0x668] sm:$0xff]
        %v422 = vld [vmem:[%s166 + $0x670] sm:$0xff]
        %v423 = vld [vmem:[%s166 + $0x678] sm:$0xff]
        %v424 = vld [vmem:[%s166 + $0x680] sm:$0xff]
        %v425 = vld [vmem:[%s166 + $0x688] sm:$0xff]
        %v426 = vld [vmem:[%s166 + $0x690] sm:$0xff]
        %v427 = vld [vmem:[%s166 + $0x698] sm:$0xff]
        %v428 = vld [vmem:[%s166 + $0x6a0] sm:$0xff]
        %v429 = vld [vmem:[%s166 + $0x6a8] sm:$0xff]
        %v430 = vld [vmem:[%s166 + $0x6b0] sm:$0xff]
        %v431 = vld [vmem:[%s166 + $0x6b8] sm:$0xff]
        %v432 = vld [vmem:[%s166 + $0x6c0] sm:$0xff]
        %v433 = vld [vmem:[%s166 + $0x6c8] sm:$0xff]
        %v434 = vld [vmem:[%s166 + $0x6d0] sm:$0xff]
        %v435 = vld [vmem:[%s166 + $0x6d8] sm:$0xff]
        %v436 = vld [vmem:[%s166 + $0x6e0] sm:$0xff]
        %v437 = vld [vmem:[%s166 + $0x6e8] sm:$0xff]
        %v438 = vld [vmem:[%s166 + $0x6f0] sm:$0xff]
        %v439 = vld [vmem:[%s166 + $0x6f8] sm:$0xff]
        %v440 = vld [vmem:[%s166 + $0x700] sm:$0xff]
        %v441 = vld [vmem:[%s166 + $0x708] sm:$0xff]
        %v442 = vld [vmem:[%s166 + $0x710] sm:$0xff]
        %v443 = vld [vmem:[%s166 + $0x718] sm:$0xff]
        %v444 = vld [vmem:[%s166 + $0x720] sm:$0xff]
        %v445 = vld [vmem:[%s166 + $0x728] sm:$0xff]
        %v446 = vld [vmem:[%s166 + $0x730] sm:$0xff]
        %v447 = vld [vmem:[%s166 + $0x738] sm:$0xff]
        %v448 = vld [vmem:[%s166 + $0x740] sm:$0xff]
        %v449 = vld [vmem:[%s166 + $0x748] sm:$0xff]
        %v450 = vld [vmem:[%s166 + $0x750] sm:$0xff]
        %v451 = vld [vmem:[%s166 + $0x758] sm:$0xff]
        %v452 = vld [vmem:[%s166 + $0x760] sm:$0xff]
        %v453 = vld [vmem:[%s166 + $0x768] sm:$0xff]
        %v454 = vld [vmem:[%s166 + $0x770] sm:$0xff]
        %v455 = vld [vmem:[%s166 + $0x778] sm:$0xff]
        %v456 = vld [vmem:[%s166 + $0x780] sm:$0xff]
        %v457 = vld [vmem:[%s166 + $0x788] sm:$0xff]
        %v458 = vld [vmem:[%s166 + $0x790] sm:$0xff]
        %v459 = vld [vmem:[%s166 + $0x798] sm:$0xff]
        %v460 = vld [vmem:[%s166 + $0x7a0] sm:$0xff]
        %v461 = vld [vmem:[%s166 + $0x7a8] sm:$0xff]
        %v462 = vld [vmem:[%s166 + $0x7b0] sm:$0xff]
        %v463 = vld [vmem:[%s166 + $0x7b8] sm:$0xff]
        %v464 = vld [vmem:[%s166 + $0x7c0] sm:$0xff]
        %v465 = vld [vmem:[%s166 + $0x7c8] sm:$0xff]
        %v466 = vld [vmem:[%s166 + $0x7d0] sm:$0xff]
        %v467 = vld [vmem:[%s166 + $0x7d8] sm:$0xff]
        %v468 = vld [vmem:[%s166 + $0x7e0] sm:$0xff]
        %v469 = vld [vmem:[%s166 + $0x7e8] sm:$0xff]
        %v470 = vld [vmem:[%s166 + $0x7f0] sm:$0xff]
        %v471 = vld [vmem:[%s166 + $0x7f8] sm:$0xff]
        %v472 = vld [vmem:[%s166 + $0x800] sm:$0xff]
        %v473 = vld [vmem:[%s166 + $0x808] sm:$0xff]
        %v474 = vld [vmem:[%s166 + $0x810] sm:$0xff]
        %v475 = vld [vmem:[%s166 + $0x818] sm:$0xff]
        %v476 = vld [vmem:[%s166 + $0x820] sm:$0xff]
        %v477 = vld [vmem:[%s166 + $0x828] sm:$0xff]
        %v478 = vld [vmem:[%s166 + $0x830] sm:$0xff]
        %v479 = vld [vmem:[%s166 + $0x838] sm:$0xff]
        %v480 = vld [vmem:[%s166 + $0x840] sm:$0xff]
        %v481 = vld [vmem:[%s166 + $0x848] sm:$0xff]
        %v482 = vld [vmem:[%s166 + $0x850] sm:$0xff]
        %v483 = vld [vmem:[%s166 + $0x858] sm:$0xff]
        %v484 = vld [vmem:[%s166 + $0x860] sm:$0xff]
        %v485 = vld [vmem:[%s166 + $0x868] sm:$0xff]
        %v486 = vld [vmem:[%s166 + $0x870] sm:$0xff]
        %v487 = vld [vmem:[%s166 + $0x878] sm:$0xff]
        %v488 = vld [vmem:[%s166 + $0x880] sm:$0xff]
        %v489 = vld [vmem:[%s166 + $0x888] sm:$0xff]
        %v490 = vld [vmem:[%s166 + $0x890] sm:$0xff]
        %v491 = vld [vmem:[%s166 + $0x898] sm:$0xff]
        %v492 = vld [vmem:[%s166 + $0x8a0] sm:$0xff]
        %v493 = vld [vmem:[%s166 + $0x8a8] sm:$0xff]
        %v494 = vld [vmem:[%s166 + $0x8b0] sm:$0xff]
        %v495 = vld [vmem:[%s166 + $0x8b8] sm:$0xff]
        %v496 = vld [vmem:[%s166 + $0x8c0] sm:$0xff]
        %v497 = vld [vmem:[%s166 + $0x8c8] sm:$0xff]
        %v498 = vld [vmem:[%s166 + $0x8d0] sm:$0xff]
        %v499 = vld [vmem:[%s166 + $0x8d8] sm:$0xff]
        %v500 = vld [vmem:[%s166 + $0x8e0] sm:$0xff]
        %v501 = vld [vmem:[%s166 + $0x8e8] sm:$0xff]
        %v502 = vld [vmem:[%s166 + $0x8f0] sm:$0xff]
        %v503 = vld [vmem:[%s166 + $0x8f8] sm:$0xff]
        %v504 = vld [vmem:[%s166 + $0x900] sm:$0xff]
        %v505 = vld [vmem:[%s166 + $0x908] sm:$0xff]
        %v506 = vld [vmem:[%s166 + $0x910] sm:$0xff]
        %v507 = vld [vmem:[%s166 + $0x918] sm:$0xff]
        %v508 = vld [vmem:[%s166 + $0x920] sm:$0xff]
        %v509 = vld [vmem:[%s166 + $0x928] sm:$0xff]
        %v510 = vld [vmem:[%s166 + $0x930] sm:$0xff]
        %v511 = vld [vmem:[%s166 + $0x938] sm:$0xff]
        %v512 = vld [vmem:[%s166 + $0x940] sm:$0xff]
        %v513 = vld [vmem:[%s166 + $0x948] sm:$0xff]
        %v514 = vld [vmem:[%s166 + $0x950] sm:$0xff]
        %v515 = vld [vmem:[%s166 + $0x958] sm:$0xff]
        %v516 = vld [vmem:[%s166 + $0x960] sm:$0xff]
        %v517 = vld [vmem:[%s166 + $0x968] sm:$0xff]
        %v518 = vld [vmem:[%s166 + $0x970] sm:$0xff]
        %v519 = vld [vmem:[%s166 + $0x978] sm:$0xff]
        %v520 = vld [vmem:[%s166 + $0x980] sm:$0xff]
        %v521 = vld [vmem:[%s166 + $0x988] sm:$0xff]
        %v522 = vld [vmem:[%s166 + $0x990] sm:$0xff]
        %v523 = vld [vmem:[%s166 + $0x998] sm:$0xff]
        %v524 = vld [vmem:[%s166 + $0x9a0] sm:$0xff]
        %v525 = vld [vmem:[%s166 + $0x9a8] sm:$0xff]
        %v526 = vld [vmem:[%s166 + $0x9b0] sm:$0xff]
        %v527 = vld [vmem:[%s166 + $0x9b8] sm:$0xff]
        %v528 = vld [vmem:[%s166 + $0x9c0] sm:$0xff]
        %v529 = vld [vmem:[%s166 + $0x9c8] sm:$0xff]
        %v530 = vld [vmem:[%s166 + $0x9d0] sm:$0xff]
        %v531 = vld [vmem:[%s166 + $0x9d8] sm:$0xff]
        %v532 = vld [vmem:[%s166 + $0x9e0] sm:$0xff]
        %v533 = vld [vmem:[%s166 + $0x9e8] sm:$0xff]
        %v534 = vld [vmem:[%s166 + $0x9f0] sm:$0xff]
        %v535 = vld [vmem:[%s166 + $0x9f8] sm:$0xff]
        %v536 = vld [vmem:[%s166 + $0xa00] sm:$0xff]
        %v537 = vld [vmem:[%s166 + $0xa08] sm:$0xff]
        %v538 = vld [vmem:[%s166 + $0xa10] sm:$0xff]
        %v539 = vld [vmem:[%s166 + $0xa18] sm:$0xff]
        %v540 = vld [vmem:[%s166 + $0xa20] sm:$0xff]
        %v541 = vld [vmem:[%s166 + $0xa28] sm:$0xff]
        %v542 = vld [vmem:[%s166 + $0xa30] sm:$0xff]
        %v543 = vld [vmem:[%s166 + $0xa38] sm:$0xff]
        %v544 = vld [vmem:[%s166 + $0xa40] sm:$0xff]
        %v545 = vld [vmem:[%s166 + $0xa48] sm:$0xff]
        %v546 = vld [vmem:[%s166 + $0xa50] sm:$0xff]
        %v547 = vld [vmem:[%s166 + $0xa58] sm:$0xff]
        %v548 = vld [vmem:[%s166 + $0xa60] sm:$0xff]
        %v549 = vld [vmem:[%s166 + $0xa68] sm:$0xff]
        %v550 = vld [vmem:[%s166 + $0xa70] sm:$0xff]
        %v551 = vld [vmem:[%s166 + $0xa78] sm:$0xff]
        %v552 = vld [vmem:[%s166 + $0xa80] sm:$0xff]
        %v553 = vld [vmem:[%s166 + $0xa88] sm:$0xff]
        %v554 = vld [vmem:[%s166 + $0xa90] sm:$0xff]
        %v555 = vld [vmem:[%s166 + $0xa98] sm:$0xff]
        %v556 = vld [vmem:[%s166 + $0xaa0] sm:$0xff]
        %v557 = vld [vmem:[%s166 + $0xaa8] sm:$0xff]
        %v558 = vld [vmem:[%s166 + $0xab0] sm:$0xff]
        %v559 = vld [vmem:[%s166 + $0xab8] sm:$0xff]
        %v560 = vld [vmem:[%s166 + $0xac0] sm:$0xff]
        %v561 = vld [vmem:[%s166 + $0xac8] sm:$0xff]
        %v562 = vld [vmem:[%s166 + $0xad0] sm:$0xff]
        %v563 = vld [vmem:[%s166 + $0xad8] sm:$0xff]
        %v564 = vld [vmem:[%s166 + $0xae0] sm:$0xff]
        %v565 = vld [vmem:[%s166 + $0xae8] sm:$0xff]
        %v566 = vld [vmem:[%s166 + $0xaf0] sm:$0xff]
        %v567 = vld [vmem:[%s166 + $0xaf8] sm:$0xff]
        %v568 = vld [vmem:[%s166 + $0xb00] sm:$0xff]
        %v569 = vld [vmem:[%s166 + $0xb08] sm:$0xff]
        %v570 = vld [vmem:[%s166 + $0xb10] sm:$0xff]
        %v571 = vld [vmem:[%s166 + $0xb18] sm:$0xff]
        %v572 = vld [vmem:[%s166 + $0xb20] sm:$0xff]
        %v573 = vld [vmem:[%s166 + $0xb28] sm:$0xff]
        %v574 = vld [vmem:[%s166 + $0xb30] sm:$0xff]
        %v575 = vld [vmem:[%s166 + $0xb38] sm:$0xff]
        %v576 = vld [vmem:[%s166 + $0xb40] sm:$0xff]
        %v577 = vld [vmem:[%s166 + $0xb48] sm:$0xff]
        %v578 = vld [vmem:[%s166 + $0xb50] sm:$0xff]
        %v579 = vld [vmem:[%s166 + $0xb58] sm:$0xff]
        %v580 = vld [vmem:[%s166 + $0xb60] sm:$0xff]
        %v581 = vld [vmem:[%s166 + $0xb68] sm:$0xff]
        %v582 = vld [vmem:[%s166 + $0xb70] sm:$0xff]
        %v583 = vld [vmem:[%s166 + $0xb78] sm:$0xff]
        %v584 = vld [vmem:[%s166 + $0xb80] sm:$0xff]
        %v585 = vld [vmem:[%s166 + $0xb88] sm:$0xff]
        %v586 = vld [vmem:[%s166 + $0xb90] sm:$0xff]
        %v587 = vld [vmem:[%s166 + $0xb98] sm:$0xff]
        %v588 = vld [vmem:[%s166 + $0xba0] sm:$0xff]
        %v589 = vld [vmem:[%s166 + $0xba8] sm:$0xff]
        %v590 = vld [vmem:[%s166 + $0xbb0] sm:$0xff]
        %v591 = vld [vmem:[%s166 + $0xbb8] sm:$0xff]
        %v592 = vld [vmem:[%s166 + $0xbc0] sm:$0xff]
        %v593 = vld [vmem:[%s166 + $0xbc8] sm:$0xff]
        %v594 = vld [vmem:[%s166 + $0xbd0] sm:$0xff]
        %v595 = vld [vmem:[%s166 + $0xbd8] sm:$0xff]
        %v596 = vld [vmem:[%s166 + $0xbe0] sm:$0xff]
        %v597 = vld [vmem:[%s166 + $0xbe8] sm:$0xff]
        %v598 = vld [vmem:[%s166 + $0xbf0] sm:$0xff]
        %v599 = vld [vmem:[%s166 + $0xbf8] sm:$0xff]
        %v600 = vld [vmem:[%s166 + $0xc00] sm:$0xff]
        %v601 = vld [vmem:[%s166 + $0xc08] sm:$0xff]
        %v602 = vld [vmem:[%s166 + $0xc10] sm:$0xff]
        %v603 = vld [vmem:[%s166 + $0xc18] sm:$0xff]
        %v604 = vld [vmem:[%s166 + $0xc20] sm:$0xff]
        %v605 = vld [vmem:[%s166 + $0xc28] sm:$0xff]
        %v606 = vld [vmem:[%s166 + $0xc30] sm:$0xff]
        %v607 = vld [vmem:[%s166 + $0xc38] sm:$0xff]
        %v608 = vld [vmem:[%s166 + $0xc40] sm:$0xff]
        %v609 = vld [vmem:[%s166 + $0xc48] sm:$0xff]
        %v610 = vld [vmem:[%s166 + $0xc50] sm:$0xff]
        %v611 = vld [vmem:[%s166 + $0xc58] sm:$0xff]
        %v612 = vld [vmem:[%s166 + $0xc60] sm:$0xff]
        %v613 = vld [vmem:[%s166 + $0xc68] sm:$0xff]
        %v614 = vld [vmem:[%s166 + $0xc70] sm:$0xff]
        %v615 = vld [vmem:[%s166 + $0xc78] sm:$0xff]
        %v616 = vld [vmem:[%s166 + $0xc80] sm:$0xff]
        %v617 = vld [vmem:[%s166 + $0xc88] sm:$0xff]
        %v618 = vld [vmem:[%s166 + $0xc90] sm:$0xff]
        %v619 = vld [vmem:[%s166 + $0xc98] sm:$0xff]
        %v620 = vld [vmem:[%s166 + $0xca0] sm:$0xff]
        %v621 = vld [vmem:[%s166 + $0xca8] sm:$0xff]
        %v622 = vld [vmem:[%s166 + $0xcb0] sm:$0xff]
        %v623 = vld [vmem:[%s166 + $0xcb8] sm:$0xff]
        %v624 = vld [vmem:[%s166 + $0xcc0] sm:$0xff]
        %v625 = vld [vmem:[%s166 + $0xcc8] sm:$0xff]
        %v626 = vld [vmem:[%s166 + $0xcd0] sm:$0xff]
        %v627 = vld [vmem:[%s166 + $0xcd8] sm:$0xff]
        %v628 = vld [vmem:[%s166 + $0xce0] sm:$0xff]
        %v629 = vld [vmem:[%s166 + $0xce8] sm:$0xff]
        %v630 = vld [vmem:[%s166 + $0xcf0] sm:$0xff]
        %v631 = vld [vmem:[%s166 + $0xcf8] sm:$0xff]
        %v632 = vld [vmem:[%s166 + $0xd00] sm:$0xff]
        %v633 = vld [vmem:[%s166 + $0xd08] sm:$0xff]
        %v634 = vld [vmem:[%s166 + $0xd10] sm:$0xff]
        %v635 = vld [vmem:[%s166 + $0xd18] sm:$0xff]
        %v636 = vld [vmem:[%s166 + $0xd20] sm:$0xff]
        %v637 = vld [vmem:[%s166 + $0xd28] sm:$0xff]
        %v638 = vld [vmem:[%s166 + $0xd30] sm:$0xff]
        %v639 = vld [vmem:[%s166 + $0xd38] sm:$0xff]
        %v640 = vld [vmem:[%s166 + $0xd40] sm:$0xff]
        %v641 = vld [vmem:[%s166 + $0xd48] sm:$0xff]
        %v642 = vld [vmem:[%s166 + $0xd50] sm:$0xff]
        %v643 = vld [vmem:[%s166 + $0xd58] sm:$0xff]
        %v644 = vld [vmem:[%s166 + $0xd60] sm:$0xff]
        %v645 = vld [vmem:[%s166 + $0xd68] sm:$0xff]
        %v646 = vld [vmem:[%s166 + $0xd70] sm:$0xff]
        %v647 = vld [vmem:[%s166 + $0xd78] sm:$0xff]
        %v648 = vld [vmem:[%s166 + $0xd80] sm:$0xff]
        %v649 = vld [vmem:[%s166 + $0xd88] sm:$0xff]
        %v650 = vld [vmem:[%s166 + $0xd90] sm:$0xff]
        %v651 = vld [vmem:[%s166 + $0xd98] sm:$0xff]
        %v652 = vld [vmem:[%s166 + $0xda0] sm:$0xff]
        %v653 = vld [vmem:[%s166 + $0xda8] sm:$0xff]
        %v654 = vld [vmem:[%s166 + $0xdb0] sm:$0xff]
        %v655 = vld [vmem:[%s166 + $0xdb8] sm:$0xff]
        %v656 = vld [vmem:[%s166 + $0xdc0] sm:$0xff]
        %v657 = vld [vmem:[%s166 + $0xdc8] sm:$0xff]
        %v658 = vld [vmem:[%s166 + $0xdd0] sm:$0xff]
        %v659 = vld [vmem:[%s166 + $0xdd8] sm:$0xff]
        %v660 = vld [vmem:[%s166 + $0xde0] sm:$0xff]
        %v661 = vld [vmem:[%s166 + $0xde8] sm:$0xff]
        %v662 = vld [vmem:[%s166 + $0xdf0] sm:$0xff]
        %v663 = vld [vmem:[%s166 + $0xdf8] sm:$0xff]
        %v664 = vld [vmem:[%s166 + $0xe00] sm:$0xff]
        %v665 = vld [vmem:[%s166 + $0xe08] sm:$0xff]
        %v666 = vld [vmem:[%s166 + $0xe10] sm:$0xff]
        %v667 = vld [vmem:[%s166 + $0xe18] sm:$0xff]
        %v668 = vld [vmem:[%s166 + $0xe20] sm:$0xff]
        %v669 = vld [vmem:[%s166 + $0xe28] sm:$0xff]
        %v670 = vld [vmem:[%s166 + $0xe30] sm:$0xff]
        %v671 = vld [vmem:[%s166 + $0xe38] sm:$0xff]
        %v672 = vld [vmem:[%s166 + $0xe40] sm:$0xff]
        %v673 = vld [vmem:[%s166 + $0xe48] sm:$0xff]
        %v674 = vld [vmem:[%s166 + $0xe50] sm:$0xff]
        %v675 = vld [vmem:[%s166 + $0xe58] sm:$0xff]
        %v676 = vld [vmem:[%s166 + $0xe60] sm:$0xff]
        %v677 = vld [vmem:[%s166 + $0xe68] sm:$0xff]
        %v678 = vld [vmem:[%s166 + $0xe70] sm:$0xff]
        %v679 = vld [vmem:[%s166 + $0xe78] sm:$0xff]
        %v680 = vld [vmem:[%s166 + $0xe80] sm:$0xff]
        %v681 = vld [vmem:[%s166 + $0xe88] sm:$0xff]
        %v682 = vld [vmem:[%s166 + $0xe90] sm:$0xff]
        %v683 = vld [vmem:[%s166 + $0xe98] sm:$0xff]
        %v684 = vld [vmem:[%s166 + $0xea0] sm:$0xff]
        %v685 = vld [vmem:[%s166 + $0xea8] sm:$0xff]
        %v686 = vld [vmem:[%s166 + $0xeb0] sm:$0xff]
        %v687 = vld [vmem:[%s166 + $0xeb8] sm:$0xff]
        %v688 = vld [vmem:[%s166 + $0xec0] sm:$0xff]
        %v689 = vld [vmem:[%s166 + $0xec8] sm:$0xff]
        %v690 = vld [vmem:[%s166 + $0xed0] sm:$0xff]
        %v691 = vld [vmem:[%s166 + $0xed8] sm:$0xff]
        %v692 = vld [vmem:[%s166 + $0xee0] sm:$0xff]
        %v693 = vld [vmem:[%s166 + $0xee8] sm:$0xff]
        %v694 = vld [vmem:[%s166 + $0xef0] sm:$0xff]
        %v695 = vld [vmem:[%s166 + $0xef8] sm:$0xff]
        %v696 = vld [vmem:[%s166 + $0xf00] sm:$0xff]
        %v697 = vld [vmem:[%s166 + $0xf08] sm:$0xff]
        %v698 = vld [vmem:[%s166 + $0xf10] sm:$0xff]
        %v699 = vld [vmem:[%s166 + $0xf18] sm:$0xff]
        %v700 = vld [vmem:[%s166 + $0xf20] sm:$0xff]
        %v701 = vld [vmem:[%s166 + $0xf28] sm:$0xff]
        %v702 = vld [vmem:[%s166 + $0xf30] sm:$0xff]
        %v703 = vld [vmem:[%s166 + $0xf38] sm:$0xff]
        %v704 = vld [vmem:[%s166 + $0xf40] sm:$0xff]
        %v705 = vld [vmem:[%s166 + $0xf48] sm:$0xff]
        %v706 = vld [vmem:[%s166 + $0xf50] sm:$0xff]
        %v707 = vld [vmem:[%s166 + $0xf58] sm:$0xff]
        %v708 = vld [vmem:[%s166 + $0xf60] sm:$0xff]
        %v709 = vld [vmem:[%s166 + $0xf68] sm:$0xff]
        %v710 = vld [vmem:[%s166 + $0xf70] sm:$0xff]
        %v711 = vld [vmem:[%s166 + $0xf78] sm:$0xff]
        %v712 = vld [vmem:[%s166 + $0xf80] sm:$0xff]
        %v713 = vld [vmem:[%s166 + $0xf88] sm:$0xff]
        %v714 = vld [vmem:[%s166 + $0xf90] sm:$0xff]
        %v715 = vld [vmem:[%s166 + $0xf98] sm:$0xff]
        %v716 = vld [vmem:[%s166 + $0xfa0] sm:$0xff]
        %v717 = vld [vmem:[%s166 + $0xfa8] sm:$0xff]
        %v718 = vld [vmem:[%s166 + $0xfb0] sm:$0xff]
        %v719 = vld [vmem:[%s166 + $0xfb8] sm:$0xff]
        %v720 = vld [vmem:[%s166 + $0xfc0] sm:$0xff]
        %v721 = vld [vmem:[%s166 + $0xfc8] sm:$0xff]
        %v722 = vld [vmem:[%s166 + $0xfd0] sm:$0xff]
        %v723 = vld [vmem:[%s166 + $0xfd8] sm:$0xff]
        %v724 = vld [vmem:[%s166 + $0xfe0] sm:$0xff]
        %v725 = vld [vmem:[%s166 + $0xfe8] sm:$0xff]
        %v726 = vld [vmem:[%s166 + $0xff0] sm:$0xff]
        %v727 = vld [vmem:[%s166 + $0xff8] sm:$0xff]
        %v728 = vld [vmem:[%s166 + $0x1000] sm:$0xff]
        %v729 = vld [vmem:[%s166 + $0x1008] sm:$0xff]
        %v730 = vld [vmem:[%s166 + $0x1010] sm:$0xff]
        %v731 = vld [vmem:[%s166 + $0x1018] sm:$0xff]
        %v732 = vld [vmem:[%s166 + $0x1020] sm:$0xff]
        %v733 = vld [vmem:[%s166 + $0x1028] sm:$0xff]
        %v734 = vld [vmem:[%s166 + $0x1030] sm:$0xff]
        %v735 = vld [vmem:[%s166 + $0x1038] sm:$0xff]
        %v736 = vld [vmem:[%s166 + $0x1040] sm:$0xff]
        %v737 = vld [vmem:[%s166 + $0x1048] sm:$0xff]
        %v738 = vld [vmem:[%s166 + $0x1050] sm:$0xff]
        %v739 = vld [vmem:[%s166 + $0x1058] sm:$0xff]
        %v740 = vld [vmem:[%s166 + $0x1060] sm:$0xff]
        %v741 = vld [vmem:[%s166 + $0x1068] sm:$0xff]
        %v742 = vld [vmem:[%s166 + $0x1070] sm:$0xff]
        %v743 = vld [vmem:[%s166 + $0x1078] sm:$0xff]
        %v744 = vld [vmem:[%s166 + $0x1080] sm:$0xff]
        %v745 = vld [vmem:[%s166 + $0x1088] sm:$0xff]
        %v746 = vld [vmem:[%s166 + $0x1090] sm:$0xff]
        %v747 = vld [vmem:[%s166 + $0x1098] sm:$0xff]
        %v748 = vld [vmem:[%s166 + $0x10a0] sm:$0xff]
        %v749 = vld [vmem:[%s166 + $0x10a8] sm:$0xff]
        %v750 = vld [vmem:[%s166 + $0x10b0] sm:$0xff]
        %v751 = vld [vmem:[%s166 + $0x10b8] sm:$0xff]
        %v752 = vld [vmem:[%s166 + $0x10c0] sm:$0xff]
        %v753 = vld [vmem:[%s166 + $0x10c8] sm:$0xff]
        %v754 = vld [vmem:[%s166 + $0x10d0] sm:$0xff]
        %v755 = vld [vmem:[%s166 + $0x10d8] sm:$0xff]
        %v756 = vld [vmem:[%s166 + $0x10e0] sm:$0xff]
        %v757 = vld [vmem:[%s166 + $0x10e8] sm:$0xff]
        %v758 = vld [vmem:[%s166 + $0x10f0] sm:$0xff]
        %v759 = vld [vmem:[%s166 + $0x10f8] sm:$0xff]
        %v760 = vld [vmem:[%s166 + $0x1100] sm:$0xff]
        %v761 = vld [vmem:[%s166 + $0x1108] sm:$0xff]
        %v762 = vld [vmem:[%s166 + $0x1110] sm:$0xff]
        %v763 = vld [vmem:[%s166 + $0x1118] sm:$0xff]
        %v764 = vld [vmem:[%s166 + $0x1120] sm:$0xff]
        %v765 = vld [vmem:[%s166 + $0x1128] sm:$0xff]
        %v766 = vld [vmem:[%s166 + $0x1130] sm:$0xff]
        %v767 = vld [vmem:[%s166 + $0x1138] sm:$0xff]
        %v768 = vld [vmem:[%s166 + $0x1140] sm:$0xff]
        %v769 = vld [vmem:[%s166 + $0x1148] sm:$0xff]
        %v770 = vld [vmem:[%s166 + $0x1150] sm:$0xff]
        %v771 = vld [vmem:[%s166 + $0x1158] sm:$0xff]
        %v772 = vld [vmem:[%s166 + $0x1160] sm:$0xff]
        %v773 = vld [vmem:[%s166 + $0x1168] sm:$0xff]
        %v774 = vld [vmem:[%s166 + $0x1170] sm:$0xff]
        %v775 = vld [vmem:[%s166 + $0x1178] sm:$0xff]
        %v776 = vld [vmem:[%s166 + $0x1180] sm:$0xff]
        %v777 = vld [vmem:[%s166 + $0x1188] sm:$0xff]
        %v778 = vld [vmem:[%s166 + $0x1190] sm:$0xff]
        %v779 = vld [vmem:[%s166 + $0x1198] sm:$0xff]
        %v780 = vld [vmem:[%s166 + $0x11a0] sm:$0xff]
        %v781 = vld [vmem:[%s166 + $0x11a8] sm:$0xff]
        %v782 = vld [vmem:[%s166 + $0x11b0] sm:$0xff]
        %v783 = vld [vmem:[%s166 + $0x11b8] sm:$0xff]
        %v784 = vld [vmem:[%s166 + $0x11c0] sm:$0xff]
        %v785 = vld [vmem:[%s166 + $0x11c8] sm:$0xff]
        %v786 = vld [vmem:[%s166 + $0x11d0] sm:$0xff]
        %v787 = vld [vmem:[%s166 + $0x11d8] sm:$0xff]
        %v788 = vld [vmem:[%s166 + $0x11e0] sm:$0xff]
        %v789 = vld [vmem:[%s166 + $0x11e8] sm:$0xff]
        %v790 = vld [vmem:[%s166 + $0x11f0] sm:$0xff]
        %v791 = vld [vmem:[%s166 + $0x11f8] sm:$0xff]
        %v792 = vld [vmem:[%s166 + $0x1200] sm:$0xff]
        %v793 = vld [vmem:[%s166 + $0x1208] sm:$0xff]
        %v794 = vld [vmem:[%s166 + $0x1210] sm:$0xff]
        %v795 = vld [vmem:[%s166 + $0x1218] sm:$0xff]
        %v796 = vld [vmem:[%s166 + $0x1220] sm:$0xff]
        %v797 = vld [vmem:[%s166 + $0x1228] sm:$0xff]
        %v798 = vld [vmem:[%s166 + $0x1230] sm:$0xff]
        %v799 = vld [vmem:[%s166 + $0x1238] sm:$0xff]
        %v800 = vld [vmem:[%s166 + $0x1240] sm:$0xff]
        %v801 = vld [vmem:[%s166 + $0x1248] sm:$0xff]
        %v802 = vld [vmem:[%s166 + $0x1250] sm:$0xff]
        %v803 = vld [vmem:[%s166 + $0x1258] sm:$0xff]
        %v804 = vld [vmem:[%s166 + $0x1260] sm:$0xff]
        %v805 = vld [vmem:[%s166 + $0x1268] sm:$0xff]
        %v806 = vld [vmem:[%s166 + $0x1270] sm:$0xff]
        %v807 = vld [vmem:[%s166 + $0x1278] sm:$0xff]
        %v808 = vld [vmem:[%s166 + $0x1280] sm:$0xff]
        %v809 = vld [vmem:[%s166 + $0x1288] sm:$0xff]
        %v810 = vld [vmem:[%s166 + $0x1290] sm:$0xff]
        %v811 = vld [vmem:[%s166 + $0x1298] sm:$0xff]
        %v812 = vld [vmem:[%s166 + $0x12a0] sm:$0xff]
        %v813 = vld [vmem:[%s166 + $0x12a8] sm:$0xff]
        %v814 = vld [vmem:[%s166 + $0x12b0] sm:$0xff]
        %v815 = vld [vmem:[%s166 + $0x12b8] sm:$0xff]
        %v816 = vld [vmem:[%s166 + $0x12c0] sm:$0xff]
        %v817 = vld [vmem:[%s166 + $0x12c8] sm:$0xff]
        %v818 = vld [vmem:[%s166 + $0x12d0] sm:$0xff]
        %v819 = vld [vmem:[%s166 + $0x12d8] sm:$0xff]
        %v820 = vld [vmem:[%s166 + $0x12e0] sm:$0xff]
        %v821 = vld [vmem:[%s166 + $0x12e8] sm:$0xff]
        %v822 = vld [vmem:[%s166 + $0x12f0] sm:$0xff]
        %v823 = vld [vmem:[%s166 + $0x12f8] sm:$0xff]
        %v824 = vld [vmem:[%s166 + $0x1300] sm:$0xff]
        %v825 = vld [vmem:[%s166 + $0x1308] sm:$0xff]
        %v826 = vld [vmem:[%s166 + $0x1310] sm:$0xff]
        %v827 = vld [vmem:[%s166 + $0x1318] sm:$0xff]
        %v828 = vld [vmem:[%s166 + $0x1320] sm:$0xff]
        %v829 = vld [vmem:[%s166 + $0x1328] sm:$0xff]
        %v830 = vld [vmem:[%s166 + $0x1330] sm:$0xff]
        %v831 = vld [vmem:[%s166 + $0x1338] sm:$0xff]
        %v832 = vld [vmem:[%s166 + $0x1340] sm:$0xff]
        %v833 = vld [vmem:[%s166 + $0x1348] sm:$0xff]
        %v834 = vld [vmem:[%s166 + $0x1350] sm:$0xff]
        %v835 = vld [vmem:[%s166 + $0x1358] sm:$0xff]
        %v836 = vld [vmem:[%s166 + $0x1360] sm:$0xff]
        %v837 = vld [vmem:[%s166 + $0x1368] sm:$0xff]
        %v838 = vld [vmem:[%s166 + $0x1370] sm:$0xff]
        %v839 = vld [vmem:[%s166 + $0x1378] sm:$0xff]
        %v840 = vld [vmem:[%s166 + $0x1380] sm:$0xff]
        %v841 = vld [vmem:[%s166 + $0x1388] sm:$0xff]
        %v842 = vld [vmem:[%s166 + $0x1390] sm:$0xff]
        %v843 = vld [vmem:[%s166 + $0x1398] sm:$0xff]
        %v844 = vld [vmem:[%s166 + $0x13a0] sm:$0xff]
        %v845 = vld [vmem:[%s166 + $0x13a8] sm:$0xff]
        %v846 = vld [vmem:[%s166 + $0x13b0] sm:$0xff]
        %v847 = vld [vmem:[%s166 + $0x13b8] sm:$0xff]
        %v848 = vld [vmem:[%s166 + $0x13c0] sm:$0xff]
        %v849 = vld [vmem:[%s166 + $0x13c8] sm:$0xff]
        %v850 = vld [vmem:[%s166 + $0x13d0] sm:$0xff]
        %v851 = vld [vmem:[%s166 + $0x13d8] sm:$0xff]
        %v852 = vld [vmem:[%s166 + $0x13e0] sm:$0xff]
        %v853 = vld [vmem:[%s166 + $0x13e8] sm:$0xff]
        %v854 = vld [vmem:[%s166 + $0x13f0] sm:$0xff]
        %v855 = vld [vmem:[%s166 + $0x13f8] sm:$0xff]
        %v856 = vld [vmem:[%s166 + $0x1400] sm:$0xff]
        %v857 = vld [vmem:[%s166 + $0x1408] sm:$0xff]
        %v858 = vld [vmem:[%s166 + $0x1410] sm:$0xff]
        %v859 = vld [vmem:[%s166 + $0x1418] sm:$0xff]
        %v860 = vld [vmem:[%s166 + $0x1420] sm:$0xff]
        %v861 = vld [vmem:[%s166 + $0x1428] sm:$0xff]
        %v862 = vld [vmem:[%s166 + $0x1430] sm:$0xff]
        %v863 = vld [vmem:[%s166 + $0x1438] sm:$0xff]
        %v864 = vld [vmem:[%s166 + $0x1440] sm:$0xff]
        %v865 = vld [vmem:[%s166 + $0x1448] sm:$0xff]
        %v866 = vld [vmem:[%s166 + $0x1450] sm:$0xff]
        %v867 = vld [vmem:[%s166 + $0x1458] sm:$0xff]
        %v868 = vld [vmem:[%s166 + $0x1460] sm:$0xff]
        %v869 = vld [vmem:[%s166 + $0x1468] sm:$0xff]
        %v870 = vld [vmem:[%s166 + $0x1470] sm:$0xff]
        %v871 = vld [vmem:[%s166 + $0x1478] sm:$0xff]
        %v872 = vld [vmem:[%s166 + $0x1480] sm:$0xff]
        %v873 = vld [vmem:[%s166 + $0x1488] sm:$0xff]
        %v874 = vld [vmem:[%s166 + $0x1490] sm:$0xff]
        %v875 = vld [vmem:[%s166 + $0x1498] sm:$0xff]
        %v876 = vld [vmem:[%s166 + $0x14a0] sm:$0xff]
        %v877 = vld [vmem:[%s166 + $0x14a8] sm:$0xff]
        %v878 = vld [vmem:[%s166 + $0x14b0] sm:$0xff]
        %v879 = vld [vmem:[%s166 + $0x14b8] sm:$0xff]
        %v880 = vld [vmem:[%s166 + $0x14c0] sm:$0xff]
        %v881 = vld [vmem:[%s166 + $0x14c8] sm:$0xff]
        %v882 = vld [vmem:[%s166 + $0x14d0] sm:$0xff]
        %v883 = vld [vmem:[%s166 + $0x14d8] sm:$0xff]
        %v884 = vld [vmem:[%s166 + $0x14e0] sm:$0xff]
        %v885 = vld [vmem:[%s166 + $0x14e8] sm:$0xff]
        %v886 = vld [vmem:[%s166 + $0x14f0] sm:$0xff]
        %v887 = vld [vmem:[%s166 + $0x14f8] sm:$0xff]
        %v888 = vld [vmem:[%s166 + $0x1500] sm:$0xff]
        %v889 = vld [vmem:[%s166 + $0x1508] sm:$0xff]
        %v890 = vld [vmem:[%s166 + $0x1510] sm:$0xff]
        %v891 = vld [vmem:[%s166 + $0x1518] sm:$0xff]
        %v892 = vld [vmem:[%s166 + $0x1520] sm:$0xff]
        %v893 = vld [vmem:[%s166 + $0x1528] sm:$0xff]
        %v894 = vld [vmem:[%s166 + $0x1530] sm:$0xff]
        %v895 = vld [vmem:[%s166 + $0x1538] sm:$0xff]
        %v896 = vld [vmem:[%s166 + $0x1540] sm:$0xff]
        %v897 = vld [vmem:[%s166 + $0x1548] sm:$0xff]
        %v898 = vld [vmem:[%s166 + $0x1550] sm:$0xff]
        %v899 = vld [vmem:[%s166 + $0x1558] sm:$0xff]
        %v900 = vld [vmem:[%s166 + $0x1560] sm:$0xff]
        %v901 = vld [vmem:[%s166 + $0x1568] sm:$0xff]
        %v902 = vld [vmem:[%s166 + $0x1570] sm:$0xff]
        %v903 = vld [vmem:[%s166 + $0x1578] sm:$0xff]
        %v904 = vld [vmem:[%s166 + $0x1580] sm:$0xff]
        %v905 = vld [vmem:[%s166 + $0x1588] sm:$0xff]
        %v906 = vld [vmem:[%s166 + $0x1590] sm:$0xff]
        %v907 = vld [vmem:[%s166 + $0x1598] sm:$0xff]
        %v908 = vld [vmem:[%s166 + $0x15a0] sm:$0xff]
        %v909 = vld [vmem:[%s166 + $0x15a8] sm:$0xff]
        %v910 = vld [vmem:[%s166 + $0x15b0] sm:$0xff]
        %v911 = vld [vmem:[%s166 + $0x15b8] sm:$0xff]
        %v912 = vld [vmem:[%s166 + $0x15c0] sm:$0xff]
        %v913 = vld [vmem:[%s166 + $0x15c8] sm:$0xff]
        %v914 = vld [vmem:[%s166 + $0x15d0] sm:$0xff]
        %v915 = vld [vmem:[%s166 + $0x15d8] sm:$0xff]
        %v916 = vld [vmem:[%s166 + $0x15e0] sm:$0xff]
        %v917 = vld [vmem:[%s166 + $0x15e8] sm:$0xff]
        %v918 = vld [vmem:[%s166 + $0x15f0] sm:$0xff]
        %v919 = vld [vmem:[%s166 + $0x15f8] sm:$0xff]
        %v920 = vld [vmem:[%s166 + $0x1600] sm:$0xff]
        %v921 = vld [vmem:[%s166 + $0x1608] sm:$0xff]
        %v922 = vld [vmem:[%s166 + $0x1610] sm:$0xff]
        %v923 = vld [vmem:[%s166 + $0x1618] sm:$0xff]
        %v924 = vld [vmem:[%s166 + $0x1620] sm:$0xff]
        %v925 = vld [vmem:[%s166 + $0x1628] sm:$0xff]
        %v926 = vld [vmem:[%s166 + $0x1630] sm:$0xff]
        %v927 = vld [vmem:[%s166 + $0x1638] sm:$0xff]
        %v928 = vld [vmem:[%s166 + $0x1640] sm:$0xff]
        %v929 = vld [vmem:[%s166 + $0x1648] sm:$0xff]
        %v930 = vld [vmem:[%s166 + $0x1650] sm:$0xff]
        %v931 = vld [vmem:[%s166 + $0x1658] sm:$0xff]
        %v932 = vld [vmem:[%s166 + $0x1660] sm:$0xff]
        %v933 = vld [vmem:[%s166 + $0x1668] sm:$0xff]
        %v934 = vld [vmem:[%s166 + $0x1670] sm:$0xff]
        %v935 = vld [vmem:[%s166 + $0x1678] sm:$0xff]
        %v936 = vld [vmem:[%s166 + $0x1680] sm:$0xff]
        %v937 = vld [vmem:[%s166 + $0x1688] sm:$0xff]
        %v938 = vld [vmem:[%s166 + $0x1690] sm:$0xff]
        %v939 = vld [vmem:[%s166 + $0x1698] sm:$0xff]
        %v940 = vld [vmem:[%s166 + $0x16a0] sm:$0xff]
        %v941 = vld [vmem:[%s166 + $0x16a8] sm:$0xff]
        %v942 = vld [vmem:[%s166 + $0x16b0] sm:$0xff]
        %v943 = vld [vmem:[%s166 + $0x16b8] sm:$0xff]
        %v944 = vld [vmem:[%s166 + $0x16c0] sm:$0xff]
        %v945 = vld [vmem:[%s166 + $0x16c8] sm:$0xff]
        %v946 = vld [vmem:[%s166 + $0x16d0] sm:$0xff]
        %v947 = vld [vmem:[%s166 + $0x16d8] sm:$0xff]
        %v948 = vld [vmem:[%s166 + $0x16e0] sm:$0xff]
        %v949 = vld [vmem:[%s166 + $0x16e8] sm:$0xff]
        %v950 = vld [vmem:[%s166 + $0x16f0] sm:$0xff]
        %v951 = vld [vmem:[%s166 + $0x16f8] sm:$0xff]
        %v952 = vld [vmem:[%s166 + $0x1700] sm:$0xff]
        %v953 = vld [vmem:[%s166 + $0x1708] sm:$0xff]
        %v954 = vld [vmem:[%s166 + $0x1710] sm:$0xff]
        %v955 = vld [vmem:[%s166 + $0x1718] sm:$0xff]
        %v956 = vld [vmem:[%s166 + $0x1720] sm:$0xff]
        %v957 = vld [vmem:[%s166 + $0x1728] sm:$0xff]
        %v958 = vld [vmem:[%s166 + $0x1730] sm:$0xff]
        %v959 = vld [vmem:[%s166 + $0x1738] sm:$0xff]
        %v960 = vld [vmem:[%s166 + $0x1740] sm:$0xff]
        %v961 = vld [vmem:[%s166 + $0x1748] sm:$0xff]
        %v962 = vld [vmem:[%s166 + $0x1750] sm:$0xff]
        %v963 = vld [vmem:[%s166 + $0x1758] sm:$0xff]
        %v964 = vld [vmem:[%s166 + $0x1760] sm:$0xff]
        %v965 = vld [vmem:[%s166 + $0x1768] sm:$0xff]
        %v966 = vld [vmem:[%s166 + $0x1770] sm:$0xff]
        %v967 = vld [vmem:[%s166 + $0x1778] sm:$0xff]
        %v968 = vld [vmem:[%s166 + $0x1780] sm:$0xff]
        %v969 = vld [vmem:[%s166 + $0x1788] sm:$0xff]
        %v970 = vld [vmem:[%s166 + $0x1790] sm:$0xff]
        %v971 = vld [vmem:[%s166 + $0x1798] sm:$0xff]
        %v972 = vld [vmem:[%s166 + $0x17a0] sm:$0xff]
        %v973 = vld [vmem:[%s166 + $0x17a8] sm:$0xff]
        %v974 = vld [vmem:[%s166 + $0x17b0] sm:$0xff]
        %v975 = vld [vmem:[%s166 + $0x17b8] sm:$0xff]
        %v976 = vld [vmem:[%s166 + $0x17c0] sm:$0xff]
        %v977 = vld [vmem:[%s166 + $0x17c8] sm:$0xff]
        %v978 = vld [vmem:[%s166 + $0x17d0] sm:$0xff]
        %v979 = vld [vmem:[%s166 + $0x17d8] sm:$0xff]
        %v980 = vld [vmem:[%s166 + $0x17e0] sm:$0xff]
        %v981 = vld [vmem:[%s166 + $0x17e8] sm:$0xff]
        %v982 = vld [vmem:[%s166 + $0x17f0] sm:$0xff]
        %v983 = vld [vmem:[%s166 + $0x17f8] sm:$0xff]
        %v984 = vld [vmem:[%s166 + $0x1800] sm:$0xff]
        %v985 = vld [vmem:[%s166 + $0x1808] sm:$0xff]
        %v986 = vld [vmem:[%s166 + $0x1810] sm:$0xff]
        %v987 = vld [vmem:[%s166 + $0x1818] sm:$0xff]
        %v988 = vld [vmem:[%s166 + $0x1820] sm:$0xff]
        %v989 = vld [vmem:[%s166 + $0x1828] sm:$0xff]
        %v990 = vld [vmem:[%s166 + $0x1830] sm:$0xff]
        %v991 = vld [vmem:[%s166 + $0x1838] sm:$0xff]
        %v992 = vld [vmem:[%s166 + $0x1840] sm:$0xff]
        %v993 = vld [vmem:[%s166 + $0x1848] sm:$0xff]
        %v994 = vld [vmem:[%s166 + $0x1850] sm:$0xff]
        %v995 = vld [vmem:[%s166 + $0x1858] sm:$0xff]
        %v996 = vld [vmem:[%s166 + $0x1860] sm:$0xff]
        %v997 = vld [vmem:[%s166 + $0x1868] sm:$0xff]
        %v998 = vld [vmem:[%s166 + $0x1870] sm:$0xff]
        %v999 = vld [vmem:[%s166 + $0x1878] sm:$0xff]
        %v1000 = vld [vmem:[%s166 + $0x1880] sm:$0xff]
        %v1001 = vld [vmem:[%s166 + $0x1888] sm:$0xff]
        %v1002 = vld [vmem:[%s166 + $0x1890] sm:$0xff]
        %v1003 = vld [vmem:[%s166 + $0x1898] sm:$0xff]
        %v1004 = vld [vmem:[%s166 + $0x18a0] sm:$0xff]
        %v1005 = vld [vmem:[%s166 + $0x18a8] sm:$0xff]
        %v1006 = vld [vmem:[%s166 + $0x18b0] sm:$0xff]
        %v1007 = vld [vmem:[%s166 + $0x18b8] sm:$0xff]
        %v1008 = vld [vmem:[%s166 + $0x18c0] sm:$0xff]
        %v1009 = vld [vmem:[%s166 + $0x18c8] sm:$0xff]
        %v1010 = vld [vmem:[%s166 + $0x18d0] sm:$0xff]
        %v1011 = vld [vmem:[%s166 + $0x18d8] sm:$0xff]
        %v1012 = vld [vmem:[%s166 + $0x18e0] sm:$0xff]
        %v1013 = vld [vmem:[%s166 + $0x18e8] sm:$0xff]
        %v1014 = vld [vmem:[%s166 + $0x18f0] sm:$0xff]
        %v1015 = vld [vmem:[%s166 + $0x18f8] sm:$0xff]
        %v1016 = vld [vmem:[%s166 + $0x1900] sm:$0xff]
        %v1017 = vld [vmem:[%s166 + $0x1908] sm:$0xff]
        %v1018 = vld [vmem:[%s166 + $0x1910] sm:$0xff]
        %v1019 = vld [vmem:[%s166 + $0x1918] sm:$0xff]
        %v1020 = vld [vmem:[%s166 + $0x1920] sm:$0xff]
        %v1021 = vld [vmem:[%s166 + $0x1928] sm:$0xff]
        %v1022 = vld [vmem:[%s166 + $0x1930] sm:$0xff]
        %v1023 = vld [vmem:[%s166 + $0x1938] sm:$0xff]
        %v1024 = vld [vmem:[%s166 + $0x1940] sm:$0xff]
        %v1025 = vld [vmem:[%s166 + $0x1948] sm:$0xff]
        %v1026 = vld [vmem:[%s166 + $0x1950] sm:$0xff]
        %v1027 = vld [vmem:[%s166 + $0x1958] sm:$0xff]
        %v1028 = vld [vmem:[%s166 + $0x1960] sm:$0xff]
        %v1029 = vld [vmem:[%s166 + $0x1968] sm:$0xff]
        %v1030 = vld [vmem:[%s166 + $0x1970] sm:$0xff]
        %v1031 = vld [vmem:[%s166 + $0x1978] sm:$0xff]
        %v1032 = vld [vmem:[%s166 + $0x1980] sm:$0xff]
        %v1033 = vld [vmem:[%s166 + $0x1988] sm:$0xff]
        %v1034 = vld [vmem:[%s166 + $0x1990] sm:$0xff]
        %v1035 = vld [vmem:[%s166 + $0x1998] sm:$0xff]
        %v1036 = vld [vmem:[%s166 + $0x19a0] sm:$0xff]
        %v1037 = vld [vmem:[%s166 + $0x19a8] sm:$0xff]
        %v1038 = vld [vmem:[%s166 + $0x19b0] sm:$0xff]
        %v1039 = vld [vmem:[%s166 + $0x19b8] sm:$0xff]
        %v1040 = vld [vmem:[%s166 + $0x19c0] sm:$0xff]
        %v1041 = vld [vmem:[%s166 + $0x19c8] sm:$0xff]
        %v1042 = vld [vmem:[%s166 + $0x19d0] sm:$0xff]
        %v1043 = vld [vmem:[%s166 + $0x19d8] sm:$0xff]
        %v1044 = vld [vmem:[%s166 + $0x19e0] sm:$0xff]
        %v1045 = vld [vmem:[%s166 + $0x19e8] sm:$0xff]
        %v1046 = vld [vmem:[%s166 + $0x19f0] sm:$0xff]
        %v1047 = vld [vmem:[%s166 + $0x19f8] sm:$0xff]
        %v1048 = vld [vmem:[%s166 + $0x1a00] sm:$0xff]
        %v1049 = vld [vmem:[%s166 + $0x1a08] sm:$0xff]
        %v1050 = vld [vmem:[%s166 + $0x1a10] sm:$0xff]
        %v1051 = vld [vmem:[%s166 + $0x1a18] sm:$0xff]
        %v1052 = vld [vmem:[%s166 + $0x1a20] sm:$0xff]
        %v1053 = vld [vmem:[%s166 + $0x1a28] sm:$0xff]
        %v1054 = vld [vmem:[%s166 + $0x1a30] sm:$0xff]
        %v1055 = vld [vmem:[%s166 + $0x1a38] sm:$0xff]
        %v1056 = vld [vmem:[%s166 + $0x1a40] sm:$0xff]
        %v1057 = vld [vmem:[%s166 + $0x1a48] sm:$0xff]
        %v1058 = vld [vmem:[%s166 + $0x1a50] sm:$0xff]
        %v1059 = vld [vmem:[%s166 + $0x1a58] sm:$0xff]
        %v1060 = vld [vmem:[%s166 + $0x1a60] sm:$0xff]
        %v1061 = vld [vmem:[%s166 + $0x1a68] sm:$0xff]
        %v1062 = vld [vmem:[%s166 + $0x1a70] sm:$0xff]
        %v1063 = vld [vmem:[%s166 + $0x1a78] sm:$0xff]
        %v1064 = vld [vmem:[%s166 + $0x1a80] sm:$0xff]
        %v1065 = vld [vmem:[%s166 + $0x1a88] sm:$0xff]
        %v1066 = vld [vmem:[%s166 + $0x1a90] sm:$0xff]
        %v1067 = vld [vmem:[%s166 + $0x1a98] sm:$0xff]
        %v1068 = vld [vmem:[%s166 + $0x1aa0] sm:$0xff]
        %v1069 = vld [vmem:[%s166 + $0x1aa8] sm:$0xff]
        %v1070 = vld [vmem:[%s166 + $0x1ab0] sm:$0xff]
        %v1071 = vld [vmem:[%s166 + $0x1ab8] sm:$0xff]
        %v1072 = vld [vmem:[%s166 + $0x1ac0] sm:$0xff]
        %v1073 = vld [vmem:[%s166 + $0x1ac8] sm:$0xff]
        %v1074 = vld [vmem:[%s166 + $0x1ad0] sm:$0xff]
        %v1075 = vld [vmem:[%s166 + $0x1ad8] sm:$0xff]
        %v1076 = vld [vmem:[%s166 + $0x1ae0] sm:$0xff]
        %v1077 = vld [vmem:[%s166 + $0x1ae8] sm:$0xff]
        %v1078 = vld [vmem:[%s166 + $0x1af0] sm:$0xff]
        %v1079 = vld [vmem:[%s166 + $0x1af8] sm:$0xff]
        %v1080 = vld [vmem:[%s166 + $0x1b00] sm:$0xff]
        %v1081 = vld [vmem:[%s166 + $0x1b08] sm:$0xff]
        %v1082 = vld [vmem:[%s166 + $0x1b10] sm:$0xff]
        %v1083 = vld [vmem:[%s166 + $0x1b18] sm:$0xff]
        %v1084 = vld [vmem:[%s166 + $0x1b20] sm:$0xff]
        %v1085 = vld [vmem:[%s166 + $0x1b28] sm:$0xff]
        %v1086 = vld [vmem:[%s166 + $0x1b30] sm:$0xff]
        %v1087 = vld [vmem:[%s166 + $0x1b38] sm:$0xff]
        %v1088 = vld [vmem:[%s166 + $0x1b40] sm:$0xff]
        %v1089 = vld [vmem:[%s166 + $0x1b48] sm:$0xff]
        %v1090 = vld [vmem:[%s166 + $0x1b50] sm:$0xff]
        %v1091 = vld [vmem:[%s166 + $0x1b58] sm:$0xff]
        %v1092 = vld [vmem:[%s166 + $0x1b60] sm:$0xff]
        %v1093 = vld [vmem:[%s166 + $0x1b68] sm:$0xff]
        %v1094 = vld [vmem:[%s166 + $0x1b70] sm:$0xff]
        %v1095 = vld [vmem:[%s166 + $0x1b78] sm:$0xff]
        %v1096 = vld [vmem:[%s166 + $0x1b80] sm:$0xff]
        %v1097 = vld [vmem:[%s166 + $0x1b88] sm:$0xff]
        %v1098 = vld [vmem:[%s166 + $0x1b90] sm:$0xff]
        %v1099 = vld [vmem:[%s166 + $0x1b98] sm:$0xff]
        %v1100 = vld [vmem:[%s166 + $0x1ba0] sm:$0xff]
        %v1101 = vld [vmem:[%s166 + $0x1ba8] sm:$0xff]
        %v1102 = vld [vmem:[%s166 + $0x1bb0] sm:$0xff]
        %v1103 = vld [vmem:[%s166 + $0x1bb8] sm:$0xff]
        %v1104 = vld [vmem:[%s166 + $0x1bc0] sm:$0xff]
        %v1105 = vld [vmem:[%s166 + $0x1bc8] sm:$0xff]
        %v1106 = vld [vmem:[%s166 + $0x1bd0] sm:$0xff]
        %v1107 = vld [vmem:[%s166 + $0x1bd8] sm:$0xff]
        %v1108 = vld [vmem:[%s166 + $0x1be0] sm:$0xff]
        %v1109 = vld [vmem:[%s166 + $0x1be8] sm:$0xff]
        %v1110 = vld [vmem:[%s166 + $0x1bf0] sm:$0xff]
        %v1111 = vld [vmem:[%s166 + $0x1bf8] sm:$0xff]
        %v1112 = vld [vmem:[%s166 + $0x1c00] sm:$0xff]
        %v1113 = vld [vmem:[%s166 + $0x1c08] sm:$0xff]
        %v1114 = vld [vmem:[%s166 + $0x1c10] sm:$0xff]
        %v1115 = vld [vmem:[%s166 + $0x1c18] sm:$0xff]
        %v1116 = vld [vmem:[%s166 + $0x1c20] sm:$0xff]
        %v1117 = vld [vmem:[%s166 + $0x1c28] sm:$0xff]
        %v1118 = vld [vmem:[%s166 + $0x1c30] sm:$0xff]
        %v1119 = vld [vmem:[%s166 + $0x1c38] sm:$0xff]
        %v1120 = vld [vmem:[%s166 + $0x1c40] sm:$0xff]
        %v1121 = vld [vmem:[%s166 + $0x1c48] sm:$0xff]
        %v1122 = vld [vmem:[%s166 + $0x1c50] sm:$0xff]
        %v1123 = vld [vmem:[%s166 + $0x1c58] sm:$0xff]
        %v1124 = vld [vmem:[%s166 + $0x1c60] sm:$0xff]
        %v1125 = vld [vmem:[%s166 + $0x1c68] sm:$0xff]
        %v1126 = vld [vmem:[%s166 + $0x1c70] sm:$0xff]
        %v1127 = vld [vmem:[%s166 + $0x1c78] sm:$0xff]
        %v1128 = vld [vmem:[%s166 + $0x1c80] sm:$0xff]
        %v1129 = vld [vmem:[%s166 + $0x1c88] sm:$0xff]
        %v1130 = vld [vmem:[%s166 + $0x1c90] sm:$0xff]
        %v1131 = vld [vmem:[%s166 + $0x1c98] sm:$0xff]
        %v1132 = vld [vmem:[%s166 + $0x1ca0] sm:$0xff]
        %v1133 = vld [vmem:[%s166 + $0x1ca8] sm:$0xff]
        %v1134 = vld [vmem:[%s166 + $0x1cb0] sm:$0xff]
        %v1135 = vld [vmem:[%s166 + $0x1cb8] sm:$0xff]
        %v1136 = vld [vmem:[%s166 + $0x1cc0] sm:$0xff]
        %v1137 = vld [vmem:[%s166 + $0x1cc8] sm:$0xff]
        %v1138 = vld [vmem:[%s166 + $0x1cd0] sm:$0xff]
        %v1139 = vld [vmem:[%s166 + $0x1cd8] sm:$0xff]
        %v1140 = vld [vmem:[%s166 + $0x1ce0] sm:$0xff]
        %v1141 = vld [vmem:[%s166 + $0x1ce8] sm:$0xff]
        %v1142 = vld [vmem:[%s166 + $0x1cf0] sm:$0xff]
        %v1143 = vld [vmem:[%s166 + $0x1cf8] sm:$0xff]
        %v1144 = vld [vmem:[%s166 + $0x1d00] sm:$0xff]
        %v1145 = vld [vmem:[%s166 + $0x1d08] sm:$0xff]
        %v1146 = vld [vmem:[%s166 + $0x1d10] sm:$0xff]
        %v1147 = vld [vmem:[%s166 + $0x1d18] sm:$0xff]
        %v1148 = vld [vmem:[%s166 + $0x1d20] sm:$0xff]
        %v1149 = vld [vmem:[%s166 + $0x1d28] sm:$0xff]
        %v1150 = vld [vmem:[%s166 + $0x1d30] sm:$0xff]
        %v1151 = vld [vmem:[%s166 + $0x1d38] sm:$0xff]
        %v1152 = vld [vmem:[%s166 + $0x1d40] sm:$0xff]
        %v1153 = vld [vmem:[%s166 + $0x1d48] sm:$0xff]
        %v1154 = vld [vmem:[%s166 + $0x1d50] sm:$0xff]
        %v1155 = vld [vmem:[%s166 + $0x1d58] sm:$0xff]
        %v1156 = vld [vmem:[%s166 + $0x1d60] sm:$0xff]
        %v1157 = vld [vmem:[%s166 + $0x1d68] sm:$0xff]
        %v1158 = vld [vmem:[%s166 + $0x1d70] sm:$0xff]
        %v1159 = vld [vmem:[%s166 + $0x1d78] sm:$0xff]
        %v1160 = vld [vmem:[%s166 + $0x1d80] sm:$0xff]
        %v1161 = vld [vmem:[%s166 + $0x1d88] sm:$0xff]
        %v1162 = vld [vmem:[%s166 + $0x1d90] sm:$0xff]
        %v1163 = vld [vmem:[%s166 + $0x1d98] sm:$0xff]
        %v1164 = vld [vmem:[%s166 + $0x1da0] sm:$0xff]
        %v1165 = vld [vmem:[%s166 + $0x1da8] sm:$0xff]
        %v1166 = vld [vmem:[%s166 + $0x1db0] sm:$0xff]
        %v1167 = vld [vmem:[%s166 + $0x1db8] sm:$0xff]
        %v1168 = vld [vmem:[%s166 + $0x1dc0] sm:$0xff]
        %v1169 = vld [vmem:[%s166 + $0x1dc8] sm:$0xff]
        %v1170 = vld [vmem:[%s166 + $0x1dd0] sm:$0xff]
        %v1171 = vld [vmem:[%s166 + $0x1dd8] sm:$0xff]
        %v1172 = vld [vmem:[%s166 + $0x1de0] sm:$0xff]
        %v1173 = vld [vmem:[%s166 + $0x1de8] sm:$0xff]
        %v1174 = vld [vmem:[%s166 + $0x1df0] sm:$0xff]
        %v1175 = vld [vmem:[%s166 + $0x1df8] sm:$0xff]
        %v1176 = vld [vmem:[%s166 + $0x1e00] sm:$0xff]
        %v1177 = vld [vmem:[%s166 + $0x1e08] sm:$0xff]
        %v1178 = vld [vmem:[%s166 + $0x1e10] sm:$0xff]
        %v1179 = vld [vmem:[%s166 + $0x1e18] sm:$0xff]
        %v1180 = vld [vmem:[%s166 + $0x1e20] sm:$0xff]
        %v1181 = vld [vmem:[%s166 + $0x1e28] sm:$0xff]
        %v1182 = vld [vmem:[%s166 + $0x1e30] sm:$0xff]
        %v1183 = vld [vmem:[%s166 + $0x1e38] sm:$0xff]
        %v1184 = vld [vmem:[%s166 + $0x1e40] sm:$0xff]
        %v1185 = vld [vmem:[%s166 + $0x1e48] sm:$0xff]
        %v1186 = vld [vmem:[%s166 + $0x1e50] sm:$0xff]
        %v1187 = vld [vmem:[%s166 + $0x1e58] sm:$0xff]
        %v1188 = vld [vmem:[%s166 + $0x1e60] sm:$0xff]
        %v1189 = vld [vmem:[%s166 + $0x1e68] sm:$0xff]
        %v1190 = vld [vmem:[%s166 + $0x1e70] sm:$0xff]
        %v1191 = vld [vmem:[%s166 + $0x1e78] sm:$0xff]
        %v1192 = vld [vmem:[%s166 + $0x1e80] sm:$0xff]
        %v1193 = vld [vmem:[%s166 + $0x1e88] sm:$0xff]
        %v1194 = vld [vmem:[%s166 + $0x1e90] sm:$0xff]
        %v1195 = vld [vmem:[%s166 + $0x1e98] sm:$0xff]
        %v1196 = vld [vmem:[%s166 + $0x1ea0] sm:$0xff]
        %v1197 = vld [vmem:[%s166 + $0x1ea8] sm:$0xff]
        %v1198 = vld [vmem:[%s166 + $0x1eb0] sm:$0xff]
        %v1199 = vld [vmem:[%s166 + $0x1eb8] sm:$0xff]
        %v1200 = vld [vmem:[%s166 + $0x1ec0] sm:$0xff]
        %v1201 = vld [vmem:[%s166 + $0x1ec8] sm:$0xff]
        %v1202 = vld [vmem:[%s166 + $0x1ed0] sm:$0xff]
        %v1203 = vld [vmem:[%s166 + $0x1ed8] sm:$0xff]
        %v1204 = vld [vmem:[%s166 + $0x1ee0] sm:$0xff]
        %v1205 = vld [vmem:[%s166 + $0x1ee8] sm:$0xff]
        %v1206 = vld [vmem:[%s166 + $0x1ef0] sm:$0xff]
        %v1207 = vld [vmem:[%s166 + $0x1ef8] sm:$0xff]
        %v1208 = vld [vmem:[%s166 + $0x1f00] sm:$0xff]
        %v1209 = vld [vmem:[%s166 + $0x1f08] sm:$0xff]
        %v1210 = vld [vmem:[%s166 + $0x1f10] sm:$0xff]
        %v1211 = vld [vmem:[%s166 + $0x1f18] sm:$0xff]
        %v1212 = vld [vmem:[%s166 + $0x1f20] sm:$0xff]
        %v1213 = vld [vmem:[%s166 + $0x1f28] sm:$0xff]
        %v1214 = vld [vmem:[%s166 + $0x1f30] sm:$0xff]
        %v1215 = vld [vmem:[%s166 + $0x1f38] sm:$0xff]
        %v1216 = vld [vmem:[%s166 + $0x1f40] sm:$0xff]
        %v1217 = vld [vmem:[%s166 + $0x1f48] sm:$0xff]
        %v1218 = vld [vmem:[%s166 + $0x1f50] sm:$0xff]
        %v1219 = vld [vmem:[%s166 + $0x1f58] sm:$0xff]
        %v1220 = vld [vmem:[%s166 + $0x1f60] sm:$0xff]
        %v1221 = vld [vmem:[%s166 + $0x1f68] sm:$0xff]
        %v1222 = vld [vmem:[%s166 + $0x1f70] sm:$0xff]
        %v1223 = vld [vmem:[%s166 + $0x1f78] sm:$0xff]
        %v1224 = vld [vmem:[%s166 + $0x1f80] sm:$0xff]
        %v1225 = vld [vmem:[%s166 + $0x1f88] sm:$0xff]
        %v1226 = vld [vmem:[%s166 + $0x1f90] sm:$0xff]
        %v1227 = vld [vmem:[%s166 + $0x1f98] sm:$0xff]
        %v1228 = vld [vmem:[%s166 + $0x1fa0] sm:$0xff]
        %v1229 = vld [vmem:[%s166 + $0x1fa8] sm:$0xff]
        %v1230 = vld [vmem:[%s166 + $0x1fb0] sm:$0xff]
        %v1231 = vld [vmem:[%s166 + $0x1fb8] sm:$0xff]
        %v1232 = vld [vmem:[%s166 + $0x1fc0] sm:$0xff]
        %v1233 = vld [vmem:[%s166 + $0x1fc8] sm:$0xff]
        %v1234 = vld [vmem:[%s166 + $0x1fd0] sm:$0xff]
        %v1235 = vld [vmem:[%s166 + $0x1fd8] sm:$0xff]
        %v1236 = vld [vmem:[%s166 + $0x1fe0] sm:$0xff]
        %v1237 = vld [vmem:[%s166 + $0x1fe8] sm:$0xff]
        %v1238 = vld [vmem:[%s166 + $0x1ff0] sm:$0xff]
        %v1239 = vld [vmem:[%s166 + $0x1ff8] sm:$0xff]
        %v1242 = vcombine.high %v214, %v214
        %v1244 = vunpack.c.l.s4 1983009808
        %v1245 = vunpack.c.0.s8 %v1244
        %v1246 = vlaneseq
        %v1247 = vshrl.u32 %v1246, 7
        %v1248 = vsub.s32 %v1245, %v1247
        %v1249 = vrot.slane %v214, %v1248
        %v1251 = vunpack.c.l.s4 1983009808
        %v1252 = vunpack.c.0.s8 %v1251
        %v1253 = vlaneseq
        %v1254 = vshrl.u32 %v1253, 7
        %v1255 = vsub.s32 %v1252, %v1254
        %v1256 = vrot.slane %v1242, %v1255
        %v1257 = vcombine.high %v1249, %v1249
        %v1258 = vcombine.high %v1256, %v1256
        %v1259 = vcombine.high %v215, %v215
        %v1261 = vunpack.c.l.s4 1983009808
        %v1262 = vunpack.c.0.s8 %v1261
        %v1263 = vlaneseq
        %v1264 = vshrl.u32 %v1263, 7
        %v1265 = vsub.s32 %v1262, %v1264
        %v1266 = vrot.slane %v215, %v1265
        %v1268 = vunpack.c.l.s4 1983009808
        %v1269 = vunpack.c.0.s8 %v1268
        %v1270 = vlaneseq
        %v1271 = vshrl.u32 %v1270, 7
        %v1272 = vsub.s32 %v1269, %v1271
        %v1273 = vrot.slane %v1259, %v1272
        %v1274 = vcombine.high %v1266, %v1266
        %v1275 = vcombine.high %v1273, %v1273
        %1284 = vmatprep.subr.mxu0 %v337
        %1285 = vmatpush1.msra.mxu0 %v336
        %1286 = vmatprep.subr.mxu0 %v329
        %1287 = vmatpush1.msra.mxu0 %v328
        %1288 = vmatprep.subr.mxu0 %v321
        %1289 = vmatpush1.msra.mxu0 %v320
        %1290 = vmatprep.subr.mxu0 %v313
        %1291 = vmatpush1.msra.mxu0 %v312
        %1292 = vmatprep.subr.mxu0 %v305
        %1293 = vmatpush1.msra.mxu0 %v304
        %1294 = vmatprep.subr.mxu0 %v297
        %1295 = vmatpush1.msra.mxu0 %v296
        %1296 = vmatprep.subr.mxu0 %v289
        %1297 = vmatpush1.msra.mxu0 %v288
        %1298 = vmatprep.subr.mxu0 %v281
        %1299 = vmatpush1.msra.mxu0 %v280
        %1300 = vmatprep.subr.mxu0 %v273
        %1301 = vmatpush1.msra.mxu0 %v272
        %1302 = vmatprep.subr.mxu0 %v265
        %1303 = vmatpush1.msra.mxu0 %v264
        %1304 = vmatprep.subr.mxu0 %v257
        %1305 = vmatpush1.msra.mxu0 %v256
        %1306 = vmatprep.subr.mxu0 %v249
        %1307 = vmatpush1.msra.mxu0 %v248
        %1308 = vmatprep.subr.mxu0 %v241
        %1309 = vmatpush1.msra.mxu0 %v240
        %1310 = vmatprep.subr.mxu0 %v233
        %1311 = vmatpush1.msra.mxu0 %v232
        %1312 = vmatprep.subr.mxu0 %v225
        %1313 = vmatpush1.msra.mxu0 %v224
        %1314 = vmatprep.subr.mxu0 %v217
        %1315 = vmatpush1.msra.mxu0 %v216
        %1316 = vmatprep.subr.mxu0 %v465
        %1317 = vmatpush2.msra.mxu0 %v464
        %1318 = vmatprep.subr.mxu0 %v457
        %1319 = vmatpush2.msra.mxu0 %v456
        %1320 = vmatprep.subr.mxu0 %v449
        %1321 = vmatpush2.msra.mxu0 %v448
        %1322 = vmatprep.subr.mxu0 %v441
        %1323 = vmatpush2.msra.mxu0 %v440
        %1324 = vmatprep.subr.mxu0 %v433
        %1325 = vmatpush2.msra.mxu0 %v432
        %1326 = vmatprep.subr.mxu0 %v425
        %1327 = vmatpush2.msra.mxu0 %v424
        %1328 = vmatprep.subr.mxu0 %v417
        %1329 = vmatpush2.msra.mxu0 %v416
        %1330 = vmatprep.subr.mxu0 %v409
        %1331 = vmatpush2.msra.mxu0 %v408
        %1332 = vmatprep.subr.mxu0 %v401
        %1333 = vmatpush2.msra.mxu0 %v400
        %1334 = vmatprep.subr.mxu0 %v393
        %1335 = vmatpush2.msra.mxu0 %v392
        %1336 = vmatprep.subr.mxu0 %v385
        %1337 = vmatpush2.msra.mxu0 %v384
        %1338 = vmatprep.subr.mxu0 %v377
        %1339 = vmatpush2.msra.mxu0 %v376
        %1340 = vmatprep.subr.mxu0 %v369
        %1341 = vmatpush2.msra.mxu0 %v368
        %1342 = vmatprep.subr.mxu0 %v361
        %1343 = vmatpush2.msra.mxu0 %v360
        %1344 = vmatprep.subr.mxu0 %v353
        %1345 = vmatpush2.msra.mxu0 %v352
        %1346 = vmatprep.subr.mxu0 %v345
        %1347 = vmatpush2.msra.mxu0 %v344
        %1348 = vmatprep.mubr.f32.mxu0 %v1257
        %1349 = vmatmul.mubr.f32.gmra.mxu0 %v1249
        %v1350 = vpop.f32.mrf.mxu0
        %v1351 = vadd.f32 0.0, %v1350
        %v1352 = vpop.f32.mrf.mxu0
        %v1353 = vadd.f32 0.0, %v1352
        %1354 = vdwg.mxu0
        %1355 = vmatprep.subr.mxu0 %v593
        %1356 = vmatpush1.msra.mxu0 %v592
        %1357 = vmatprep.subr.mxu0 %v585
        %1358 = vmatpush1.msra.mxu0 %v584
        %1359 = vmatprep.subr.mxu0 %v577
        %1360 = vmatpush1.msra.mxu0 %v576
        %1361 = vmatprep.subr.mxu0 %v569
        %1362 = vmatpush1.msra.mxu0 %v568
        %1363 = vmatprep.subr.mxu0 %v561
        %1364 = vmatpush1.msra.mxu0 %v560
        %1365 = vmatprep.subr.mxu0 %v553
        %1366 = vmatpush1.msra.mxu0 %v552
        %1367 = vmatprep.subr.mxu0 %v545
        %1368 = vmatpush1.msra.mxu0 %v544
        %1369 = vmatprep.subr.mxu0 %v537
        %1370 = vmatpush1.msra.mxu0 %v536
        %1371 = vmatprep.subr.mxu0 %v529
        %1372 = vmatpush1.msra.mxu0 %v528
        %1373 = vmatprep.subr.mxu0 %v521
        %1374 = vmatpush1.msra.mxu0 %v520
        %1375 = vmatprep.subr.mxu0 %v513
        %1376 = vmatpush1.msra.mxu0 %v512
        %1377 = vmatprep.subr.mxu0 %v505
        %1378 = vmatpush1.msra.mxu0 %v504
        %1379 = vmatprep.subr.mxu0 %v497
        %1380 = vmatpush1.msra.mxu0 %v496
        %1381 = vmatprep.subr.mxu0 %v489
        %1382 = vmatpush1.msra.mxu0 %v488
        %1383 = vmatprep.subr.mxu0 %v481
        %1384 = vmatpush1.msra.mxu0 %v480
        %1385 = vmatprep.subr.mxu0 %v473
        %1386 = vmatpush1.msra.mxu0 %v472
        %1387 = vmatprep.subr.mxu0 %v721
        %1388 = vmatpush2.msra.mxu0 %v720
        %1389 = vmatprep.subr.mxu0 %v713
        %1390 = vmatpush2.msra.mxu0 %v712
        %1391 = vmatprep.subr.mxu0 %v705
        %1392 = vmatpush2.msra.mxu0 %v704
        %1393 = vmatprep.subr.mxu0 %v697
        %1394 = vmatpush2.msra.mxu0 %v696
        %1395 = vmatprep.subr.mxu0 %v689
        %1396 = vmatpush2.msra.mxu0 %v688
        %1397 = vmatprep.subr.mxu0 %v681
        %1398 = vmatpush2.msra.mxu0 %v680
        %1399 = vmatprep.subr.mxu0 %v673
        %1400 = vmatpush2.msra.mxu0 %v672
        %1401 = vmatprep.subr.mxu0 %v665
        %1402 = vmatpush2.msra.mxu0 %v664
        %1403 = vmatprep.subr.mxu0 %v657
        %1404 = vmatpush2.msra.mxu0 %v656
        %1405 = vmatprep.subr.mxu0 %v649
        %1406 = vmatpush2.msra.mxu0 %v648
        %1407 = vmatprep.subr.mxu0 %v641
        %1408 = vmatpush2.msra.mxu0 %v640
        %1409 = vmatprep.subr.mxu0 %v633
        %1410 = vmatpush2.msra.mxu0 %v632
        %1411 = vmatprep.subr.mxu0 %v625
        %1412 = vmatpush2.msra.mxu0 %v624
        %1413 = vmatprep.subr.mxu0 %v617
        %1414 = vmatpush2.msra.mxu0 %v616
        %1415 = vmatprep.subr.mxu0 %v609
        %1416 = vmatpush2.msra.mxu0 %v608
        %1417 = vmatprep.subr.mxu0 %v601
        %1418 = vmatpush2.msra.mxu0 %v600
        %1419 = vmatprep.mubr.f32.mxu0 %v1258
        %1420 = vmatmul.mubr.f32.gmra.mxu0 %v1256
        %v1421 = vpop.f32.mrf.mxu0
        %v1422 = vadd.f32 %v1351, %v1421
        %v1423 = vpop.f32.mrf.mxu0
        %v1424 = vadd.f32 %v1353, %v1423
        %1425 = vdwg.mxu0
        %1426 = vmatprep.subr.mxu0 %v849
        %1427 = vmatpush1.msra.mxu0 %v848
        %1428 = vmatprep.subr.mxu0 %v841
        %1429 = vmatpush1.msra.mxu0 %v840
        %1430 = vmatprep.subr.mxu0 %v833
        %1431 = vmatpush1.msra.mxu0 %v832
        %1432 = vmatprep.subr.mxu0 %v825
        %1433 = vmatpush1.msra.mxu0 %v824
        %1434 = vmatprep.subr.mxu0 %v817
        %1435 = vmatpush1.msra.mxu0 %v816
        %1436 = vmatprep.subr.mxu0 %v809
        %1437 = vmatpush1.msra.mxu0 %v808
        %1438 = vmatprep.subr.mxu0 %v801
        %1439 = vmatpush1.msra.mxu0 %v800
        %1440 = vmatprep.subr.mxu0 %v793
        %1441 = vmatpush1.msra.mxu0 %v792
        %1442 = vmatprep.subr.mxu0 %v785
        %1443 = vmatpush1.msra.mxu0 %v784
        %1444 = vmatprep.subr.mxu0 %v777
        %1445 = vmatpush1.msra.mxu0 %v776
        %1446 = vmatprep.subr.mxu0 %v769
        %1447 = vmatpush1.msra.mxu0 %v768
        %1448 = vmatprep.subr.mxu0 %v761
        %1449 = vmatpush1.msra.mxu0 %v760
        %1450 = vmatprep.subr.mxu0 %v753
        %1451 = vmatpush1.msra.mxu0 %v752
        %1452 = vmatprep.subr.mxu0 %v745
        %1453 = vmatpush1.msra.mxu0 %v744
        %1454 = vmatprep.subr.mxu0 %v737
        %1455 = vmatpush1.msra.mxu0 %v736
        %1456 = vmatprep.subr.mxu0 %v729
        %1457 = vmatpush1.msra.mxu0 %v728
        %1458 = vmatprep.subr.mxu0 %v977
        %1459 = vmatpush2.msra.mxu0 %v976
        %1460 = vmatprep.subr.mxu0 %v969
        %1461 = vmatpush2.msra.mxu0 %v968
        %1462 = vmatprep.subr.mxu0 %v961
        %1463 = vmatpush2.msra.mxu0 %v960
        %1464 = vmatprep.subr.mxu0 %v953
        %1465 = vmatpush2.msra.mxu0 %v952
        %1466 = vmatprep.subr.mxu0 %v945
        %1467 = vmatpush2.msra.mxu0 %v944
        %1468 = vmatprep.subr.mxu0 %v937
        %1469 = vmatpush2.msra.mxu0 %v936
        %1470 = vmatprep.subr.mxu0 %v929
        %1471 = vmatpush2.msra.mxu0 %v928
        %1472 = vmatprep.subr.mxu0 %v921
        %1473 = vmatpush2.msra.mxu0 %v920
        %1474 = vmatprep.subr.mxu0 %v913
        %1475 = vmatpush2.msra.mxu0 %v912
        %1476 = vmatprep.subr.mxu0 %v905
        %1477 = vmatpush2.msra.mxu0 %v904
        %1478 = vmatprep.subr.mxu0 %v897
        %1479 = vmatpush2.msra.mxu0 %v896
        %1480 = vmatprep.subr.mxu0 %v889
        %1481 = vmatpush2.msra.mxu0 %v888
        %1482 = vmatprep.subr.mxu0 %v881
        %1483 = vmatpush2.msra.mxu0 %v880
        %1484 = vmatprep.subr.mxu0 %v873
        %1485 = vmatpush2.msra.mxu0 %v872
        %1486 = vmatprep.subr.mxu0 %v865
        %1487 = vmatpush2.msra.mxu0 %v864
        %1488 = vmatprep.subr.mxu0 %v857
        %1489 = vmatpush2.msra.mxu0 %v856
        %1490 = vmatprep.mubr.f32.mxu0 %v1274
        %1491 = vmatmul.mubr.f32.gmra.mxu0 %v1266
        %v1492 = vpop.f32.mrf.mxu0
        %v1493 = vadd.f32 %v1422, %v1492
        %v1494 = vpop.f32.mrf.mxu0
        %v1495 = vadd.f32 %v1424, %v1494
        %1496 = vdwg.mxu0
        %1497 = vmatprep.subr.mxu0 %v1105
        %1498 = vmatpush1.msra.mxu0 %v1104
        %1499 = vmatprep.subr.mxu0 %v1097
        %1500 = vmatpush1.msra.mxu0 %v1096
        %1501 = vmatprep.subr.mxu0 %v1089
        %1502 = vmatpush1.msra.mxu0 %v1088
        %1503 = vmatprep.subr.mxu0 %v1081
        %1504 = vmatpush1.msra.mxu0 %v1080
        %1505 = vmatprep.subr.mxu0 %v1073
        %1506 = vmatpush1.msra.mxu0 %v1072
        %1507 = vmatprep.subr.mxu0 %v1065
        %1508 = vmatpush1.msra.mxu0 %v1064
        %1509 = vmatprep.subr.mxu0 %v1057
        %1510 = vmatpush1.msra.mxu0 %v1056
        %1511 = vmatprep.subr.mxu0 %v1049
        %1512 = vmatpush1.msra.mxu0 %v1048
        %1513 = vmatprep.subr.mxu0 %v1041
        %1514 = vmatpush1.msra.mxu0 %v1040
        %1515 = vmatprep.subr.mxu0 %v1033
        %1516 = vmatpush1.msra.mxu0 %v1032
        %1517 = vmatprep.subr.mxu0 %v1025
        %1518 = vmatpush1.msra.mxu0 %v1024
        %1519 = vmatprep.subr.mxu0 %v1017
        %1520 = vmatpush1.msra.mxu0 %v1016
        %1521 = vmatprep.subr.mxu0 %v1009
        %1522 = vmatpush1.msra.mxu0 %v1008
        %1523 = vmatprep.subr.mxu0 %v1001
        %1524 = vmatpush1.msra.mxu0 %v1000
        %1525 = vmatprep.subr.mxu0 %v993
        %1526 = vmatpush1.msra.mxu0 %v992
        %1527 = vmatprep.subr.mxu0 %v985
        %1528 = vmatpush1.msra.mxu0 %v984
        %1529 = vmatprep.subr.mxu0 %v1233
        %1530 = vmatpush2.msra.mxu0 %v1232
        %1531 = vmatprep.subr.mxu0 %v1225
        %1532 = vmatpush2.msra.mxu0 %v1224
        %1533 = vmatprep.subr.mxu0 %v1217
        %1534 = vmatpush2.msra.mxu0 %v1216
        %1535 = vmatprep.subr.mxu0 %v1209
        %1536 = vmatpush2.msra.mxu0 %v1208
        %1537 = vmatprep.subr.mxu0 %v1201
        %1538 = vmatpush2.msra.mxu0 %v1200
        %1539 = vmatprep.subr.mxu0 %v1193
        %1540 = vmatpush2.msra.mxu0 %v1192
        %1541 = vmatprep.subr.mxu0 %v1185
        %1542 = vmatpush2.msra.mxu0 %v1184
        %1543 = vmatprep.subr.mxu0 %v1177
        %1544 = vmatpush2.msra.mxu0 %v1176
        %1545 = vmatprep.subr.mxu0 %v1169
        %1546 = vmatpush2.msra.mxu0 %v1168
        %1547 = vmatprep.subr.mxu0 %v1161
        %1548 = vmatpush2.msra.mxu0 %v1160
        %1549 = vmatprep.subr.mxu0 %v1153
        %1550 = vmatpush2.msra.mxu0 %v1152
        %1551 = vmatprep.subr.mxu0 %v1145
        %1552 = vmatpush2.msra.mxu0 %v1144
        %1553 = vmatprep.subr.mxu0 %v1137
        %1554 = vmatpush2.msra.mxu0 %v1136
        %1555 = vmatprep.subr.mxu0 %v1129
        %1556 = vmatpush2.msra.mxu0 %v1128
        %1557 = vmatprep.subr.mxu0 %v1121
        %1558 = vmatpush2.msra.mxu0 %v1120
        %1559 = vmatprep.subr.mxu0 %v1113
        %1560 = vmatpush2.msra.mxu0 %v1112
        %1561 = vmatprep.mubr.f32.mxu0 %v1275
        %1562 = vmatmul.mubr.f32.gmra.mxu0 %v1273
        %v1563 = vpop.f32.mrf.mxu0
        %v1564 = vadd.f32 %v1493, %v1563
        %v1565 = vpop.f32.mrf.mxu0
        %v1566 = vadd.f32 %v1495, %v1565
        %1567 = vdwg.mxu0
        %1568 = vmatprep.subr.mxu0 %v339
        %1569 = vmatpush1.msra.mxu0 %v338
        %1570 = vmatprep.subr.mxu0 %v331
        %1571 = vmatpush1.msra.mxu0 %v330
        %1572 = vmatprep.subr.mxu0 %v323
        %1573 = vmatpush1.msra.mxu0 %v322
        %1574 = vmatprep.subr.mxu0 %v315
        %1575 = vmatpush1.msra.mxu0 %v314
        %1576 = vmatprep.subr.mxu0 %v307
        %1577 = vmatpush1.msra.mxu0 %v306
        %1578 = vmatprep.subr.mxu0 %v299
        %1579 = vmatpush1.msra.mxu0 %v298
        %1580 = vmatprep.subr.mxu0 %v291
        %1581 = vmatpush1.msra.mxu0 %v290
        %1582 = vmatprep.subr.mxu0 %v283
        %1583 = vmatpush1.msra.mxu0 %v282
        %1584 = vmatprep.subr.mxu0 %v275
        %1585 = vmatpush1.msra.mxu0 %v274
        %1586 = vmatprep.subr.mxu0 %v267
        %1587 = vmatpush1.msra.mxu0 %v266
        %1588 = vmatprep.subr.mxu0 %v259
        %1589 = vmatpush1.msra.mxu0 %v258
        %1590 = vmatprep.subr.mxu0 %v251
        %1591 = vmatpush1.msra.mxu0 %v250
        %1592 = vmatprep.subr.mxu0 %v243
        %1593 = vmatpush1.msra.mxu0 %v242
        %1594 = vmatprep.subr.mxu0 %v235
        %1595 = vmatpush1.msra.mxu0 %v234
        %1596 = vmatprep.subr.mxu0 %v227
        %1597 = vmatpush1.msra.mxu0 %v226
        %1598 = vmatprep.subr.mxu0 %v219
        %1599 = vmatpush1.msra.mxu0 %v218
        %1600 = vmatprep.subr.mxu0 %v467
        %1601 = vmatpush2.msra.mxu0 %v466
        %1602 = vmatprep.subr.mxu0 %v459
        %1603 = vmatpush2.msra.mxu0 %v458
        %1604 = vmatprep.subr.mxu0 %v451
        %1605 = vmatpush2.msra.mxu0 %v450
        %1606 = vmatprep.subr.mxu0 %v443
        %1607 = vmatpush2.msra.mxu0 %v442
        %1608 = vmatprep.subr.mxu0 %v435
        %1609 = vmatpush2.msra.mxu0 %v434
        %1610 = vmatprep.subr.mxu0 %v427
        %1611 = vmatpush2.msra.mxu0 %v426
        %1612 = vmatprep.subr.mxu0 %v419
        %1613 = vmatpush2.msra.mxu0 %v418
        %1614 = vmatprep.subr.mxu0 %v411
        %1615 = vmatpush2.msra.mxu0 %v410
        %1616 = vmatprep.subr.mxu0 %v403
        %1617 = vmatpush2.msra.mxu0 %v402
        %1618 = vmatprep.subr.mxu0 %v395
        %1619 = vmatpush2.msra.mxu0 %v394
        %1620 = vmatprep.subr.mxu0 %v387
        %1621 = vmatpush2.msra.mxu0 %v386
        %1622 = vmatprep.subr.mxu0 %v379
        %1623 = vmatpush2.msra.mxu0 %v378
        %1624 = vmatprep.subr.mxu0 %v371
        %1625 = vmatpush2.msra.mxu0 %v370
        %1626 = vmatprep.subr.mxu0 %v363
        %1627 = vmatpush2.msra.mxu0 %v362
        %1628 = vmatprep.subr.mxu0 %v355
        %1629 = vmatpush2.msra.mxu0 %v354
        %1630 = vmatprep.subr.mxu0 %v347
        %1631 = vmatpush2.msra.mxu0 %v346
        %1632 = vmatprep.mubr.f32.mxu0 %v1257
        %1633 = vmatmul.mubr.f32.gmra.mxu0 %v1249
        %v1634 = vpop.f32.mrf.mxu0
        %v1635 = vadd.f32 0.0, %v1634
        %v1636 = vpop.f32.mrf.mxu0
        %v1637 = vadd.f32 0.0, %v1636
        %1638 = vdwg.mxu0
        %1639 = vmatprep.subr.mxu0 %v595
        %1640 = vmatpush1.msra.mxu0 %v594
        %1641 = vmatprep.subr.mxu0 %v587
        %1642 = vmatpush1.msra.mxu0 %v586
        %1643 = vmatprep.subr.mxu0 %v579
        %1644 = vmatpush1.msra.mxu0 %v578
        %1645 = vmatprep.subr.mxu0 %v571
        %1646 = vmatpush1.msra.mxu0 %v570
        %1647 = vmatprep.subr.mxu0 %v563
        %1648 = vmatpush1.msra.mxu0 %v562
        %1649 = vmatprep.subr.mxu0 %v555
        %1650 = vmatpush1.msra.mxu0 %v554
        %1651 = vmatprep.subr.mxu0 %v547
        %1652 = vmatpush1.msra.mxu0 %v546
        %1653 = vmatprep.subr.mxu0 %v539
        %1654 = vmatpush1.msra.mxu0 %v538
        %1655 = vmatprep.subr.mxu0 %v531
        %1656 = vmatpush1.msra.mxu0 %v530
        %1657 = vmatprep.subr.mxu0 %v523
        %1658 = vmatpush1.msra.mxu0 %v522
        %1659 = vmatprep.subr.mxu0 %v515
        %1660 = vmatpush1.msra.mxu0 %v514
        %1661 = vmatprep.subr.mxu0 %v507
        %1662 = vmatpush1.msra.mxu0 %v506
        %1663 = vmatprep.subr.mxu0 %v499
        %1664 = vmatpush1.msra.mxu0 %v498
        %1665 = vmatprep.subr.mxu0 %v491
        %1666 = vmatpush1.msra.mxu0 %v490
        %1667 = vmatprep.subr.mxu0 %v483
        %1668 = vmatpush1.msra.mxu0 %v482
        %1669 = vmatprep.subr.mxu0 %v475
        %1670 = vmatpush1.msra.mxu0 %v474
        %1671 = vmatprep.subr.mxu0 %v723
        %1672 = vmatpush2.msra.mxu0 %v722
        %1673 = vmatprep.subr.mxu0 %v715
        %1674 = vmatpush2.msra.mxu0 %v714
        %1675 = vmatprep.subr.mxu0 %v707
        %1676 = vmatpush2.msra.mxu0 %v706
        %1677 = vmatprep.subr.mxu0 %v699
        %1678 = vmatpush2.msra.mxu0 %v698
        %1679 = vmatprep.subr.mxu0 %v691
        %1680 = vmatpush2.msra.mxu0 %v690
        %1681 = vmatprep.subr.mxu0 %v683
        %1682 = vmatpush2.msra.mxu0 %v682
        %1683 = vmatprep.subr.mxu0 %v675
        %1684 = vmatpush2.msra.mxu0 %v674
        %1685 = vmatprep.subr.mxu0 %v667
        %1686 = vmatpush2.msra.mxu0 %v666
        %1687 = vmatprep.subr.mxu0 %v659
        %1688 = vmatpush2.msra.mxu0 %v658
        %1689 = vmatprep.subr.mxu0 %v651
        %1690 = vmatpush2.msra.mxu0 %v650
        %1691 = vmatprep.subr.mxu0 %v643
        %1692 = vmatpush2.msra.mxu0 %v642
        %1693 = vmatprep.subr.mxu0 %v635
        %1694 = vmatpush2.msra.mxu0 %v634
        %1695 = vmatprep.subr.mxu0 %v627
        %1696 = vmatpush2.msra.mxu0 %v626
        %1697 = vmatprep.subr.mxu0 %v619
        %1698 = vmatpush2.msra.mxu0 %v618
        %1699 = vmatprep.subr.mxu0 %v611
        %1700 = vmatpush2.msra.mxu0 %v610
        %1701 = vmatprep.subr.mxu0 %v603
        %1702 = vmatpush2.msra.mxu0 %v602
        %1703 = vmatprep.mubr.f32.mxu0 %v1258
        %1704 = vmatmul.mubr.f32.gmra.mxu0 %v1256
        %v1705 = vpop.f32.mrf.mxu0
        %v1706 = vadd.f32 %v1635, %v1705
        %v1707 = vpop.f32.mrf.mxu0
        %v1708 = vadd.f32 %v1637, %v1707
        %1709 = vdwg.mxu0
        %1710 = vmatprep.subr.mxu0 %v851
        %1711 = vmatpush1.msra.mxu0 %v850
        %1712 = vmatprep.subr.mxu0 %v843
        %1713 = vmatpush1.msra.mxu0 %v842
        %1714 = vmatprep.subr.mxu0 %v835
        %1715 = vmatpush1.msra.mxu0 %v834
        %1716 = vmatprep.subr.mxu0 %v827
        %1717 = vmatpush1.msra.mxu0 %v826
        %1718 = vmatprep.subr.mxu0 %v819
        %1719 = vmatpush1.msra.mxu0 %v818
        %1720 = vmatprep.subr.mxu0 %v811
        %1721 = vmatpush1.msra.mxu0 %v810
        %1722 = vmatprep.subr.mxu0 %v803
        %1723 = vmatpush1.msra.mxu0 %v802
        %1724 = vmatprep.subr.mxu0 %v795
        %1725 = vmatpush1.msra.mxu0 %v794
        %1726 = vmatprep.subr.mxu0 %v787
        %1727 = vmatpush1.msra.mxu0 %v786
        %1728 = vmatprep.subr.mxu0 %v779
        %1729 = vmatpush1.msra.mxu0 %v778
        %1730 = vmatprep.subr.mxu0 %v771
        %1731 = vmatpush1.msra.mxu0 %v770
        %1732 = vmatprep.subr.mxu0 %v763
        %1733 = vmatpush1.msra.mxu0 %v762
        %1734 = vmatprep.subr.mxu0 %v755
        %1735 = vmatpush1.msra.mxu0 %v754
        %1736 = vmatprep.subr.mxu0 %v747
        %1737 = vmatpush1.msra.mxu0 %v746
        %1738 = vmatprep.subr.mxu0 %v739
        %1739 = vmatpush1.msra.mxu0 %v738
        %1740 = vmatprep.subr.mxu0 %v731
        %1741 = vmatpush1.msra.mxu0 %v730
        %1742 = vmatprep.subr.mxu0 %v979
        %1743 = vmatpush2.msra.mxu0 %v978
        %1744 = vmatprep.subr.mxu0 %v971
        %1745 = vmatpush2.msra.mxu0 %v970
        %1746 = vmatprep.subr.mxu0 %v963
        %1747 = vmatpush2.msra.mxu0 %v962
        %1748 = vmatprep.subr.mxu0 %v955
        %1749 = vmatpush2.msra.mxu0 %v954
        %1750 = vmatprep.subr.mxu0 %v947
        %1751 = vmatpush2.msra.mxu0 %v946
        %1752 = vmatprep.subr.mxu0 %v939
        %1753 = vmatpush2.msra.mxu0 %v938
        %1754 = vmatprep.subr.mxu0 %v931
        %1755 = vmatpush2.msra.mxu0 %v930
        %1756 = vmatprep.subr.mxu0 %v923
        %1757 = vmatpush2.msra.mxu0 %v922
        %1758 = vmatprep.subr.mxu0 %v915
        %1759 = vmatpush2.msra.mxu0 %v914
        %1760 = vmatprep.subr.mxu0 %v907
        %1761 = vmatpush2.msra.mxu0 %v906
        %1762 = vmatprep.subr.mxu0 %v899
        %1763 = vmatpush2.msra.mxu0 %v898
        %1764 = vmatprep.subr.mxu0 %v891
        %1765 = vmatpush2.msra.mxu0 %v890
        %1766 = vmatprep.subr.mxu0 %v883
        %1767 = vmatpush2.msra.mxu0 %v882
        %1768 = vmatprep.subr.mxu0 %v875
        %1769 = vmatpush2.msra.mxu0 %v874
        %1770 = vmatprep.subr.mxu0 %v867
        %1771 = vmatpush2.msra.mxu0 %v866
        %1772 = vmatprep.subr.mxu0 %v859
        %1773 = vmatpush2.msra.mxu0 %v858
        %1774 = vmatprep.mubr.f32.mxu0 %v1274
        %1775 = vmatmul.mubr.f32.gmra.mxu0 %v1266
        %v1776 = vpop.f32.mrf.mxu0
        %v1777 = vadd.f32 %v1706, %v1776
        %v1778 = vpop.f32.mrf.mxu0
        %v1779 = vadd.f32 %v1708, %v1778
        %1780 = vdwg.mxu0
        %1781 = vmatprep.subr.mxu0 %v1107
        %1782 = vmatpush1.msra.mxu0 %v1106
        %1783 = vmatprep.subr.mxu0 %v1099
        %1784 = vmatpush1.msra.mxu0 %v1098
        %1785 = vmatprep.subr.mxu0 %v1091
        %1786 = vmatpush1.msra.mxu0 %v1090
        %1787 = vmatprep.subr.mxu0 %v1083
        %1788 = vmatpush1.msra.mxu0 %v1082
        %1789 = vmatprep.subr.mxu0 %v1075
        %1790 = vmatpush1.msra.mxu0 %v1074
        %1791 = vmatprep.subr.mxu0 %v1067
        %1792 = vmatpush1.msra.mxu0 %v1066
        %1793 = vmatprep.subr.mxu0 %v1059
        %1794 = vmatpush1.msra.mxu0 %v1058
        %1795 = vmatprep.subr.mxu0 %v1051
        %1796 = vmatpush1.msra.mxu0 %v1050
        %1797 = vmatprep.subr.mxu0 %v1043
        %1798 = vmatpush1.msra.mxu0 %v1042
        %1799 = vmatprep.subr.mxu0 %v1035
        %1800 = vmatpush1.msra.mxu0 %v1034
        %1801 = vmatprep.subr.mxu0 %v1027
        %1802 = vmatpush1.msra.mxu0 %v1026
        %1803 = vmatprep.subr.mxu0 %v1019
        %1804 = vmatpush1.msra.mxu0 %v1018
        %1805 = vmatprep.subr.mxu0 %v1011
        %1806 = vmatpush1.msra.mxu0 %v1010
        %1807 = vmatprep.subr.mxu0 %v1003
        %1808 = vmatpush1.msra.mxu0 %v1002
        %1809 = vmatprep.subr.mxu0 %v995
        %1810 = vmatpush1.msra.mxu0 %v994
        %1811 = vmatprep.subr.mxu0 %v987
        %1812 = vmatpush1.msra.mxu0 %v986
        %1813 = vmatprep.subr.mxu0 %v1235
        %1814 = vmatpush2.msra.mxu0 %v1234
        %1815 = vmatprep.subr.mxu0 %v1227
        %1816 = vmatpush2.msra.mxu0 %v1226
        %1817 = vmatprep.subr.mxu0 %v1219
        %1818 = vmatpush2.msra.mxu0 %v1218
        %1819 = vmatprep.subr.mxu0 %v1211
        %1820 = vmatpush2.msra.mxu0 %v1210
        %1821 = vmatprep.subr.mxu0 %v1203
        %1822 = vmatpush2.msra.mxu0 %v1202
        %1823 = vmatprep.subr.mxu0 %v1195
        %1824 = vmatpush2.msra.mxu0 %v1194
        %1825 = vmatprep.subr.mxu0 %v1187
        %1826 = vmatpush2.msra.mxu0 %v1186
        %1827 = vmatprep.subr.mxu0 %v1179
        %1828 = vmatpush2.msra.mxu0 %v1178
        %1829 = vmatprep.subr.mxu0 %v1171
        %1830 = vmatpush2.msra.mxu0 %v1170
        %1831 = vmatprep.subr.mxu0 %v1163
        %1832 = vmatpush2.msra.mxu0 %v1162
        %1833 = vmatprep.subr.mxu0 %v1155
        %1834 = vmatpush2.msra.mxu0 %v1154
        %1835 = vmatprep.subr.mxu0 %v1147
        %1836 = vmatpush2.msra.mxu0 %v1146
        %1837 = vmatprep.subr.mxu0 %v1139
        %1838 = vmatpush2.msra.mxu0 %v1138
        %1839 = vmatprep.subr.mxu0 %v1131
        %1840 = vmatpush2.msra.mxu0 %v1130
        %1841 = vmatprep.subr.mxu0 %v1123
        %1842 = vmatpush2.msra.mxu0 %v1122
        %1843 = vmatprep.subr.mxu0 %v1115
        %1844 = vmatpush2.msra.mxu0 %v1114
        %1845 = vmatprep.mubr.f32.mxu0 %v1275
        %1846 = vmatmul.mubr.f32.gmra.mxu0 %v1273
        %v1847 = vpop.f32.mrf.mxu0
        %v1848 = vadd.f32 %v1777, %v1847
        %v1849 = vpop.f32.mrf.mxu0
        %v1850 = vadd.f32 %v1779, %v1849
        %1851 = vdwg.mxu0
        %1852 = vmatprep.subr.mxu0 %v341
        %1853 = vmatpush1.msra.mxu0 %v340
        %1854 = vmatprep.subr.mxu0 %v333
        %1855 = vmatpush1.msra.mxu0 %v332
        %1856 = vmatprep.subr.mxu0 %v325
        %1857 = vmatpush1.msra.mxu0 %v324
        %1858 = vmatprep.subr.mxu0 %v317
        %1859 = vmatpush1.msra.mxu0 %v316
        %1860 = vmatprep.subr.mxu0 %v309
        %1861 = vmatpush1.msra.mxu0 %v308
        %1862 = vmatprep.subr.mxu0 %v301
        %1863 = vmatpush1.msra.mxu0 %v300
        %1864 = vmatprep.subr.mxu0 %v293
        %1865 = vmatpush1.msra.mxu0 %v292
        %1866 = vmatprep.subr.mxu0 %v285
        %1867 = vmatpush1.msra.mxu0 %v284
        %1868 = vmatprep.subr.mxu0 %v277
        %1869 = vmatpush1.msra.mxu0 %v276
        %1870 = vmatprep.subr.mxu0 %v269
        %1871 = vmatpush1.msra.mxu0 %v268
        %1872 = vmatprep.subr.mxu0 %v261
        %1873 = vmatpush1.msra.mxu0 %v260
        %1874 = vmatprep.subr.mxu0 %v253
        %1875 = vmatpush1.msra.mxu0 %v252
        %1876 = vmatprep.subr.mxu0 %v245
        %1877 = vmatpush1.msra.mxu0 %v244
        %1878 = vmatprep.subr.mxu0 %v237
        %1879 = vmatpush1.msra.mxu0 %v236
        %1880 = vmatprep.subr.mxu0 %v229
        %1881 = vmatpush1.msra.mxu0 %v228
        %1882 = vmatprep.subr.mxu0 %v221
        %1883 = vmatpush1.msra.mxu0 %v220
        %1884 = vmatprep.subr.mxu0 %v469
        %1885 = vmatpush2.msra.mxu0 %v468
        %1886 = vmatprep.subr.mxu0 %v461
        %1887 = vmatpush2.msra.mxu0 %v460
        %1888 = vmatprep.subr.mxu0 %v453
        %1889 = vmatpush2.msra.mxu0 %v452
        %1890 = vmatprep.subr.mxu0 %v445
        %1891 = vmatpush2.msra.mxu0 %v444
        %1892 = vmatprep.subr.mxu0 %v437
        %1893 = vmatpush2.msra.mxu0 %v436
        %1894 = vmatprep.subr.mxu0 %v429
        %1895 = vmatpush2.msra.mxu0 %v428
        %1896 = vmatprep.subr.mxu0 %v421
        %1897 = vmatpush2.msra.mxu0 %v420
        %1898 = vmatprep.subr.mxu0 %v413
        %1899 = vmatpush2.msra.mxu0 %v412
        %1900 = vmatprep.subr.mxu0 %v405
        %1901 = vmatpush2.msra.mxu0 %v404
        %1902 = vmatprep.subr.mxu0 %v397
        %1903 = vmatpush2.msra.mxu0 %v396
        %1904 = vmatprep.subr.mxu0 %v389
        %1905 = vmatpush2.msra.mxu0 %v388
        %1906 = vmatprep.subr.mxu0 %v381
        %1907 = vmatpush2.msra.mxu0 %v380
        %1908 = vmatprep.subr.mxu0 %v373
        %1909 = vmatpush2.msra.mxu0 %v372
        %1910 = vmatprep.subr.mxu0 %v365
        %1911 = vmatpush2.msra.mxu0 %v364
        %1912 = vmatprep.subr.mxu0 %v357
        %1913 = vmatpush2.msra.mxu0 %v356
        %1914 = vmatprep.subr.mxu0 %v349
        %1915 = vmatpush2.msra.mxu0 %v348
        %1916 = vmatprep.mubr.f32.mxu0 %v1257
        %1917 = vmatmul.mubr.f32.gmra.mxu0 %v1249
        %v1918 = vpop.f32.mrf.mxu0
        %v1919 = vadd.f32 0.0, %v1918
        %v1920 = vpop.f32.mrf.mxu0
        %v1921 = vadd.f32 0.0, %v1920
        %1922 = vdwg.mxu0
        %1923 = vmatprep.subr.mxu0 %v597
        %1924 = vmatpush1.msra.mxu0 %v596
        %1925 = vmatprep.subr.mxu0 %v589
        %1926 = vmatpush1.msra.mxu0 %v588
        %1927 = vmatprep.subr.mxu0 %v581
        %1928 = vmatpush1.msra.mxu0 %v580
        %1929 = vmatprep.subr.mxu0 %v573
        %1930 = vmatpush1.msra.mxu0 %v572
        %1931 = vmatprep.subr.mxu0 %v565
        %1932 = vmatpush1.msra.mxu0 %v564
        %1933 = vmatprep.subr.mxu0 %v557
        %1934 = vmatpush1.msra.mxu0 %v556
        %1935 = vmatprep.subr.mxu0 %v549
        %1936 = vmatpush1.msra.mxu0 %v548
        %1937 = vmatprep.subr.mxu0 %v541
        %1938 = vmatpush1.msra.mxu0 %v540
        %1939 = vmatprep.subr.mxu0 %v533
        %1940 = vmatpush1.msra.mxu0 %v532
        %1941 = vmatprep.subr.mxu0 %v525
        %1942 = vmatpush1.msra.mxu0 %v524
        %1943 = vmatprep.subr.mxu0 %v517
        %1944 = vmatpush1.msra.mxu0 %v516
        %1945 = vmatprep.subr.mxu0 %v509
        %1946 = vmatpush1.msra.mxu0 %v508
        %1947 = vmatprep.subr.mxu0 %v501
        %1948 = vmatpush1.msra.mxu0 %v500
        %1949 = vmatprep.subr.mxu0 %v493
        %1950 = vmatpush1.msra.mxu0 %v492
        %1951 = vmatprep.subr.mxu0 %v485
        %1952 = vmatpush1.msra.mxu0 %v484
        %1953 = vmatprep.subr.mxu0 %v477
        %1954 = vmatpush1.msra.mxu0 %v476
        %1955 = vmatprep.subr.mxu0 %v725
        %1956 = vmatpush2.msra.mxu0 %v724
        %1957 = vmatprep.subr.mxu0 %v717
        %1958 = vmatpush2.msra.mxu0 %v716
        %1959 = vmatprep.subr.mxu0 %v709
        %1960 = vmatpush2.msra.mxu0 %v708
        %1961 = vmatprep.subr.mxu0 %v701
        %1962 = vmatpush2.msra.mxu0 %v700
        %1963 = vmatprep.subr.mxu0 %v693
        %1964 = vmatpush2.msra.mxu0 %v692
        %1965 = vmatprep.subr.mxu0 %v685
        %1966 = vmatpush2.msra.mxu0 %v684
        %1967 = vmatprep.subr.mxu0 %v677
        %1968 = vmatpush2.msra.mxu0 %v676
        %1969 = vmatprep.subr.mxu0 %v669
        %1970 = vmatpush2.msra.mxu0 %v668
        %1971 = vmatprep.subr.mxu0 %v661
        %1972 = vmatpush2.msra.mxu0 %v660
        %1973 = vmatprep.subr.mxu0 %v653
        %1974 = vmatpush2.msra.mxu0 %v652
        %1975 = vmatprep.subr.mxu0 %v645
        %1976 = vmatpush2.msra.mxu0 %v644
        %1977 = vmatprep.subr.mxu0 %v637
        %1978 = vmatpush2.msra.mxu0 %v636
        %1979 = vmatprep.subr.mxu0 %v629
        %1980 = vmatpush2.msra.mxu0 %v628
        %1981 = vmatprep.subr.mxu0 %v621
        %1982 = vmatpush2.msra.mxu0 %v620
        %1983 = vmatprep.subr.mxu0 %v613
        %1984 = vmatpush2.msra.mxu0 %v612
        %1985 = vmatprep.subr.mxu0 %v605
        %1986 = vmatpush2.msra.mxu0 %v604
        %1987 = vmatprep.mubr.f32.mxu0 %v1258
        %1988 = vmatmul.mubr.f32.gmra.mxu0 %v1256
        %v1989 = vpop.f32.mrf.mxu0
        %v1990 = vadd.f32 %v1919, %v1989
        %v1991 = vpop.f32.mrf.mxu0
        %v1992 = vadd.f32 %v1921, %v1991
        %1993 = vdwg.mxu0
        %1994 = vmatprep.subr.mxu0 %v853
        %1995 = vmatpush1.msra.mxu0 %v852
        %1996 = vmatprep.subr.mxu0 %v845
        %1997 = vmatpush1.msra.mxu0 %v844
        %1998 = vmatprep.subr.mxu0 %v837
        %1999 = vmatpush1.msra.mxu0 %v836
        %2000 = vmatprep.subr.mxu0 %v829
        %2001 = vmatpush1.msra.mxu0 %v828
        %2002 = vmatprep.subr.mxu0 %v821
        %2003 = vmatpush1.msra.mxu0 %v820
        %2004 = vmatprep.subr.mxu0 %v813
        %2005 = vmatpush1.msra.mxu0 %v812
        %2006 = vmatprep.subr.mxu0 %v805
        %2007 = vmatpush1.msra.mxu0 %v804
        %2008 = vmatprep.subr.mxu0 %v797
        %2009 = vmatpush1.msra.mxu0 %v796
        %2010 = vmatprep.subr.mxu0 %v789
        %2011 = vmatpush1.msra.mxu0 %v788
        %2012 = vmatprep.subr.mxu0 %v781
        %2013 = vmatpush1.msra.mxu0 %v780
        %2014 = vmatprep.subr.mxu0 %v773
        %2015 = vmatpush1.msra.mxu0 %v772
        %2016 = vmatprep.subr.mxu0 %v765
        %2017 = vmatpush1.msra.mxu0 %v764
        %2018 = vmatprep.subr.mxu0 %v757
        %2019 = vmatpush1.msra.mxu0 %v756
        %2020 = vmatprep.subr.mxu0 %v749
        %2021 = vmatpush1.msra.mxu0 %v748
        %2022 = vmatprep.subr.mxu0 %v741
        %2023 = vmatpush1.msra.mxu0 %v740
        %2024 = vmatprep.subr.mxu0 %v733
        %2025 = vmatpush1.msra.mxu0 %v732
        %2026 = vmatprep.subr.mxu0 %v981
        %2027 = vmatpush2.msra.mxu0 %v980
        %2028 = vmatprep.subr.mxu0 %v973
        %2029 = vmatpush2.msra.mxu0 %v972
        %2030 = vmatprep.subr.mxu0 %v965
        %2031 = vmatpush2.msra.mxu0 %v964
        %2032 = vmatprep.subr.mxu0 %v957
        %2033 = vmatpush2.msra.mxu0 %v956
        %2034 = vmatprep.subr.mxu0 %v949
        %2035 = vmatpush2.msra.mxu0 %v948
        %2036 = vmatprep.subr.mxu0 %v941
        %2037 = vmatpush2.msra.mxu0 %v940
        %2038 = vmatprep.subr.mxu0 %v933
        %2039 = vmatpush2.msra.mxu0 %v932
        %2040 = vmatprep.subr.mxu0 %v925
        %2041 = vmatpush2.msra.mxu0 %v924
        %2042 = vmatprep.subr.mxu0 %v917
        %2043 = vmatpush2.msra.mxu0 %v916
        %2044 = vmatprep.subr.mxu0 %v909
        %2045 = vmatpush2.msra.mxu0 %v908
        %2046 = vmatprep.subr.mxu0 %v901
        %2047 = vmatpush2.msra.mxu0 %v900
        %2048 = vmatprep.subr.mxu0 %v893
        %2049 = vmatpush2.msra.mxu0 %v892
        %2050 = vmatprep.subr.mxu0 %v885
        %2051 = vmatpush2.msra.mxu0 %v884
        %2052 = vmatprep.subr.mxu0 %v877
        %2053 = vmatpush2.msra.mxu0 %v876
        %2054 = vmatprep.subr.mxu0 %v869
        %2055 = vmatpush2.msra.mxu0 %v868
        %2056 = vmatprep.subr.mxu0 %v861
        %2057 = vmatpush2.msra.mxu0 %v860
        %2058 = vmatprep.mubr.f32.mxu0 %v1274
        %2059 = vmatmul.mubr.f32.gmra.mxu0 %v1266
        %v2060 = vpop.f32.mrf.mxu0
        %v2061 = vadd.f32 %v1990, %v2060
        %v2062 = vpop.f32.mrf.mxu0
        %v2063 = vadd.f32 %v1992, %v2062
        %2064 = vdwg.mxu0
        %2065 = vmatprep.subr.mxu0 %v1109
        %2066 = vmatpush1.msra.mxu0 %v1108
        %2067 = vmatprep.subr.mxu0 %v1101
        %2068 = vmatpush1.msra.mxu0 %v1100
        %2069 = vmatprep.subr.mxu0 %v1093
        %2070 = vmatpush1.msra.mxu0 %v1092
        %2071 = vmatprep.subr.mxu0 %v1085
        %2072 = vmatpush1.msra.mxu0 %v1084
        %2073 = vmatprep.subr.mxu0 %v1077
        %2074 = vmatpush1.msra.mxu0 %v1076
        %2075 = vmatprep.subr.mxu0 %v1069
        %2076 = vmatpush1.msra.mxu0 %v1068
        %2077 = vmatprep.subr.mxu0 %v1061
        %2078 = vmatpush1.msra.mxu0 %v1060
        %2079 = vmatprep.subr.mxu0 %v1053
        %2080 = vmatpush1.msra.mxu0 %v1052
        %2081 = vmatprep.subr.mxu0 %v1045
        %2082 = vmatpush1.msra.mxu0 %v1044
        %2083 = vmatprep.subr.mxu0 %v1037
        %2084 = vmatpush1.msra.mxu0 %v1036
        %2085 = vmatprep.subr.mxu0 %v1029
        %2086 = vmatpush1.msra.mxu0 %v1028
        %2087 = vmatprep.subr.mxu0 %v1021
        %2088 = vmatpush1.msra.mxu0 %v1020
        %2089 = vmatprep.subr.mxu0 %v1013
        %2090 = vmatpush1.msra.mxu0 %v1012
        %2091 = vmatprep.subr.mxu0 %v1005
        %2092 = vmatpush1.msra.mxu0 %v1004
        %2093 = vmatprep.subr.mxu0 %v997
        %2094 = vmatpush1.msra.mxu0 %v996
        %2095 = vmatprep.subr.mxu0 %v989
        %2096 = vmatpush1.msra.mxu0 %v988
        %2097 = vmatprep.subr.mxu0 %v1237
        %2098 = vmatpush2.msra.mxu0 %v1236
        %2099 = vmatprep.subr.mxu0 %v1229
        %2100 = vmatpush2.msra.mxu0 %v1228
        %2101 = vmatprep.subr.mxu0 %v1221
        %2102 = vmatpush2.msra.mxu0 %v1220
        %2103 = vmatprep.subr.mxu0 %v1213
        %2104 = vmatpush2.msra.mxu0 %v1212
        %2105 = vmatprep.subr.mxu0 %v1205
        %2106 = vmatpush2.msra.mxu0 %v1204
        %2107 = vmatprep.subr.mxu0 %v1197
        %2108 = vmatpush2.msra.mxu0 %v1196
        %2109 = vmatprep.subr.mxu0 %v1189
        %2110 = vmatpush2.msra.mxu0 %v1188
        %2111 = vmatprep.subr.mxu0 %v1181
        %2112 = vmatpush2.msra.mxu0 %v1180
        %2113 = vmatprep.subr.mxu0 %v1173
        %2114 = vmatpush2.msra.mxu0 %v1172
        %2115 = vmatprep.subr.mxu0 %v1165
        %2116 = vmatpush2.msra.mxu0 %v1164
        %2117 = vmatprep.subr.mxu0 %v1157
        %2118 = vmatpush2.msra.mxu0 %v1156
        %2119 = vmatprep.subr.mxu0 %v1149
        %2120 = vmatpush2.msra.mxu0 %v1148
        %2121 = vmatprep.subr.mxu0 %v1141
        %2122 = vmatpush2.msra.mxu0 %v1140
        %2123 = vmatprep.subr.mxu0 %v1133
        %2124 = vmatpush2.msra.mxu0 %v1132
        %2125 = vmatprep.subr.mxu0 %v1125
        %2126 = vmatpush2.msra.mxu0 %v1124
        %2127 = vmatprep.subr.mxu0 %v1117
        %2128 = vmatpush2.msra.mxu0 %v1116
        %2129 = vmatprep.mubr.f32.mxu0 %v1275
        %2130 = vmatmul.mubr.f32.gmra.mxu0 %v1273
        %v2131 = vpop.f32.mrf.mxu0
        %v2132 = vadd.f32 %v2061, %v2131
        %v2133 = vpop.f32.mrf.mxu0
        %v2134 = vadd.f32 %v2063, %v2133
        %2135 = vdwg.mxu0
        %2136 = vmatprep.subr.mxu0 %v343
        %2137 = vmatpush1.msra.mxu0 %v342
        %2138 = vmatprep.subr.mxu0 %v335
        %2139 = vmatpush1.msra.mxu0 %v334
        %2140 = vmatprep.subr.mxu0 %v327
        %2141 = vmatpush1.msra.mxu0 %v326
        %2142 = vmatprep.subr.mxu0 %v319
        %2143 = vmatpush1.msra.mxu0 %v318
        %2144 = vmatprep.subr.mxu0 %v311
        %2145 = vmatpush1.msra.mxu0 %v310
        %2146 = vmatprep.subr.mxu0 %v303
        %2147 = vmatpush1.msra.mxu0 %v302
        %2148 = vmatprep.subr.mxu0 %v295
        %2149 = vmatpush1.msra.mxu0 %v294
        %2150 = vmatprep.subr.mxu0 %v287
        %2151 = vmatpush1.msra.mxu0 %v286
        %2152 = vmatprep.subr.mxu0 %v279
        %2153 = vmatpush1.msra.mxu0 %v278
        %2154 = vmatprep.subr.mxu0 %v271
        %2155 = vmatpush1.msra.mxu0 %v270
        %2156 = vmatprep.subr.mxu0 %v263
        %2157 = vmatpush1.msra.mxu0 %v262
        %2158 = vmatprep.subr.mxu0 %v255
        %2159 = vmatpush1.msra.mxu0 %v254
        %2160 = vmatprep.subr.mxu0 %v247
        %2161 = vmatpush1.msra.mxu0 %v246
        %2162 = vmatprep.subr.mxu0 %v239
        %2163 = vmatpush1.msra.mxu0 %v238
        %2164 = vmatprep.subr.mxu0 %v231
        %2165 = vmatpush1.msra.mxu0 %v230
        %2166 = vmatprep.subr.mxu0 %v223
        %2167 = vmatpush1.msra.mxu0 %v222
        %2168 = vmatprep.subr.mxu0 %v471
        %2169 = vmatpush2.msra.mxu0 %v470
        %2170 = vmatprep.subr.mxu0 %v463
        %2171 = vmatpush2.msra.mxu0 %v462
        %2172 = vmatprep.subr.mxu0 %v455
        %2173 = vmatpush2.msra.mxu0 %v454
        %2174 = vmatprep.subr.mxu0 %v447
        %2175 = vmatpush2.msra.mxu0 %v446
        %2176 = vmatprep.subr.mxu0 %v439
        %2177 = vmatpush2.msra.mxu0 %v438
        %2178 = vmatprep.subr.mxu0 %v431
        %2179 = vmatpush2.msra.mxu0 %v430
        %2180 = vmatprep.subr.mxu0 %v423
        %2181 = vmatpush2.msra.mxu0 %v422
        %2182 = vmatprep.subr.mxu0 %v415
        %2183 = vmatpush2.msra.mxu0 %v414
        %2184 = vmatprep.subr.mxu0 %v407
        %2185 = vmatpush2.msra.mxu0 %v406
        %2186 = vmatprep.subr.mxu0 %v399
        %2187 = vmatpush2.msra.mxu0 %v398
        %2188 = vmatprep.subr.mxu0 %v391
        %2189 = vmatpush2.msra.mxu0 %v390
        %2190 = vmatprep.subr.mxu0 %v383
        %2191 = vmatpush2.msra.mxu0 %v382
        %2192 = vmatprep.subr.mxu0 %v375
        %2193 = vmatpush2.msra.mxu0 %v374
        %2194 = vmatprep.subr.mxu0 %v367
        %2195 = vmatpush2.msra.mxu0 %v366
        %2196 = vmatprep.subr.mxu0 %v359
        %2197 = vmatpush2.msra.mxu0 %v358
        %2198 = vmatprep.subr.mxu0 %v351
        %2199 = vmatpush2.msra.mxu0 %v350
        %2200 = vmatprep.mubr.f32.mxu0 %v1257
        %2201 = vmatmul.mubr.f32.gmra.mxu0 %v1249
        %v2202 = vpop.f32.mrf.mxu0
        %v2203 = vadd.f32 0.0, %v2202
        %v2204 = vpop.f32.mrf.mxu0
        %v2205 = vadd.f32 0.0, %v2204
        %2206 = vdwg.mxu0
        %2207 = vmatprep.subr.mxu0 %v599
        %2208 = vmatpush1.msra.mxu0 %v598
        %2209 = vmatprep.subr.mxu0 %v591
        %2210 = vmatpush1.msra.mxu0 %v590
        %2211 = vmatprep.subr.mxu0 %v583
        %2212 = vmatpush1.msra.mxu0 %v582
        %2213 = vmatprep.subr.mxu0 %v575
        %2214 = vmatpush1.msra.mxu0 %v574
        %2215 = vmatprep.subr.mxu0 %v567
        %2216 = vmatpush1.msra.mxu0 %v566
        %2217 = vmatprep.subr.mxu0 %v559
        %2218 = vmatpush1.msra.mxu0 %v558
        %2219 = vmatprep.subr.mxu0 %v551
        %2220 = vmatpush1.msra.mxu0 %v550
        %2221 = vmatprep.subr.mxu0 %v543
        %2222 = vmatpush1.msra.mxu0 %v542
        %2223 = vmatprep.subr.mxu0 %v535
        %2224 = vmatpush1.msra.mxu0 %v534
        %2225 = vmatprep.subr.mxu0 %v527
        %2226 = vmatpush1.msra.mxu0 %v526
        %2227 = vmatprep.subr.mxu0 %v519
        %2228 = vmatpush1.msra.mxu0 %v518
        %2229 = vmatprep.subr.mxu0 %v511
        %2230 = vmatpush1.msra.mxu0 %v510
        %2231 = vmatprep.subr.mxu0 %v503
        %2232 = vmatpush1.msra.mxu0 %v502
        %2233 = vmatprep.subr.mxu0 %v495
        %2234 = vmatpush1.msra.mxu0 %v494
        %2235 = vmatprep.subr.mxu0 %v487
        %2236 = vmatpush1.msra.mxu0 %v486
        %2237 = vmatprep.subr.mxu0 %v479
        %2238 = vmatpush1.msra.mxu0 %v478
        %2239 = vmatprep.subr.mxu0 %v727
        %2240 = vmatpush2.msra.mxu0 %v726
        %2241 = vmatprep.subr.mxu0 %v719
        %2242 = vmatpush2.msra.mxu0 %v718
        %2243 = vmatprep.subr.mxu0 %v711
        %2244 = vmatpush2.msra.mxu0 %v710
        %2245 = vmatprep.subr.mxu0 %v703
        %2246 = vmatpush2.msra.mxu0 %v702
        %2247 = vmatprep.subr.mxu0 %v695
        %2248 = vmatpush2.msra.mxu0 %v694
        %2249 = vmatprep.subr.mxu0 %v687
        %2250 = vmatpush2.msra.mxu0 %v686
        %2251 = vmatprep.subr.mxu0 %v679
        %2252 = vmatpush2.msra.mxu0 %v678
        %2253 = vmatprep.subr.mxu0 %v671
        %2254 = vmatpush2.msra.mxu0 %v670
        %2255 = vmatprep.subr.mxu0 %v663
        %2256 = vmatpush2.msra.mxu0 %v662
        %2257 = vmatprep.subr.mxu0 %v655
        %2258 = vmatpush2.msra.mxu0 %v654
        %2259 = vmatprep.subr.mxu0 %v647
        %2260 = vmatpush2.msra.mxu0 %v646
        %2261 = vmatprep.subr.mxu0 %v639
        %2262 = vmatpush2.msra.mxu0 %v638
        %2263 = vmatprep.subr.mxu0 %v631
        %2264 = vmatpush2.msra.mxu0 %v630
        %2265 = vmatprep.subr.mxu0 %v623
        %2266 = vmatpush2.msra.mxu0 %v622
        %2267 = vmatprep.subr.mxu0 %v615
        %2268 = vmatpush2.msra.mxu0 %v614
        %2269 = vmatprep.subr.mxu0 %v607
        %2270 = vmatpush2.msra.mxu0 %v606
        %2271 = vmatprep.mubr.f32.mxu0 %v1258
        %2272 = vmatmul.mubr.f32.gmra.mxu0 %v1256
        %v2273 = vpop.f32.mrf.mxu0
        %v2274 = vadd.f32 %v2203, %v2273
        %v2275 = vpop.f32.mrf.mxu0
        %v2276 = vadd.f32 %v2205, %v2275
        %2277 = vdwg.mxu0
        %2278 = vmatprep.subr.mxu0 %v855
        %2279 = vmatpush1.msra.mxu0 %v854
        %2280 = vmatprep.subr.mxu0 %v847
        %2281 = vmatpush1.msra.mxu0 %v846
        %2282 = vmatprep.subr.mxu0 %v839
        %2283 = vmatpush1.msra.mxu0 %v838
        %2284 = vmatprep.subr.mxu0 %v831
        %2285 = vmatpush1.msra.mxu0 %v830
        %2286 = vmatprep.subr.mxu0 %v823
        %2287 = vmatpush1.msra.mxu0 %v822
        %2288 = vmatprep.subr.mxu0 %v815
        %2289 = vmatpush1.msra.mxu0 %v814
        %2290 = vmatprep.subr.mxu0 %v807
        %2291 = vmatpush1.msra.mxu0 %v806
        %2292 = vmatprep.subr.mxu0 %v799
        %2293 = vmatpush1.msra.mxu0 %v798
        %2294 = vmatprep.subr.mxu0 %v791
        %2295 = vmatpush1.msra.mxu0 %v790
        %2296 = vmatprep.subr.mxu0 %v783
        %2297 = vmatpush1.msra.mxu0 %v782
        %2298 = vmatprep.subr.mxu0 %v775
        %2299 = vmatpush1.msra.mxu0 %v774
        %2300 = vmatprep.subr.mxu0 %v767
        %2301 = vmatpush1.msra.mxu0 %v766
        %2302 = vmatprep.subr.mxu0 %v759
        %2303 = vmatpush1.msra.mxu0 %v758
        %2304 = vmatprep.subr.mxu0 %v751
        %2305 = vmatpush1.msra.mxu0 %v750
        %2306 = vmatprep.subr.mxu0 %v743
        %2307 = vmatpush1.msra.mxu0 %v742
        %2308 = vmatprep.subr.mxu0 %v735
        %2309 = vmatpush1.msra.mxu0 %v734
        %2310 = vmatprep.subr.mxu0 %v983
        %2311 = vmatpush2.msra.mxu0 %v982
        %2312 = vmatprep.subr.mxu0 %v975
        %2313 = vmatpush2.msra.mxu0 %v974
        %2314 = vmatprep.subr.mxu0 %v967
        %2315 = vmatpush2.msra.mxu0 %v966
        %2316 = vmatprep.subr.mxu0 %v959
        %2317 = vmatpush2.msra.mxu0 %v958
        %2318 = vmatprep.subr.mxu0 %v951
        %2319 = vmatpush2.msra.mxu0 %v950
        %2320 = vmatprep.subr.mxu0 %v943
        %2321 = vmatpush2.msra.mxu0 %v942
        %2322 = vmatprep.subr.mxu0 %v935
        %2323 = vmatpush2.msra.mxu0 %v934
        %2324 = vmatprep.subr.mxu0 %v927
        %2325 = vmatpush2.msra.mxu0 %v926
        %2326 = vmatprep.subr.mxu0 %v919
        %2327 = vmatpush2.msra.mxu0 %v918
        %2328 = vmatprep.subr.mxu0 %v911
        %2329 = vmatpush2.msra.mxu0 %v910
        %2330 = vmatprep.subr.mxu0 %v903
        %2331 = vmatpush2.msra.mxu0 %v902
        %2332 = vmatprep.subr.mxu0 %v895
        %2333 = vmatpush2.msra.mxu0 %v894
        %2334 = vmatprep.subr.mxu0 %v887
        %2335 = vmatpush2.msra.mxu0 %v886
        %2336 = vmatprep.subr.mxu0 %v879
        %2337 = vmatpush2.msra.mxu0 %v878
        %2338 = vmatprep.subr.mxu0 %v871
        %2339 = vmatpush2.msra.mxu0 %v870
        %2340 = vmatprep.subr.mxu0 %v863
        %2341 = vmatpush2.msra.mxu0 %v862
        %2342 = vmatprep.mubr.f32.mxu0 %v1274
        %2343 = vmatmul.mubr.f32.gmra.mxu0 %v1266
        %v2344 = vpop.f32.mrf.mxu0
        %v2345 = vadd.f32 %v2274, %v2344
        %v2346 = vpop.f32.mrf.mxu0
        %v2347 = vadd.f32 %v2276, %v2346
        %2348 = vdwg.mxu0
        %2349 = vmatprep.subr.mxu0 %v1111
        %2350 = vmatpush1.msra.mxu0 %v1110
        %2351 = vmatprep.subr.mxu0 %v1103
        %2352 = vmatpush1.msra.mxu0 %v1102
        %2353 = vmatprep.subr.mxu0 %v1095
        %2354 = vmatpush1.msra.mxu0 %v1094
        %2355 = vmatprep.subr.mxu0 %v1087
        %2356 = vmatpush1.msra.mxu0 %v1086
        %2357 = vmatprep.subr.mxu0 %v1079
        %2358 = vmatpush1.msra.mxu0 %v1078
        %2359 = vmatprep.subr.mxu0 %v1071
        %2360 = vmatpush1.msra.mxu0 %v1070
        %2361 = vmatprep.subr.mxu0 %v1063
        %2362 = vmatpush1.msra.mxu0 %v1062
        %2363 = vmatprep.subr.mxu0 %v1055
        %2364 = vmatpush1.msra.mxu0 %v1054
        %2365 = vmatprep.subr.mxu0 %v1047
        %2366 = vmatpush1.msra.mxu0 %v1046
        %2367 = vmatprep.subr.mxu0 %v1039
        %2368 = vmatpush1.msra.mxu0 %v1038
        %2369 = vmatprep.subr.mxu0 %v1031
        %2370 = vmatpush1.msra.mxu0 %v1030
        %2371 = vmatprep.subr.mxu0 %v1023
        %2372 = vmatpush1.msra.mxu0 %v1022
        %2373 = vmatprep.subr.mxu0 %v1015
        %2374 = vmatpush1.msra.mxu0 %v1014
        %2375 = vmatprep.subr.mxu0 %v1007
        %2376 = vmatpush1.msra.mxu0 %v1006
        %2377 = vmatprep.subr.mxu0 %v999
        %2378 = vmatpush1.msra.mxu0 %v998
        %2379 = vmatprep.subr.mxu0 %v991
        %2380 = vmatpush1.msra.mxu0 %v990
        %2381 = vmatprep.subr.mxu0 %v1239
        %2382 = vmatpush2.msra.mxu0 %v1238
        %2383 = vmatprep.subr.mxu0 %v1231
        %2384 = vmatpush2.msra.mxu0 %v1230
        %2385 = vmatprep.subr.mxu0 %v1223
        %2386 = vmatpush2.msra.mxu0 %v1222
        %2387 = vmatprep.subr.mxu0 %v1215
        %2388 = vmatpush2.msra.mxu0 %v1214
        %2389 = vmatprep.subr.mxu0 %v1207
        %2390 = vmatpush2.msra.mxu0 %v1206
        %2391 = vmatprep.subr.mxu0 %v1199
        %2392 = vmatpush2.msra.mxu0 %v1198
        %2393 = vmatprep.subr.mxu0 %v1191
        %2394 = vmatpush2.msra.mxu0 %v1190
        %2395 = vmatprep.subr.mxu0 %v1183
        %2396 = vmatpush2.msra.mxu0 %v1182
        %2397 = vmatprep.subr.mxu0 %v1175
        %2398 = vmatpush2.msra.mxu0 %v1174
        %2399 = vmatprep.subr.mxu0 %v1167
        %2400 = vmatpush2.msra.mxu0 %v1166
        %2401 = vmatprep.subr.mxu0 %v1159
        %2402 = vmatpush2.msra.mxu0 %v1158
        %2403 = vmatprep.subr.mxu0 %v1151
        %2404 = vmatpush2.msra.mxu0 %v1150
        %2405 = vmatprep.subr.mxu0 %v1143
        %2406 = vmatpush2.msra.mxu0 %v1142
        %2407 = vmatprep.subr.mxu0 %v1135
        %2408 = vmatpush2.msra.mxu0 %v1134
        %2409 = vmatprep.subr.mxu0 %v1127
        %2410 = vmatpush2.msra.mxu0 %v1126
        %2411 = vmatprep.subr.mxu0 %v1119
        %2412 = vmatpush2.msra.mxu0 %v1118
        %2413 = vmatprep.mubr.f32.mxu0 %v1275
        %2414 = vmatmul.mubr.f32.gmra.mxu0 %v1273
        %v2415 = vpop.f32.mrf.mxu0
        %v2416 = vadd.f32 %v2345, %v2415
        %v2417 = vpop.f32.mrf.mxu0
        %v2418 = vadd.f32 %v2347, %v2417
        %2419 = vdwg.mxu0
        %v2428 = vcombine.low %v1564, %v1566
        %v2429 = vcombine.low %v1848, %v1850
        %v2431 = vunpack.c.l.s4 1983009808
        %v2432 = vunpack.c.0.s8 %v2431
        %v2433 = vlaneseq
        %v2434 = vshrl.u32 %v2433, 7
        %v2435 = vsub.s32 %v2432, %v2434
        %v2436 = vrot.slane %v2428, %v2435
        %v2438 = vunpack.c.l.s4 1983009808
        %v2439 = vunpack.c.0.s8 %v2438
        %v2440 = vlaneseq
        %v2441 = vshrl.u32 %v2440, 7
        %v2442 = vsub.s32 %v2439, %v2441
        %v2443 = vrot.slane %v2429, %v2442
        %v2444 = vcombine.low %v2436, %v2443
        %v2445 = vcombine.low %v2132, %v2134
        %v2446 = vcombine.low %v2416, %v2418
        %v2448 = vunpack.c.l.s4 1983009808
        %v2449 = vunpack.c.0.s8 %v2448
        %v2450 = vlaneseq
        %v2451 = vshrl.u32 %v2450, 7
        %v2452 = vsub.s32 %v2449, %v2451
        %v2453 = vrot.slane %v2445, %v2452
        %v2455 = vunpack.c.l.s4 1983009808
        %v2456 = vunpack.c.0.s8 %v2455
        %v2457 = vlaneseq
        %v2458 = vshrl.u32 %v2457, 7
        %v2459 = vsub.s32 %v2456, %v2458
        %v2460 = vrot.slane %v2446, %v2459
        %v2461 = vcombine.low %v2453, %v2460
        %v2464 = vadd.f32 %v212, %v2444
        %v2465 = vadd.f32 %v213, %v2461
        %2466 = vst [vmem:[#allocation2] sm:$0xff] %v2464
        %2467 = vst [vmem:[#allocation2 + $0x8] sm:$0xff] %v2465
        %p2468 = scmp.eq.s32.totalorder %s21, 1
        // Predicated region
        $region37: #{vgg_forward.13} parent=27 // pred_check
          %p2469 = pneg %p2468
        $region38: #{vgg_forward.13} parent=27 // pred_check_branch
          %2471 = sbr.rel (%p2469) target = $region40
        $region39: #{vgg_forward.13} parent=27 // pred_region
          %v2472 = vld [vmem:[#allocation2] sm:$0xff]
          %v2473 = vld [vmem:[#allocation2 + $0x8] sm:$0xff]
          %v2474 = vmax.f32 %v2472, 0.0
          %v2475 = vmax.f32 %v2473, 0.0
          %2476 = vst [vmem:[%s204] sm:$0xff] %v2474
          %2477 = vst [vmem:[%s204 + $0x8] sm:$0xff] %v2475
        $region40: #{vgg_forward.13} parent=27 // pred_fallthru
          _
        %s2478 = smul.u32 8, %s20
        %p2479 = scmp.lt.s32.totalorder %s2478, 31
        %s2480 = scalar_select %p2479, %s2478, 31
        %s2481 = smul.addr %s2480, 2
        %s2482 = scalar_lea.vmem %s2, %s2481
        // Predicated region
        $region41: #{vgg_forward.13} parent=27 // pred_check
          %p2483 = pneg %p100
        $region42: #{vgg_forward.13} parent=27 // pred_check_branch
          %2485 = sbr.rel (%p2483) target = $region44
        $region43: #{vgg_forward.13} parent=27 // pred_region
          %s2486 = smul.u32 8, %s20
        $region44: #{vgg_forward.13} parent=27 // pred_fallthru
          _
      $region28: #{vgg_forward.13} parent=5 // pred_fallthru
        _
      %p2487 = scmp.le.s32.totalorder 2, %s11
      // Predicated region
      $region45: #{vgg_forward.13} parent=5 // pred_check
        %p2488 = pneg %p2487
      $region46: #{vgg_forward.13} parent=5 // pred_check_branch
        %2490 = sbr.rel (%p2488) target = $region48
      $region47: #{vgg_forward.13} parent=5 // pred_region
        %s2491 = ssub.s32 %s11, 2
        // Predicated region
        $region49: #{vgg_forward.13} parent=47 // pred_check
          %p2492 = pneg %p106
        $region50: #{vgg_forward.13} parent=47 // pred_check_branch
          %2494 = sbr.rel (%p2492) target = $region52
        $region51: #{vgg_forward.13} parent=47 // pred_region
          %s2495 = smul.u32 8, %s22
          %p2496 = scmp.lt.s32.totalorder %s2495, 31
          %s2497 = scalar_select %p2496, %s2495, 31
          %s2498 = smul.addr %s2497, 2
          %s2499 = scalar_lea.vmem %s2, %s2498
        $region52: #{vgg_forward.13} parent=47 // pred_fallthru
          _
      $region48: #{vgg_forward.13} parent=5 // pred_fallthru
        _
    $region6: #{vgg_forward.13} parent=1 // loop_footer
      %s15 = sadd.s32 1, %s11
    $region7: #{vgg_forward.13} parent=1 // loop_footer_branch
      %10 = sbr.rel target = $region3
    $region8: #{vgg_forward.13} parent=1 // loop_exit
      _
    %2500 = vsyncpa [#allocation4], 1
    %s2501 = scalar_lea.sflag [#allocation4], 1
    %2502 = vsyncpa %s2501, 1

// kernel: vgg_forward.14
$region0: #{vgg_forward.14}
  #allocation0 [shape = 'u32[]', space=smem, size = 0x4, offset = 0x4, fixed_abs, tag = 'smem constant byte address 0x4 - core index']
  #allocation1 [shape = 'u32[144,128]{1,0:T(1,128)}', space=vmem, size = 0x12000, scoped, tag = 'internal scratch']
  #allocation2 [shape = 'f32[2,1024]{1,0:T(2,128)}', space=vmem, size = 0x2000, scoped, tag = 'scratch operand']
  %s0 = inlined_call_operand.vmem [shape: f32[2,4096], index: 0, kind: input, shape index: {}]
  %s1 = inlined_call_operand.hbm [shape: f32[4096,4096], index: 1, kind: input, shape index: {}]
  %s2 = inlined_call_operand.vmem [shape: f32[2,4096], index: 2, kind: output, shape index: {}]
  %s3 = sld [smem:[#allocation0]]
  $region53: #{vgg_forward.14} parent=0
    _
  %s5 = ssub.s32 1, %s3
  %s6 = scalar_select 0, %s5, %s3
  $region1: #{vgg_forward.14} parent=0
    #allocation3 [shape = 'u8[8388608]{0}', space=vmem, size = 0x800000, scoped, tag = 'input window, operand 1']
    #allocation4 [shape = 's32[2]{0}', space=sflag, size = 0x8, scoped, tag = 'scoped memory for vgg_forward.14']
    %7 = vsyncpa [#allocation4], 0
    %s8 = scalar_lea.sflag [#allocation4], 1
    %9 = vsyncpa %s8, 0
    loop: start=0, step=1, limit=18
    $region2: #{vgg_forward.14} parent=1 // loop_pre_header
      _
    $region3: #{vgg_forward.14} parent=1 // loop_header
      %s11 = sphi 0, %s15
      %p12 = scmp.ge.s32.totalorder %s11, 18
      %s18 = sphi 0, %s30
      %s19 = sphi 0, %s26
      %s20 = sphi 0, %s18
      %s21 = sphi 0, %s19
      %s22 = sphi 0, %s20
      %s23 = sphi 0, %s21
      %s33 = sphi 0, %s35
      %s36 = sphi 0, %s33
      %s37 = sphi 0, %s36
      %s53 = sphi 0, %s37
      %s61 = sphi 0, %s63
      %s64 = sphi 0, %s61
      %s65 = sphi 0, %s64
      %s81 = sphi 0, %s65
      %s87 = sphi 0, %s89
      %s90 = sphi 0, %s87
      %s91 = sphi 0, %s90
      %s107 = sphi 0, %s91
    $region4: #{vgg_forward.14} parent=1 // loop_header_branch
      %14 = sbr.rel (%p12) target = $region8
    $region5: #{vgg_forward.14} parent=1 // loop_body
      %s16 = ssub.s32 %s11, 1
      %s17 = ssub.s32 %s11, 2
      %s24 = sadd.s32 1, %s19
      %p25 = scmp.ge.s32.totalorder %s24, 4
      %s26 = scalar_select %p25, 0, %s24
      %s27 = sadd.s32 1, %s18
      %s28 = scalar_select %p25, %s27, %s18
      %p29 = scmp.ge.s32.totalorder %s28, 4
      %s30 = scalar_select %p29, 0, %s28
      %s31 = ssub.s32 %s19, %s26
      %p32 = scmp.eq.s32.totalorder %s31, 0
      %s34 = sadd.s32 %s33, 1
      %s35 = scalar_select %p32, %s33, %s34
      %p38 = pneg %p32
      %p39 = scmp.eq.s32.totalorder %s11, 15
      %p40 = por %p38, %p39
      %p41 = scmp.ne.s32.totalorder %s33, %s36
      %p42 = scmp.eq.s32.totalorder %s11, 0
      %p43 = por %p41, %p42
      %p44 = scmp.ne.s32.totalorder %s33, %s36
      %p45 = scmp.eq.s32.totalorder %s16, 15
      %p46 = por %p44, %p45
      %p47 = scmp.ne.s32.totalorder %s36, %s37
      %p48 = scmp.eq.s32.totalorder %s16, 0
      %p49 = por %p47, %p48
      %p50 = scmp.ne.s32.totalorder %s36, %s37
      %p51 = scmp.eq.s32.totalorder %s17, 15
      %p52 = por %p50, %p51
      %p54 = scmp.ne.s32.totalorder %s37, %s53
      %p55 = scmp.eq.s32.totalorder %s17, 0
      %p56 = por %p54, %p55
      %s57 = ssub.s32 %s19, %s26
      %s58 = ssub.s32 %s18, %s30
      %s59 = sor.u32 %s57, %s58
      %p60 = scmp.eq.s32.totalorder %s59, 0
      %s62 = sadd.s32 %s61, 1
      %s63 = scalar_select %p60, %s61, %s62
      %p66 = pneg %p60
      %p67 = scmp.eq.s32.totalorder %s11, 15
      %p68 = por %p66, %p67
      %p69 = scmp.ne.s32.totalorder %s61, %s64
      %p70 = scmp.eq.s32.totalorder %s11, 0
      %p71 = por %p69, %p70
      %p72 = scmp.ne.s32.totalorder %s61, %s64
      %p73 = scmp.eq.s32.totalorder %s16, 15
      %p74 = por %p72, %p73
      %p75 = scmp.ne.s32.totalorder %s64, %s65
      %p76 = scmp.eq.s32.totalorder %s16, 0
      %p77 = por %p75, %p76
      %p78 = scmp.ne.s32.totalorder %s64, %s65
      %p79 = scmp.eq.s32.totalorder %s17, 15
      %p80 = por %p78, %p79
      %p82 = scmp.ne.s32.totalorder %s65, %s81
      %p83 = scmp.eq.s32.totalorder %s17, 0
      %p84 = por %p82, %p83
      %s85 = ssub.s32 %s18, %s30
      %p86 = scmp.eq.s32.totalorder %s85, 0
      %s88 = sadd.s32 %s87, 1
      %s89 = scalar_select %p86, %s87, %s88
      %p92 = pneg %p86
      %p93 = scmp.eq.s32.totalorder %s11, 15
      %p94 = por %p92, %p93
      %p95 = scmp.ne.s32.totalorder %s87, %s90
      %p96 = scmp.eq.s32.totalorder %s11, 0
      %p97 = por %p95, %p96
      %p98 = scmp.ne.s32.totalorder %s87, %s90
      %p99 = scmp.eq.s32.totalorder %s16, 15
      %p100 = por %p98, %p99
      %p101 = scmp.ne.s32.totalorder %s90, %s91
      %p102 = scmp.eq.s32.totalorder %s16, 0
      %p103 = por %p101, %p102
      %p104 = scmp.ne.s32.totalorder %s90, %s91
      %p105 = scmp.eq.s32.totalorder %s17, 15
      %p106 = por %p104, %p105
      %p108 = scmp.ne.s32.totalorder %s91, %s107
      %p109 = scmp.eq.s32.totalorder %s17, 0
      %p110 = por %p108, %p109
      %p111 = scmp.le.s32.totalorder 1, %s11
      %p112 = scmp.lt.s32.totalorder %s11, 17
      %p113 = pnand %p111, %p112
      %p114 = pneg %p113
      // Predicated region
      $region9: #{vgg_forward.14} parent=5 // pred_check
        _
      $region10: #{vgg_forward.14} parent=5 // pred_check_branch
        %116 = sbr.rel (%p113) target = $region12
      $region11: #{vgg_forward.14} parent=5 // pred_region
        %s117 = ssub.s32 %s11, 1
      $region12: #{vgg_forward.14} parent=5 // pred_fallthru
        _
      %p118 = scmp.lt.s32.totalorder %s11, 16
      // Predicated region
      $region13: #{vgg_forward.14} parent=5 // pred_check
        %p119 = pneg %p118
      $region14: #{vgg_forward.14} parent=5 // pred_check_branch
        %121 = sbr.rel (%p119) target = $region16
      $region15: #{vgg_forward.14} parent=5 // pred_region
        // Predicated region
        $region17: #{vgg_forward.14} parent=15 // pred_check
          %p122 = pneg %p43
        $region18: #{vgg_forward.14} parent=15 // pred_check_branch
          %124 = sbr.rel (%p122) target = $region20
        $region19: #{vgg_forward.14} parent=15 // pred_region
          %s125 = smul.u32 8, %s19
          %p126 = scmp.lt.s32.totalorder %s125, 31
          %s127 = scalar_select %p126, %s125, 31
          %s128 = smul.addr %s127, 2
          %s129 = scalar_lea.vmem %s0, %s128
          %s130 = smul.u32 8, %s19
        $region20: #{vgg_forward.14} parent=15 // pred_fallthru
          _
        // Predicated region
        $region21: #{vgg_forward.14} parent=15 // pred_check
          %p131 = pneg %p71
        $region22: #{vgg_forward.14} parent=15 // pred_check_branch
          %133 = sbr.rel (%p131) target = $region24
        $region23: #{vgg_forward.14} parent=15 // pred_region
          %s134 = sand.u32 %s61, 1
          %s135 = scalar_lea.sflag [#allocation4], %s134
          %s136 = sand.u32 %s61, 1
          %s137 = smul.addr %s136, 8192
          %s138 = scalar_lea.vmem [#allocation3], %s137
          %s139 = smul.u32 128, %s19
          %s140 = smul.u32 8, %s18
          %s142 = ssub.s32 131072, 131072
          %143 = vsyncadd %s135, %s142
          %s144 = smul.addr %s139, 32
          %s145 = sadd.s32 %s140, %s144
          %s146 = smul.addr %s145, 128
          %s147 = scalar_lea.hbm %s1, %s146
          %s148 = sshll.u32 %s138, 4
          %s149 = int_to_ptr.vmem [resolvable:$true] %s148
          %154 = dma.hbm_to_vmem [thread:$0]  %s147, 131072, %s149, %s135, 4096, 1024, 64
        $region24: #{vgg_forward.14} parent=15 // pred_fallthru
          _
      $region16: #{vgg_forward.14} parent=5 // pred_fallthru
        _
      %p155 = scmp.le.s32.totalorder 1, %s11
      %p156 = scmp.lt.s32.totalorder %s11, 17
      %p157 = pnand %p155, %p156
      %p158 = pneg %p157
      // Predicated region
      $region25: #{vgg_forward.14} parent=5 // pred_check
        _
      $region26: #{vgg_forward.14} parent=5 // pred_check_branch
        %160 = sbr.rel (%p157) target = $region28
      $region27: #{vgg_forward.14} parent=5 // pred_region
        %s161 = ssub.s32 %s11, 1
        %s162 = sand.u32 %s64, 1
        %s163 = scalar_lea.sflag [#allocation4], %s162
        %s164 = sand.u32 %s64, 1
        %s165 = smul.addr %s164, 8192
        %s166 = scalar_lea.vmem [#allocation3], %s165
        // Predicated region
        $region29: #{vgg_forward.14} parent=27 // pred_check
          %p167 = pneg %p77
        $region30: #{vgg_forward.14} parent=27 // pred_check_branch
          %169 = sbr.rel (%p167) target = $region32
        $region31: #{vgg_forward.14} parent=27 // pred_region
          %170 = dma.done %s163, 131072
        $region32: #{vgg_forward.14} parent=27 // pred_fallthru
          _
        %s171 = smul.u32 8, %s21
        %p172 = scmp.lt.s32.totalorder %s171, 31
        %s173 = scalar_select %p172, %s171, 31
        %s174 = smul.addr %s173, 2
        %s175 = scalar_lea.vmem %s0, %s174
        %p176 = pneg %p49
        %p177 = pneg %p46
        %s178 = sand.u32 %s64, 1
        %s179 = scalar_lea.sflag [#allocation4], %s178
        %s180 = sand.u32 %s64, 1
        %s181 = smul.addr %s180, 8192
        %s182 = scalar_lea.vmem [#allocation3], %s181
        %p183 = pneg %p77
        %p184 = pneg %p74
        %p185 = pneg %p103
        %p186 = pneg %p100
        %s187 = smul.u32 8, %s20
        %p188 = scmp.lt.s32.totalorder %s187, 31
        %s189 = scalar_select %p188, %s187, 31
        %s190 = smul.addr %s189, 2
        %s191 = scalar_lea.vmem %s2, %s190
        %s192 = smul.u32 8, %s21
        %p193 = scmp.lt.s32.totalorder %s192, 31
        %s194 = scalar_select %p193, %s192, 31
        %s195 = smul.addr %s194, 2
        %s196 = scalar_lea.vmem %s0, %s195
        %s197 = smul.u32 8, %s21
        %s198 = smul.u32 128, %s21
        %s199 = smul.u32 8, %s20
        %s200 = smul.u32 8, %s20
        %p201 = scmp.lt.s32.totalorder %s200, 31
        %s202 = scalar_select %p201, %s200, 31
        %s203 = smul.addr %s202, 2
        %s204 = scalar_lea.vmem %s2, %s203
        %s205 = smul.u32 8, %s20
        %p206 = scmp.eq.s32.totalorder %s21, 0
        // Predicated region
        $region33: #{vgg_forward.14} parent=27 // pred_check
          %p207 = pneg %p206
        $region34: #{vgg_forward.14} parent=27 // pred_check_branch
          %209 = sbr.rel (%p207) target = $region36
        $region35: #{vgg_forward.14} parent=27 // pred_region
          %210 = vst [vmem:[#allocation2] sm:$0xff] 0.0
          %211 = vst [vmem:[#allocation2 + $0x8] sm:$0xff] 0.0
        $region36: #{vgg_forward.14} parent=27 // pred_fallthru
          _
        %v212 = vld [vmem:[#allocation2] sm:$0xff]
        %v213 = vld [vmem:[#allocation2 + $0x8] sm:$0xff]
        %v214 = vld [vmem:[%s196] sm:$0xff]
        %v215 = vld [vmem:[%s196 + $0x8] sm:$0xff]
        %v216 = vld [vmem:[%s166] sm:$0xff]
        %v217 = vld [vmem:[%s166 + $0x8] sm:$0xff]
        %v218 = vld [vmem:[%s166 + $0x10] sm:$0xff]
        %v219 = vld [vmem:[%s166 + $0x18] sm:$0xff]
        %v220 = vld [vmem:[%s166 + $0x20] sm:$0xff]
        %v221 = vld [vmem:[%s166 + $0x28] sm:$0xff]
        %v222 = vld [vmem:[%s166 + $0x30] sm:$0xff]
        %v223 = vld [vmem:[%s166 + $0x38] sm:$0xff]
        %v224 = vld [vmem:[%s166 + $0x40] sm:$0xff]
        %v225 = vld [vmem:[%s166 + $0x48] sm:$0xff]
        %v226 = vld [vmem:[%s166 + $0x50] sm:$0xff]
        %v227 = vld [vmem:[%s166 + $0x58] sm:$0xff]
        %v228 = vld [vmem:[%s166 + $0x60] sm:$0xff]
        %v229 = vld [vmem:[%s166 + $0x68] sm:$0xff]
        %v230 = vld [vmem:[%s166 + $0x70] sm:$0xff]
        %v231 = vld [vmem:[%s166 + $0x78] sm:$0xff]
        %v232 = vld [vmem:[%s166 + $0x80] sm:$0xff]
        %v233 = vld [vmem:[%s166 + $0x88] sm:$0xff]
        %v234 = vld [vmem:[%s166 + $0x90] sm:$0xff]
        %v235 = vld [vmem:[%s166 + $0x98] sm:$0xff]
        %v236 = vld [vmem:[%s166 + $0xa0] sm:$0xff]
        %v237 = vld [vmem:[%s166 + $0xa8] sm:$0xff]
        %v238 = vld [vmem:[%s166 + $0xb0] sm:$0xff]
        %v239 = vld [vmem:[%s166 + $0xb8] sm:$0xff]
        %v240 = vld [vmem:[%s166 + $0xc0] sm:$0xff]
        %v241 = vld [vmem:[%s166 + $0xc8] sm:$0xff]
        %v242 = vld [vmem:[%s166 + $0xd0] sm:$0xff]
        %v243 = vld [vmem:[%s166 + $0xd8] sm:$0xff]
        %v244 = vld [vmem:[%s166 + $0xe0] sm:$0xff]
        %v245 = vld [vmem:[%s166 + $0xe8] sm:$0xff]
        %v246 = vld [vmem:[%s166 + $0xf0] sm:$0xff]
        %v247 = vld [vmem:[%s166 + $0xf8] sm:$0xff]
        %v248 = vld [vmem:[%s166 + $0x100] sm:$0xff]
        %v249 = vld [vmem:[%s166 + $0x108] sm:$0xff]
        %v250 = vld [vmem:[%s166 + $0x110] sm:$0xff]
        %v251 = vld [vmem:[%s166 + $0x118] sm:$0xff]
        %v252 = vld [vmem:[%s166 + $0x120] sm:$0xff]
        %v253 = vld [vmem:[%s166 + $0x128] sm:$0xff]
        %v254 = vld [vmem:[%s166 + $0x130] sm:$0xff]
        %v255 = vld [vmem:[%s166 + $0x138] sm:$0xff]
        %v256 = vld [vmem:[%s166 + $0x140] sm:$0xff]
        %v257 = vld [vmem:[%s166 + $0x148] sm:$0xff]
        %v258 = vld [vmem:[%s166 + $0x150] sm:$0xff]
        %v259 = vld [vmem:[%s166 + $0x158] sm:$0xff]
        %v260 = vld [vmem:[%s166 + $0x160] sm:$0xff]
        %v261 = vld [vmem:[%s166 + $0x168] sm:$0xff]
        %v262 = vld [vmem:[%s166 + $0x170] sm:$0xff]
        %v263 = vld [vmem:[%s166 + $0x178] sm:$0xff]
        %v264 = vld [vmem:[%s166 + $0x180] sm:$0xff]
        %v265 = vld [vmem:[%s166 + $0x188] sm:$0xff]
        %v266 = vld [vmem:[%s166 + $0x190] sm:$0xff]
        %v267 = vld [vmem:[%s166 + $0x198] sm:$0xff]
        %v268 = vld [vmem:[%s166 + $0x1a0] sm:$0xff]
        %v269 = vld [vmem:[%s166 + $0x1a8] sm:$0xff]
        %v270 = vld [vmem:[%s166 + $0x1b0] sm:$0xff]
        %v271 = vld [vmem:[%s166 + $0x1b8] sm:$0xff]
        %v272 = vld [vmem:[%s166 + $0x1c0] sm:$0xff]
        %v273 = vld [vmem:[%s166 + $0x1c8] sm:$0xff]
        %v274 = vld [vmem:[%s166 + $0x1d0] sm:$0xff]
        %v275 = vld [vmem:[%s166 + $0x1d8] sm:$0xff]
        %v276 = vld [vmem:[%s166 + $0x1e0] sm:$0xff]
        %v277 = vld [vmem:[%s166 + $0x1e8] sm:$0xff]
        %v278 = vld [vmem:[%s166 + $0x1f0] sm:$0xff]
        %v279 = vld [vmem:[%s166 + $0x1f8] sm:$0xff]
        %v280 = vld [vmem:[%s166 + $0x200] sm:$0xff]
        %v281 = vld [vmem:[%s166 + $0x208] sm:$0xff]
        %v282 = vld [vmem:[%s166 + $0x210] sm:$0xff]
        %v283 = vld [vmem:[%s166 + $0x218] sm:$0xff]
        %v284 = vld [vmem:[%s166 + $0x220] sm:$0xff]
        %v285 = vld [vmem:[%s166 + $0x228] sm:$0xff]
        %v286 = vld [vmem:[%s166 + $0x230] sm:$0xff]
        %v287 = vld [vmem:[%s166 + $0x238] sm:$0xff]
        %v288 = vld [vmem:[%s166 + $0x240] sm:$0xff]
        %v289 = vld [vmem:[%s166 + $0x248] sm:$0xff]
        %v290 = vld [vmem:[%s166 + $0x250] sm:$0xff]
        %v291 = vld [vmem:[%s166 + $0x258] sm:$0xff]
        %v292 = vld [vmem:[%s166 + $0x260] sm:$0xff]
        %v293 = vld [vmem:[%s166 + $0x268] sm:$0xff]
        %v294 = vld [vmem:[%s166 + $0x270] sm:$0xff]
        %v295 = vld [vmem:[%s166 + $0x278] sm:$0xff]
        %v296 = vld [vmem:[%s166 + $0x280] sm:$0xff]
        %v297 = vld [vmem:[%s166 + $0x288] sm:$0xff]
        %v298 = vld [vmem:[%s166 + $0x290] sm:$0xff]
        %v299 = vld [vmem:[%s166 + $0x298] sm:$0xff]
        %v300 = vld [vmem:[%s166 + $0x2a0] sm:$0xff]
        %v301 = vld [vmem:[%s166 + $0x2a8] sm:$0xff]
        %v302 = vld [vmem:[%s166 + $0x2b0] sm:$0xff]
        %v303 = vld [vmem:[%s166 + $0x2b8] sm:$0xff]
        %v304 = vld [vmem:[%s166 + $0x2c0] sm:$0xff]
        %v305 = vld [vmem:[%s166 + $0x2c8] sm:$0xff]
        %v306 = vld [vmem:[%s166 + $0x2d0] sm:$0xff]
        %v307 = vld [vmem:[%s166 + $0x2d8] sm:$0xff]
        %v308 = vld [vmem:[%s166 + $0x2e0] sm:$0xff]
        %v309 = vld [vmem:[%s166 + $0x2e8] sm:$0xff]
        %v310 = vld [vmem:[%s166 + $0x2f0] sm:$0xff]
        %v311 = vld [vmem:[%s166 + $0x2f8] sm:$0xff]
        %v312 = vld [vmem:[%s166 + $0x300] sm:$0xff]
        %v313 = vld [vmem:[%s166 + $0x308] sm:$0xff]
        %v314 = vld [vmem:[%s166 + $0x310] sm:$0xff]
        %v315 = vld [vmem:[%s166 + $0x318] sm:$0xff]
        %v316 = vld [vmem:[%s166 + $0x320] sm:$0xff]
        %v317 = vld [vmem:[%s166 + $0x328] sm:$0xff]
        %v318 = vld [vmem:[%s166 + $0x330] sm:$0xff]
        %v319 = vld [vmem:[%s166 + $0x338] sm:$0xff]
        %v320 = vld [vmem:[%s166 + $0x340] sm:$0xff]
        %v321 = vld [vmem:[%s166 + $0x348] sm:$0xff]
        %v322 = vld [vmem:[%s166 + $0x350] sm:$0xff]
        %v323 = vld [vmem:[%s166 + $0x358] sm:$0xff]
        %v324 = vld [vmem:[%s166 + $0x360] sm:$0xff]
        %v325 = vld [vmem:[%s166 + $0x368] sm:$0xff]
        %v326 = vld [vmem:[%s166 + $0x370] sm:$0xff]
        %v327 = vld [vmem:[%s166 + $0x378] sm:$0xff]
        %v328 = vld [vmem:[%s166 + $0x380] sm:$0xff]
        %v329 = vld [vmem:[%s166 + $0x388] sm:$0xff]
        %v330 = vld [vmem:[%s166 + $0x390] sm:$0xff]
        %v331 = vld [vmem:[%s166 + $0x398] sm:$0xff]
        %v332 = vld [vmem:[%s166 + $0x3a0] sm:$0xff]
        %v333 = vld [vmem:[%s166 + $0x3a8] sm:$0xff]
        %v334 = vld [vmem:[%s166 + $0x3b0] sm:$0xff]
        %v335 = vld [vmem:[%s166 + $0x3b8] sm:$0xff]
        %v336 = vld [vmem:[%s166 + $0x3c0] sm:$0xff]
        %v337 = vld [vmem:[%s166 + $0x3c8] sm:$0xff]
        %v338 = vld [vmem:[%s166 + $0x3d0] sm:$0xff]
        %v339 = vld [vmem:[%s166 + $0x3d8] sm:$0xff]
        %v340 = vld [vmem:[%s166 + $0x3e0] sm:$0xff]
        %v341 = vld [vmem:[%s166 + $0x3e8] sm:$0xff]
        %v342 = vld [vmem:[%s166 + $0x3f0] sm:$0xff]
        %v343 = vld [vmem:[%s166 + $0x3f8] sm:$0xff]
        %v344 = vld [vmem:[%s166 + $0x400] sm:$0xff]
        %v345 = vld [vmem:[%s166 + $0x408] sm:$0xff]
        %v346 = vld [vmem:[%s166 + $0x410] sm:$0xff]
        %v347 = vld [vmem:[%s166 + $0x418] sm:$0xff]
        %v348 = vld [vmem:[%s166 + $0x420] sm:$0xff]
        %v349 = vld [vmem:[%s166 + $0x428] sm:$0xff]
        %v350 = vld [vmem:[%s166 + $0x430] sm:$0xff]
        %v351 = vld [vmem:[%s166 + $0x438] sm:$0xff]
        %v352 = vld [vmem:[%s166 + $0x440] sm:$0xff]
        %v353 = vld [vmem:[%s166 + $0x448] sm:$0xff]
        %v354 = vld [vmem:[%s166 + $0x450] sm:$0xff]
        %v355 = vld [vmem:[%s166 + $0x458] sm:$0xff]
        %v356 = vld [vmem:[%s166 + $0x460] sm:$0xff]
        %v357 = vld [vmem:[%s166 + $0x468] sm:$0xff]
        %v358 = vld [vmem:[%s166 + $0x470] sm:$0xff]
        %v359 = vld [vmem:[%s166 + $0x478] sm:$0xff]
        %v360 = vld [vmem:[%s166 + $0x480] sm:$0xff]
        %v361 = vld [vmem:[%s166 + $0x488] sm:$0xff]
        %v362 = vld [vmem:[%s166 + $0x490] sm:$0xff]
        %v363 = vld [vmem:[%s166 + $0x498] sm:$0xff]
        %v364 = vld [vmem:[%s166 + $0x4a0] sm:$0xff]
        %v365 = vld [vmem:[%s166 + $0x4a8] sm:$0xff]
        %v366 = vld [vmem:[%s166 + $0x4b0] sm:$0xff]
        %v367 = vld [vmem:[%s166 + $0x4b8] sm:$0xff]
        %v368 = vld [vmem:[%s166 + $0x4c0] sm:$0xff]
        %v369 = vld [vmem:[%s166 + $0x4c8] sm:$0xff]
        %v370 = vld [vmem:[%s166 + $0x4d0] sm:$0xff]
        %v371 = vld [vmem:[%s166 + $0x4d8] sm:$0xff]
        %v372 = vld [vmem:[%s166 + $0x4e0] sm:$0xff]
        %v373 = vld [vmem:[%s166 + $0x4e8] sm:$0xff]
        %v374 = vld [vmem:[%s166 + $0x4f0] sm:$0xff]
        %v375 = vld [vmem:[%s166 + $0x4f8] sm:$0xff]
        %v376 = vld [vmem:[%s166 + $0x500] sm:$0xff]
        %v377 = vld [vmem:[%s166 + $0x508] sm:$0xff]
        %v378 = vld [vmem:[%s166 + $0x510] sm:$0xff]
        %v379 = vld [vmem:[%s166 + $0x518] sm:$0xff]
        %v380 = vld [vmem:[%s166 + $0x520] sm:$0xff]
        %v381 = vld [vmem:[%s166 + $0x528] sm:$0xff]
        %v382 = vld [vmem:[%s166 + $0x530] sm:$0xff]
        %v383 = vld [vmem:[%s166 + $0x538] sm:$0xff]
        %v384 = vld [vmem:[%s166 + $0x540] sm:$0xff]
        %v385 = vld [vmem:[%s166 + $0x548] sm:$0xff]
        %v386 = vld [vmem:[%s166 + $0x550] sm:$0xff]
        %v387 = vld [vmem:[%s166 + $0x558] sm:$0xff]
        %v388 = vld [vmem:[%s166 + $0x560] sm:$0xff]
        %v389 = vld [vmem:[%s166 + $0x568] sm:$0xff]
        %v390 = vld [vmem:[%s166 + $0x570] sm:$0xff]
        %v391 = vld [vmem:[%s166 + $0x578] sm:$0xff]
        %v392 = vld [vmem:[%s166 + $0x580] sm:$0xff]
        %v393 = vld [vmem:[%s166 + $0x588] sm:$0xff]
        %v394 = vld [vmem:[%s166 + $0x590] sm:$0xff]
        %v395 = vld [vmem:[%s166 + $0x598] sm:$0xff]
        %v396 = vld [vmem:[%s166 + $0x5a0] sm:$0xff]
        %v397 = vld [vmem:[%s166 + $0x5a8] sm:$0xff]
        %v398 = vld [vmem:[%s166 + $0x5b0] sm:$0xff]
        %v399 = vld [vmem:[%s166 + $0x5b8] sm:$0xff]
        %v400 = vld [vmem:[%s166 + $0x5c0] sm:$0xff]
        %v401 = vld [vmem:[%s166 + $0x5c8] sm:$0xff]
        %v402 = vld [vmem:[%s166 + $0x5d0] sm:$0xff]
        %v403 = vld [vmem:[%s166 + $0x5d8] sm:$0xff]
        %v404 = vld [vmem:[%s166 + $0x5e0] sm:$0xff]
        %v405 = vld [vmem:[%s166 + $0x5e8] sm:$0xff]
        %v406 = vld [vmem:[%s166 + $0x5f0] sm:$0xff]
        %v407 = vld [vmem:[%s166 + $0x5f8] sm:$0xff]
        %v408 = vld [vmem:[%s166 + $0x600] sm:$0xff]
        %v409 = vld [vmem:[%s166 + $0x608] sm:$0xff]
        %v410 = vld [vmem:[%s166 + $0x610] sm:$0xff]
        %v411 = vld [vmem:[%s166 + $0x618] sm:$0xff]
        %v412 = vld [vmem:[%s166 + $0x620] sm:$0xff]
        %v413 = vld [vmem:[%s166 + $0x628] sm:$0xff]
        %v414 = vld [vmem:[%s166 + $0x630] sm:$0xff]
        %v415 = vld [vmem:[%s166 + $0x638] sm:$0xff]
        %v416 = vld [vmem:[%s166 + $0x640] sm:$0xff]
        %v417 = vld [vmem:[%s166 + $0x648] sm:$0xff]
        %v418 = vld [vmem:[%s166 + $0x650] sm:$0xff]
        %v419 = vld [vmem:[%s166 + $0x658] sm:$0xff]
        %v420 = vld [vmem:[%s166 + $0x660] sm:$0xff]
        %v421 = vld [vmem:[%s166 + $0x668] sm:$0xff]
        %v422 = vld [vmem:[%s166 + $0x670] sm:$0xff]
        %v423 = vld [vmem:[%s166 + $0x678] sm:$0xff]
        %v424 = vld [vmem:[%s166 + $0x680] sm:$0xff]
        %v425 = vld [vmem:[%s166 + $0x688] sm:$0xff]
        %v426 = vld [vmem:[%s166 + $0x690] sm:$0xff]
        %v427 = vld [vmem:[%s166 + $0x698] sm:$0xff]
        %v428 = vld [vmem:[%s166 + $0x6a0] sm:$0xff]
        %v429 = vld [vmem:[%s166 + $0x6a8] sm:$0xff]
        %v430 = vld [vmem:[%s166 + $0x6b0] sm:$0xff]
        %v431 = vld [vmem:[%s166 + $0x6b8] sm:$0xff]
        %v432 = vld [vmem:[%s166 + $0x6c0] sm:$0xff]
        %v433 = vld [vmem:[%s166 + $0x6c8] sm:$0xff]
        %v434 = vld [vmem:[%s166 + $0x6d0] sm:$0xff]
        %v435 = vld [vmem:[%s166 + $0x6d8] sm:$0xff]
        %v436 = vld [vmem:[%s166 + $0x6e0] sm:$0xff]
        %v437 = vld [vmem:[%s166 + $0x6e8] sm:$0xff]
        %v438 = vld [vmem:[%s166 + $0x6f0] sm:$0xff]
        %v439 = vld [vmem:[%s166 + $0x6f8] sm:$0xff]
        %v440 = vld [vmem:[%s166 + $0x700] sm:$0xff]
        %v441 = vld [vmem:[%s166 + $0x708] sm:$0xff]
        %v442 = vld [vmem:[%s166 + $0x710] sm:$0xff]
        %v443 = vld [vmem:[%s166 + $0x718] sm:$0xff]
        %v444 = vld [vmem:[%s166 + $0x720] sm:$0xff]
        %v445 = vld [vmem:[%s166 + $0x728] sm:$0xff]
        %v446 = vld [vmem:[%s166 + $0x730] sm:$0xff]
        %v447 = vld [vmem:[%s166 + $0x738] sm:$0xff]
        %v448 = vld [vmem:[%s166 + $0x740] sm:$0xff]
        %v449 = vld [vmem:[%s166 + $0x748] sm:$0xff]
        %v450 = vld [vmem:[%s166 + $0x750] sm:$0xff]
        %v451 = vld [vmem:[%s166 + $0x758] sm:$0xff]
        %v452 = vld [vmem:[%s166 + $0x760] sm:$0xff]
        %v453 = vld [vmem:[%s166 + $0x768] sm:$0xff]
        %v454 = vld [vmem:[%s166 + $0x770] sm:$0xff]
        %v455 = vld [vmem:[%s166 + $0x778] sm:$0xff]
        %v456 = vld [vmem:[%s166 + $0x780] sm:$0xff]
        %v457 = vld [vmem:[%s166 + $0x788] sm:$0xff]
        %v458 = vld [vmem:[%s166 + $0x790] sm:$0xff]
        %v459 = vld [vmem:[%s166 + $0x798] sm:$0xff]
        %v460 = vld [vmem:[%s166 + $0x7a0] sm:$0xff]
        %v461 = vld [vmem:[%s166 + $0x7a8] sm:$0xff]
        %v462 = vld [vmem:[%s166 + $0x7b0] sm:$0xff]
        %v463 = vld [vmem:[%s166 + $0x7b8] sm:$0xff]
        %v464 = vld [vmem:[%s166 + $0x7c0] sm:$0xff]
        %v465 = vld [vmem:[%s166 + $0x7c8] sm:$0xff]
        %v466 = vld [vmem:[%s166 + $0x7d0] sm:$0xff]
        %v467 = vld [vmem:[%s166 + $0x7d8] sm:$0xff]
        %v468 = vld [vmem:[%s166 + $0x7e0] sm:$0xff]
        %v469 = vld [vmem:[%s166 + $0x7e8] sm:$0xff]
        %v470 = vld [vmem:[%s166 + $0x7f0] sm:$0xff]
        %v471 = vld [vmem:[%s166 + $0x7f8] sm:$0xff]
        %v472 = vld [vmem:[%s166 + $0x800] sm:$0xff]
        %v473 = vld [vmem:[%s166 + $0x808] sm:$0xff]
        %v474 = vld [vmem:[%s166 + $0x810] sm:$0xff]
        %v475 = vld [vmem:[%s166 + $0x818] sm:$0xff]
        %v476 = vld [vmem:[%s166 + $0x820] sm:$0xff]
        %v477 = vld [vmem:[%s166 + $0x828] sm:$0xff]
        %v478 = vld [vmem:[%s166 + $0x830] sm:$0xff]
        %v479 = vld [vmem:[%s166 + $0x838] sm:$0xff]
        %v480 = vld [vmem:[%s166 + $0x840] sm:$0xff]
        %v481 = vld [vmem:[%s166 + $0x848] sm:$0xff]
        %v482 = vld [vmem:[%s166 + $0x850] sm:$0xff]
        %v483 = vld [vmem:[%s166 + $0x858] sm:$0xff]
        %v484 = vld [vmem:[%s166 + $0x860] sm:$0xff]
        %v485 = vld [vmem:[%s166 + $0x868] sm:$0xff]
        %v486 = vld [vmem:[%s166 + $0x870] sm:$0xff]
        %v487 = vld [vmem:[%s166 + $0x878] sm:$0xff]
        %v488 = vld [vmem:[%s166 + $0x880] sm:$0xff]
        %v489 = vld [vmem:[%s166 + $0x888] sm:$0xff]
        %v490 = vld [vmem:[%s166 + $0x890] sm:$0xff]
        %v491 = vld [vmem:[%s166 + $0x898] sm:$0xff]
        %v492 = vld [vmem:[%s166 + $0x8a0] sm:$0xff]
        %v493 = vld [vmem:[%s166 + $0x8a8] sm:$0xff]
        %v494 = vld [vmem:[%s166 + $0x8b0] sm:$0xff]
        %v495 = vld [vmem:[%s166 + $0x8b8] sm:$0xff]
        %v496 = vld [vmem:[%s166 + $0x8c0] sm:$0xff]
        %v497 = vld [vmem:[%s166 + $0x8c8] sm:$0xff]
        %v498 = vld [vmem:[%s166 + $0x8d0] sm:$0xff]
        %v499 = vld [vmem:[%s166 + $0x8d8] sm:$0xff]
        %v500 = vld [vmem:[%s166 + $0x8e0] sm:$0xff]
        %v501 = vld [vmem:[%s166 + $0x8e8] sm:$0xff]
        %v502 = vld [vmem:[%s166 + $0x8f0] sm:$0xff]
        %v503 = vld [vmem:[%s166 + $0x8f8] sm:$0xff]
        %v504 = vld [vmem:[%s166 + $0x900] sm:$0xff]
        %v505 = vld [vmem:[%s166 + $0x908] sm:$0xff]
        %v506 = vld [vmem:[%s166 + $0x910] sm:$0xff]
        %v507 = vld [vmem:[%s166 + $0x918] sm:$0xff]
        %v508 = vld [vmem:[%s166 + $0x920] sm:$0xff]
        %v509 = vld [vmem:[%s166 + $0x928] sm:$0xff]
        %v510 = vld [vmem:[%s166 + $0x930] sm:$0xff]
        %v511 = vld [vmem:[%s166 + $0x938] sm:$0xff]
        %v512 = vld [vmem:[%s166 + $0x940] sm:$0xff]
        %v513 = vld [vmem:[%s166 + $0x948] sm:$0xff]
        %v514 = vld [vmem:[%s166 + $0x950] sm:$0xff]
        %v515 = vld [vmem:[%s166 + $0x958] sm:$0xff]
        %v516 = vld [vmem:[%s166 + $0x960] sm:$0xff]
        %v517 = vld [vmem:[%s166 + $0x968] sm:$0xff]
        %v518 = vld [vmem:[%s166 + $0x970] sm:$0xff]
        %v519 = vld [vmem:[%s166 + $0x978] sm:$0xff]
        %v520 = vld [vmem:[%s166 + $0x980] sm:$0xff]
        %v521 = vld [vmem:[%s166 + $0x988] sm:$0xff]
        %v522 = vld [vmem:[%s166 + $0x990] sm:$0xff]
        %v523 = vld [vmem:[%s166 + $0x998] sm:$0xff]
        %v524 = vld [vmem:[%s166 + $0x9a0] sm:$0xff]
        %v525 = vld [vmem:[%s166 + $0x9a8] sm:$0xff]
        %v526 = vld [vmem:[%s166 + $0x9b0] sm:$0xff]
        %v527 = vld [vmem:[%s166 + $0x9b8] sm:$0xff]
        %v528 = vld [vmem:[%s166 + $0x9c0] sm:$0xff]
        %v529 = vld [vmem:[%s166 + $0x9c8] sm:$0xff]
        %v530 = vld [vmem:[%s166 + $0x9d0] sm:$0xff]
        %v531 = vld [vmem:[%s166 + $0x9d8] sm:$0xff]
        %v532 = vld [vmem:[%s166 + $0x9e0] sm:$0xff]
        %v533 = vld [vmem:[%s166 + $0x9e8] sm:$0xff]
        %v534 = vld [vmem:[%s166 + $0x9f0] sm:$0xff]
        %v535 = vld [vmem:[%s166 + $0x9f8] sm:$0xff]
        %v536 = vld [vmem:[%s166 + $0xa00] sm:$0xff]
        %v537 = vld [vmem:[%s166 + $0xa08] sm:$0xff]
        %v538 = vld [vmem:[%s166 + $0xa10] sm:$0xff]
        %v539 = vld [vmem:[%s166 + $0xa18] sm:$0xff]
        %v540 = vld [vmem:[%s166 + $0xa20] sm:$0xff]
        %v541 = vld [vmem:[%s166 + $0xa28] sm:$0xff]
        %v542 = vld [vmem:[%s166 + $0xa30] sm:$0xff]
        %v543 = vld [vmem:[%s166 + $0xa38] sm:$0xff]
        %v544 = vld [vmem:[%s166 + $0xa40] sm:$0xff]
        %v545 = vld [vmem:[%s166 + $0xa48] sm:$0xff]
        %v546 = vld [vmem:[%s166 + $0xa50] sm:$0xff]
        %v547 = vld [vmem:[%s166 + $0xa58] sm:$0xff]
        %v548 = vld [vmem:[%s166 + $0xa60] sm:$0xff]
        %v549 = vld [vmem:[%s166 + $0xa68] sm:$0xff]
        %v550 = vld [vmem:[%s166 + $0xa70] sm:$0xff]
        %v551 = vld [vmem:[%s166 + $0xa78] sm:$0xff]
        %v552 = vld [vmem:[%s166 + $0xa80] sm:$0xff]
        %v553 = vld [vmem:[%s166 + $0xa88] sm:$0xff]
        %v554 = vld [vmem:[%s166 + $0xa90] sm:$0xff]
        %v555 = vld [vmem:[%s166 + $0xa98] sm:$0xff]
        %v556 = vld [vmem:[%s166 + $0xaa0] sm:$0xff]
        %v557 = vld [vmem:[%s166 + $0xaa8] sm:$0xff]
        %v558 = vld [vmem:[%s166 + $0xab0] sm:$0xff]
        %v559 = vld [vmem:[%s166 + $0xab8] sm:$0xff]
        %v560 = vld [vmem:[%s166 + $0xac0] sm:$0xff]
        %v561 = vld [vmem:[%s166 + $0xac8] sm:$0xff]
        %v562 = vld [vmem:[%s166 + $0xad0] sm:$0xff]
        %v563 = vld [vmem:[%s166 + $0xad8] sm:$0xff]
        %v564 = vld [vmem:[%s166 + $0xae0] sm:$0xff]
        %v565 = vld [vmem:[%s166 + $0xae8] sm:$0xff]
        %v566 = vld [vmem:[%s166 + $0xaf0] sm:$0xff]
        %v567 = vld [vmem:[%s166 + $0xaf8] sm:$0xff]
        %v568 = vld [vmem:[%s166 + $0xb00] sm:$0xff]
        %v569 = vld [vmem:[%s166 + $0xb08] sm:$0xff]
        %v570 = vld [vmem:[%s166 + $0xb10] sm:$0xff]
        %v571 = vld [vmem:[%s166 + $0xb18] sm:$0xff]
        %v572 = vld [vmem:[%s166 + $0xb20] sm:$0xff]
        %v573 = vld [vmem:[%s166 + $0xb28] sm:$0xff]
        %v574 = vld [vmem:[%s166 + $0xb30] sm:$0xff]
        %v575 = vld [vmem:[%s166 + $0xb38] sm:$0xff]
        %v576 = vld [vmem:[%s166 + $0xb40] sm:$0xff]
        %v577 = vld [vmem:[%s166 + $0xb48] sm:$0xff]
        %v578 = vld [vmem:[%s166 + $0xb50] sm:$0xff]
        %v579 = vld [vmem:[%s166 + $0xb58] sm:$0xff]
        %v580 = vld [vmem:[%s166 + $0xb60] sm:$0xff]
        %v581 = vld [vmem:[%s166 + $0xb68] sm:$0xff]
        %v582 = vld [vmem:[%s166 + $0xb70] sm:$0xff]
        %v583 = vld [vmem:[%s166 + $0xb78] sm:$0xff]
        %v584 = vld [vmem:[%s166 + $0xb80] sm:$0xff]
        %v585 = vld [vmem:[%s166 + $0xb88] sm:$0xff]
        %v586 = vld [vmem:[%s166 + $0xb90] sm:$0xff]
        %v587 = vld [vmem:[%s166 + $0xb98] sm:$0xff]
        %v588 = vld [vmem:[%s166 + $0xba0] sm:$0xff]
        %v589 = vld [vmem:[%s166 + $0xba8] sm:$0xff]
        %v590 = vld [vmem:[%s166 + $0xbb0] sm:$0xff]
        %v591 = vld [vmem:[%s166 + $0xbb8] sm:$0xff]
        %v592 = vld [vmem:[%s166 + $0xbc0] sm:$0xff]
        %v593 = vld [vmem:[%s166 + $0xbc8] sm:$0xff]
        %v594 = vld [vmem:[%s166 + $0xbd0] sm:$0xff]
        %v595 = vld [vmem:[%s166 + $0xbd8] sm:$0xff]
        %v596 = vld [vmem:[%s166 + $0xbe0] sm:$0xff]
        %v597 = vld [vmem:[%s166 + $0xbe8] sm:$0xff]
        %v598 = vld [vmem:[%s166 + $0xbf0] sm:$0xff]
        %v599 = vld [vmem:[%s166 + $0xbf8] sm:$0xff]
        %v600 = vld [vmem:[%s166 + $0xc00] sm:$0xff]
        %v601 = vld [vmem:[%s166 + $0xc08] sm:$0xff]
        %v602 = vld [vmem:[%s166 + $0xc10] sm:$0xff]
        %v603 = vld [vmem:[%s166 + $0xc18] sm:$0xff]
        %v604 = vld [vmem:[%s166 + $0xc20] sm:$0xff]
        %v605 = vld [vmem:[%s166 + $0xc28] sm:$0xff]
        %v606 = vld [vmem:[%s166 + $0xc30] sm:$0xff]
        %v607 = vld [vmem:[%s166 + $0xc38] sm:$0xff]
        %v608 = vld [vmem:[%s166 + $0xc40] sm:$0xff]
        %v609 = vld [vmem:[%s166 + $0xc48] sm:$0xff]
        %v610 = vld [vmem:[%s166 + $0xc50] sm:$0xff]
        %v611 = vld [vmem:[%s166 + $0xc58] sm:$0xff]
        %v612 = vld [vmem:[%s166 + $0xc60] sm:$0xff]
        %v613 = vld [vmem:[%s166 + $0xc68] sm:$0xff]
        %v614 = vld [vmem:[%s166 + $0xc70] sm:$0xff]
        %v615 = vld [vmem:[%s166 + $0xc78] sm:$0xff]
        %v616 = vld [vmem:[%s166 + $0xc80] sm:$0xff]
        %v617 = vld [vmem:[%s166 + $0xc88] sm:$0xff]
        %v618 = vld [vmem:[%s166 + $0xc90] sm:$0xff]
        %v619 = vld [vmem:[%s166 + $0xc98] sm:$0xff]
        %v620 = vld [vmem:[%s166 + $0xca0] sm:$0xff]
        %v621 = vld [vmem:[%s166 + $0xca8] sm:$0xff]
        %v622 = vld [vmem:[%s166 + $0xcb0] sm:$0xff]
        %v623 = vld [vmem:[%s166 + $0xcb8] sm:$0xff]
        %v624 = vld [vmem:[%s166 + $0xcc0] sm:$0xff]
        %v625 = vld [vmem:[%s166 + $0xcc8] sm:$0xff]
        %v626 = vld [vmem:[%s166 + $0xcd0] sm:$0xff]
        %v627 = vld [vmem:[%s166 + $0xcd8] sm:$0xff]
        %v628 = vld [vmem:[%s166 + $0xce0] sm:$0xff]
        %v629 = vld [vmem:[%s166 + $0xce8] sm:$0xff]
        %v630 = vld [vmem:[%s166 + $0xcf0] sm:$0xff]
        %v631 = vld [vmem:[%s166 + $0xcf8] sm:$0xff]
        %v632 = vld [vmem:[%s166 + $0xd00] sm:$0xff]
        %v633 = vld [vmem:[%s166 + $0xd08] sm:$0xff]
        %v634 = vld [vmem:[%s166 + $0xd10] sm:$0xff]
        %v635 = vld [vmem:[%s166 + $0xd18] sm:$0xff]
        %v636 = vld [vmem:[%s166 + $0xd20] sm:$0xff]
        %v637 = vld [vmem:[%s166 + $0xd28] sm:$0xff]
        %v638 = vld [vmem:[%s166 + $0xd30] sm:$0xff]
        %v639 = vld [vmem:[%s166 + $0xd38] sm:$0xff]
        %v640 = vld [vmem:[%s166 + $0xd40] sm:$0xff]
        %v641 = vld [vmem:[%s166 + $0xd48] sm:$0xff]
        %v642 = vld [vmem:[%s166 + $0xd50] sm:$0xff]
        %v643 = vld [vmem:[%s166 + $0xd58] sm:$0xff]
        %v644 = vld [vmem:[%s166 + $0xd60] sm:$0xff]
        %v645 = vld [vmem:[%s166 + $0xd68] sm:$0xff]
        %v646 = vld [vmem:[%s166 + $0xd70] sm:$0xff]
        %v647 = vld [vmem:[%s166 + $0xd78] sm:$0xff]
        %v648 = vld [vmem:[%s166 + $0xd80] sm:$0xff]
        %v649 = vld [vmem:[%s166 + $0xd88] sm:$0xff]
        %v650 = vld [vmem:[%s166 + $0xd90] sm:$0xff]
        %v651 = vld [vmem:[%s166 + $0xd98] sm:$0xff]
        %v652 = vld [vmem:[%s166 + $0xda0] sm:$0xff]
        %v653 = vld [vmem:[%s166 + $0xda8] sm:$0xff]
        %v654 = vld [vmem:[%s166 + $0xdb0] sm:$0xff]
        %v655 = vld [vmem:[%s166 + $0xdb8] sm:$0xff]
        %v656 = vld [vmem:[%s166 + $0xdc0] sm:$0xff]
        %v657 = vld [vmem:[%s166 + $0xdc8] sm:$0xff]
        %v658 = vld [vmem:[%s166 + $0xdd0] sm:$0xff]
        %v659 = vld [vmem:[%s166 + $0xdd8] sm:$0xff]
        %v660 = vld [vmem:[%s166 + $0xde0] sm:$0xff]
        %v661 = vld [vmem:[%s166 + $0xde8] sm:$0xff]
        %v662 = vld [vmem:[%s166 + $0xdf0] sm:$0xff]
        %v663 = vld [vmem:[%s166 + $0xdf8] sm:$0xff]
        %v664 = vld [vmem:[%s166 + $0xe00] sm:$0xff]
        %v665 = vld [vmem:[%s166 + $0xe08] sm:$0xff]
        %v666 = vld [vmem:[%s166 + $0xe10] sm:$0xff]
        %v667 = vld [vmem:[%s166 + $0xe18] sm:$0xff]
        %v668 = vld [vmem:[%s166 + $0xe20] sm:$0xff]
        %v669 = vld [vmem:[%s166 + $0xe28] sm:$0xff]
        %v670 = vld [vmem:[%s166 + $0xe30] sm:$0xff]
        %v671 = vld [vmem:[%s166 + $0xe38] sm:$0xff]
        %v672 = vld [vmem:[%s166 + $0xe40] sm:$0xff]
        %v673 = vld [vmem:[%s166 + $0xe48] sm:$0xff]
        %v674 = vld [vmem:[%s166 + $0xe50] sm:$0xff]
        %v675 = vld [vmem:[%s166 + $0xe58] sm:$0xff]
        %v676 = vld [vmem:[%s166 + $0xe60] sm:$0xff]
        %v677 = vld [vmem:[%s166 + $0xe68] sm:$0xff]
        %v678 = vld [vmem:[%s166 + $0xe70] sm:$0xff]
        %v679 = vld [vmem:[%s166 + $0xe78] sm:$0xff]
        %v680 = vld [vmem:[%s166 + $0xe80] sm:$0xff]
        %v681 = vld [vmem:[%s166 + $0xe88] sm:$0xff]
        %v682 = vld [vmem:[%s166 + $0xe90] sm:$0xff]
        %v683 = vld [vmem:[%s166 + $0xe98] sm:$0xff]
        %v684 = vld [vmem:[%s166 + $0xea0] sm:$0xff]
        %v685 = vld [vmem:[%s166 + $0xea8] sm:$0xff]
        %v686 = vld [vmem:[%s166 + $0xeb0] sm:$0xff]
        %v687 = vld [vmem:[%s166 + $0xeb8] sm:$0xff]
        %v688 = vld [vmem:[%s166 + $0xec0] sm:$0xff]
        %v689 = vld [vmem:[%s166 + $0xec8] sm:$0xff]
        %v690 = vld [vmem:[%s166 + $0xed0] sm:$0xff]
        %v691 = vld [vmem:[%s166 + $0xed8] sm:$0xff]
        %v692 = vld [vmem:[%s166 + $0xee0] sm:$0xff]
        %v693 = vld [vmem:[%s166 + $0xee8] sm:$0xff]
        %v694 = vld [vmem:[%s166 + $0xef0] sm:$0xff]
        %v695 = vld [vmem:[%s166 + $0xef8] sm:$0xff]
        %v696 = vld [vmem:[%s166 + $0xf00] sm:$0xff]
        %v697 = vld [vmem:[%s166 + $0xf08] sm:$0xff]
        %v698 = vld [vmem:[%s166 + $0xf10] sm:$0xff]
        %v699 = vld [vmem:[%s166 + $0xf18] sm:$0xff]
        %v700 = vld [vmem:[%s166 + $0xf20] sm:$0xff]
        %v701 = vld [vmem:[%s166 + $0xf28] sm:$0xff]
        %v702 = vld [vmem:[%s166 + $0xf30] sm:$0xff]
        %v703 = vld [vmem:[%s166 + $0xf38] sm:$0xff]
        %v704 = vld [vmem:[%s166 + $0xf40] sm:$0xff]
        %v705 = vld [vmem:[%s166 + $0xf48] sm:$0xff]
        %v706 = vld [vmem:[%s166 + $0xf50] sm:$0xff]
        %v707 = vld [vmem:[%s166 + $0xf58] sm:$0xff]
        %v708 = vld [vmem:[%s166 + $0xf60] sm:$0xff]
        %v709 = vld [vmem:[%s166 + $0xf68] sm:$0xff]
        %v710 = vld [vmem:[%s166 + $0xf70] sm:$0xff]
        %v711 = vld [vmem:[%s166 + $0xf78] sm:$0xff]
        %v712 = vld [vmem:[%s166 + $0xf80] sm:$0xff]
        %v713 = vld [vmem:[%s166 + $0xf88] sm:$0xff]
        %v714 = vld [vmem:[%s166 + $0xf90] sm:$0xff]
        %v715 = vld [vmem:[%s166 + $0xf98] sm:$0xff]
        %v716 = vld [vmem:[%s166 + $0xfa0] sm:$0xff]
        %v717 = vld [vmem:[%s166 + $0xfa8] sm:$0xff]
        %v718 = vld [vmem:[%s166 + $0xfb0] sm:$0xff]
        %v719 = vld [vmem:[%s166 + $0xfb8] sm:$0xff]
        %v720 = vld [vmem:[%s166 + $0xfc0] sm:$0xff]
        %v721 = vld [vmem:[%s166 + $0xfc8] sm:$0xff]
        %v722 = vld [vmem:[%s166 + $0xfd0] sm:$0xff]
        %v723 = vld [vmem:[%s166 + $0xfd8] sm:$0xff]
        %v724 = vld [vmem:[%s166 + $0xfe0] sm:$0xff]
        %v725 = vld [vmem:[%s166 + $0xfe8] sm:$0xff]
        %v726 = vld [vmem:[%s166 + $0xff0] sm:$0xff]
        %v727 = vld [vmem:[%s166 + $0xff8] sm:$0xff]
        %v728 = vld [vmem:[%s166 + $0x1000] sm:$0xff]
        %v729 = vld [vmem:[%s166 + $0x1008] sm:$0xff]
        %v730 = vld [vmem:[%s166 + $0x1010] sm:$0xff]
        %v731 = vld [vmem:[%s166 + $0x1018] sm:$0xff]
        %v732 = vld [vmem:[%s166 + $0x1020] sm:$0xff]
        %v733 = vld [vmem:[%s166 + $0x1028] sm:$0xff]
        %v734 = vld [vmem:[%s166 + $0x1030] sm:$0xff]
        %v735 = vld [vmem:[%s166 + $0x1038] sm:$0xff]
        %v736 = vld [vmem:[%s166 + $0x1040] sm:$0xff]
        %v737 = vld [vmem:[%s166 + $0x1048] sm:$0xff]
        %v738 = vld [vmem:[%s166 + $0x1050] sm:$0xff]
        %v739 = vld [vmem:[%s166 + $0x1058] sm:$0xff]
        %v740 = vld [vmem:[%s166 + $0x1060] sm:$0xff]
        %v741 = vld [vmem:[%s166 + $0x1068] sm:$0xff]
        %v742 = vld [vmem:[%s166 + $0x1070] sm:$0xff]
        %v743 = vld [vmem:[%s166 + $0x1078] sm:$0xff]
        %v744 = vld [vmem:[%s166 + $0x1080] sm:$0xff]
        %v745 = vld [vmem:[%s166 + $0x1088] sm:$0xff]
        %v746 = vld [vmem:[%s166 + $0x1090] sm:$0xff]
        %v747 = vld [vmem:[%s166 + $0x1098] sm:$0xff]
        %v748 = vld [vmem:[%s166 + $0x10a0] sm:$0xff]
        %v749 = vld [vmem:[%s166 + $0x10a8] sm:$0xff]
        %v750 = vld [vmem:[%s166 + $0x10b0] sm:$0xff]
        %v751 = vld [vmem:[%s166 + $0x10b8] sm:$0xff]
        %v752 = vld [vmem:[%s166 + $0x10c0] sm:$0xff]
        %v753 = vld [vmem:[%s166 + $0x10c8] sm:$0xff]
        %v754 = vld [vmem:[%s166 + $0x10d0] sm:$0xff]
        %v755 = vld [vmem:[%s166 + $0x10d8] sm:$0xff]
        %v756 = vld [vmem:[%s166 + $0x10e0] sm:$0xff]
        %v757 = vld [vmem:[%s166 + $0x10e8] sm:$0xff]
        %v758 = vld [vmem:[%s166 + $0x10f0] sm:$0xff]
        %v759 = vld [vmem:[%s166 + $0x10f8] sm:$0xff]
        %v760 = vld [vmem:[%s166 + $0x1100] sm:$0xff]
        %v761 = vld [vmem:[%s166 + $0x1108] sm:$0xff]
        %v762 = vld [vmem:[%s166 + $0x1110] sm:$0xff]
        %v763 = vld [vmem:[%s166 + $0x1118] sm:$0xff]
        %v764 = vld [vmem:[%s166 + $0x1120] sm:$0xff]
        %v765 = vld [vmem:[%s166 + $0x1128] sm:$0xff]
        %v766 = vld [vmem:[%s166 + $0x1130] sm:$0xff]
        %v767 = vld [vmem:[%s166 + $0x1138] sm:$0xff]
        %v768 = vld [vmem:[%s166 + $0x1140] sm:$0xff]
        %v769 = vld [vmem:[%s166 + $0x1148] sm:$0xff]
        %v770 = vld [vmem:[%s166 + $0x1150] sm:$0xff]
        %v771 = vld [vmem:[%s166 + $0x1158] sm:$0xff]
        %v772 = vld [vmem:[%s166 + $0x1160] sm:$0xff]
        %v773 = vld [vmem:[%s166 + $0x1168] sm:$0xff]
        %v774 = vld [vmem:[%s166 + $0x1170] sm:$0xff]
        %v775 = vld [vmem:[%s166 + $0x1178] sm:$0xff]
        %v776 = vld [vmem:[%s166 + $0x1180] sm:$0xff]
        %v777 = vld [vmem:[%s166 + $0x1188] sm:$0xff]
        %v778 = vld [vmem:[%s166 + $0x1190] sm:$0xff]
        %v779 = vld [vmem:[%s166 + $0x1198] sm:$0xff]
        %v780 = vld [vmem:[%s166 + $0x11a0] sm:$0xff]
        %v781 = vld [vmem:[%s166 + $0x11a8] sm:$0xff]
        %v782 = vld [vmem:[%s166 + $0x11b0] sm:$0xff]
        %v783 = vld [vmem:[%s166 + $0x11b8] sm:$0xff]
        %v784 = vld [vmem:[%s166 + $0x11c0] sm:$0xff]
        %v785 = vld [vmem:[%s166 + $0x11c8] sm:$0xff]
        %v786 = vld [vmem:[%s166 + $0x11d0] sm:$0xff]
        %v787 = vld [vmem:[%s166 + $0x11d8] sm:$0xff]
        %v788 = vld [vmem:[%s166 + $0x11e0] sm:$0xff]
        %v789 = vld [vmem:[%s166 + $0x11e8] sm:$0xff]
        %v790 = vld [vmem:[%s166 + $0x11f0] sm:$0xff]
        %v791 = vld [vmem:[%s166 + $0x11f8] sm:$0xff]
        %v792 = vld [vmem:[%s166 + $0x1200] sm:$0xff]
        %v793 = vld [vmem:[%s166 + $0x1208] sm:$0xff]
        %v794 = vld [vmem:[%s166 + $0x1210] sm:$0xff]
        %v795 = vld [vmem:[%s166 + $0x1218] sm:$0xff]
        %v796 = vld [vmem:[%s166 + $0x1220] sm:$0xff]
        %v797 = vld [vmem:[%s166 + $0x1228] sm:$0xff]
        %v798 = vld [vmem:[%s166 + $0x1230] sm:$0xff]
        %v799 = vld [vmem:[%s166 + $0x1238] sm:$0xff]
        %v800 = vld [vmem:[%s166 + $0x1240] sm:$0xff]
        %v801 = vld [vmem:[%s166 + $0x1248] sm:$0xff]
        %v802 = vld [vmem:[%s166 + $0x1250] sm:$0xff]
        %v803 = vld [vmem:[%s166 + $0x1258] sm:$0xff]
        %v804 = vld [vmem:[%s166 + $0x1260] sm:$0xff]
        %v805 = vld [vmem:[%s166 + $0x1268] sm:$0xff]
        %v806 = vld [vmem:[%s166 + $0x1270] sm:$0xff]
        %v807 = vld [vmem:[%s166 + $0x1278] sm:$0xff]
        %v808 = vld [vmem:[%s166 + $0x1280] sm:$0xff]
        %v809 = vld [vmem:[%s166 + $0x1288] sm:$0xff]
        %v810 = vld [vmem:[%s166 + $0x1290] sm:$0xff]
        %v811 = vld [vmem:[%s166 + $0x1298] sm:$0xff]
        %v812 = vld [vmem:[%s166 + $0x12a0] sm:$0xff]
        %v813 = vld [vmem:[%s166 + $0x12a8] sm:$0xff]
        %v814 = vld [vmem:[%s166 + $0x12b0] sm:$0xff]
        %v815 = vld [vmem:[%s166 + $0x12b8] sm:$0xff]
        %v816 = vld [vmem:[%s166 + $0x12c0] sm:$0xff]
        %v817 = vld [vmem:[%s166 + $0x12c8] sm:$0xff]
        %v818 = vld [vmem:[%s166 + $0x12d0] sm:$0xff]
        %v819 = vld [vmem:[%s166 + $0x12d8] sm:$0xff]
        %v820 = vld [vmem:[%s166 + $0x12e0] sm:$0xff]
        %v821 = vld [vmem:[%s166 + $0x12e8] sm:$0xff]
        %v822 = vld [vmem:[%s166 + $0x12f0] sm:$0xff]
        %v823 = vld [vmem:[%s166 + $0x12f8] sm:$0xff]
        %v824 = vld [vmem:[%s166 + $0x1300] sm:$0xff]
        %v825 = vld [vmem:[%s166 + $0x1308] sm:$0xff]
        %v826 = vld [vmem:[%s166 + $0x1310] sm:$0xff]
        %v827 = vld [vmem:[%s166 + $0x1318] sm:$0xff]
        %v828 = vld [vmem:[%s166 + $0x1320] sm:$0xff]
        %v829 = vld [vmem:[%s166 + $0x1328] sm:$0xff]
        %v830 = vld [vmem:[%s166 + $0x1330] sm:$0xff]
        %v831 = vld [vmem:[%s166 + $0x1338] sm:$0xff]
        %v832 = vld [vmem:[%s166 + $0x1340] sm:$0xff]
        %v833 = vld [vmem:[%s166 + $0x1348] sm:$0xff]
        %v834 = vld [vmem:[%s166 + $0x1350] sm:$0xff]
        %v835 = vld [vmem:[%s166 + $0x1358] sm:$0xff]
        %v836 = vld [vmem:[%s166 + $0x1360] sm:$0xff]
        %v837 = vld [vmem:[%s166 + $0x1368] sm:$0xff]
        %v838 = vld [vmem:[%s166 + $0x1370] sm:$0xff]
        %v839 = vld [vmem:[%s166 + $0x1378] sm:$0xff]
        %v840 = vld [vmem:[%s166 + $0x1380] sm:$0xff]
        %v841 = vld [vmem:[%s166 + $0x1388] sm:$0xff]
        %v842 = vld [vmem:[%s166 + $0x1390] sm:$0xff]
        %v843 = vld [vmem:[%s166 + $0x1398] sm:$0xff]
        %v844 = vld [vmem:[%s166 + $0x13a0] sm:$0xff]
        %v845 = vld [vmem:[%s166 + $0x13a8] sm:$0xff]
        %v846 = vld [vmem:[%s166 + $0x13b0] sm:$0xff]
        %v847 = vld [vmem:[%s166 + $0x13b8] sm:$0xff]
        %v848 = vld [vmem:[%s166 + $0x13c0] sm:$0xff]
        %v849 = vld [vmem:[%s166 + $0x13c8] sm:$0xff]
        %v850 = vld [vmem:[%s166 + $0x13d0] sm:$0xff]
        %v851 = vld [vmem:[%s166 + $0x13d8] sm:$0xff]
        %v852 = vld [vmem:[%s166 + $0x13e0] sm:$0xff]
        %v853 = vld [vmem:[%s166 + $0x13e8] sm:$0xff]
        %v854 = vld [vmem:[%s166 + $0x13f0] sm:$0xff]
        %v855 = vld [vmem:[%s166 + $0x13f8] sm:$0xff]
        %v856 = vld [vmem:[%s166 + $0x1400] sm:$0xff]
        %v857 = vld [vmem:[%s166 + $0x1408] sm:$0xff]
        %v858 = vld [vmem:[%s166 + $0x1410] sm:$0xff]
        %v859 = vld [vmem:[%s166 + $0x1418] sm:$0xff]
        %v860 = vld [vmem:[%s166 + $0x1420] sm:$0xff]
        %v861 = vld [vmem:[%s166 + $0x1428] sm:$0xff]
        %v862 = vld [vmem:[%s166 + $0x1430] sm:$0xff]
        %v863 = vld [vmem:[%s166 + $0x1438] sm:$0xff]
        %v864 = vld [vmem:[%s166 + $0x1440] sm:$0xff]
        %v865 = vld [vmem:[%s166 + $0x1448] sm:$0xff]
        %v866 = vld [vmem:[%s166 + $0x1450] sm:$0xff]
        %v867 = vld [vmem:[%s166 + $0x1458] sm:$0xff]
        %v868 = vld [vmem:[%s166 + $0x1460] sm:$0xff]
        %v869 = vld [vmem:[%s166 + $0x1468] sm:$0xff]
        %v870 = vld [vmem:[%s166 + $0x1470] sm:$0xff]
        %v871 = vld [vmem:[%s166 + $0x1478] sm:$0xff]
        %v872 = vld [vmem:[%s166 + $0x1480] sm:$0xff]
        %v873 = vld [vmem:[%s166 + $0x1488] sm:$0xff]
        %v874 = vld [vmem:[%s166 + $0x1490] sm:$0xff]
        %v875 = vld [vmem:[%s166 + $0x1498] sm:$0xff]
        %v876 = vld [vmem:[%s166 + $0x14a0] sm:$0xff]
        %v877 = vld [vmem:[%s166 + $0x14a8] sm:$0xff]
        %v878 = vld [vmem:[%s166 + $0x14b0] sm:$0xff]
        %v879 = vld [vmem:[%s166 + $0x14b8] sm:$0xff]
        %v880 = vld [vmem:[%s166 + $0x14c0] sm:$0xff]
        %v881 = vld [vmem:[%s166 + $0x14c8] sm:$0xff]
        %v882 = vld [vmem:[%s166 + $0x14d0] sm:$0xff]
        %v883 = vld [vmem:[%s166 + $0x14d8] sm:$0xff]
        %v884 = vld [vmem:[%s166 + $0x14e0] sm:$0xff]
        %v885 = vld [vmem:[%s166 + $0x14e8] sm:$0xff]
        %v886 = vld [vmem:[%s166 + $0x14f0] sm:$0xff]
        %v887 = vld [vmem:[%s166 + $0x14f8] sm:$0xff]
        %v888 = vld [vmem:[%s166 + $0x1500] sm:$0xff]
        %v889 = vld [vmem:[%s166 + $0x1508] sm:$0xff]
        %v890 = vld [vmem:[%s166 + $0x1510] sm:$0xff]
        %v891 = vld [vmem:[%s166 + $0x1518] sm:$0xff]
        %v892 = vld [vmem:[%s166 + $0x1520] sm:$0xff]
        %v893 = vld [vmem:[%s166 + $0x1528] sm:$0xff]
        %v894 = vld [vmem:[%s166 + $0x1530] sm:$0xff]
        %v895 = vld [vmem:[%s166 + $0x1538] sm:$0xff]
        %v896 = vld [vmem:[%s166 + $0x1540] sm:$0xff]
        %v897 = vld [vmem:[%s166 + $0x1548] sm:$0xff]
        %v898 = vld [vmem:[%s166 + $0x1550] sm:$0xff]
        %v899 = vld [vmem:[%s166 + $0x1558] sm:$0xff]
        %v900 = vld [vmem:[%s166 + $0x1560] sm:$0xff]
        %v901 = vld [vmem:[%s166 + $0x1568] sm:$0xff]
        %v902 = vld [vmem:[%s166 + $0x1570] sm:$0xff]
        %v903 = vld [vmem:[%s166 + $0x1578] sm:$0xff]
        %v904 = vld [vmem:[%s166 + $0x1580] sm:$0xff]
        %v905 = vld [vmem:[%s166 + $0x1588] sm:$0xff]
        %v906 = vld [vmem:[%s166 + $0x1590] sm:$0xff]
        %v907 = vld [vmem:[%s166 + $0x1598] sm:$0xff]
        %v908 = vld [vmem:[%s166 + $0x15a0] sm:$0xff]
        %v909 = vld [vmem:[%s166 + $0x15a8] sm:$0xff]
        %v910 = vld [vmem:[%s166 + $0x15b0] sm:$0xff]
        %v911 = vld [vmem:[%s166 + $0x15b8] sm:$0xff]
        %v912 = vld [vmem:[%s166 + $0x15c0] sm:$0xff]
        %v913 = vld [vmem:[%s166 + $0x15c8] sm:$0xff]
        %v914 = vld [vmem:[%s166 + $0x15d0] sm:$0xff]
        %v915 = vld [vmem:[%s166 + $0x15d8] sm:$0xff]
        %v916 = vld [vmem:[%s166 + $0x15e0] sm:$0xff]
        %v917 = vld [vmem:[%s166 + $0x15e8] sm:$0xff]
        %v918 = vld [vmem:[%s166 + $0x15f0] sm:$0xff]
        %v919 = vld [vmem:[%s166 + $0x15f8] sm:$0xff]
        %v920 = vld [vmem:[%s166 + $0x1600] sm:$0xff]
        %v921 = vld [vmem:[%s166 + $0x1608] sm:$0xff]
        %v922 = vld [vmem:[%s166 + $0x1610] sm:$0xff]
        %v923 = vld [vmem:[%s166 + $0x1618] sm:$0xff]
        %v924 = vld [vmem:[%s166 + $0x1620] sm:$0xff]
        %v925 = vld [vmem:[%s166 + $0x1628] sm:$0xff]
        %v926 = vld [vmem:[%s166 + $0x1630] sm:$0xff]
        %v927 = vld [vmem:[%s166 + $0x1638] sm:$0xff]
        %v928 = vld [vmem:[%s166 + $0x1640] sm:$0xff]
        %v929 = vld [vmem:[%s166 + $0x1648] sm:$0xff]
        %v930 = vld [vmem:[%s166 + $0x1650] sm:$0xff]
        %v931 = vld [vmem:[%s166 + $0x1658] sm:$0xff]
        %v932 = vld [vmem:[%s166 + $0x1660] sm:$0xff]
        %v933 = vld [vmem:[%s166 + $0x1668] sm:$0xff]
        %v934 = vld [vmem:[%s166 + $0x1670] sm:$0xff]
        %v935 = vld [vmem:[%s166 + $0x1678] sm:$0xff]
        %v936 = vld [vmem:[%s166 + $0x1680] sm:$0xff]
        %v937 = vld [vmem:[%s166 + $0x1688] sm:$0xff]
        %v938 = vld [vmem:[%s166 + $0x1690] sm:$0xff]
        %v939 = vld [vmem:[%s166 + $0x1698] sm:$0xff]
        %v940 = vld [vmem:[%s166 + $0x16a0] sm:$0xff]
        %v941 = vld [vmem:[%s166 + $0x16a8] sm:$0xff]
        %v942 = vld [vmem:[%s166 + $0x16b0] sm:$0xff]
        %v943 = vld [vmem:[%s166 + $0x16b8] sm:$0xff]
        %v944 = vld [vmem:[%s166 + $0x16c0] sm:$0xff]
        %v945 = vld [vmem:[%s166 + $0x16c8] sm:$0xff]
        %v946 = vld [vmem:[%s166 + $0x16d0] sm:$0xff]
        %v947 = vld [vmem:[%s166 + $0x16d8] sm:$0xff]
        %v948 = vld [vmem:[%s166 + $0x16e0] sm:$0xff]
        %v949 = vld [vmem:[%s166 + $0x16e8] sm:$0xff]
        %v950 = vld [vmem:[%s166 + $0x16f0] sm:$0xff]
        %v951 = vld [vmem:[%s166 + $0x16f8] sm:$0xff]
        %v952 = vld [vmem:[%s166 + $0x1700] sm:$0xff]
        %v953 = vld [vmem:[%s166 + $0x1708] sm:$0xff]
        %v954 = vld [vmem:[%s166 + $0x1710] sm:$0xff]
        %v955 = vld [vmem:[%s166 + $0x1718] sm:$0xff]
        %v956 = vld [vmem:[%s166 + $0x1720] sm:$0xff]
        %v957 = vld [vmem:[%s166 + $0x1728] sm:$0xff]
        %v958 = vld [vmem:[%s166 + $0x1730] sm:$0xff]
        %v959 = vld [vmem:[%s166 + $0x1738] sm:$0xff]
        %v960 = vld [vmem:[%s166 + $0x1740] sm:$0xff]
        %v961 = vld [vmem:[%s166 + $0x1748] sm:$0xff]
        %v962 = vld [vmem:[%s166 + $0x1750] sm:$0xff]
        %v963 = vld [vmem:[%s166 + $0x1758] sm:$0xff]
        %v964 = vld [vmem:[%s166 + $0x1760] sm:$0xff]
        %v965 = vld [vmem:[%s166 + $0x1768] sm:$0xff]
        %v966 = vld [vmem:[%s166 + $0x1770] sm:$0xff]
        %v967 = vld [vmem:[%s166 + $0x1778] sm:$0xff]
        %v968 = vld [vmem:[%s166 + $0x1780] sm:$0xff]
        %v969 = vld [vmem:[%s166 + $0x1788] sm:$0xff]
        %v970 = vld [vmem:[%s166 + $0x1790] sm:$0xff]
        %v971 = vld [vmem:[%s166 + $0x1798] sm:$0xff]
        %v972 = vld [vmem:[%s166 + $0x17a0] sm:$0xff]
        %v973 = vld [vmem:[%s166 + $0x17a8] sm:$0xff]
        %v974 = vld [vmem:[%s166 + $0x17b0] sm:$0xff]
        %v975 = vld [vmem:[%s166 + $0x17b8] sm:$0xff]
        %v976 = vld [vmem:[%s166 + $0x17c0] sm:$0xff]
        %v977 = vld [vmem:[%s166 + $0x17c8] sm:$0xff]
        %v978 = vld [vmem:[%s166 + $0x17d0] sm:$0xff]
        %v979 = vld [vmem:[%s166 + $0x17d8] sm:$0xff]
        %v980 = vld [vmem:[%s166 + $0x17e0] sm:$0xff]
        %v981 = vld [vmem:[%s166 + $0x17e8] sm:$0xff]
        %v982 = vld [vmem:[%s166 + $0x17f0] sm:$0xff]
        %v983 = vld [vmem:[%s166 + $0x17f8] sm:$0xff]
        %v984 = vld [vmem:[%s166 + $0x1800] sm:$0xff]
        %v985 = vld [vmem:[%s166 + $0x1808] sm:$0xff]
        %v986 = vld [vmem:[%s166 + $0x1810] sm:$0xff]
        %v987 = vld [vmem:[%s166 + $0x1818] sm:$0xff]
        %v988 = vld [vmem:[%s166 + $0x1820] sm:$0xff]
        %v989 = vld [vmem:[%s166 + $0x1828] sm:$0xff]
        %v990 = vld [vmem:[%s166 + $0x1830] sm:$0xff]
        %v991 = vld [vmem:[%s166 + $0x1838] sm:$0xff]
        %v992 = vld [vmem:[%s166 + $0x1840] sm:$0xff]
        %v993 = vld [vmem:[%s166 + $0x1848] sm:$0xff]
        %v994 = vld [vmem:[%s166 + $0x1850] sm:$0xff]
        %v995 = vld [vmem:[%s166 + $0x1858] sm:$0xff]
        %v996 = vld [vmem:[%s166 + $0x1860] sm:$0xff]
        %v997 = vld [vmem:[%s166 + $0x1868] sm:$0xff]
        %v998 = vld [vmem:[%s166 + $0x1870] sm:$0xff]
        %v999 = vld [vmem:[%s166 + $0x1878] sm:$0xff]
        %v1000 = vld [vmem:[%s166 + $0x1880] sm:$0xff]
        %v1001 = vld [vmem:[%s166 + $0x1888] sm:$0xff]
        %v1002 = vld [vmem:[%s166 + $0x1890] sm:$0xff]
        %v1003 = vld [vmem:[%s166 + $0x1898] sm:$0xff]
        %v1004 = vld [vmem:[%s166 + $0x18a0] sm:$0xff]
        %v1005 = vld [vmem:[%s166 + $0x18a8] sm:$0xff]
        %v1006 = vld [vmem:[%s166 + $0x18b0] sm:$0xff]
        %v1007 = vld [vmem:[%s166 + $0x18b8] sm:$0xff]
        %v1008 = vld [vmem:[%s166 + $0x18c0] sm:$0xff]
        %v1009 = vld [vmem:[%s166 + $0x18c8] sm:$0xff]
        %v1010 = vld [vmem:[%s166 + $0x18d0] sm:$0xff]
        %v1011 = vld [vmem:[%s166 + $0x18d8] sm:$0xff]
        %v1012 = vld [vmem:[%s166 + $0x18e0] sm:$0xff]
        %v1013 = vld [vmem:[%s166 + $0x18e8] sm:$0xff]
        %v1014 = vld [vmem:[%s166 + $0x18f0] sm:$0xff]
        %v1015 = vld [vmem:[%s166 + $0x18f8] sm:$0xff]
        %v1016 = vld [vmem:[%s166 + $0x1900] sm:$0xff]
        %v1017 = vld [vmem:[%s166 + $0x1908] sm:$0xff]
        %v1018 = vld [vmem:[%s166 + $0x1910] sm:$0xff]
        %v1019 = vld [vmem:[%s166 + $0x1918] sm:$0xff]
        %v1020 = vld [vmem:[%s166 + $0x1920] sm:$0xff]
        %v1021 = vld [vmem:[%s166 + $0x1928] sm:$0xff]
        %v1022 = vld [vmem:[%s166 + $0x1930] sm:$0xff]
        %v1023 = vld [vmem:[%s166 + $0x1938] sm:$0xff]
        %v1024 = vld [vmem:[%s166 + $0x1940] sm:$0xff]
        %v1025 = vld [vmem:[%s166 + $0x1948] sm:$0xff]
        %v1026 = vld [vmem:[%s166 + $0x1950] sm:$0xff]
        %v1027 = vld [vmem:[%s166 + $0x1958] sm:$0xff]
        %v1028 = vld [vmem:[%s166 + $0x1960] sm:$0xff]
        %v1029 = vld [vmem:[%s166 + $0x1968] sm:$0xff]
        %v1030 = vld [vmem:[%s166 + $0x1970] sm:$0xff]
        %v1031 = vld [vmem:[%s166 + $0x1978] sm:$0xff]
        %v1032 = vld [vmem:[%s166 + $0x1980] sm:$0xff]
        %v1033 = vld [vmem:[%s166 + $0x1988] sm:$0xff]
        %v1034 = vld [vmem:[%s166 + $0x1990] sm:$0xff]
        %v1035 = vld [vmem:[%s166 + $0x1998] sm:$0xff]
        %v1036 = vld [vmem:[%s166 + $0x19a0] sm:$0xff]
        %v1037 = vld [vmem:[%s166 + $0x19a8] sm:$0xff]
        %v1038 = vld [vmem:[%s166 + $0x19b0] sm:$0xff]
        %v1039 = vld [vmem:[%s166 + $0x19b8] sm:$0xff]
        %v1040 = vld [vmem:[%s166 + $0x19c0] sm:$0xff]
        %v1041 = vld [vmem:[%s166 + $0x19c8] sm:$0xff]
        %v1042 = vld [vmem:[%s166 + $0x19d0] sm:$0xff]
        %v1043 = vld [vmem:[%s166 + $0x19d8] sm:$0xff]
        %v1044 = vld [vmem:[%s166 + $0x19e0] sm:$0xff]
        %v1045 = vld [vmem:[%s166 + $0x19e8] sm:$0xff]
        %v1046 = vld [vmem:[%s166 + $0x19f0] sm:$0xff]
        %v1047 = vld [vmem:[%s166 + $0x19f8] sm:$0xff]
        %v1048 = vld [vmem:[%s166 + $0x1a00] sm:$0xff]
        %v1049 = vld [vmem:[%s166 + $0x1a08] sm:$0xff]
        %v1050 = vld [vmem:[%s166 + $0x1a10] sm:$0xff]
        %v1051 = vld [vmem:[%s166 + $0x1a18] sm:$0xff]
        %v1052 = vld [vmem:[%s166 + $0x1a20] sm:$0xff]
        %v1053 = vld [vmem:[%s166 + $0x1a28] sm:$0xff]
        %v1054 = vld [vmem:[%s166 + $0x1a30] sm:$0xff]
        %v1055 = vld [vmem:[%s166 + $0x1a38] sm:$0xff]
        %v1056 = vld [vmem:[%s166 + $0x1a40] sm:$0xff]
        %v1057 = vld [vmem:[%s166 + $0x1a48] sm:$0xff]
        %v1058 = vld [vmem:[%s166 + $0x1a50] sm:$0xff]
        %v1059 = vld [vmem:[%s166 + $0x1a58] sm:$0xff]
        %v1060 = vld [vmem:[%s166 + $0x1a60] sm:$0xff]
        %v1061 = vld [vmem:[%s166 + $0x1a68] sm:$0xff]
        %v1062 = vld [vmem:[%s166 + $0x1a70] sm:$0xff]
        %v1063 = vld [vmem:[%s166 + $0x1a78] sm:$0xff]
        %v1064 = vld [vmem:[%s166 + $0x1a80] sm:$0xff]
        %v1065 = vld [vmem:[%s166 + $0x1a88] sm:$0xff]
        %v1066 = vld [vmem:[%s166 + $0x1a90] sm:$0xff]
        %v1067 = vld [vmem:[%s166 + $0x1a98] sm:$0xff]
        %v1068 = vld [vmem:[%s166 + $0x1aa0] sm:$0xff]
        %v1069 = vld [vmem:[%s166 + $0x1aa8] sm:$0xff]
        %v1070 = vld [vmem:[%s166 + $0x1ab0] sm:$0xff]
        %v1071 = vld [vmem:[%s166 + $0x1ab8] sm:$0xff]
        %v1072 = vld [vmem:[%s166 + $0x1ac0] sm:$0xff]
        %v1073 = vld [vmem:[%s166 + $0x1ac8] sm:$0xff]
        %v1074 = vld [vmem:[%s166 + $0x1ad0] sm:$0xff]
        %v1075 = vld [vmem:[%s166 + $0x1ad8] sm:$0xff]
        %v1076 = vld [vmem:[%s166 + $0x1ae0] sm:$0xff]
        %v1077 = vld [vmem:[%s166 + $0x1ae8] sm:$0xff]
        %v1078 = vld [vmem:[%s166 + $0x1af0] sm:$0xff]
        %v1079 = vld [vmem:[%s166 + $0x1af8] sm:$0xff]
        %v1080 = vld [vmem:[%s166 + $0x1b00] sm:$0xff]
        %v1081 = vld [vmem:[%s166 + $0x1b08] sm:$0xff]
        %v1082 = vld [vmem:[%s166 + $0x1b10] sm:$0xff]
        %v1083 = vld [vmem:[%s166 + $0x1b18] sm:$0xff]
        %v1084 = vld [vmem:[%s166 + $0x1b20] sm:$0xff]
        %v1085 = vld [vmem:[%s166 + $0x1b28] sm:$0xff]
        %v1086 = vld [vmem:[%s166 + $0x1b30] sm:$0xff]
        %v1087 = vld [vmem:[%s166 + $0x1b38] sm:$0xff]
        %v1088 = vld [vmem:[%s166 + $0x1b40] sm:$0xff]
        %v1089 = vld [vmem:[%s166 + $0x1b48] sm:$0xff]
        %v1090 = vld [vmem:[%s166 + $0x1b50] sm:$0xff]
        %v1091 = vld [vmem:[%s166 + $0x1b58] sm:$0xff]
        %v1092 = vld [vmem:[%s166 + $0x1b60] sm:$0xff]
        %v1093 = vld [vmem:[%s166 + $0x1b68] sm:$0xff]
        %v1094 = vld [vmem:[%s166 + $0x1b70] sm:$0xff]
        %v1095 = vld [vmem:[%s166 + $0x1b78] sm:$0xff]
        %v1096 = vld [vmem:[%s166 + $0x1b80] sm:$0xff]
        %v1097 = vld [vmem:[%s166 + $0x1b88] sm:$0xff]
        %v1098 = vld [vmem:[%s166 + $0x1b90] sm:$0xff]
        %v1099 = vld [vmem:[%s166 + $0x1b98] sm:$0xff]
        %v1100 = vld [vmem:[%s166 + $0x1ba0] sm:$0xff]
        %v1101 = vld [vmem:[%s166 + $0x1ba8] sm:$0xff]
        %v1102 = vld [vmem:[%s166 + $0x1bb0] sm:$0xff]
        %v1103 = vld [vmem:[%s166 + $0x1bb8] sm:$0xff]
        %v1104 = vld [vmem:[%s166 + $0x1bc0] sm:$0xff]
        %v1105 = vld [vmem:[%s166 + $0x1bc8] sm:$0xff]
        %v1106 = vld [vmem:[%s166 + $0x1bd0] sm:$0xff]
        %v1107 = vld [vmem:[%s166 + $0x1bd8] sm:$0xff]
        %v1108 = vld [vmem:[%s166 + $0x1be0] sm:$0xff]
        %v1109 = vld [vmem:[%s166 + $0x1be8] sm:$0xff]
        %v1110 = vld [vmem:[%s166 + $0x1bf0] sm:$0xff]
        %v1111 = vld [vmem:[%s166 + $0x1bf8] sm:$0xff]
        %v1112 = vld [vmem:[%s166 + $0x1c00] sm:$0xff]
        %v1113 = vld [vmem:[%s166 + $0x1c08] sm:$0xff]
        %v1114 = vld [vmem:[%s166 + $0x1c10] sm:$0xff]
        %v1115 = vld [vmem:[%s166 + $0x1c18] sm:$0xff]
        %v1116 = vld [vmem:[%s166 + $0x1c20] sm:$0xff]
        %v1117 = vld [vmem:[%s166 + $0x1c28] sm:$0xff]
        %v1118 = vld [vmem:[%s166 + $0x1c30] sm:$0xff]
        %v1119 = vld [vmem:[%s166 + $0x1c38] sm:$0xff]
        %v1120 = vld [vmem:[%s166 + $0x1c40] sm:$0xff]
        %v1121 = vld [vmem:[%s166 + $0x1c48] sm:$0xff]
        %v1122 = vld [vmem:[%s166 + $0x1c50] sm:$0xff]
        %v1123 = vld [vmem:[%s166 + $0x1c58] sm:$0xff]
        %v1124 = vld [vmem:[%s166 + $0x1c60] sm:$0xff]
        %v1125 = vld [vmem:[%s166 + $0x1c68] sm:$0xff]
        %v1126 = vld [vmem:[%s166 + $0x1c70] sm:$0xff]
        %v1127 = vld [vmem:[%s166 + $0x1c78] sm:$0xff]
        %v1128 = vld [vmem:[%s166 + $0x1c80] sm:$0xff]
        %v1129 = vld [vmem:[%s166 + $0x1c88] sm:$0xff]
        %v1130 = vld [vmem:[%s166 + $0x1c90] sm:$0xff]
        %v1131 = vld [vmem:[%s166 + $0x1c98] sm:$0xff]
        %v1132 = vld [vmem:[%s166 + $0x1ca0] sm:$0xff]
        %v1133 = vld [vmem:[%s166 + $0x1ca8] sm:$0xff]
        %v1134 = vld [vmem:[%s166 + $0x1cb0] sm:$0xff]
        %v1135 = vld [vmem:[%s166 + $0x1cb8] sm:$0xff]
        %v1136 = vld [vmem:[%s166 + $0x1cc0] sm:$0xff]
        %v1137 = vld [vmem:[%s166 + $0x1cc8] sm:$0xff]
        %v1138 = vld [vmem:[%s166 + $0x1cd0] sm:$0xff]
        %v1139 = vld [vmem:[%s166 + $0x1cd8] sm:$0xff]
        %v1140 = vld [vmem:[%s166 + $0x1ce0] sm:$0xff]
        %v1141 = vld [vmem:[%s166 + $0x1ce8] sm:$0xff]
        %v1142 = vld [vmem:[%s166 + $0x1cf0] sm:$0xff]
        %v1143 = vld [vmem:[%s166 + $0x1cf8] sm:$0xff]
        %v1144 = vld [vmem:[%s166 + $0x1d00] sm:$0xff]
        %v1145 = vld [vmem:[%s166 + $0x1d08] sm:$0xff]
        %v1146 = vld [vmem:[%s166 + $0x1d10] sm:$0xff]
        %v1147 = vld [vmem:[%s166 + $0x1d18] sm:$0xff]
        %v1148 = vld [vmem:[%s166 + $0x1d20] sm:$0xff]
        %v1149 = vld [vmem:[%s166 + $0x1d28] sm:$0xff]
        %v1150 = vld [vmem:[%s166 + $0x1d30] sm:$0xff]
        %v1151 = vld [vmem:[%s166 + $0x1d38] sm:$0xff]
        %v1152 = vld [vmem:[%s166 + $0x1d40] sm:$0xff]
        %v1153 = vld [vmem:[%s166 + $0x1d48] sm:$0xff]
        %v1154 = vld [vmem:[%s166 + $0x1d50] sm:$0xff]
        %v1155 = vld [vmem:[%s166 + $0x1d58] sm:$0xff]
        %v1156 = vld [vmem:[%s166 + $0x1d60] sm:$0xff]
        %v1157 = vld [vmem:[%s166 + $0x1d68] sm:$0xff]
        %v1158 = vld [vmem:[%s166 + $0x1d70] sm:$0xff]
        %v1159 = vld [vmem:[%s166 + $0x1d78] sm:$0xff]
        %v1160 = vld [vmem:[%s166 + $0x1d80] sm:$0xff]
        %v1161 = vld [vmem:[%s166 + $0x1d88] sm:$0xff]
        %v1162 = vld [vmem:[%s166 + $0x1d90] sm:$0xff]
        %v1163 = vld [vmem:[%s166 + $0x1d98] sm:$0xff]
        %v1164 = vld [vmem:[%s166 + $0x1da0] sm:$0xff]
        %v1165 = vld [vmem:[%s166 + $0x1da8] sm:$0xff]
        %v1166 = vld [vmem:[%s166 + $0x1db0] sm:$0xff]
        %v1167 = vld [vmem:[%s166 + $0x1db8] sm:$0xff]
        %v1168 = vld [vmem:[%s166 + $0x1dc0] sm:$0xff]
        %v1169 = vld [vmem:[%s166 + $0x1dc8] sm:$0xff]
        %v1170 = vld [vmem:[%s166 + $0x1dd0] sm:$0xff]
        %v1171 = vld [vmem:[%s166 + $0x1dd8] sm:$0xff]
        %v1172 = vld [vmem:[%s166 + $0x1de0] sm:$0xff]
        %v1173 = vld [vmem:[%s166 + $0x1de8] sm:$0xff]
        %v1174 = vld [vmem:[%s166 + $0x1df0] sm:$0xff]
        %v1175 = vld [vmem:[%s166 + $0x1df8] sm:$0xff]
        %v1176 = vld [vmem:[%s166 + $0x1e00] sm:$0xff]
        %v1177 = vld [vmem:[%s166 + $0x1e08] sm:$0xff]
        %v1178 = vld [vmem:[%s166 + $0x1e10] sm:$0xff]
        %v1179 = vld [vmem:[%s166 + $0x1e18] sm:$0xff]
        %v1180 = vld [vmem:[%s166 + $0x1e20] sm:$0xff]
        %v1181 = vld [vmem:[%s166 + $0x1e28] sm:$0xff]
        %v1182 = vld [vmem:[%s166 + $0x1e30] sm:$0xff]
        %v1183 = vld [vmem:[%s166 + $0x1e38] sm:$0xff]
        %v1184 = vld [vmem:[%s166 + $0x1e40] sm:$0xff]
        %v1185 = vld [vmem:[%s166 + $0x1e48] sm:$0xff]
        %v1186 = vld [vmem:[%s166 + $0x1e50] sm:$0xff]
        %v1187 = vld [vmem:[%s166 + $0x1e58] sm:$0xff]
        %v1188 = vld [vmem:[%s166 + $0x1e60] sm:$0xff]
        %v1189 = vld [vmem:[%s166 + $0x1e68] sm:$0xff]
        %v1190 = vld [vmem:[%s166 + $0x1e70] sm:$0xff]
        %v1191 = vld [vmem:[%s166 + $0x1e78] sm:$0xff]
        %v1192 = vld [vmem:[%s166 + $0x1e80] sm:$0xff]
        %v1193 = vld [vmem:[%s166 + $0x1e88] sm:$0xff]
        %v1194 = vld [vmem:[%s166 + $0x1e90] sm:$0xff]
        %v1195 = vld [vmem:[%s166 + $0x1e98] sm:$0xff]
        %v1196 = vld [vmem:[%s166 + $0x1ea0] sm:$0xff]
        %v1197 = vld [vmem:[%s166 + $0x1ea8] sm:$0xff]
        %v1198 = vld [vmem:[%s166 + $0x1eb0] sm:$0xff]
        %v1199 = vld [vmem:[%s166 + $0x1eb8] sm:$0xff]
        %v1200 = vld [vmem:[%s166 + $0x1ec0] sm:$0xff]
        %v1201 = vld [vmem:[%s166 + $0x1ec8] sm:$0xff]
        %v1202 = vld [vmem:[%s166 + $0x1ed0] sm:$0xff]
        %v1203 = vld [vmem:[%s166 + $0x1ed8] sm:$0xff]
        %v1204 = vld [vmem:[%s166 + $0x1ee0] sm:$0xff]
        %v1205 = vld [vmem:[%s166 + $0x1ee8] sm:$0xff]
        %v1206 = vld [vmem:[%s166 + $0x1ef0] sm:$0xff]
        %v1207 = vld [vmem:[%s166 + $0x1ef8] sm:$0xff]
        %v1208 = vld [vmem:[%s166 + $0x1f00] sm:$0xff]
        %v1209 = vld [vmem:[%s166 + $0x1f08] sm:$0xff]
        %v1210 = vld [vmem:[%s166 + $0x1f10] sm:$0xff]
        %v1211 = vld [vmem:[%s166 + $0x1f18] sm:$0xff]
        %v1212 = vld [vmem:[%s166 + $0x1f20] sm:$0xff]
        %v1213 = vld [vmem:[%s166 + $0x1f28] sm:$0xff]
        %v1214 = vld [vmem:[%s166 + $0x1f30] sm:$0xff]
        %v1215 = vld [vmem:[%s166 + $0x1f38] sm:$0xff]
        %v1216 = vld [vmem:[%s166 + $0x1f40] sm:$0xff]
        %v1217 = vld [vmem:[%s166 + $0x1f48] sm:$0xff]
        %v1218 = vld [vmem:[%s166 + $0x1f50] sm:$0xff]
        %v1219 = vld [vmem:[%s166 + $0x1f58] sm:$0xff]
        %v1220 = vld [vmem:[%s166 + $0x1f60] sm:$0xff]
        %v1221 = vld [vmem:[%s166 + $0x1f68] sm:$0xff]
        %v1222 = vld [vmem:[%s166 + $0x1f70] sm:$0xff]
        %v1223 = vld [vmem:[%s166 + $0x1f78] sm:$0xff]
        %v1224 = vld [vmem:[%s166 + $0x1f80] sm:$0xff]
        %v1225 = vld [vmem:[%s166 + $0x1f88] sm:$0xff]
        %v1226 = vld [vmem:[%s166 + $0x1f90] sm:$0xff]
        %v1227 = vld [vmem:[%s166 + $0x1f98] sm:$0xff]
        %v1228 = vld [vmem:[%s166 + $0x1fa0] sm:$0xff]
        %v1229 = vld [vmem:[%s166 + $0x1fa8] sm:$0xff]
        %v1230 = vld [vmem:[%s166 + $0x1fb0] sm:$0xff]
        %v1231 = vld [vmem:[%s166 + $0x1fb8] sm:$0xff]
        %v1232 = vld [vmem:[%s166 + $0x1fc0] sm:$0xff]
        %v1233 = vld [vmem:[%s166 + $0x1fc8] sm:$0xff]
        %v1234 = vld [vmem:[%s166 + $0x1fd0] sm:$0xff]
        %v1235 = vld [vmem:[%s166 + $0x1fd8] sm:$0xff]
        %v1236 = vld [vmem:[%s166 + $0x1fe0] sm:$0xff]
        %v1237 = vld [vmem:[%s166 + $0x1fe8] sm:$0xff]
        %v1238 = vld [vmem:[%s166 + $0x1ff0] sm:$0xff]
        %v1239 = vld [vmem:[%s166 + $0x1ff8] sm:$0xff]
        %v1242 = vcombine.high %v214, %v214
        %v1244 = vunpack.c.l.s4 1983009808
        %v1245 = vunpack.c.0.s8 %v1244
        %v1246 = vlaneseq
        %v1247 = vshrl.u32 %v1246, 7
        %v1248 = vsub.s32 %v1245, %v1247
        %v1249 = vrot.slane %v214, %v1248
        %v1251 = vunpack.c.l.s4 1983009808
        %v1252 = vunpack.c.0.s8 %v1251
        %v1253 = vlaneseq
        %v1254 = vshrl.u32 %v1253, 7
        %v1255 = vsub.s32 %v1252, %v1254
        %v1256 = vrot.slane %v1242, %v1255
        %v1257 = vcombine.high %v1249, %v1249
        %v1258 = vcombine.high %v1256, %v1256
        %v1259 = vcombine.high %v215, %v215
        %v1261 = vunpack.c.l.s4 1983009808
        %v1262 = vunpack.c.0.s8 %v1261
        %v1263 = vlaneseq
        %v1264 = vshrl.u32 %v1263, 7
        %v1265 = vsub.s32 %v1262, %v1264
        %v1266 = vrot.slane %v215, %v1265
        %v1268 = vunpack.c.l.s4 1983009808
        %v1269 = vunpack.c.0.s8 %v1268
        %v1270 = vlaneseq
        %v1271 = vshrl.u32 %v1270, 7
        %v1272 = vsub.s32 %v1269, %v1271
        %v1273 = vrot.slane %v1259, %v1272
        %v1274 = vcombine.high %v1266, %v1266
        %v1275 = vcombine.high %v1273, %v1273
        %1284 = vmatprep.subr.mxu0 %v337
        %1285 = vmatpush1.msra.mxu0 %v336
        %1286 = vmatprep.subr.mxu0 %v329
        %1287 = vmatpush1.msra.mxu0 %v328
        %1288 = vmatprep.subr.mxu0 %v321
        %1289 = vmatpush1.msra.mxu0 %v320
        %1290 = vmatprep.subr.mxu0 %v313
        %1291 = vmatpush1.msra.mxu0 %v312
        %1292 = vmatprep.subr.mxu0 %v305
        %1293 = vmatpush1.msra.mxu0 %v304
        %1294 = vmatprep.subr.mxu0 %v297
        %1295 = vmatpush1.msra.mxu0 %v296
        %1296 = vmatprep.subr.mxu0 %v289
        %1297 = vmatpush1.msra.mxu0 %v288
        %1298 = vmatprep.subr.mxu0 %v281
        %1299 = vmatpush1.msra.mxu0 %v280
        %1300 = vmatprep.subr.mxu0 %v273
        %1301 = vmatpush1.msra.mxu0 %v272
        %1302 = vmatprep.subr.mxu0 %v265
        %1303 = vmatpush1.msra.mxu0 %v264
        %1304 = vmatprep.subr.mxu0 %v257
        %1305 = vmatpush1.msra.mxu0 %v256
        %1306 = vmatprep.subr.mxu0 %v249
        %1307 = vmatpush1.msra.mxu0 %v248
        %1308 = vmatprep.subr.mxu0 %v241
        %1309 = vmatpush1.msra.mxu0 %v240
        %1310 = vmatprep.subr.mxu0 %v233
        %1311 = vmatpush1.msra.mxu0 %v232
        %1312 = vmatprep.subr.mxu0 %v225
        %1313 = vmatpush1.msra.mxu0 %v224
        %1314 = vmatprep.subr.mxu0 %v217
        %1315 = vmatpush1.msra.mxu0 %v216
        %1316 = vmatprep.subr.mxu0 %v465
        %1317 = vmatpush2.msra.mxu0 %v464
        %1318 = vmatprep.subr.mxu0 %v457
        %1319 = vmatpush2.msra.mxu0 %v456
        %1320 = vmatprep.subr.mxu0 %v449
        %1321 = vmatpush2.msra.mxu0 %v448
        %1322 = vmatprep.subr.mxu0 %v441
        %1323 = vmatpush2.msra.mxu0 %v440
        %1324 = vmatprep.subr.mxu0 %v433
        %1325 = vmatpush2.msra.mxu0 %v432
        %1326 = vmatprep.subr.mxu0 %v425
        %1327 = vmatpush2.msra.mxu0 %v424
        %1328 = vmatprep.subr.mxu0 %v417
        %1329 = vmatpush2.msra.mxu0 %v416
        %1330 = vmatprep.subr.mxu0 %v409
        %1331 = vmatpush2.msra.mxu0 %v408
        %1332 = vmatprep.subr.mxu0 %v401
        %1333 = vmatpush2.msra.mxu0 %v400
        %1334 = vmatprep.subr.mxu0 %v393
        %1335 = vmatpush2.msra.mxu0 %v392
        %1336 = vmatprep.subr.mxu0 %v385
        %1337 = vmatpush2.msra.mxu0 %v384
        %1338 = vmatprep.subr.mxu0 %v377
        %1339 = vmatpush2.msra.mxu0 %v376
        %1340 = vmatprep.subr.mxu0 %v369
        %1341 = vmatpush2.msra.mxu0 %v368
        %1342 = vmatprep.subr.mxu0 %v361
        %1343 = vmatpush2.msra.mxu0 %v360
        %1344 = vmatprep.subr.mxu0 %v353
        %1345 = vmatpush2.msra.mxu0 %v352
        %1346 = vmatprep.subr.mxu0 %v345
        %1347 = vmatpush2.msra.mxu0 %v344
        %1348 = vmatprep.mubr.f32.mxu0 %v1257
        %1349 = vmatmul.mubr.f32.gmra.mxu0 %v1249
        %v1350 = vpop.f32.mrf.mxu0
        %v1351 = vadd.f32 0.0, %v1350
        %v1352 = vpop.f32.mrf.mxu0
        %v1353 = vadd.f32 0.0, %v1352
        %1354 = vdwg.mxu0
        %1355 = vmatprep.subr.mxu0 %v593
        %1356 = vmatpush1.msra.mxu0 %v592
        %1357 = vmatprep.subr.mxu0 %v585
        %1358 = vmatpush1.msra.mxu0 %v584
        %1359 = vmatprep.subr.mxu0 %v577
        %1360 = vmatpush1.msra.mxu0 %v576
        %1361 = vmatprep.subr.mxu0 %v569
        %1362 = vmatpush1.msra.mxu0 %v568
        %1363 = vmatprep.subr.mxu0 %v561
        %1364 = vmatpush1.msra.mxu0 %v560
        %1365 = vmatprep.subr.mxu0 %v553
        %1366 = vmatpush1.msra.mxu0 %v552
        %1367 = vmatprep.subr.mxu0 %v545
        %1368 = vmatpush1.msra.mxu0 %v544
        %1369 = vmatprep.subr.mxu0 %v537
        %1370 = vmatpush1.msra.mxu0 %v536
        %1371 = vmatprep.subr.mxu0 %v529
        %1372 = vmatpush1.msra.mxu0 %v528
        %1373 = vmatprep.subr.mxu0 %v521
        %1374 = vmatpush1.msra.mxu0 %v520
        %1375 = vmatprep.subr.mxu0 %v513
        %1376 = vmatpush1.msra.mxu0 %v512
        %1377 = vmatprep.subr.mxu0 %v505
        %1378 = vmatpush1.msra.mxu0 %v504
        %1379 = vmatprep.subr.mxu0 %v497
        %1380 = vmatpush1.msra.mxu0 %v496
        %1381 = vmatprep.subr.mxu0 %v489
        %1382 = vmatpush1.msra.mxu0 %v488
        %1383 = vmatprep.subr.mxu0 %v481
        %1384 = vmatpush1.msra.mxu0 %v480
        %1385 = vmatprep.subr.mxu0 %v473
        %1386 = vmatpush1.msra.mxu0 %v472
        %1387 = vmatprep.subr.mxu0 %v721
        %1388 = vmatpush2.msra.mxu0 %v720
        %1389 = vmatprep.subr.mxu0 %v713
        %1390 = vmatpush2.msra.mxu0 %v712
        %1391 = vmatprep.subr.mxu0 %v705
        %1392 = vmatpush2.msra.mxu0 %v704
        %1393 = vmatprep.subr.mxu0 %v697
        %1394 = vmatpush2.msra.mxu0 %v696
        %1395 = vmatprep.subr.mxu0 %v689
        %1396 = vmatpush2.msra.mxu0 %v688
        %1397 = vmatprep.subr.mxu0 %v681
        %1398 = vmatpush2.msra.mxu0 %v680
        %1399 = vmatprep.subr.mxu0 %v673
        %1400 = vmatpush2.msra.mxu0 %v672
        %1401 = vmatprep.subr.mxu0 %v665
        %1402 = vmatpush2.msra.mxu0 %v664
        %1403 = vmatprep.subr.mxu0 %v657
        %1404 = vmatpush2.msra.mxu0 %v656
        %1405 = vmatprep.subr.mxu0 %v649
        %1406 = vmatpush2.msra.mxu0 %v648
        %1407 = vmatprep.subr.mxu0 %v641
        %1408 = vmatpush2.msra.mxu0 %v640
        %1409 = vmatprep.subr.mxu0 %v633
        %1410 = vmatpush2.msra.mxu0 %v632
        %1411 = vmatprep.subr.mxu0 %v625
        %1412 = vmatpush2.msra.mxu0 %v624
        %1413 = vmatprep.subr.mxu0 %v617
        %1414 = vmatpush2.msra.mxu0 %v616
        %1415 = vmatprep.subr.mxu0 %v609
        %1416 = vmatpush2.msra.mxu0 %v608
        %1417 = vmatprep.subr.mxu0 %v601
        %1418 = vmatpush2.msra.mxu0 %v600
        %1419 = vmatprep.mubr.f32.mxu0 %v1258
        %1420 = vmatmul.mubr.f32.gmra.mxu0 %v1256
        %v1421 = vpop.f32.mrf.mxu0
        %v1422 = vadd.f32 %v1351, %v1421
        %v1423 = vpop.f32.mrf.mxu0
        %v1424 = vadd.f32 %v1353, %v1423
        %1425 = vdwg.mxu0
        %1426 = vmatprep.subr.mxu0 %v849
        %1427 = vmatpush1.msra.mxu0 %v848
        %1428 = vmatprep.subr.mxu0 %v841
        %1429 = vmatpush1.msra.mxu0 %v840
        %1430 = vmatprep.subr.mxu0 %v833
        %1431 = vmatpush1.msra.mxu0 %v832
        %1432 = vmatprep.subr.mxu0 %v825
        %1433 = vmatpush1.msra.mxu0 %v824
        %1434 = vmatprep.subr.mxu0 %v817
        %1435 = vmatpush1.msra.mxu0 %v816
        %1436 = vmatprep.subr.mxu0 %v809
        %1437 = vmatpush1.msra.mxu0 %v808
        %1438 = vmatprep.subr.mxu0 %v801
        %1439 = vmatpush1.msra.mxu0 %v800
        %1440 = vmatprep.subr.mxu0 %v793
        %1441 = vmatpush1.msra.mxu0 %v792
        %1442 = vmatprep.subr.mxu0 %v785
        %1443 = vmatpush1.msra.mxu0 %v784
        %1444 = vmatprep.subr.mxu0 %v777
        %1445 = vmatpush1.msra.mxu0 %v776
        %1446 = vmatprep.subr.mxu0 %v769
        %1447 = vmatpush1.msra.mxu0 %v768
        %1448 = vmatprep.subr.mxu0 %v761
        %1449 = vmatpush1.msra.mxu0 %v760
        %1450 = vmatprep.subr.mxu0 %v753
        %1451 = vmatpush1.msra.mxu0 %v752
        %1452 = vmatprep.subr.mxu0 %v745
        %1453 = vmatpush1.msra.mxu0 %v744
        %1454 = vmatprep.subr.mxu0 %v737
        %1455 = vmatpush1.msra.mxu0 %v736
        %1456 = vmatprep.subr.mxu0 %v729
        %1457 = vmatpush1.msra.mxu0 %v728
        %1458 = vmatprep.subr.mxu0 %v977
        %1459 = vmatpush2.msra.mxu0 %v976
        %1460 = vmatprep.subr.mxu0 %v969
        %1461 = vmatpush2.msra.mxu0 %v968
        %1462 = vmatprep.subr.mxu0 %v961
        %1463 = vmatpush2.msra.mxu0 %v960
        %1464 = vmatprep.subr.mxu0 %v953
        %1465 = vmatpush2.msra.mxu0 %v952
        %1466 = vmatprep.subr.mxu0 %v945
        %1467 = vmatpush2.msra.mxu0 %v944
        %1468 = vmatprep.subr.mxu0 %v937
        %1469 = vmatpush2.msra.mxu0 %v936
        %1470 = vmatprep.subr.mxu0 %v929
        %1471 = vmatpush2.msra.mxu0 %v928
        %1472 = vmatprep.subr.mxu0 %v921
        %1473 = vmatpush2.msra.mxu0 %v920
        %1474 = vmatprep.subr.mxu0 %v913
        %1475 = vmatpush2.msra.mxu0 %v912
        %1476 = vmatprep.subr.mxu0 %v905
        %1477 = vmatpush2.msra.mxu0 %v904
        %1478 = vmatprep.subr.mxu0 %v897
        %1479 = vmatpush2.msra.mxu0 %v896
        %1480 = vmatprep.subr.mxu0 %v889
        %1481 = vmatpush2.msra.mxu0 %v888
        %1482 = vmatprep.subr.mxu0 %v881
        %1483 = vmatpush2.msra.mxu0 %v880
        %1484 = vmatprep.subr.mxu0 %v873
        %1485 = vmatpush2.msra.mxu0 %v872
        %1486 = vmatprep.subr.mxu0 %v865
        %1487 = vmatpush2.msra.mxu0 %v864
        %1488 = vmatprep.subr.mxu0 %v857
        %1489 = vmatpush2.msra.mxu0 %v856
        %1490 = vmatprep.mubr.f32.mxu0 %v1274
        %1491 = vmatmul.mubr.f32.gmra.mxu0 %v1266
        %v1492 = vpop.f32.mrf.mxu0
        %v1493 = vadd.f32 %v1422, %v1492
        %v1494 = vpop.f32.mrf.mxu0
        %v1495 = vadd.f32 %v1424, %v1494
        %1496 = vdwg.mxu0
        %1497 = vmatprep.subr.mxu0 %v1105
        %1498 = vmatpush1.msra.mxu0 %v1104
        %1499 = vmatprep.subr.mxu0 %v1097
        %1500 = vmatpush1.msra.mxu0 %v1096
        %1501 = vmatprep.subr.mxu0 %v1089
        %1502 = vmatpush1.msra.mxu0 %v1088
        %1503 = vmatprep.subr.mxu0 %v1081
        %1504 = vmatpush1.msra.mxu0 %v1080
        %1505 = vmatprep.subr.mxu0 %v1073
        %1506 = vmatpush1.msra.mxu0 %v1072
        %1507 = vmatprep.subr.mxu0 %v1065
        %1508 = vmatpush1.msra.mxu0 %v1064
        %1509 = vmatprep.subr.mxu0 %v1057
        %1510 = vmatpush1.msra.mxu0 %v1056
        %1511 = vmatprep.subr.mxu0 %v1049
        %1512 = vmatpush1.msra.mxu0 %v1048
        %1513 = vmatprep.subr.mxu0 %v1041
        %1514 = vmatpush1.msra.mxu0 %v1040
        %1515 = vmatprep.subr.mxu0 %v1033
        %1516 = vmatpush1.msra.mxu0 %v1032
        %1517 = vmatprep.subr.mxu0 %v1025
        %1518 = vmatpush1.msra.mxu0 %v1024
        %1519 = vmatprep.subr.mxu0 %v1017
        %1520 = vmatpush1.msra.mxu0 %v1016
        %1521 = vmatprep.subr.mxu0 %v1009
        %1522 = vmatpush1.msra.mxu0 %v1008
        %1523 = vmatprep.subr.mxu0 %v1001
        %1524 = vmatpush1.msra.mxu0 %v1000
        %1525 = vmatprep.subr.mxu0 %v993
        %1526 = vmatpush1.msra.mxu0 %v992
        %1527 = vmatprep.subr.mxu0 %v985
        %1528 = vmatpush1.msra.mxu0 %v984
        %1529 = vmatprep.subr.mxu0 %v1233
        %1530 = vmatpush2.msra.mxu0 %v1232
        %1531 = vmatprep.subr.mxu0 %v1225
        %1532 = vmatpush2.msra.mxu0 %v1224
        %1533 = vmatprep.subr.mxu0 %v1217
        %1534 = vmatpush2.msra.mxu0 %v1216
        %1535 = vmatprep.subr.mxu0 %v1209
        %1536 = vmatpush2.msra.mxu0 %v1208
        %1537 = vmatprep.subr.mxu0 %v1201
        %1538 = vmatpush2.msra.mxu0 %v1200
        %1539 = vmatprep.subr.mxu0 %v1193
        %1540 = vmatpush2.msra.mxu0 %v1192
        %1541 = vmatprep.subr.mxu0 %v1185
        %1542 = vmatpush2.msra.mxu0 %v1184
        %1543 = vmatprep.subr.mxu0 %v1177
        %1544 = vmatpush2.msra.mxu0 %v1176
        %1545 = vmatprep.subr.mxu0 %v1169
        %1546 = vmatpush2.msra.mxu0 %v1168
        %1547 = vmatprep.subr.mxu0 %v1161
        %1548 = vmatpush2.msra.mxu0 %v1160
        %1549 = vmatprep.subr.mxu0 %v1153
        %1550 = vmatpush2.msra.mxu0 %v1152
        %1551 = vmatprep.subr.mxu0 %v1145
        %1552 = vmatpush2.msra.mxu0 %v1144
        %1553 = vmatprep.subr.mxu0 %v1137
        %1554 = vmatpush2.msra.mxu0 %v1136
        %1555 = vmatprep.subr.mxu0 %v1129
        %1556 = vmatpush2.msra.mxu0 %v1128
        %1557 = vmatprep.subr.mxu0 %v1121
        %1558 = vmatpush2.msra.mxu0 %v1120
        %1559 = vmatprep.subr.mxu0 %v1113
        %1560 = vmatpush2.msra.mxu0 %v1112
        %1561 = vmatprep.mubr.f32.mxu0 %v1275
        %1562 = vmatmul.mubr.f32.gmra.mxu0 %v1273
        %v1563 = vpop.f32.mrf.mxu0
        %v1564 = vadd.f32 %v1493, %v1563
        %v1565 = vpop.f32.mrf.mxu0
        %v1566 = vadd.f32 %v1495, %v1565
        %1567 = vdwg.mxu0
        %1568 = vmatprep.subr.mxu0 %v339
        %1569 = vmatpush1.msra.mxu0 %v338
        %1570 = vmatprep.subr.mxu0 %v331
        %1571 = vmatpush1.msra.mxu0 %v330
        %1572 = vmatprep.subr.mxu0 %v323
        %1573 = vmatpush1.msra.mxu0 %v322
        %1574 = vmatprep.subr.mxu0 %v315
        %1575 = vmatpush1.msra.mxu0 %v314
        %1576 = vmatprep.subr.mxu0 %v307
        %1577 = vmatpush1.msra.mxu0 %v306
        %1578 = vmatprep.subr.mxu0 %v299
        %1579 = vmatpush1.msra.mxu0 %v298
        %1580 = vmatprep.subr.mxu0 %v291
        %1581 = vmatpush1.msra.mxu0 %v290
        %1582 = vmatprep.subr.mxu0 %v283
        %1583 = vmatpush1.msra.mxu0 %v282
        %1584 = vmatprep.subr.mxu0 %v275
        %1585 = vmatpush1.msra.mxu0 %v274
        %1586 = vmatprep.subr.mxu0 %v267
        %1587 = vmatpush1.msra.mxu0 %v266
        %1588 = vmatprep.subr.mxu0 %v259
        %1589 = vmatpush1.msra.mxu0 %v258
        %1590 = vmatprep.subr.mxu0 %v251
        %1591 = vmatpush1.msra.mxu0 %v250
        %1592 = vmatprep.subr.mxu0 %v243
        %1593 = vmatpush1.msra.mxu0 %v242
        %1594 = vmatprep.subr.mxu0 %v235
        %1595 = vmatpush1.msra.mxu0 %v234
        %1596 = vmatprep.subr.mxu0 %v227
        %1597 = vmatpush1.msra.mxu0 %v226
        %1598 = vmatprep.subr.mxu0 %v219
        %1599 = vmatpush1.msra.mxu0 %v218
        %1600 = vmatprep.subr.mxu0 %v467
        %1601 = vmatpush2.msra.mxu0 %v466
        %1602 = vmatprep.subr.mxu0 %v459
        %1603 = vmatpush2.msra.mxu0 %v458
        %1604 = vmatprep.subr.mxu0 %v451
        %1605 = vmatpush2.msra.mxu0 %v450
        %1606 = vmatprep.subr.mxu0 %v443
        %1607 = vmatpush2.msra.mxu0 %v442
        %1608 = vmatprep.subr.mxu0 %v435
        %1609 = vmatpush2.msra.mxu0 %v434
        %1610 = vmatprep.subr.mxu0 %v427
        %1611 = vmatpush2.msra.mxu0 %v426
        %1612 = vmatprep.subr.mxu0 %v419
        %1613 = vmatpush2.msra.mxu0 %v418
        %1614 = vmatprep.subr.mxu0 %v411
        %1615 = vmatpush2.msra.mxu0 %v410
        %1616 = vmatprep.subr.mxu0 %v403
        %1617 = vmatpush2.msra.mxu0 %v402
        %1618 = vmatprep.subr.mxu0 %v395
        %1619 = vmatpush2.msra.mxu0 %v394
        %1620 = vmatprep.subr.mxu0 %v387
        %1621 = vmatpush2.msra.mxu0 %v386
        %1622 = vmatprep.subr.mxu0 %v379
        %1623 = vmatpush2.msra.mxu0 %v378
        %1624 = vmatprep.subr.mxu0 %v371
        %1625 = vmatpush2.msra.mxu0 %v370
        %1626 = vmatprep.subr.mxu0 %v363
        %1627 = vmatpush2.msra.mxu0 %v362
        %1628 = vmatprep.subr.mxu0 %v355
        %1629 = vmatpush2.msra.mxu0 %v354
        %1630 = vmatprep.subr.mxu0 %v347
        %1631 = vmatpush2.msra.mxu0 %v346
        %1632 = vmatprep.mubr.f32.mxu0 %v1257
        %1633 = vmatmul.mubr.f32.gmra.mxu0 %v1249
        %v1634 = vpop.f32.mrf.mxu0
        %v1635 = vadd.f32 0.0, %v1634
        %v1636 = vpop.f32.mrf.mxu0
        %v1637 = vadd.f32 0.0, %v1636
        %1638 = vdwg.mxu0
        %1639 = vmatprep.subr.mxu0 %v595
        %1640 = vmatpush1.msra.mxu0 %v594
        %1641 = vmatprep.subr.mxu0 %v587
        %1642 = vmatpush1.msra.mxu0 %v586
        %1643 = vmatprep.subr.mxu0 %v579
        %1644 = vmatpush1.msra.mxu0 %v578
        %1645 = vmatprep.subr.mxu0 %v571
        %1646 = vmatpush1.msra.mxu0 %v570
        %1647 = vmatprep.subr.mxu0 %v563
        %1648 = vmatpush1.msra.mxu0 %v562
        %1649 = vmatprep.subr.mxu0 %v555
        %1650 = vmatpush1.msra.mxu0 %v554
        %1651 = vmatprep.subr.mxu0 %v547
        %1652 = vmatpush1.msra.mxu0 %v546
        %1653 = vmatprep.subr.mxu0 %v539
        %1654 = vmatpush1.msra.mxu0 %v538
        %1655 = vmatprep.subr.mxu0 %v531
        %1656 = vmatpush1.msra.mxu0 %v530
        %1657 = vmatprep.subr.mxu0 %v523
        %1658 = vmatpush1.msra.mxu0 %v522
        %1659 = vmatprep.subr.mxu0 %v515
        %1660 = vmatpush1.msra.mxu0 %v514
        %1661 = vmatprep.subr.mxu0 %v507
        %1662 = vmatpush1.msra.mxu0 %v506
        %1663 = vmatprep.subr.mxu0 %v499
        %1664 = vmatpush1.msra.mxu0 %v498
        %1665 = vmatprep.subr.mxu0 %v491
        %1666 = vmatpush1.msra.mxu0 %v490
        %1667 = vmatprep.subr.mxu0 %v483
        %1668 = vmatpush1.msra.mxu0 %v482
        %1669 = vmatprep.subr.mxu0 %v475
        %1670 = vmatpush1.msra.mxu0 %v474
        %1671 = vmatprep.subr.mxu0 %v723
        %1672 = vmatpush2.msra.mxu0 %v722
        %1673 = vmatprep.subr.mxu0 %v715
        %1674 = vmatpush2.msra.mxu0 %v714
        %1675 = vmatprep.subr.mxu0 %v707
        %1676 = vmatpush2.msra.mxu0 %v706
        %1677 = vmatprep.subr.mxu0 %v699
        %1678 = vmatpush2.msra.mxu0 %v698
        %1679 = vmatprep.subr.mxu0 %v691
        %1680 = vmatpush2.msra.mxu0 %v690
        %1681 = vmatprep.subr.mxu0 %v683
        %1682 = vmatpush2.msra.mxu0 %v682
        %1683 = vmatprep.subr.mxu0 %v675
        %1684 = vmatpush2.msra.mxu0 %v674
        %1685 = vmatprep.subr.mxu0 %v667
        %1686 = vmatpush2.msra.mxu0 %v666
        %1687 = vmatprep.subr.mxu0 %v659
        %1688 = vmatpush2.msra.mxu0 %v658
        %1689 = vmatprep.subr.mxu0 %v651
        %1690 = vmatpush2.msra.mxu0 %v650
        %1691 = vmatprep.subr.mxu0 %v643
        %1692 = vmatpush2.msra.mxu0 %v642
        %1693 = vmatprep.subr.mxu0 %v635
        %1694 = vmatpush2.msra.mxu0 %v634
        %1695 = vmatprep.subr.mxu0 %v627
        %1696 = vmatpush2.msra.mxu0 %v626
        %1697 = vmatprep.subr.mxu0 %v619
        %1698 = vmatpush2.msra.mxu0 %v618
        %1699 = vmatprep.subr.mxu0 %v611
        %1700 = vmatpush2.msra.mxu0 %v610
        %1701 = vmatprep.subr.mxu0 %v603
        %1702 = vmatpush2.msra.mxu0 %v602
        %1703 = vmatprep.mubr.f32.mxu0 %v1258
        %1704 = vmatmul.mubr.f32.gmra.mxu0 %v1256
        %v1705 = vpop.f32.mrf.mxu0
        %v1706 = vadd.f32 %v1635, %v1705
        %v1707 = vpop.f32.mrf.mxu0
        %v1708 = vadd.f32 %v1637, %v1707
        %1709 = vdwg.mxu0
        %1710 = vmatprep.subr.mxu0 %v851
        %1711 = vmatpush1.msra.mxu0 %v850
        %1712 = vmatprep.subr.mxu0 %v843
        %1713 = vmatpush1.msra.mxu0 %v842
        %1714 = vmatprep.subr.mxu0 %v835
        %1715 = vmatpush1.msra.mxu0 %v834
        %1716 = vmatprep.subr.mxu0 %v827
        %1717 = vmatpush1.msra.mxu0 %v826
        %1718 = vmatprep.subr.mxu0 %v819
        %1719 = vmatpush1.msra.mxu0 %v818
        %1720 = vmatprep.subr.mxu0 %v811
        %1721 = vmatpush1.msra.mxu0 %v810
        %1722 = vmatprep.subr.mxu0 %v803
        %1723 = vmatpush1.msra.mxu0 %v802
        %1724 = vmatprep.subr.mxu0 %v795
        %1725 = vmatpush1.msra.mxu0 %v794
        %1726 = vmatprep.subr.mxu0 %v787
        %1727 = vmatpush1.msra.mxu0 %v786
        %1728 = vmatprep.subr.mxu0 %v779
        %1729 = vmatpush1.msra.mxu0 %v778
        %1730 = vmatprep.subr.mxu0 %v771
        %1731 = vmatpush1.msra.mxu0 %v770
        %1732 = vmatprep.subr.mxu0 %v763
        %1733 = vmatpush1.msra.mxu0 %v762
        %1734 = vmatprep.subr.mxu0 %v755
        %1735 = vmatpush1.msra.mxu0 %v754
        %1736 = vmatprep.subr.mxu0 %v747
        %1737 = vmatpush1.msra.mxu0 %v746
        %1738 = vmatprep.subr.mxu0 %v739
        %1739 = vmatpush1.msra.mxu0 %v738
        %1740 = vmatprep.subr.mxu0 %v731
        %1741 = vmatpush1.msra.mxu0 %v730
        %1742 = vmatprep.subr.mxu0 %v979
        %1743 = vmatpush2.msra.mxu0 %v978
        %1744 = vmatprep.subr.mxu0 %v971
        %1745 = vmatpush2.msra.mxu0 %v970
        %1746 = vmatprep.subr.mxu0 %v963
        %1747 = vmatpush2.msra.mxu0 %v962
        %1748 = vmatprep.subr.mxu0 %v955
        %1749 = vmatpush2.msra.mxu0 %v954
        %1750 = vmatprep.subr.mxu0 %v947
        %1751 = vmatpush2.msra.mxu0 %v946
        %1752 = vmatprep.subr.mxu0 %v939
        %1753 = vmatpush2.msra.mxu0 %v938
        %1754 = vmatprep.subr.mxu0 %v931
        %1755 = vmatpush2.msra.mxu0 %v930
        %1756 = vmatprep.subr.mxu0 %v923
        %1757 = vmatpush2.msra.mxu0 %v922
        %1758 = vmatprep.subr.mxu0 %v915
        %1759 = vmatpush2.msra.mxu0 %v914
        %1760 = vmatprep.subr.mxu0 %v907
        %1761 = vmatpush2.msra.mxu0 %v906
        %1762 = vmatprep.subr.mxu0 %v899
        %1763 = vmatpush2.msra.mxu0 %v898
        %1764 = vmatprep.subr.mxu0 %v891
        %1765 = vmatpush2.msra.mxu0 %v890
        %1766 = vmatprep.subr.mxu0 %v883
        %1767 = vmatpush2.msra.mxu0 %v882
        %1768 = vmatprep.subr.mxu0 %v875
        %1769 = vmatpush2.msra.mxu0 %v874
        %1770 = vmatprep.subr.mxu0 %v867
        %1771 = vmatpush2.msra.mxu0 %v866
        %1772 = vmatprep.subr.mxu0 %v859
        %1773 = vmatpush2.msra.mxu0 %v858
        %1774 = vmatprep.mubr.f32.mxu0 %v1274
        %1775 = vmatmul.mubr.f32.gmra.mxu0 %v1266
        %v1776 = vpop.f32.mrf.mxu0
        %v1777 = vadd.f32 %v1706, %v1776
        %v1778 = vpop.f32.mrf.mxu0
        %v1779 = vadd.f32 %v1708, %v1778
        %1780 = vdwg.mxu0
        %1781 = vmatprep.subr.mxu0 %v1107
        %1782 = vmatpush1.msra.mxu0 %v1106
        %1783 = vmatprep.subr.mxu0 %v1099
        %1784 = vmatpush1.msra.mxu0 %v1098
        %1785 = vmatprep.subr.mxu0 %v1091
        %1786 = vmatpush1.msra.mxu0 %v1090
        %1787 = vmatprep.subr.mxu0 %v1083
        %1788 = vmatpush1.msra.mxu0 %v1082
        %1789 = vmatprep.subr.mxu0 %v1075
        %1790 = vmatpush1.msra.mxu0 %v1074
        %1791 = vmatprep.subr.mxu0 %v1067
        %1792 = vmatpush1.msra.mxu0 %v1066
        %1793 = vmatprep.subr.mxu0 %v1059
        %1794 = vmatpush1.msra.mxu0 %v1058
        %1795 = vmatprep.subr.mxu0 %v1051
        %1796 = vmatpush1.msra.mxu0 %v1050
        %1797 = vmatprep.subr.mxu0 %v1043
        %1798 = vmatpush1.msra.mxu0 %v1042
        %1799 = vmatprep.subr.mxu0 %v1035
        %1800 = vmatpush1.msra.mxu0 %v1034
        %1801 = vmatprep.subr.mxu0 %v1027
        %1802 = vmatpush1.msra.mxu0 %v1026
        %1803 = vmatprep.subr.mxu0 %v1019
        %1804 = vmatpush1.msra.mxu0 %v1018
        %1805 = vmatprep.subr.mxu0 %v1011
        %1806 = vmatpush1.msra.mxu0 %v1010
        %1807 = vmatprep.subr.mxu0 %v1003
        %1808 = vmatpush1.msra.mxu0 %v1002
        %1809 = vmatprep.subr.mxu0 %v995
        %1810 = vmatpush1.msra.mxu0 %v994
        %1811 = vmatprep.subr.mxu0 %v987
        %1812 = vmatpush1.msra.mxu0 %v986
        %1813 = vmatprep.subr.mxu0 %v1235
        %1814 = vmatpush2.msra.mxu0 %v1234
        %1815 = vmatprep.subr.mxu0 %v1227
        %1816 = vmatpush2.msra.mxu0 %v1226
        %1817 = vmatprep.subr.mxu0 %v1219
        %1818 = vmatpush2.msra.mxu0 %v1218
        %1819 = vmatprep.subr.mxu0 %v1211
        %1820 = vmatpush2.msra.mxu0 %v1210
        %1821 = vmatprep.subr.mxu0 %v1203
        %1822 = vmatpush2.msra.mxu0 %v1202
        %1823 = vmatprep.subr.mxu0 %v1195
        %1824 = vmatpush2.msra.mxu0 %v1194
        %1825 = vmatprep.subr.mxu0 %v1187
        %1826 = vmatpush2.msra.mxu0 %v1186
        %1827 = vmatprep.subr.mxu0 %v1179
        %1828 = vmatpush2.msra.mxu0 %v1178
        %1829 = vmatprep.subr.mxu0 %v1171
        %1830 = vmatpush2.msra.mxu0 %v1170
        %1831 = vmatprep.subr.mxu0 %v1163
        %1832 = vmatpush2.msra.mxu0 %v1162
        %1833 = vmatprep.subr.mxu0 %v1155
        %1834 = vmatpush2.msra.mxu0 %v1154
        %1835 = vmatprep.subr.mxu0 %v1147
        %1836 = vmatpush2.msra.mxu0 %v1146
        %1837 = vmatprep.subr.mxu0 %v1139
        %1838 = vmatpush2.msra.mxu0 %v1138
        %1839 = vmatprep.subr.mxu0 %v1131
        %1840 = vmatpush2.msra.mxu0 %v1130
        %1841 = vmatprep.subr.mxu0 %v1123
        %1842 = vmatpush2.msra.mxu0 %v1122
        %1843 = vmatprep.subr.mxu0 %v1115
        %1844 = vmatpush2.msra.mxu0 %v1114
        %1845 = vmatprep.mubr.f32.mxu0 %v1275
        %1846 = vmatmul.mubr.f32.gmra.mxu0 %v1273
        %v1847 = vpop.f32.mrf.mxu0
        %v1848 = vadd.f32 %v1777, %v1847
        %v1849 = vpop.f32.mrf.mxu0
        %v1850 = vadd.f32 %v1779, %v1849
        %1851 = vdwg.mxu0
        %1852 = vmatprep.subr.mxu0 %v341
        %1853 = vmatpush1.msra.mxu0 %v340
        %1854 = vmatprep.subr.mxu0 %v333
        %1855 = vmatpush1.msra.mxu0 %v332
        %1856 = vmatprep.subr.mxu0 %v325
        %1857 = vmatpush1.msra.mxu0 %v324
        %1858 = vmatprep.subr.mxu0 %v317
        %1859 = vmatpush1.msra.mxu0 %v316
        %1860 = vmatprep.subr.mxu0 %v309
        %1861 = vmatpush1.msra.mxu0 %v308
        %1862 = vmatprep.subr.mxu0 %v301
        %1863 = vmatpush1.msra.mxu0 %v300
        %1864 = vmatprep.subr.mxu0 %v293
        %1865 = vmatpush1.msra.mxu0 %v292
        %1866 = vmatprep.subr.mxu0 %v285
        %1867 = vmatpush1.msra.mxu0 %v284
        %1868 = vmatprep.subr.mxu0 %v277
        %1869 = vmatpush1.msra.mxu0 %v276
        %1870 = vmatprep.subr.mxu0 %v269
        %1871 = vmatpush1.msra.mxu0 %v268
        %1872 = vmatprep.subr.mxu0 %v261
        %1873 = vmatpush1.msra.mxu0 %v260
        %1874 = vmatprep.subr.mxu0 %v253
        %1875 = vmatpush1.msra.mxu0 %v252
        %1876 = vmatprep.subr.mxu0 %v245
        %1877 = vmatpush1.msra.mxu0 %v244
        %1878 = vmatprep.subr.mxu0 %v237
        %1879 = vmatpush1.msra.mxu0 %v236
        %1880 = vmatprep.subr.mxu0 %v229
        %1881 = vmatpush1.msra.mxu0 %v228
        %1882 = vmatprep.subr.mxu0 %v221
        %1883 = vmatpush1.msra.mxu0 %v220
        %1884 = vmatprep.subr.mxu0 %v469
        %1885 = vmatpush2.msra.mxu0 %v468
        %1886 = vmatprep.subr.mxu0 %v461
        %1887 = vmatpush2.msra.mxu0 %v460
        %1888 = vmatprep.subr.mxu0 %v453
        %1889 = vmatpush2.msra.mxu0 %v452
        %1890 = vmatprep.subr.mxu0 %v445
        %1891 = vmatpush2.msra.mxu0 %v444
        %1892 = vmatprep.subr.mxu0 %v437
        %1893 = vmatpush2.msra.mxu0 %v436
        %1894 = vmatprep.subr.mxu0 %v429
        %1895 = vmatpush2.msra.mxu0 %v428
        %1896 = vmatprep.subr.mxu0 %v421
        %1897 = vmatpush2.msra.mxu0 %v420
        %1898 = vmatprep.subr.mxu0 %v413
        %1899 = vmatpush2.msra.mxu0 %v412
        %1900 = vmatprep.subr.mxu0 %v405
        %1901 = vmatpush2.msra.mxu0 %v404
        %1902 = vmatprep.subr.mxu0 %v397
        %1903 = vmatpush2.msra.mxu0 %v396
        %1904 = vmatprep.subr.mxu0 %v389
        %1905 = vmatpush2.msra.mxu0 %v388
        %1906 = vmatprep.subr.mxu0 %v381
        %1907 = vmatpush2.msra.mxu0 %v380
        %1908 = vmatprep.subr.mxu0 %v373
        %1909 = vmatpush2.msra.mxu0 %v372
        %1910 = vmatprep.subr.mxu0 %v365
        %1911 = vmatpush2.msra.mxu0 %v364
        %1912 = vmatprep.subr.mxu0 %v357
        %1913 = vmatpush2.msra.mxu0 %v356
        %1914 = vmatprep.subr.mxu0 %v349
        %1915 = vmatpush2.msra.mxu0 %v348
        %1916 = vmatprep.mubr.f32.mxu0 %v1257
        %1917 = vmatmul.mubr.f32.gmra.mxu0 %v1249
        %v1918 = vpop.f32.mrf.mxu0
        %v1919 = vadd.f32 0.0, %v1918
        %v1920 = vpop.f32.mrf.mxu0
        %v1921 = vadd.f32 0.0, %v1920
        %1922 = vdwg.mxu0
        %1923 = vmatprep.subr.mxu0 %v597
        %1924 = vmatpush1.msra.mxu0 %v596
        %1925 = vmatprep.subr.mxu0 %v589
        %1926 = vmatpush1.msra.mxu0 %v588
        %1927 = vmatprep.subr.mxu0 %v581
        %1928 = vmatpush1.msra.mxu0 %v580
        %1929 = vmatprep.subr.mxu0 %v573
        %1930 = vmatpush1.msra.mxu0 %v572
        %1931 = vmatprep.subr.mxu0 %v565
        %1932 = vmatpush1.msra.mxu0 %v564
        %1933 = vmatprep.subr.mxu0 %v557
        %1934 = vmatpush1.msra.mxu0 %v556
        %1935 = vmatprep.subr.mxu0 %v549
        %1936 = vmatpush1.msra.mxu0 %v548
        %1937 = vmatprep.subr.mxu0 %v541
        %1938 = vmatpush1.msra.mxu0 %v540
        %1939 = vmatprep.subr.mxu0 %v533
        %1940 = vmatpush1.msra.mxu0 %v532
        %1941 = vmatprep.subr.mxu0 %v525
        %1942 = vmatpush1.msra.mxu0 %v524
        %1943 = vmatprep.subr.mxu0 %v517
        %1944 = vmatpush1.msra.mxu0 %v516
        %1945 = vmatprep.subr.mxu0 %v509
        %1946 = vmatpush1.msra.mxu0 %v508
        %1947 = vmatprep.subr.mxu0 %v501
        %1948 = vmatpush1.msra.mxu0 %v500
        %1949 = vmatprep.subr.mxu0 %v493
        %1950 = vmatpush1.msra.mxu0 %v492
        %1951 = vmatprep.subr.mxu0 %v485
        %1952 = vmatpush1.msra.mxu0 %v484
        %1953 = vmatprep.subr.mxu0 %v477
        %1954 = vmatpush1.msra.mxu0 %v476
        %1955 = vmatprep.subr.mxu0 %v725
        %1956 = vmatpush2.msra.mxu0 %v724
        %1957 = vmatprep.subr.mxu0 %v717
        %1958 = vmatpush2.msra.mxu0 %v716
        %1959 = vmatprep.subr.mxu0 %v709
        %1960 = vmatpush2.msra.mxu0 %v708
        %1961 = vmatprep.subr.mxu0 %v701
        %1962 = vmatpush2.msra.mxu0 %v700
        %1963 = vmatprep.subr.mxu0 %v693
        %1964 = vmatpush2.msra.mxu0 %v692
        %1965 = vmatprep.subr.mxu0 %v685
        %1966 = vmatpush2.msra.mxu0 %v684
        %1967 = vmatprep.subr.mxu0 %v677
        %1968 = vmatpush2.msra.mxu0 %v676
        %1969 = vmatprep.subr.mxu0 %v669
        %1970 = vmatpush2.msra.mxu0 %v668
        %1971 = vmatprep.subr.mxu0 %v661
        %1972 = vmatpush2.msra.mxu0 %v660
        %1973 = vmatprep.subr.mxu0 %v653
        %1974 = vmatpush2.msra.mxu0 %v652
        %1975 = vmatprep.subr.mxu0 %v645
        %1976 = vmatpush2.msra.mxu0 %v644
        %1977 = vmatprep.subr.mxu0 %v637
        %1978 = vmatpush2.msra.mxu0 %v636
        %1979 = vmatprep.subr.mxu0 %v629
        %1980 = vmatpush2.msra.mxu0 %v628
        %1981 = vmatprep.subr.mxu0 %v621
        %1982 = vmatpush2.msra.mxu0 %v620
        %1983 = vmatprep.subr.mxu0 %v613
        %1984 = vmatpush2.msra.mxu0 %v612
        %1985 = vmatprep.subr.mxu0 %v605
        %1986 = vmatpush2.msra.mxu0 %v604
        %1987 = vmatprep.mubr.f32.mxu0 %v1258
        %1988 = vmatmul.mubr.f32.gmra.mxu0 %v1256
        %v1989 = vpop.f32.mrf.mxu0
        %v1990 = vadd.f32 %v1919, %v1989
        %v1991 = vpop.f32.mrf.mxu0
        %v1992 = vadd.f32 %v1921, %v1991
        %1993 = vdwg.mxu0
        %1994 = vmatprep.subr.mxu0 %v853
        %1995 = vmatpush1.msra.mxu0 %v852
        %1996 = vmatprep.subr.mxu0 %v845
        %1997 = vmatpush1.msra.mxu0 %v844
        %1998 = vmatprep.subr.mxu0 %v837
        %1999 = vmatpush1.msra.mxu0 %v836
        %2000 = vmatprep.subr.mxu0 %v829
        %2001 = vmatpush1.msra.mxu0 %v828
        %2002 = vmatprep.subr.mxu0 %v821
        %2003 = vmatpush1.msra.mxu0 %v820
        %2004 = vmatprep.subr.mxu0 %v813
        %2005 = vmatpush1.msra.mxu0 %v812
        %2006 = vmatprep.subr.mxu0 %v805
        %2007 = vmatpush1.msra.mxu0 %v804
        %2008 = vmatprep.subr.mxu0 %v797
        %2009 = vmatpush1.msra.mxu0 %v796
        %2010 = vmatprep.subr.mxu0 %v789
        %2011 = vmatpush1.msra.mxu0 %v788
        %2012 = vmatprep.subr.mxu0 %v781
        %2013 = vmatpush1.msra.mxu0 %v780
        %2014 = vmatprep.subr.mxu0 %v773
        %2015 = vmatpush1.msra.mxu0 %v772
        %2016 = vmatprep.subr.mxu0 %v765
        %2017 = vmatpush1.msra.mxu0 %v764
        %2018 = vmatprep.subr.mxu0 %v757
        %2019 = vmatpush1.msra.mxu0 %v756
        %2020 = vmatprep.subr.mxu0 %v749
        %2021 = vmatpush1.msra.mxu0 %v748
        %2022 = vmatprep.subr.mxu0 %v741
        %2023 = vmatpush1.msra.mxu0 %v740
        %2024 = vmatprep.subr.mxu0 %v733
        %2025 = vmatpush1.msra.mxu0 %v732
        %2026 = vmatprep.subr.mxu0 %v981
        %2027 = vmatpush2.msra.mxu0 %v980
        %2028 = vmatprep.subr.mxu0 %v973
        %2029 = vmatpush2.msra.mxu0 %v972
        %2030 = vmatprep.subr.mxu0 %v965
        %2031 = vmatpush2.msra.mxu0 %v964
        %2032 = vmatprep.subr.mxu0 %v957
        %2033 = vmatpush2.msra.mxu0 %v956
        %2034 = vmatprep.subr.mxu0 %v949
        %2035 = vmatpush2.msra.mxu0 %v948
        %2036 = vmatprep.subr.mxu0 %v941
        %2037 = vmatpush2.msra.mxu0 %v940
        %2038 = vmatprep.subr.mxu0 %v933
        %2039 = vmatpush2.msra.mxu0 %v932
        %2040 = vmatprep.subr.mxu0 %v925
        %2041 = vmatpush2.msra.mxu0 %v924
        %2042 = vmatprep.subr.mxu0 %v917
        %2043 = vmatpush2.msra.mxu0 %v916
        %2044 = vmatprep.subr.mxu0 %v909
        %2045 = vmatpush2.msra.mxu0 %v908
        %2046 = vmatprep.subr.mxu0 %v901
        %2047 = vmatpush2.msra.mxu0 %v900
        %2048 = vmatprep.subr.mxu0 %v893
        %2049 = vmatpush2.msra.mxu0 %v892
        %2050 = vmatprep.subr.mxu0 %v885
        %2051 = vmatpush2.msra.mxu0 %v884
        %2052 = vmatprep.subr.mxu0 %v877
        %2053 = vmatpush2.msra.mxu0 %v876
        %2054 = vmatprep.subr.mxu0 %v869
        %2055 = vmatpush2.msra.mxu0 %v868
        %2056 = vmatprep.subr.mxu0 %v861
        %2057 = vmatpush2.msra.mxu0 %v860
        %2058 = vmatprep.mubr.f32.mxu0 %v1274
        %2059 = vmatmul.mubr.f32.gmra.mxu0 %v1266
        %v2060 = vpop.f32.mrf.mxu0
        %v2061 = vadd.f32 %v1990, %v2060
        %v2062 = vpop.f32.mrf.mxu0
        %v2063 = vadd.f32 %v1992, %v2062
        %2064 = vdwg.mxu0
        %2065 = vmatprep.subr.mxu0 %v1109
        %2066 = vmatpush1.msra.mxu0 %v1108
        %2067 = vmatprep.subr.mxu0 %v1101
        %2068 = vmatpush1.msra.mxu0 %v1100
        %2069 = vmatprep.subr.mxu0 %v1093
        %2070 = vmatpush1.msra.mxu0 %v1092
        %2071 = vmatprep.subr.mxu0 %v1085
        %2072 = vmatpush1.msra.mxu0 %v1084
        %2073 = vmatprep.subr.mxu0 %v1077
        %2074 = vmatpush1.msra.mxu0 %v1076
        %2075 = vmatprep.subr.mxu0 %v1069
        %2076 = vmatpush1.msra.mxu0 %v1068
        %2077 = vmatprep.subr.mxu0 %v1061
        %2078 = vmatpush1.msra.mxu0 %v1060
        %2079 = vmatprep.subr.mxu0 %v1053
        %2080 = vmatpush1.msra.mxu0 %v1052
        %2081 = vmatprep.subr.mxu0 %v1045
        %2082 = vmatpush1.msra.mxu0 %v1044
        %2083 = vmatprep.subr.mxu0 %v1037
        %2084 = vmatpush1.msra.mxu0 %v1036
        %2085 = vmatprep.subr.mxu0 %v1029
        %2086 = vmatpush1.msra.mxu0 %v1028
        %2087 = vmatprep.subr.mxu0 %v1021
        %2088 = vmatpush1.msra.mxu0 %v1020
        %2089 = vmatprep.subr.mxu0 %v1013
        %2090 = vmatpush1.msra.mxu0 %v1012
        %2091 = vmatprep.subr.mxu0 %v1005
        %2092 = vmatpush1.msra.mxu0 %v1004
        %2093 = vmatprep.subr.mxu0 %v997
        %2094 = vmatpush1.msra.mxu0 %v996
        %2095 = vmatprep.subr.mxu0 %v989
        %2096 = vmatpush1.msra.mxu0 %v988
        %2097 = vmatprep.subr.mxu0 %v1237
        %2098 = vmatpush2.msra.mxu0 %v1236
        %2099 = vmatprep.subr.mxu0 %v1229
        %2100 = vmatpush2.msra.mxu0 %v1228
        %2101 = vmatprep.subr.mxu0 %v1221
        %2102 = vmatpush2.msra.mxu0 %v1220
        %2103 = vmatprep.subr.mxu0 %v1213
        %2104 = vmatpush2.msra.mxu0 %v1212
        %2105 = vmatprep.subr.mxu0 %v1205
        %2106 = vmatpush2.msra.mxu0 %v1204
        %2107 = vmatprep.subr.mxu0 %v1197
        %2108 = vmatpush2.msra.mxu0 %v1196
        %2109 = vmatprep.subr.mxu0 %v1189
        %2110 = vmatpush2.msra.mxu0 %v1188
        %2111 = vmatprep.subr.mxu0 %v1181
        %2112 = vmatpush2.msra.mxu0 %v1180
        %2113 = vmatprep.subr.mxu0 %v1173
        %2114 = vmatpush2.msra.mxu0 %v1172
        %2115 = vmatprep.subr.mxu0 %v1165
        %2116 = vmatpush2.msra.mxu0 %v1164
        %2117 = vmatprep.subr.mxu0 %v1157
        %2118 = vmatpush2.msra.mxu0 %v1156
        %2119 = vmatprep.subr.mxu0 %v1149
        %2120 = vmatpush2.msra.mxu0 %v1148
        %2121 = vmatprep.subr.mxu0 %v1141
        %2122 = vmatpush2.msra.mxu0 %v1140
        %2123 = vmatprep.subr.mxu0 %v1133
        %2124 = vmatpush2.msra.mxu0 %v1132
        %2125 = vmatprep.subr.mxu0 %v1125
        %2126 = vmatpush2.msra.mxu0 %v1124
        %2127 = vmatprep.subr.mxu0 %v1117
        %2128 = vmatpush2.msra.mxu0 %v1116
        %2129 = vmatprep.mubr.f32.mxu0 %v1275
        %2130 = vmatmul.mubr.f32.gmra.mxu0 %v1273
        %v2131 = vpop.f32.mrf.mxu0
        %v2132 = vadd.f32 %v2061, %v2131
        %v2133 = vpop.f32.mrf.mxu0
        %v2134 = vadd.f32 %v2063, %v2133
        %2135 = vdwg.mxu0
        %2136 = vmatprep.subr.mxu0 %v343
        %2137 = vmatpush1.msra.mxu0 %v342
        %2138 = vmatprep.subr.mxu0 %v335
        %2139 = vmatpush1.msra.mxu0 %v334
        %2140 = vmatprep.subr.mxu0 %v327
        %2141 = vmatpush1.msra.mxu0 %v326
        %2142 = vmatprep.subr.mxu0 %v319
        %2143 = vmatpush1.msra.mxu0 %v318
        %2144 = vmatprep.subr.mxu0 %v311
        %2145 = vmatpush1.msra.mxu0 %v310
        %2146 = vmatprep.subr.mxu0 %v303
        %2147 = vmatpush1.msra.mxu0 %v302
        %2148 = vmatprep.subr.mxu0 %v295
        %2149 = vmatpush1.msra.mxu0 %v294
        %2150 = vmatprep.subr.mxu0 %v287
        %2151 = vmatpush1.msra.mxu0 %v286
        %2152 = vmatprep.subr.mxu0 %v279
        %2153 = vmatpush1.msra.mxu0 %v278
        %2154 = vmatprep.subr.mxu0 %v271
        %2155 = vmatpush1.msra.mxu0 %v270
        %2156 = vmatprep.subr.mxu0 %v263
        %2157 = vmatpush1.msra.mxu0 %v262
        %2158 = vmatprep.subr.mxu0 %v255
        %2159 = vmatpush1.msra.mxu0 %v254
        %2160 = vmatprep.subr.mxu0 %v247
        %2161 = vmatpush1.msra.mxu0 %v246
        %2162 = vmatprep.subr.mxu0 %v239
        %2163 = vmatpush1.msra.mxu0 %v238
        %2164 = vmatprep.subr.mxu0 %v231
        %2165 = vmatpush1.msra.mxu0 %v230
        %2166 = vmatprep.subr.mxu0 %v223
        %2167 = vmatpush1.msra.mxu0 %v222
        %2168 = vmatprep.subr.mxu0 %v471
        %2169 = vmatpush2.msra.mxu0 %v470
        %2170 = vmatprep.subr.mxu0 %v463
        %2171 = vmatpush2.msra.mxu0 %v462
        %2172 = vmatprep.subr.mxu0 %v455
        %2173 = vmatpush2.msra.mxu0 %v454
        %2174 = vmatprep.subr.mxu0 %v447
        %2175 = vmatpush2.msra.mxu0 %v446
        %2176 = vmatprep.subr.mxu0 %v439
        %2177 = vmatpush2.msra.mxu0 %v438
        %2178 = vmatprep.subr.mxu0 %v431
        %2179 = vmatpush2.msra.mxu0 %v430
        %2180 = vmatprep.subr.mxu0 %v423
        %2181 = vmatpush2.msra.mxu0 %v422
        %2182 = vmatprep.subr.mxu0 %v415
        %2183 = vmatpush2.msra.mxu0 %v414
        %2184 = vmatprep.subr.mxu0 %v407
        %2185 = vmatpush2.msra.mxu0 %v406
        %2186 = vmatprep.subr.mxu0 %v399
        %2187 = vmatpush2.msra.mxu0 %v398
        %2188 = vmatprep.subr.mxu0 %v391
        %2189 = vmatpush2.msra.mxu0 %v390
        %2190 = vmatprep.subr.mxu0 %v383
        %2191 = vmatpush2.msra.mxu0 %v382
        %2192 = vmatprep.subr.mxu0 %v375
        %2193 = vmatpush2.msra.mxu0 %v374
        %2194 = vmatprep.subr.mxu0 %v367
        %2195 = vmatpush2.msra.mxu0 %v366
        %2196 = vmatprep.subr.mxu0 %v359
        %2197 = vmatpush2.msra.mxu0 %v358
        %2198 = vmatprep.subr.mxu0 %v351
        %2199 = vmatpush2.msra.mxu0 %v350
        %2200 = vmatprep.mubr.f32.mxu0 %v1257
        %2201 = vmatmul.mubr.f32.gmra.mxu0 %v1249
        %v2202 = vpop.f32.mrf.mxu0
        %v2203 = vadd.f32 0.0, %v2202
        %v2204 = vpop.f32.mrf.mxu0
        %v2205 = vadd.f32 0.0, %v2204
        %2206 = vdwg.mxu0
        %2207 = vmatprep.subr.mxu0 %v599
        %2208 = vmatpush1.msra.mxu0 %v598
        %2209 = vmatprep.subr.mxu0 %v591
        %2210 = vmatpush1.msra.mxu0 %v590
        %2211 = vmatprep.subr.mxu0 %v583
        %2212 = vmatpush1.msra.mxu0 %v582
        %2213 = vmatprep.subr.mxu0 %v575
        %2214 = vmatpush1.msra.mxu0 %v574
        %2215 = vmatprep.subr.mxu0 %v567
        %2216 = vmatpush1.msra.mxu0 %v566
        %2217 = vmatprep.subr.mxu0 %v559
        %2218 = vmatpush1.msra.mxu0 %v558
        %2219 = vmatprep.subr.mxu0 %v551
        %2220 = vmatpush1.msra.mxu0 %v550
        %2221 = vmatprep.subr.mxu0 %v543
        %2222 = vmatpush1.msra.mxu0 %v542
        %2223 = vmatprep.subr.mxu0 %v535
        %2224 = vmatpush1.msra.mxu0 %v534
        %2225 = vmatprep.subr.mxu0 %v527
        %2226 = vmatpush1.msra.mxu0 %v526
        %2227 = vmatprep.subr.mxu0 %v519
        %2228 = vmatpush1.msra.mxu0 %v518
        %2229 = vmatprep.subr.mxu0 %v511
        %2230 = vmatpush1.msra.mxu0 %v510
        %2231 = vmatprep.subr.mxu0 %v503
        %2232 = vmatpush1.msra.mxu0 %v502
        %2233 = vmatprep.subr.mxu0 %v495
        %2234 = vmatpush1.msra.mxu0 %v494
        %2235 = vmatprep.subr.mxu0 %v487
        %2236 = vmatpush1.msra.mxu0 %v486
        %2237 = vmatprep.subr.mxu0 %v479
        %2238 = vmatpush1.msra.mxu0 %v478
        %2239 = vmatprep.subr.mxu0 %v727
        %2240 = vmatpush2.msra.mxu0 %v726
        %2241 = vmatprep.subr.mxu0 %v719
        %2242 = vmatpush2.msra.mxu0 %v718
        %2243 = vmatprep.subr.mxu0 %v711
        %2244 = vmatpush2.msra.mxu0 %v710
        %2245 = vmatprep.subr.mxu0 %v703
        %2246 = vmatpush2.msra.mxu0 %v702
        %2247 = vmatprep.subr.mxu0 %v695
        %2248 = vmatpush2.msra.mxu0 %v694
        %2249 = vmatprep.subr.mxu0 %v687
        %2250 = vmatpush2.msra.mxu0 %v686
        %2251 = vmatprep.subr.mxu0 %v679
        %2252 = vmatpush2.msra.mxu0 %v678
        %2253 = vmatprep.subr.mxu0 %v671
        %2254 = vmatpush2.msra.mxu0 %v670
        %2255 = vmatprep.subr.mxu0 %v663
        %2256 = vmatpush2.msra.mxu0 %v662
        %2257 = vmatprep.subr.mxu0 %v655
        %2258 = vmatpush2.msra.mxu0 %v654
        %2259 = vmatprep.subr.mxu0 %v647
        %2260 = vmatpush2.msra.mxu0 %v646
        %2261 = vmatprep.subr.mxu0 %v639
        %2262 = vmatpush2.msra.mxu0 %v638
        %2263 = vmatprep.subr.mxu0 %v631
        %2264 = vmatpush2.msra.mxu0 %v630
        %2265 = vmatprep.subr.mxu0 %v623
        %2266 = vmatpush2.msra.mxu0 %v622
        %2267 = vmatprep.subr.mxu0 %v615
        %2268 = vmatpush2.msra.mxu0 %v614
        %2269 = vmatprep.subr.mxu0 %v607
        %2270 = vmatpush2.msra.mxu0 %v606
        %2271 = vmatprep.mubr.f32.mxu0 %v1258
        %2272 = vmatmul.mubr.f32.gmra.mxu0 %v1256
        %v2273 = vpop.f32.mrf.mxu0
        %v2274 = vadd.f32 %v2203, %v2273
        %v2275 = vpop.f32.mrf.mxu0
        %v2276 = vadd.f32 %v2205, %v2275
        %2277 = vdwg.mxu0
        %2278 = vmatprep.subr.mxu0 %v855
        %2279 = vmatpush1.msra.mxu0 %v854
        %2280 = vmatprep.subr.mxu0 %v847
        %2281 = vmatpush1.msra.mxu0 %v846
        %2282 = vmatprep.subr.mxu0 %v839
        %2283 = vmatpush1.msra.mxu0 %v838
        %2284 = vmatprep.subr.mxu0 %v831
        %2285 = vmatpush1.msra.mxu0 %v830
        %2286 = vmatprep.subr.mxu0 %v823
        %2287 = vmatpush1.msra.mxu0 %v822
        %2288 = vmatprep.subr.mxu0 %v815
        %2289 = vmatpush1.msra.mxu0 %v814
        %2290 = vmatprep.subr.mxu0 %v807
        %2291 = vmatpush1.msra.mxu0 %v806
        %2292 = vmatprep.subr.mxu0 %v799
        %2293 = vmatpush1.msra.mxu0 %v798
        %2294 = vmatprep.subr.mxu0 %v791
        %2295 = vmatpush1.msra.mxu0 %v790
        %2296 = vmatprep.subr.mxu0 %v783
        %2297 = vmatpush1.msra.mxu0 %v782
        %2298 = vmatprep.subr.mxu0 %v775
        %2299 = vmatpush1.msra.mxu0 %v774
        %2300 = vmatprep.subr.mxu0 %v767
        %2301 = vmatpush1.msra.mxu0 %v766
        %2302 = vmatprep.subr.mxu0 %v759
        %2303 = vmatpush1.msra.mxu0 %v758
        %2304 = vmatprep.subr.mxu0 %v751
        %2305 = vmatpush1.msra.mxu0 %v750
        %2306 = vmatprep.subr.mxu0 %v743
        %2307 = vmatpush1.msra.mxu0 %v742
        %2308 = vmatprep.subr.mxu0 %v735
        %2309 = vmatpush1.msra.mxu0 %v734
        %2310 = vmatprep.subr.mxu0 %v983
        %2311 = vmatpush2.msra.mxu0 %v982
        %2312 = vmatprep.subr.mxu0 %v975
        %2313 = vmatpush2.msra.mxu0 %v974
        %2314 = vmatprep.subr.mxu0 %v967
        %2315 = vmatpush2.msra.mxu0 %v966
        %2316 = vmatprep.subr.mxu0 %v959
        %2317 = vmatpush2.msra.mxu0 %v958
        %2318 = vmatprep.subr.mxu0 %v951
        %2319 = vmatpush2.msra.mxu0 %v950
        %2320 = vmatprep.subr.mxu0 %v943
        %2321 = vmatpush2.msra.mxu0 %v942
        %2322 = vmatprep.subr.mxu0 %v935
        %2323 = vmatpush2.msra.mxu0 %v934
        %2324 = vmatprep.subr.mxu0 %v927
        %2325 = vmatpush2.msra.mxu0 %v926
        %2326 = vmatprep.subr.mxu0 %v919
        %2327 = vmatpush2.msra.mxu0 %v918
        %2328 = vmatprep.subr.mxu0 %v911
        %2329 = vmatpush2.msra.mxu0 %v910
        %2330 = vmatprep.subr.mxu0 %v903
        %2331 = vmatpush2.msra.mxu0 %v902
        %2332 = vmatprep.subr.mxu0 %v895
        %2333 = vmatpush2.msra.mxu0 %v894
        %2334 = vmatprep.subr.mxu0 %v887
        %2335 = vmatpush2.msra.mxu0 %v886
        %2336 = vmatprep.subr.mxu0 %v879
        %2337 = vmatpush2.msra.mxu0 %v878
        %2338 = vmatprep.subr.mxu0 %v871
        %2339 = vmatpush2.msra.mxu0 %v870
        %2340 = vmatprep.subr.mxu0 %v863
        %2341 = vmatpush2.msra.mxu0 %v862
        %2342 = vmatprep.mubr.f32.mxu0 %v1274
        %2343 = vmatmul.mubr.f32.gmra.mxu0 %v1266
        %v2344 = vpop.f32.mrf.mxu0
        %v2345 = vadd.f32 %v2274, %v2344
        %v2346 = vpop.f32.mrf.mxu0
        %v2347 = vadd.f32 %v2276, %v2346
        %2348 = vdwg.mxu0
        %2349 = vmatprep.subr.mxu0 %v1111
        %2350 = vmatpush1.msra.mxu0 %v1110
        %2351 = vmatprep.subr.mxu0 %v1103
        %2352 = vmatpush1.msra.mxu0 %v1102
        %2353 = vmatprep.subr.mxu0 %v1095
        %2354 = vmatpush1.msra.mxu0 %v1094
        %2355 = vmatprep.subr.mxu0 %v1087
        %2356 = vmatpush1.msra.mxu0 %v1086
        %2357 = vmatprep.subr.mxu0 %v1079
        %2358 = vmatpush1.msra.mxu0 %v1078
        %2359 = vmatprep.subr.mxu0 %v1071
        %2360 = vmatpush1.msra.mxu0 %v1070
        %2361 = vmatprep.subr.mxu0 %v1063
        %2362 = vmatpush1.msra.mxu0 %v1062
        %2363 = vmatprep.subr.mxu0 %v1055
        %2364 = vmatpush1.msra.mxu0 %v1054
        %2365 = vmatprep.subr.mxu0 %v1047
        %2366 = vmatpush1.msra.mxu0 %v1046
        %2367 = vmatprep.subr.mxu0 %v1039
        %2368 = vmatpush1.msra.mxu0 %v1038
        %2369 = vmatprep.subr.mxu0 %v1031
        %2370 = vmatpush1.msra.mxu0 %v1030
        %2371 = vmatprep.subr.mxu0 %v1023
        %2372 = vmatpush1.msra.mxu0 %v1022
        %2373 = vmatprep.subr.mxu0 %v1015
        %2374 = vmatpush1.msra.mxu0 %v1014
        %2375 = vmatprep.subr.mxu0 %v1007
        %2376 = vmatpush1.msra.mxu0 %v1006
        %2377 = vmatprep.subr.mxu0 %v999
        %2378 = vmatpush1.msra.mxu0 %v998
        %2379 = vmatprep.subr.mxu0 %v991
        %2380 = vmatpush1.msra.mxu0 %v990
        %2381 = vmatprep.subr.mxu0 %v1239
        %2382 = vmatpush2.msra.mxu0 %v1238
        %2383 = vmatprep.subr.mxu0 %v1231
        %2384 = vmatpush2.msra.mxu0 %v1230
        %2385 = vmatprep.subr.mxu0 %v1223
        %2386 = vmatpush2.msra.mxu0 %v1222
        %2387 = vmatprep.subr.mxu0 %v1215
        %2388 = vmatpush2.msra.mxu0 %v1214
        %2389 = vmatprep.subr.mxu0 %v1207
        %2390 = vmatpush2.msra.mxu0 %v1206
        %2391 = vmatprep.subr.mxu0 %v1199
        %2392 = vmatpush2.msra.mxu0 %v1198
        %2393 = vmatprep.subr.mxu0 %v1191
        %2394 = vmatpush2.msra.mxu0 %v1190
        %2395 = vmatprep.subr.mxu0 %v1183
        %2396 = vmatpush2.msra.mxu0 %v1182
        %2397 = vmatprep.subr.mxu0 %v1175
        %2398 = vmatpush2.msra.mxu0 %v1174
        %2399 = vmatprep.subr.mxu0 %v1167
        %2400 = vmatpush2.msra.mxu0 %v1166
        %2401 = vmatprep.subr.mxu0 %v1159
        %2402 = vmatpush2.msra.mxu0 %v1158
        %2403 = vmatprep.subr.mxu0 %v1151
        %2404 = vmatpush2.msra.mxu0 %v1150
        %2405 = vmatprep.subr.mxu0 %v1143
        %2406 = vmatpush2.msra.mxu0 %v1142
        %2407 = vmatprep.subr.mxu0 %v1135
        %2408 = vmatpush2.msra.mxu0 %v1134
        %2409 = vmatprep.subr.mxu0 %v1127
        %2410 = vmatpush2.msra.mxu0 %v1126
        %2411 = vmatprep.subr.mxu0 %v1119
        %2412 = vmatpush2.msra.mxu0 %v1118
        %2413 = vmatprep.mubr.f32.mxu0 %v1275
        %2414 = vmatmul.mubr.f32.gmra.mxu0 %v1273
        %v2415 = vpop.f32.mrf.mxu0
        %v2416 = vadd.f32 %v2345, %v2415
        %v2417 = vpop.f32.mrf.mxu0
        %v2418 = vadd.f32 %v2347, %v2417
        %2419 = vdwg.mxu0
        %v2428 = vcombine.low %v1564, %v1566
        %v2429 = vcombine.low %v1848, %v1850
        %v2431 = vunpack.c.l.s4 1983009808
        %v2432 = vunpack.c.0.s8 %v2431
        %v2433 = vlaneseq
        %v2434 = vshrl.u32 %v2433, 7
        %v2435 = vsub.s32 %v2432, %v2434
        %v2436 = vrot.slane %v2428, %v2435
        %v2438 = vunpack.c.l.s4 1983009808
        %v2439 = vunpack.c.0.s8 %v2438
        %v2440 = vlaneseq
        %v2441 = vshrl.u32 %v2440, 7
        %v2442 = vsub.s32 %v2439, %v2441
        %v2443 = vrot.slane %v2429, %v2442
        %v2444 = vcombine.low %v2436, %v2443
        %v2445 = vcombine.low %v2132, %v2134
        %v2446 = vcombine.low %v2416, %v2418
        %v2448 = vunpack.c.l.s4 1983009808
        %v2449 = vunpack.c.0.s8 %v2448
        %v2450 = vlaneseq
        %v2451 = vshrl.u32 %v2450, 7
        %v2452 = vsub.s32 %v2449, %v2451
        %v2453 = vrot.slane %v2445, %v2452
        %v2455 = vunpack.c.l.s4 1983009808
        %v2456 = vunpack.c.0.s8 %v2455
        %v2457 = vlaneseq
        %v2458 = vshrl.u32 %v2457, 7
        %v2459 = vsub.s32 %v2456, %v2458
        %v2460 = vrot.slane %v2446, %v2459
        %v2461 = vcombine.low %v2453, %v2460
        %v2464 = vadd.f32 %v212, %v2444
        %v2465 = vadd.f32 %v213, %v2461
        %2466 = vst [vmem:[#allocation2] sm:$0xff] %v2464
        %2467 = vst [vmem:[#allocation2 + $0x8] sm:$0xff] %v2465
        %p2468 = scmp.eq.s32.totalorder %s21, 3
        // Predicated region
        $region37: #{vgg_forward.14} parent=27 // pred_check
          %p2469 = pneg %p2468
        $region38: #{vgg_forward.14} parent=27 // pred_check_branch
          %2471 = sbr.rel (%p2469) target = $region40
        $region39: #{vgg_forward.14} parent=27 // pred_region
          %v2472 = vld [vmem:[#allocation2] sm:$0xff]
          %v2473 = vld [vmem:[#allocation2 + $0x8] sm:$0xff]
          %v2474 = vmax.f32 %v2472, 0.0
          %v2475 = vmax.f32 %v2473, 0.0
          %2476 = vst [vmem:[%s204] sm:$0xff] %v2474
          %2477 = vst [vmem:[%s204 + $0x8] sm:$0xff] %v2475
        $region40: #{vgg_forward.14} parent=27 // pred_fallthru
          _
        %s2478 = smul.u32 8, %s20
        %p2479 = scmp.lt.s32.totalorder %s2478, 31
        %s2480 = scalar_select %p2479, %s2478, 31
        %s2481 = smul.addr %s2480, 2
        %s2482 = scalar_lea.vmem %s2, %s2481
        // Predicated region
        $region41: #{vgg_forward.14} parent=27 // pred_check
          %p2483 = pneg %p100
        $region42: #{vgg_forward.14} parent=27 // pred_check_branch
          %2485 = sbr.rel (%p2483) target = $region44
        $region43: #{vgg_forward.14} parent=27 // pred_region
          %s2486 = smul.u32 8, %s20
        $region44: #{vgg_forward.14} parent=27 // pred_fallthru
          _
      $region28: #{vgg_forward.14} parent=5 // pred_fallthru
        _
      %p2487 = scmp.le.s32.totalorder 2, %s11
      // Predicated region
      $region45: #{vgg_forward.14} parent=5 // pred_check
        %p2488 = pneg %p2487
      $region46: #{vgg_forward.14} parent=5 // pred_check_branch
        %2490 = sbr.rel (%p2488) target = $region48
      $region47: #{vgg_forward.14} parent=5 // pred_region
        %s2491 = ssub.s32 %s11, 2
        // Predicated region
        $region49: #{vgg_forward.14} parent=47 // pred_check
          %p2492 = pneg %p106
        $region50: #{vgg_forward.14} parent=47 // pred_check_branch
          %2494 = sbr.rel (%p2492) target = $region52
        $region51: #{vgg_forward.14} parent=47 // pred_region
          %s2495 = smul.u32 8, %s22
          %p2496 = scmp.lt.s32.totalorder %s2495, 31
          %s2497 = scalar_select %p2496, %s2495, 31
          %s2498 = smul.addr %s2497, 2
          %s2499 = scalar_lea.vmem %s2, %s2498
        $region52: #{vgg_forward.14} parent=47 // pred_fallthru
          _
      $region48: #{vgg_forward.14} parent=5 // pred_fallthru
        _
    $region6: #{vgg_forward.14} parent=1 // loop_footer
      %s15 = sadd.s32 1, %s11
    $region7: #{vgg_forward.14} parent=1 // loop_footer_branch
      %10 = sbr.rel target = $region3
    $region8: #{vgg_forward.14} parent=1 // loop_exit
      _
    %2500 = vsyncpa [#allocation4], 1
    %s2501 = scalar_lea.sflag [#allocation4], 1
    %2502 = vsyncpa %s2501, 1

</llo_original>
